<compile_context>
chip_gen: v7x
topology: tpu7x:2x2x1
jax: 0.10.0
libtpu: 0.0.40
codegen_flags: <defaults>
</compile_context>

<pallas_src>
import functools

import jax
import jax.numpy as jnp
from jax import lax
from jax.experimental import pallas as pl
from jax.experimental.pallas import tpu as pltpu

EPS = 1e-5
ACT_DTYPE = jnp.bfloat16            # HBM dtype for inter-pass activations / MXU inputs
VMEM_LIMIT = 64 * 1024 * 1024       # scoped-VMEM cap; actual usage bounded by _pick_bt
VMEM_BUDGET = 24 * 1024 * 1024      # per-step working-set budget used to choose Bt


# ----------------------------- in-kernel helpers ------------------------------

def _taps_matrix(xp_ref, H, W):
    # xp_ref: (B, H+2, W+2, C) zero-padded VMEM scratch  ->  (B*H*W, 9*C) im2row
    # matrix, tap order dy-major / dx-minor, channels innermost (matches weights).
    taps = [xp_ref[:, dy:dy + H, dx:dx + W, :] for dy in range(3) for dx in range(3)]
    cat = jnp.concatenate(taps, axis=-1)                       # (B, H, W, 9*C)
    return cat.reshape(cat.shape[0] * H * W, cat.shape[-1])


def _col_stats(y):
    # Per-channel [sum ; sum_of_squares] of y (rows, C) via MXU ones-row matmuls
    # (keeps the long reduction off the XLU).  Strictly f32.  -> (2, C).
    ones = jnp.ones((1, y.shape[0]), jnp.float32)
    s = jnp.dot(ones, y, preferred_element_type=jnp.float32)
    ss = jnp.dot(ones, y * y, preferred_element_type=jnp.float32)
    return jnp.concatenate([s, ss], axis=0)


def _pad_into(xp_ref, interior, H, W, C, bt):
    # Zero-pad `interior` (bt, H, W, C) into the (bt, H+2, W+2, C) scratch.
    # Every element of the scratch is (re)written each step -> no cross-step state,
    # safe under core-parallel grid sharding.
    dt = xp_ref.dtype
    zrow = jnp.zeros((bt, 1, W + 2, C), dt)
    xp_ref[:, 0:1, :, :] = zrow
    xp_ref[:, H + 1:H + 2, :, :] = zrow
    zcol = jnp.zeros((bt, H, 1, C), dt)
    xp_ref[:, 1:H + 1, :, :] = jnp.concatenate([zcol, interior, zcol], axis=2)


# ---------------------------------- kernels -----------------------------------

def _conv1_kernel(x_ref, w_ref, y1_ref, yd_ref, stats_ref, xp_ref,
                  *, H, W, cin, cout, bt):
    # conv1 + downsample conv fused into one (9*Cin, 2*Cout) bf16 matmul, f32 acc.
    xb = x_ref[...].astype(xp_ref.dtype)                            # f32 -> bf16
    _pad_into(xp_ref, xb, H, W, cin, bt)

    t = _taps_matrix(xp_ref, H, W)                                  # (bt*H*W, 9*Cin) bf16
    y = jnp.dot(t, w_ref[...], preferred_element_type=jnp.float32)  # (bt*H*W, 2*Cout) f32
    y1_ref[...] = y[:, :cout].reshape(bt, H * W, cout).astype(y1_ref.dtype)
    yd_ref[...] = y[:, cout:].reshape(bt, H * W, cout).astype(yd_ref.dtype)

    stats_ref[0] = _col_stats(y)                                    # per-step partial


def _conv2_kernel(y1_ref, s1_ref, b1_ref, w2_ref, y2_ref, stats_ref, hp_ref,
                  *, H, W, cout, bt):
    # bn1 (folded affine, f32 math) + relu on the fly, zero-pad into persistent
    # scratch, conv2 as one (9*Cout, Cout) bf16 matmul, per-step BN2 stats partial.
    h1 = jnp.maximum(y1_ref[...].astype(jnp.float32) * s1_ref[...] + b1_ref[...], 0.0)
    h1 = h1.reshape(bt, H, W, cout).astype(hp_ref.dtype)
    _pad_into(hp_ref, h1, H, W, cout, bt)

    t = _taps_matrix(hp_ref, H, W)                                   # (bt*H*W, 9*Cout)
    y2 = jnp.dot(t, w2_ref[...], preferred_element_type=jnp.float32)
    y2_ref[...] = y2.reshape(bt, H * W, cout).astype(y2_ref.dtype)

    stats_ref[0] = _col_stats(y2)                                    # per-step partial


def _epilogue_kernel(y2_ref, yd_ref, s2_ref, b2_ref, sd_ref, bd_ref, out_ref):
    # bn2(y2) + bn_d(yd) + residual add + relu on lane-dense (bt, H, W*Cout) slabs.
    # bf16 loads, f32 math, f32 (module-dtype) store.
    y2 = y2_ref[...].astype(jnp.float32)
    yd = yd_ref[...].astype(jnp.float32)
    out_ref[...] = jnp.maximum(
        y2 * s2_ref[...] + b2_ref[...] + yd * sd_ref[...] + bd_ref[...], 0.0)


# ------------------------------- wrapper (JAX) ---------------------------------

def _pick_bt(n, h, w, cin, cout, budget=VMEM_BUDGET):
    # Largest divisor of n whose per-step footprint (double-buffered I/O blocks,
    # padded scratch, 9x im2row taps, f32 matmul result) fits the VMEM budget.
    def est(bt):
        io = 2 * (bt * h * w * cin * 4 + 2 * bt * h * w * cout * 2)
        pad = bt * (h + 2) * (w + 2) * max(cin, cout) * 2
        taps = bt * h * w * 9 * max(cin, cout) * 2
        acc = bt * h * w * 2 * cout * 4
        return io + pad + taps + acc
    best = 1
    for bt in range(1, n + 1):
        if n % bt == 0 and est(bt) <= budget:
            best = bt
    return best


def _bn_affine(stats, gamma, beta, count):
    # Fold training-mode BN (batch mean, biased var) + affine into (scale, shift).
    mean = stats[0:1] / count
    var = jnp.maximum(stats[1:2] / count - mean * mean, 0.0)   # clamp for stability
    scale = gamma * lax.rsqrt(var + EPS)
    shift = beta - mean * scale
    return scale, shift


@jax.jit
def residual_block(x_nchw, params):
    n, cin, h, w = x_nchw.shape
    cout = params["g1"].shape[-1]
    nhw = n * h * w
    bt = _pick_bt(n, h, w, cin, cout)
    steps = n // bt

    # Boundary layout change; kept because the module contract is NCHW.
    # (If the surrounding model is NHWC these two transposes should be dropped.)
    x = jnp.transpose(x_nchw, (0, 2, 3, 1))                          # NCHW -> NHWC

    w1d = jnp.concatenate([params["w1"], params["wd"]], axis=1).astype(ACT_DTYPE)
    w2 = params["w2"].astype(ACT_DTYPE)

    cp = pltpu.CompilerParams(dimension_semantics=("parallel",),
                              vmem_limit_bytes=VMEM_LIMIT)

    # ---- pass 1: conv1 + downsample conv (single fused matmul) + BN stat partials ----
    y1, yd, stats1d_p = pl.pallas_call(
        functools.partial(_conv1_kernel, H=h, W=w, cin=cin, cout=cout, bt=bt),
        grid=(steps,),
        in_specs=[
            pl.BlockSpec((bt, h, w, cin), lambda i: (i, 0, 0, 0)),
            pl.BlockSpec((9 * cin, 2 * cout), lambda i: (0, 0)),
        ],
        out_specs=(
            pl.BlockSpec((bt, h * w, cout), lambda i: (i, 0, 0)),
            pl.BlockSpec((bt, h * w, cout), lambda i: (i, 0, 0)),
            pl.BlockSpec((1, 2, 2 * cout), lambda i: (i, 0, 0)),     # per-step partial
        ),
        out_shape=(
            jax.ShapeDtypeStruct((n, h * w, cout), ACT_DTYPE),
            jax.ShapeDtypeStruct((n, h * w, cout), ACT_DTYPE),
            jax.ShapeDtypeStruct((steps, 2, 2 * cout), jnp.float32),
        ),
        scratch_shapes=[pltpu.VMEM((bt, h + 2, w + 2, cin), ACT_DTYPE)],
        compiler_params=cp,
    )(x, w1d)

    stats1d = jnp.sum(stats1d_p, axis=0)                             # (2, 2*Cout) f32
    s1, b1 = _bn_affine(stats1d[:, :cout], params["g1"], params["b1"], nhw)
    sd, bd = _bn_affine(stats1d[:, cout:], params["gd"], params["bd"], nhw)

    # ---- pass 2: bn1+relu folded into conv2's input, conv2 matmul + BN2 partials ----
    y2, stats2_p = pl.pallas_call(
        functools.partial(_conv2_kernel, H=h, W=w, cout=cout, bt=bt),
        grid=(steps,),
        in_specs=[
            pl.BlockSpec((bt, h * w, cout), lambda i: (i, 0, 0)),
            pl.BlockSpec((1, cout), lambda i: (0, 0)),
            pl.BlockSpec((1, cout), lambda i: (0, 0)),
            pl.BlockSpec((9 * cout, cout), lambda i: (0, 0)),
        ],
        out_specs=(
            pl.BlockSpec((bt, h * w, cout), lambda i: (i, 0, 0)),
            pl.BlockSpec((1, 2, cout), lambda i: (i, 0, 0)),         # per-step partial
        ),
        out_shape=(
            jax.ShapeDtypeStruct((n, h * w, cout), ACT_DTYPE),
            jax.ShapeDtypeStruct((steps, 2, cout), jnp.float32),
        ),
        scratch_shapes=[pltpu.VMEM((bt, h + 2, w + 2, cout), ACT_DTYPE)],
        compiler_params=cp,
    )(y1, s1, b1, w2)

    stats2 = jnp.sum(stats2_p, axis=0)
    s2, b2 = _bn_affine(stats2, params["g2"], params["b2"], nhw)

    # ---- pass 3: bn2 + bn_d + residual + relu on lane-dense (H, W*Cout) slabs ----
    # (N, H*W, C) -> (N, H, W*C) is a free row-major re-view; per-channel affine
    # vectors are tiled W times so the kernel is full-lane VPU work with unmasked vst.
    y2v = y2.reshape(n, h, w * cout)
    ydv = yd.reshape(n, h, w * cout)
    s2t, b2t = jnp.tile(s2, (1, w)), jnp.tile(b2, (1, w))
    sdt, bdt = jnp.tile(sd, (1, w)), jnp.tile(bd, (1, w))

    out = pl.pallas_call(
        _epilogue_kernel,
        grid=(steps,),
        in_specs=[
            pl.BlockSpec((bt, h, w * cout), lambda i: (i, 0, 0)),
            pl.BlockSpec((bt, h, w * cout), lambda i: (i, 0, 0)),
            pl.BlockSpec((1, w * cout), lambda i: (0, 0)),
            pl.BlockSpec((1, w * cout), lambda i: (0, 0)),
            pl.BlockSpec((1, w * cout), lambda i: (0, 0)),
            pl.BlockSpec((1, w * cout), lambda i: (0, 0)),
        ],
        out_specs=pl.BlockSpec((bt, h, w * cout), lambda i: (i, 0, 0)),
        out_shape=jax.ShapeDtypeStruct((n, h, w * cout), jnp.float32),
        compiler_params=cp,
    )(y2v, ydv, s2t, b2t, sdt, bdt)

    return jnp.transpose(out.reshape(n, h, w, cout), (0, 3, 1, 2))   # NHWC -> NCHW


# ------------------------ deterministic parameter init --------------------------

def init_params(key, cin, cout):
    ks = jax.random.split(key, 12)

    def conv_w(k, ci):
        w_oihw = 0.1 * jax.random.normal(k, (cout, ci, 3, 3), jnp.float32)  # PyTorch OIHW
        # (dy, dx, Cin, Cout) -> (9*Cin, Cout): rows ordered (dy*3+dx)*Cin + ci,
        # matching the in-kernel tap concatenation order.
        w_mat = jnp.transpose(w_oihw, (2, 3, 1, 0)).reshape(9 * ci, cout)
        return w_mat, w_oihw

    w1_m, w1_raw = conv_w(ks[0], cin)
    w2_m, w2_raw = conv_w(ks[1], cout)
    wd_m, wd_raw = conv_w(ks[2], cin)

    def vec(k, scale=0.1, offset=0.0):
        return offset + scale * jax.random.normal(k, (1, cout), jnp.float32)

    params = dict(
        w1=w1_m, g1=vec(ks[6], offset=1.0), b1=vec(ks[7]),
        w2=w2_m, g2=vec(ks[8], offset=1.0), b2=vec(ks[9]),
        wd=wd_m, gd=vec(ks[10], offset=1.0), bd=vec(ks[11]),
    )
    # Conv biases exist only in the reference: under training-mode BatchNorm the bias
    # is cancelled exactly by the batch-mean subtraction, so the kernel path drops it.
    raw = dict(
        w1=w1_raw, w2=w2_raw, wd=wd_raw,
        c1=vec(ks[3]), c2=vec(ks[4]), cd=vec(ks[5]),
        g1=params["g1"], b1=params["b1"],
        g2=params["g2"], b2=params["b2"],
        gd=params["gd"], bd=params["bd"],
    )
    return params, raw


# ------------------------------ pure-JAX reference -------------------------------

def reference(x, p):
    def conv(inp, w, b):
        y = lax.conv_general_dilated(inp, w, (1, 1), ((1, 1), (1, 1)),
                                     dimension_numbers=("NCHW", "OIHW", "NCHW"))
        return y + b.reshape(1, -1, 1, 1)

    def bn(inp, g, bt):
        mean = jnp.mean(inp, axis=(0, 2, 3), keepdims=True)
        var = jnp.mean((inp - mean) ** 2, axis=(0, 2, 3), keepdims=True)
        return ((inp - mean) * lax.rsqrt(var + EPS) * g.reshape(1, -1, 1, 1)
                + bt.reshape(1, -1, 1, 1))

    out = jnp.maximum(bn(conv(x, p["w1"], p["c1"]), p["g1"], p["b1"]), 0.0)
    out = bn(conv(out, p["w2"], p["c2"]), p["g2"], p["b2"])
    resid = bn(conv(x, p["wd"], p["cd"]), p["gd"], p["bd"])
    return jnp.maximum(out + resid, 0.0)


# ------------------------------------ main ----------------------------------------

if __name__ == "__main__":
    N, CIN, COUT, H, W = 2, 4, 8, 16, 16   # in_channels != out_channels -> downsample active
    key = jax.random.PRNGKey(0)
    kx, kp = jax.random.split(key)
    x = jax.random.normal(kx, (N, CIN, H, W), jnp.float32)
    params, raw = init_params(kp, CIN, COUT)

    out = jax.block_until_ready(residual_block(x, params))
    assert out.shape == (N, COUT, H, W), out.shape

    ref = jax.block_until_ready(reference(x, raw))
    err = float(jnp.max(jnp.abs(out - ref)))
    # bf16 intermediates / MXU inputs -> looser tolerance than the pure-f32 variant.
    tol = 5e-2 if ACT_DTYPE is jnp.bfloat16 else 1e-3
    assert err < tol, f"mismatch vs reference: {err} (tol {tol})"

    print("KERNEL_OK")
</pallas_src>

<mosaic_0001>
module attributes {stable_mosaic.version = 11 : i64} {
  func.func @_conv2_kernel(%arg0: i32, %arg1: memref<2x256x8xbf16, #tpu.memory_space<vmem>>, %arg2: memref<1x8xf32, #tpu.memory_space<vmem>>, %arg3: memref<1x8xf32, #tpu.memory_space<vmem>>, %arg4: memref<72x8xbf16, #tpu.memory_space<vmem>>, %arg5: memref<2x256x8xbf16, #tpu.memory_space<vmem>>, %arg6: memref<1x2x8xf32, #tpu.memory_space<vmem>>, %arg7: memref<2x18x18x8xbf16, #tpu.memory_space<vmem>>) attributes {dimension_semantics = [#tpu.dimension_semantics<parallel>], iteration_bounds = array<i64: 1>, scalar_prefetch = 0 : i64, scratch_operands = 1 : i64, tpu.core_type = #tpu.core_type<tc>, window_params = [{transform_indices = @transform_0, window_bounds = array<i64: 2, 256, 8>}, {pipeline_mode = #tpu.pipeline_mode<synchronous>, transform_indices = @transform_1, window_bounds = array<i64: 1, 8>}, {pipeline_mode = #tpu.pipeline_mode<synchronous>, transform_indices = @transform_2, window_bounds = array<i64: 1, 8>}, {pipeline_mode = #tpu.pipeline_mode<synchronous>, transform_indices = @transform_3, window_bounds = array<i64: 72, 8>}, {transform_indices = @transform_4, window_bounds = array<i64: 2, 256, 8>}, {transform_indices = @transform_5, window_bounds = array<i64: 1, 2, 8>}]} {
    %c0 = arith.constant 0 : index
    %c0_0 = arith.constant 0 : index
    %c0_1 = arith.constant 0 : index
    %0 = vector.load %arg1[%c0, %c0_0, %c0_1] : memref<2x256x8xbf16, #tpu.memory_space<vmem>>, vector<2x256x8xbf16>
    %1 = arith.extf %0 : vector<2x256x8xbf16> to vector<2x256x8xf32>
    %c0_2 = arith.constant 0 : index
    %c0_3 = arith.constant 0 : index
    %2 = vector.load %arg2[%c0_2, %c0_3] : memref<1x8xf32, #tpu.memory_space<vmem>>, vector<1x8xf32>
    %3 = vector.shape_cast %2 : vector<1x8xf32> to vector<1x1x8xf32>
    %4 = vector.broadcast %3 : vector<1x1x8xf32> to vector<2x256x8xf32>
    %5 = arith.mulf %1, %4 : vector<2x256x8xf32>
    %c0_4 = arith.constant 0 : index
    %c0_5 = arith.constant 0 : index
    %6 = vector.load %arg3[%c0_4, %c0_5] : memref<1x8xf32, #tpu.memory_space<vmem>>, vector<1x8xf32>
    %7 = vector.shape_cast %6 : vector<1x8xf32> to vector<1x1x8xf32>
    %8 = vector.broadcast %7 : vector<1x1x8xf32> to vector<2x256x8xf32>
    %9 = arith.addf %5, %8 : vector<2x256x8xf32>
    %cst = arith.constant 0.000000e+00 : f32
    %10 = vector.broadcast %cst : f32 to vector<2x256x8xf32>
    %11 = arith.maximumf %9, %10 : vector<2x256x8xf32>
    %12 = vector.shape_cast %11 : vector<2x256x8xf32> to vector<2x16x16x8xf32>
    %13 = arith.truncf %12 : vector<2x16x16x8xf32> to vector<2x16x16x8xbf16>
    %cst_6 = arith.constant 0.000000e+00 : bf16
    %14 = vector.broadcast %cst_6 : bf16 to vector<2x1x18x8xbf16>
    %c0_7 = arith.constant 0 : index
    %c0_8 = arith.constant 0 : index
    %c0_9 = arith.constant 0 : index
    %c0_10 = arith.constant 0 : index
    %15 = vector.load %arg7[%c0_7, %c0_8, %c0_9, %c0_10] : memref<2x18x18x8xbf16, #tpu.memory_space<vmem>>, vector<2x1x18x8xbf16>
    tpu.vector_store %arg7[%c0_7, %c0_8, %c0_9, %c0_10], %14 {strides = array<i32>} : memref<2x18x18x8xbf16, #tpu.memory_space<vmem>>, vector<2x1x18x8xbf16>,
    %c0_11 = arith.constant 0 : index
    %c17 = arith.constant 17 : index
    %c0_12 = arith.constant 0 : index
    %c0_13 = arith.constant 0 : index
    %16 = vector.load %arg7[%c0_11, %c17, %c0_12, %c0_13] : memref<2x18x18x8xbf16, #tpu.memory_space<vmem>>, vector<2x1x18x8xbf16>
    tpu.vector_store %arg7[%c0_11, %c17, %c0_12, %c0_13], %14 {strides = array<i32>} : memref<2x18x18x8xbf16, #tpu.memory_space<vmem>>, vector<2x1x18x8xbf16>,
    %cst_14 = arith.constant 0.000000e+00 : bf16
    %17 = vector.broadcast %cst_14 : bf16 to vector<2x16x1x8xbf16>
    %18 = tpu.concatenate %17, %13, %17 in 2 : vector<2x16x1x8xbf16>, vector<2x16x16x8xbf16>, vector<2x16x1x8xbf16> -> vector<2x16x18x8xbf16>
    %c0_15 = arith.constant 0 : index
    %c1 = arith.constant 1 : index
    %c0_16 = arith.constant 0 : index
    %c0_17 = arith.constant 0 : index
    %19 = vector.load %arg7[%c0_15, %c1, %c0_16, %c0_17] : memref<2x18x18x8xbf16, #tpu.memory_space<vmem>>, vector<2x16x18x8xbf16>
    tpu.vector_store %arg7[%c0_15, %c1, %c0_16, %c0_17], %18 {strides = array<i32>} : memref<2x18x18x8xbf16, #tpu.memory_space<vmem>>, vector<2x16x18x8xbf16>,
    %c0_18 = arith.constant 0 : index
    %c0_19 = arith.constant 0 : index
    %c0_20 = arith.constant 0 : index
    %c0_21 = arith.constant 0 : index
    %20 = vector.load %arg7[%c0_18, %c0_19, %c0_20, %c0_21] : memref<2x18x18x8xbf16, #tpu.memory_space<vmem>>, vector<2x16x16x8xbf16>
    %c0_22 = arith.constant 0 : index
    %c0_23 = arith.constant 0 : index
    %c1_24 = arith.constant 1 : index
    %c0_25 = arith.constant 0 : index
    %21 = vector.load %arg7[%c0_22, %c0_23, %c1_24, %c0_25] : memref<2x18x18x8xbf16, #tpu.memory_space<vmem>>, vector<2x16x16x8xbf16>
    %c0_26 = arith.constant 0 : index
    %c0_27 = arith.constant 0 : index
    %c2 = arith.constant 2 : index
    %c0_28 = arith.constant 0 : index
    %22 = vector.load %arg7[%c0_26, %c0_27, %c2, %c0_28] : memref<2x18x18x8xbf16, #tpu.memory_space<vmem>>, vector<2x16x16x8xbf16>
    %c0_29 = arith.constant 0 : index
    %c1_30 = arith.constant 1 : index
    %c0_31 = arith.constant 0 : index
    %c0_32 = arith.constant 0 : index
    %23 = vector.load %arg7[%c0_29, %c1_30, %c0_31, %c0_32] : memref<2x18x18x8xbf16, #tpu.memory_space<vmem>>, vector<2x16x16x8xbf16>
    %c0_33 = arith.constant 0 : index
    %c1_34 = arith.constant 1 : index
    %c1_35 = arith.constant 1 : index
    %c0_36 = arith.constant 0 : index
    %24 = vector.load %arg7[%c0_33, %c1_34, %c1_35, %c0_36] : memref<2x18x18x8xbf16, #tpu.memory_space<vmem>>, vector<2x16x16x8xbf16>
    %c0_37 = arith.constant 0 : index
    %c1_38 = arith.constant 1 : index
    %c2_39 = arith.constant 2 : index
    %c0_40 = arith.constant 0 : index
    %25 = vector.load %arg7[%c0_37, %c1_38, %c2_39, %c0_40] : memref<2x18x18x8xbf16, #tpu.memory_space<vmem>>, vector<2x16x16x8xbf16>
    %c0_41 = arith.constant 0 : index
    %c2_42 = arith.constant 2 : index
    %c0_43 = arith.constant 0 : index
    %c0_44 = arith.constant 0 : index
    %26 = vector.load %arg7[%c0_41, %c2_42, %c0_43, %c0_44] : memref<2x18x18x8xbf16, #tpu.memory_space<vmem>>, vector<2x16x16x8xbf16>
    %c0_45 = arith.constant 0 : index
    %c2_46 = arith.constant 2 : index
    %c1_47 = arith.constant 1 : index
    %c0_48 = arith.constant 0 : index
    %27 = vector.load %arg7[%c0_45, %c2_46, %c1_47, %c0_48] : memref<2x18x18x8xbf16, #tpu.memory_space<vmem>>, vector<2x16x16x8xbf16>
    %c0_49 = arith.constant 0 : index
    %c2_50 = arith.constant 2 : index
    %c2_51 = arith.constant 2 : index
    %c0_52 = arith.constant 0 : index
    %28 = vector.load %arg7[%c0_49, %c2_50, %c2_51, %c0_52] : memref<2x18x18x8xbf16, #tpu.memory_space<vmem>>, vector<2x16x16x8xbf16>
    %29 = tpu.concatenate %20, %21, %22, %23, %24, %25, %26, %27, %28 in 3 : vector<2x16x16x8xbf16>, vector<2x16x16x8xbf16>, vector<2x16x16x8xbf16>, vector<2x16x16x8xbf16>, vector<2x16x16x8xbf16>, vector<2x16x16x8xbf16>, vector<2x16x16x8xbf16>, vector<2x16x16x8xbf16>, vector<2x16x16x8xbf16> -> vector<2x16x16x72xbf16>
    %30 = vector.shape_cast %29 : vector<2x16x16x72xbf16> to vector<512x72xbf16>
    %c0_53 = arith.constant 0 : index
    %c0_54 = arith.constant 0 : index
    %31 = vector.load %arg4[%c0_53, %c0_54] : memref<72x8xbf16, #tpu.memory_space<vmem>>, vector<72x8xbf16>
    %cst_55 = arith.constant dense<0.000000e+00> : vector<512x8xf32>
    %32 = tpu.matmul %30, %31, %cst_55 {dimension_numbers = #tpu.dot_dimension_numbers<[1], [0], [0], [1], [0, 0, 1, 1], [], []>} : vector<512x72xbf16>, vector<72x8xbf16>, vector<512x8xf32> -> vector<512x8xf32>
    %33 = vector.shape_cast %32 : vector<512x8xf32> to vector<2x256x8xf32>
    %34 = arith.truncf %33 : vector<2x256x8xf32> to vector<2x256x8xbf16>
    %c0_56 = arith.constant 0 : index
    %c0_57 = arith.constant 0 : index
    %c0_58 = arith.constant 0 : index
    %35 = vector.load %arg5[%c0_56, %c0_57, %c0_58] : memref<2x256x8xbf16, #tpu.memory_space<vmem>>, vector<2x256x8xbf16>
    tpu.vector_store %arg5[%c0_56, %c0_57, %c0_58], %34 {strides = array<i32>} : memref<2x256x8xbf16, #tpu.memory_space<vmem>>, vector<2x256x8xbf16>,
    %cst_59 = arith.constant 1.000000e+00 : f32
    %36 = vector.broadcast %cst_59 : f32 to vector<1x512xf32>
    %cst_60 = arith.constant dense<0.000000e+00> : vector<1x8xf32>
    %37 = tpu.matmul %36, %32, %cst_60 {dimension_numbers = #tpu.dot_dimension_numbers<[1], [0], [0], [1], [0, 0, 1, 1], [], []>} : vector<1x512xf32>, vector<512x8xf32>, vector<1x8xf32> -> vector<1x8xf32>
    %38 = arith.mulf %32, %32 : vector<512x8xf32>
    %cst_61 = arith.constant dense<0.000000e+00> : vector<1x8xf32>
    %39 = tpu.matmul %36, %38, %cst_61 {dimension_numbers = #tpu.dot_dimension_numbers<[1], [0], [0], [1], [0, 0, 1, 1], [], []>} : vector<1x512xf32>, vector<512x8xf32>, vector<1x8xf32> -> vector<1x8xf32>
    %40 = tpu.concatenate %37, %39 in 0 : vector<1x8xf32>, vector<1x8xf32> -> vector<2x8xf32>
    %c0_62 = arith.constant 0 : index
    %c0_63 = arith.constant 0 : index
    %c0_64 = arith.constant 0 : index
    %41 = vector.load %arg6[%c0_62, %c0_63, %c0_64] : memref<1x2x8xf32, #tpu.memory_space<vmem>>, vector<1x2x8xf32>
    %42 = vector.shape_cast %41 : vector<1x2x8xf32> to vector<2x8xf32>
    %43 = vector.shape_cast %40 : vector<2x8xf32> to vector<1x2x8xf32>
    tpu.vector_store %arg6[%c0_62, %c0_63, %c0_64], %43 {strides = array<i32>} : memref<1x2x8xf32, #tpu.memory_space<vmem>>, vector<1x2x8xf32>,
    return
  }
  func.func @transform_0(%arg0: i32) -> (i32, i32, i32) {
    %c0_i32 = arith.constant 0 : i32
    %c0_i32_0 = arith.constant 0 : i32
    %c0_i32_1 = arith.constant 0 : i32
    return %arg0, %c0_i32, %c0_i32_0 : i32, i32, i32
  }
  func.func @transform_1(%arg0: i32) -> (i32, i32) {
    %c0_i32 = arith.constant 0 : i32
    %c0_i32_0 = arith.constant 0 : i32
    %c0_i32_1 = arith.constant 0 : i32
    return %c0_i32, %c0_i32_0 : i32, i32
  }
  func.func @transform_2(%arg0: i32) -> (i32, i32) {
    %c0_i32 = arith.constant 0 : i32
    %c0_i32_0 = arith.constant 0 : i32
    %c0_i32_1 = arith.constant 0 : i32
    return %c0_i32, %c0_i32_0 : i32, i32
  }
  func.func @transform_3(%arg0: i32) -> (i32, i32) {
    %c0_i32 = arith.constant 0 : i32
    %c0_i32_0 = arith.constant 0 : i32
    %c0_i32_1 = arith.constant 0 : i32
    return %c0_i32, %c0_i32_0 : i32, i32
  }
  func.func @transform_4(%arg0: i32) -> (i32, i32, i32) {
    %c0_i32 = arith.constant 0 : i32
    %c0_i32_0 = arith.constant 0 : i32
    %c0_i32_1 = arith.constant 0 : i32
    return %arg0, %c0_i32, %c0_i32_0 : i32, i32, i32
  }
  func.func @transform_5(%arg0: i32) -> (i32, i32, i32) {
    %c0_i32 = arith.constant 0 : i32
    %c0_i32_0 = arith.constant 0 : i32
    %c0_i32_1 = arith.constant 0 : i32
    return %arg0, %c0_i32, %c0_i32_0 : i32, i32, i32
  }
}

module attributes {stable_mosaic.version = 11 : i64} {
  func.func @_conv1_kernel(%arg0: i32, %arg1: memref<2x16x16x4xf32, #tpu.memory_space<vmem>>, %arg2: memref<36x16xbf16, #tpu.memory_space<vmem>>, %arg3: memref<2x256x8xbf16, #tpu.memory_space<vmem>>, %arg4: memref<2x256x8xbf16, #tpu.memory_space<vmem>>, %arg5: memref<1x2x16xf32, #tpu.memory_space<vmem>>, %arg6: memref<2x18x18x4xbf16, #tpu.memory_space<vmem>>) attributes {dimension_semantics = [#tpu.dimension_semantics<parallel>], iteration_bounds = array<i64: 1>, scalar_prefetch = 0 : i64, scratch_operands = 1 : i64, tpu.core_type = #tpu.core_type<tc>, window_params = [{transform_indices = @transform_0, window_bounds = array<i64: 2, 16, 16, 4>}, {pipeline_mode = #tpu.pipeline_mode<synchronous>, transform_indices = @transform_1, window_bounds = array<i64: 36, 16>}, {transform_indices = @transform_2, window_bounds = array<i64: 2, 256, 8>}, {transform_indices = @transform_3, window_bounds = array<i64: 2, 256, 8>}, {transform_indices = @transform_4, window_bounds = array<i64: 1, 2, 16>}]} {
    %c0 = arith.constant 0 : index
    %c0_0 = arith.constant 0 : index
    %c0_1 = arith.constant 0 : index
    %c0_2 = arith.constant 0 : index
    %0 = vector.load %arg1[%c0, %c0_0, %c0_1, %c0_2] : memref<2x16x16x4xf32, #tpu.memory_space<vmem>>, vector<2x16x16x4xf32>
    %1 = arith.truncf %0 : vector<2x16x16x4xf32> to vector<2x16x16x4xbf16>
    %cst = arith.constant 0.000000e+00 : bf16
    %2 = vector.broadcast %cst : bf16 to vector<2x1x18x4xbf16>
    %c0_3 = arith.constant 0 : index
    %c0_4 = arith.constant 0 : index
    %c0_5 = arith.constant 0 : index
    %c0_6 = arith.constant 0 : index
    %3 = vector.load %arg6[%c0_3, %c0_4, %c0_5, %c0_6] : memref<2x18x18x4xbf16, #tpu.memory_space<vmem>>, vector<2x1x18x4xbf16>
    tpu.vector_store %arg6[%c0_3, %c0_4, %c0_5, %c0_6], %2 {strides = array<i32>} : memref<2x18x18x4xbf16, #tpu.memory_space<vmem>>, vector<2x1x18x4xbf16>,
    %c0_7 = arith.constant 0 : index
    %c17 = arith.constant 17 : index
    %c0_8 = arith.constant 0 : index
    %c0_9 = arith.constant 0 : index
    %4 = vector.load %arg6[%c0_7, %c17, %c0_8, %c0_9] : memref<2x18x18x4xbf16, #tpu.memory_space<vmem>>, vector<2x1x18x4xbf16>
    tpu.vector_store %arg6[%c0_7, %c17, %c0_8, %c0_9], %2 {strides = array<i32>} : memref<2x18x18x4xbf16, #tpu.memory_space<vmem>>, vector<2x1x18x4xbf16>,
    %cst_10 = arith.constant 0.000000e+00 : bf16
    %5 = vector.broadcast %cst_10 : bf16 to vector<2x16x1x4xbf16>
    %6 = tpu.concatenate %5, %1, %5 in 2 : vector<2x16x1x4xbf16>, vector<2x16x16x4xbf16>, vector<2x16x1x4xbf16> -> vector<2x16x18x4xbf16>
    %c0_11 = arith.constant 0 : index
    %c1 = arith.constant 1 : index
    %c0_12 = arith.constant 0 : index
    %c0_13 = arith.constant 0 : index
    %7 = vector.load %arg6[%c0_11, %c1, %c0_12, %c0_13] : memref<2x18x18x4xbf16, #tpu.memory_space<vmem>>, vector<2x16x18x4xbf16>
    tpu.vector_store %arg6[%c0_11, %c1, %c0_12, %c0_13], %6 {strides = array<i32>} : memref<2x18x18x4xbf16, #tpu.memory_space<vmem>>, vector<2x16x18x4xbf16>,
    %c0_14 = arith.constant 0 : index
    %c0_15 = arith.constant 0 : index
    %c0_16 = arith.constant 0 : index
    %c0_17 = arith.constant 0 : index
    %8 = vector.load %arg6[%c0_14, %c0_15, %c0_16, %c0_17] : memref<2x18x18x4xbf16, #tpu.memory_space<vmem>>, vector<2x16x16x4xbf16>
    %c0_18 = arith.constant 0 : index
    %c0_19 = arith.constant 0 : index
    %c1_20 = arith.constant 1 : index
    %c0_21 = arith.constant 0 : index
    %9 = vector.load %arg6[%c0_18, %c0_19, %c1_20, %c0_21] : memref<2x18x18x4xbf16, #tpu.memory_space<vmem>>, vector<2x16x16x4xbf16>
    %c0_22 = arith.constant 0 : index
    %c0_23 = arith.constant 0 : index
    %c2 = arith.constant 2 : index
    %c0_24 = arith.constant 0 : index
    %10 = vector.load %arg6[%c0_22, %c0_23, %c2, %c0_24] : memref<2x18x18x4xbf16, #tpu.memory_space<vmem>>, vector<2x16x16x4xbf16>
    %c0_25 = arith.constant 0 : index
    %c1_26 = arith.constant 1 : index
    %c0_27 = arith.constant 0 : index
    %c0_28 = arith.constant 0 : index
    %11 = vector.load %arg6[%c0_25, %c1_26, %c0_27, %c0_28] : memref<2x18x18x4xbf16, #tpu.memory_space<vmem>>, vector<2x16x16x4xbf16>
    %c0_29 = arith.constant 0 : index
    %c1_30 = arith.constant 1 : index
    %c1_31 = arith.constant 1 : index
    %c0_32 = arith.constant 0 : index
    %12 = vector.load %arg6[%c0_29, %c1_30, %c1_31, %c0_32] : memref<2x18x18x4xbf16, #tpu.memory_space<vmem>>, vector<2x16x16x4xbf16>
    %c0_33 = arith.constant 0 : index
    %c1_34 = arith.constant 1 : index
    %c2_35 = arith.constant 2 : index
    %c0_36 = arith.constant 0 : index
    %13 = vector.load %arg6[%c0_33, %c1_34, %c2_35, %c0_36] : memref<2x18x18x4xbf16, #tpu.memory_space<vmem>>, vector<2x16x16x4xbf16>
    %c0_37 = arith.constant 0 : index
    %c2_38 = arith.constant 2 : index
    %c0_39 = arith.constant 0 : index
    %c0_40 = arith.constant 0 : index
    %14 = vector.load %arg6[%c0_37, %c2_38, %c0_39, %c0_40] : memref<2x18x18x4xbf16, #tpu.memory_space<vmem>>, vector<2x16x16x4xbf16>
    %c0_41 = arith.constant 0 : index
    %c2_42 = arith.constant 2 : index
    %c1_43 = arith.constant 1 : index
    %c0_44 = arith.constant 0 : index
    %15 = vector.load %arg6[%c0_41, %c2_42, %c1_43, %c0_44] : memref<2x18x18x4xbf16, #tpu.memory_space<vmem>>, vector<2x16x16x4xbf16>
    %c0_45 = arith.constant 0 : index
    %c2_46 = arith.constant 2 : index
    %c2_47 = arith.constant 2 : index
    %c0_48 = arith.constant 0 : index
    %16 = vector.load %arg6[%c0_45, %c2_46, %c2_47, %c0_48] : memref<2x18x18x4xbf16, #tpu.memory_space<vmem>>, vector<2x16x16x4xbf16>
    %17 = tpu.concatenate %8, %9, %10, %11, %12, %13, %14, %15, %16 in 3 : vector<2x16x16x4xbf16>, vector<2x16x16x4xbf16>, vector<2x16x16x4xbf16>, vector<2x16x16x4xbf16>, vector<2x16x16x4xbf16>, vector<2x16x16x4xbf16>, vector<2x16x16x4xbf16>, vector<2x16x16x4xbf16>, vector<2x16x16x4xbf16> -> vector<2x16x16x36xbf16>
    %18 = vector.shape_cast %17 : vector<2x16x16x36xbf16> to vector<512x36xbf16>
    %c0_49 = arith.constant 0 : index
    %c0_50 = arith.constant 0 : index
    %19 = vector.load %arg2[%c0_49, %c0_50] : memref<36x16xbf16, #tpu.memory_space<vmem>>, vector<36x16xbf16>
    %cst_51 = arith.constant dense<0.000000e+00> : vector<512x16xf32>
    %20 = tpu.matmul %18, %19, %cst_51 {dimension_numbers = #tpu.dot_dimension_numbers<[1], [0], [0], [1], [0, 0, 1, 1], [], []>} : vector<512x36xbf16>, vector<36x16xbf16>, vector<512x16xf32> -> vector<512x16xf32>
    %21 = vector.extract_strided_slice %20 {offsets = [0, 0], sizes = [512, 8], strides = [1, 1]} : vector<512x16xf32> to vector<512x8xf32>
    %22 = vector.shape_cast %21 : vector<512x8xf32> to vector<2x256x8xf32>
    %23 = arith.truncf %22 : vector<2x256x8xf32> to vector<2x256x8xbf16>
    %c0_52 = arith.constant 0 : index
    %c0_53 = arith.constant 0 : index
    %c0_54 = arith.constant 0 : index
    %24 = vector.load %arg3[%c0_52, %c0_53, %c0_54] : memref<2x256x8xbf16, #tpu.memory_space<vmem>>, vector<2x256x8xbf16>
    tpu.vector_store %arg3[%c0_52, %c0_53, %c0_54], %23 {strides = array<i32>} : memref<2x256x8xbf16, #tpu.memory_space<vmem>>, vector<2x256x8xbf16>,
    %25 = vector.extract_strided_slice %20 {offsets = [0, 8], sizes = [512, 8], strides = [1, 1]} : vector<512x16xf32> to vector<512x8xf32>
    %26 = vector.shape_cast %25 : vector<512x8xf32> to vector<2x256x8xf32>
    %27 = arith.truncf %26 : vector<2x256x8xf32> to vector<2x256x8xbf16>
    %c0_55 = arith.constant 0 : index
    %c0_56 = arith.constant 0 : index
    %c0_57 = arith.constant 0 : index
    %28 = vector.load %arg4[%c0_55, %c0_56, %c0_57] : memref<2x256x8xbf16, #tpu.memory_space<vmem>>, vector<2x256x8xbf16>
    tpu.vector_store %arg4[%c0_55, %c0_56, %c0_57], %27 {strides = array<i32>} : memref<2x256x8xbf16, #tpu.memory_space<vmem>>, vector<2x256x8xbf16>,
    %cst_58 = arith.constant 1.000000e+00 : f32
    %29 = vector.broadcast %cst_58 : f32 to vector<1x512xf32>
    %cst_59 = arith.constant dense<0.000000e+00> : vector<1x16xf32>
    %30 = tpu.matmul %29, %20, %cst_59 {dimension_numbers = #tpu.dot_dimension_numbers<[1], [0], [0], [1], [0, 0, 1, 1], [], []>} : vector<1x512xf32>, vector<512x16xf32>, vector<1x16xf32> -> vector<1x16xf32>
    %31 = arith.mulf %20, %20 : vector<512x16xf32>
    %cst_60 = arith.constant dense<0.000000e+00> : vector<1x16xf32>
    %32 = tpu.matmul %29, %31, %cst_60 {dimension_numbers = #tpu.dot_dimension_numbers<[1], [0], [0], [1], [0, 0, 1, 1], [], []>} : vector<1x512xf32>, vector<512x16xf32>, vector<1x16xf32> -> vector<1x16xf32>
    %33 = tpu.concatenate %30, %32 in 0 : vector<1x16xf32>, vector<1x16xf32> -> vector<2x16xf32>
    %c0_61 = arith.constant 0 : index
    %c0_62 = arith.constant 0 : index
    %c0_63 = arith.constant 0 : index
    %34 = vector.load %arg5[%c0_61, %c0_62, %c0_63] : memref<1x2x16xf32, #tpu.memory_space<vmem>>, vector<1x2x16xf32>
    %35 = vector.shape_cast %34 : vector<1x2x16xf32> to vector<2x16xf32>
    %36 = vector.shape_cast %33 : vector<2x16xf32> to vector<1x2x16xf32>
    tpu.vector_store %arg5[%c0_61, %c0_62, %c0_63], %36 {strides = array<i32>} : memref<1x2x16xf32, #tpu.memory_space<vmem>>, vector<1x2x16xf32>,
    return
  }
  func.func @transform_0(%arg0: i32) -> (i32, i32, i32, i32) {
    %c0_i32 = arith.constant 0 : i32
    %c0_i32_0 = arith.constant 0 : i32
    %c0_i32_1 = arith.constant 0 : i32
    %c0_i32_2 = arith.constant 0 : i32
    return %arg0, %c0_i32, %c0_i32_0, %c0_i32_1 : i32, i32, i32, i32
  }
  func.func @transform_1(%arg0: i32) -> (i32, i32) {
    %c0_i32 = arith.constant 0 : i32
    %c0_i32_0 = arith.constant 0 : i32
    %c0_i32_1 = arith.constant 0 : i32
    return %c0_i32, %c0_i32_0 : i32, i32
  }
  func.func @transform_2(%arg0: i32) -> (i32, i32, i32) {
    %c0_i32 = arith.constant 0 : i32
    %c0_i32_0 = arith.constant 0 : i32
    %c0_i32_1 = arith.constant 0 : i32
    return %arg0, %c0_i32, %c0_i32_0 : i32, i32, i32
  }
  func.func @transform_3(%arg0: i32) -> (i32, i32, i32) {
    %c0_i32 = arith.constant 0 : i32
    %c0_i32_0 = arith.constant 0 : i32
    %c0_i32_1 = arith.constant 0 : i32
    return %arg0, %c0_i32, %c0_i32_0 : i32, i32, i32
  }
  func.func @transform_4(%arg0: i32) -> (i32, i32, i32) {
    %c0_i32 = arith.constant 0 : i32
    %c0_i32_0 = arith.constant 0 : i32
    %c0_i32_1 = arith.constant 0 : i32
    return %arg0, %c0_i32, %c0_i32_0 : i32, i32, i32
  }
}

module attributes {stable_mosaic.version = 11 : i64} {
  func.func @_epilogue_kernel(%arg0: i32, %arg1: memref<2x16x128xbf16, #tpu.memory_space<vmem>>, %arg2: memref<2x16x128xbf16, #tpu.memory_space<vmem>>, %arg3: memref<1x128xf32, #tpu.memory_space<vmem>>, %arg4: memref<1x128xf32, #tpu.memory_space<vmem>>, %arg5: memref<1x128xf32, #tpu.memory_space<vmem>>, %arg6: memref<1x128xf32, #tpu.memory_space<vmem>>, %arg7: memref<2x16x128xf32, #tpu.memory_space<vmem>>) attributes {dimension_semantics = [#tpu.dimension_semantics<parallel>], iteration_bounds = array<i64: 1>, scalar_prefetch = 0 : i64, scratch_operands = 0 : i64, tpu.core_type = #tpu.core_type<tc>, window_params = [{transform_indices = @transform_0, window_bounds = array<i64: 2, 16, 128>}, {transform_indices = @transform_1, window_bounds = array<i64: 2, 16, 128>}, {pipeline_mode = #tpu.pipeline_mode<synchronous>, transform_indices = @transform_2, window_bounds = array<i64: 1, 128>}, {pipeline_mode = #tpu.pipeline_mode<synchronous>, transform_indices = @transform_3, window_bounds = array<i64: 1, 128>}, {pipeline_mode = #tpu.pipeline_mode<synchronous>, transform_indices = @transform_4, window_bounds = array<i64: 1, 128>}, {pipeline_mode = #tpu.pipeline_mode<synchronous>, transform_indices = @transform_5, window_bounds = array<i64: 1, 128>}, {transform_indices = @transform_6, window_bounds = array<i64: 2, 16, 128>}]} {
    %c0 = arith.constant 0 : index
    %c0_0 = arith.constant 0 : index
    %c0_1 = arith.constant 0 : index
    %0 = vector.load %arg1[%c0, %c0_0, %c0_1] : memref<2x16x128xbf16, #tpu.memory_space<vmem>>, vector<2x16x128xbf16>
    %1 = arith.extf %0 : vector<2x16x128xbf16> to vector<2x16x128xf32>
    %c0_2 = arith.constant 0 : index
    %c0_3 = arith.constant 0 : index
    %c0_4 = arith.constant 0 : index
    %2 = vector.load %arg2[%c0_2, %c0_3, %c0_4] : memref<2x16x128xbf16, #tpu.memory_space<vmem>>, vector<2x16x128xbf16>
    %3 = arith.extf %2 : vector<2x16x128xbf16> to vector<2x16x128xf32>
    %c0_5 = arith.constant 0 : index
    %c0_6 = arith.constant 0 : index
    %4 = vector.load %arg3[%c0_5, %c0_6] : memref<1x128xf32, #tpu.memory_space<vmem>>, vector<1x128xf32>
    %5 = vector.shape_cast %4 : vector<1x128xf32> to vector<1x1x128xf32>
    %6 = vector.broadcast %5 : vector<1x1x128xf32> to vector<2x16x128xf32>
    %7 = arith.mulf %1, %6 : vector<2x16x128xf32>
    %c0_7 = arith.constant 0 : index
    %c0_8 = arith.constant 0 : index
    %8 = vector.load %arg4[%c0_7, %c0_8] : memref<1x128xf32, #tpu.memory_space<vmem>>, vector<1x128xf32>
    %9 = vector.shape_cast %8 : vector<1x128xf32> to vector<1x1x128xf32>
    %10 = vector.broadcast %9 : vector<1x1x128xf32> to vector<2x16x128xf32>
    %11 = arith.addf %7, %10 : vector<2x16x128xf32>
    %c0_9 = arith.constant 0 : index
    %c0_10 = arith.constant 0 : index
    %12 = vector.load %arg5[%c0_9, %c0_10] : memref<1x128xf32, #tpu.memory_space<vmem>>, vector<1x128xf32>
    %13 = vector.shape_cast %12 : vector<1x128xf32> to vector<1x1x128xf32>
    %14 = vector.broadcast %13 : vector<1x1x128xf32> to vector<2x16x128xf32>
    %15 = arith.mulf %3, %14 : vector<2x16x128xf32>
    %16 = arith.addf %11, %15 : vector<2x16x128xf32>
    %c0_11 = arith.constant 0 : index
    %c0_12 = arith.constant 0 : index
    %17 = vector.load %arg6[%c0_11, %c0_12] : memref<1x128xf32, #tpu.memory_space<vmem>>, vector<1x128xf32>
    %18 = vector.shape_cast %17 : vector<1x128xf32> to vector<1x1x128xf32>
    %19 = vector.broadcast %18 : vector<1x1x128xf32> to vector<2x16x128xf32>
    %20 = arith.addf %16, %19 : vector<2x16x128xf32>
    %cst = arith.constant 0.000000e+00 : f32
    %21 = vector.broadcast %cst : f32 to vector<2x16x128xf32>
    %22 = arith.maximumf %20, %21 : vector<2x16x128xf32>
    %c0_13 = arith.constant 0 : index
    %c0_14 = arith.constant 0 : index
    %c0_15 = arith.constant 0 : index
    %23 = vector.load %arg7[%c0_13, %c0_14, %c0_15] : memref<2x16x128xf32, #tpu.memory_space<vmem>>, vector<2x16x128xf32>
    tpu.vector_store %arg7[%c0_13, %c0_14, %c0_15], %22 {strides = array<i32>} : memref<2x16x128xf32, #tpu.memory_space<vmem>>, vector<2x16x128xf32>,
    return
  }
  func.func @transform_0(%arg0: i32) -> (i32, i32, i32) {
    %c0_i32 = arith.constant 0 : i32
    %c0_i32_0 = arith.constant 0 : i32
    %c0_i32_1 = arith.constant 0 : i32
    return %arg0, %c0_i32, %c0_i32_0 : i32, i32, i32
  }
  func.func @transform_1(%arg0: i32) -> (i32, i32, i32) {
    %c0_i32 = arith.constant 0 : i32
    %c0_i32_0 = arith.constant 0 : i32
    %c0_i32_1 = arith.constant 0 : i32
    return %arg0, %c0_i32, %c0_i32_0 : i32, i32, i32
  }
  func.func @transform_2(%arg0: i32) -> (i32, i32) {
    %c0_i32 = arith.constant 0 : i32
    %c0_i32_0 = arith.constant 0 : i32
    %c0_i32_1 = arith.constant 0 : i32
    return %c0_i32, %c0_i32_0 : i32, i32
  }
  func.func @transform_3(%arg0: i32) -> (i32, i32) {
    %c0_i32 = arith.constant 0 : i32
    %c0_i32_0 = arith.constant 0 : i32
    %c0_i32_1 = arith.constant 0 : i32
    return %c0_i32, %c0_i32_0 : i32, i32
  }
  func.func @transform_4(%arg0: i32) -> (i32, i32) {
    %c0_i32 = arith.constant 0 : i32
    %c0_i32_0 = arith.constant 0 : i32
    %c0_i32_1 = arith.constant 0 : i32
    return %c0_i32, %c0_i32_0 : i32, i32
  }
  func.func @transform_5(%arg0: i32) -> (i32, i32) {
    %c0_i32 = arith.constant 0 : i32
    %c0_i32_0 = arith.constant 0 : i32
    %c0_i32_1 = arith.constant 0 : i32
    return %c0_i32, %c0_i32_0 : i32, i32
  }
  func.func @transform_6(%arg0: i32) -> (i32, i32, i32) {
    %c0_i32 = arith.constant 0 : i32
    %c0_i32_0 = arith.constant 0 : i32
    %c0_i32_1 = arith.constant 0 : i32
    return %arg0, %c0_i32, %c0_i32_0 : i32, i32, i32
  }
}

</mosaic_0001>

<llo_original>
// kernel: residual_block.5
$region0: #{residual_block.5}
  #allocation0 [shape = 'u32[]', space=smem, size = 0x4, offset = 0x4, fixed_abs, tag = 'smem constant byte address 0x4 - core index']
  #allocation1 [shape = 'u32[144,128]{1,0:T(1,128)}', space=vmem, size = 0x12000, scoped, tag = 'internal scratch']
  %s0 = inlined_call_operand.hbm [shape: bf16[2,16,128], index: 0, kind: input, shape index: {}]
  %s1 = inlined_call_operand.hbm [shape: bf16[2,16,128], index: 1, kind: input, shape index: {}]
  %s2 = inlined_call_operand.hbm [shape: f32[1,128], index: 2, kind: input, shape index: {}]
  %s3 = inlined_call_operand.hbm [shape: f32[1,128], index: 3, kind: input, shape index: {}]
  %s4 = inlined_call_operand.hbm [shape: f32[1,128], index: 4, kind: input, shape index: {}]
  %s5 = inlined_call_operand.hbm [shape: f32[1,128], index: 5, kind: input, shape index: {}]
  %s6 = inlined_call_operand.hbm [shape: f32[2,16,128], index: 6, kind: output, shape index: {}]
  %s7 = sld [smem:[#allocation0]]
  $region58: #{residual_block.5} parent=0
    _
  %s9 = ssub.s32 1, %s7
  %s10 = scalar_select 0, %s9, %s7
  $region1: #{residual_block.5} parent=0
    #allocation2 [shape = 'u8[8192]{0}', space=vmem, size = 0x2000, scoped, tag = 'input window, operand 0, single buffered']
    #allocation3 [shape = 's32[1]{0}', space=sflag, size = 0x4, scoped, tag = 'scoped memory for residual_block.5']
    #allocation4 [shape = 's32[1]{0}', space=sflag, size = 0x4, scoped, tag = 'scoped memory for residual_block.5']
    #allocation5 [shape = 'u8[8192]{0}', space=vmem, size = 0x2000, scoped, tag = 'input window, operand 1, single buffered']
    #allocation6 [shape = 's32[1]{0}', space=sflag, size = 0x4, scoped, tag = 'scoped memory for residual_block.5']
    #allocation7 [shape = 'u8[512]{0}', space=vmem, size = 0x400, scoped, tag = 'input window, operand 2, single buffered']
    #allocation8 [shape = 'u8[512]{0}', space=vmem, size = 0x400, scoped, tag = 'input window, operand 3, single buffered']
    #allocation9 [shape = 's32[1]{0}', space=sflag, size = 0x4, scoped, tag = 'scoped memory for residual_block.5']
    #allocation10 [shape = 'u8[512]{0}', space=vmem, size = 0x400, scoped, tag = 'input window, operand 4, single buffered']
    #allocation11 [shape = 'u8[512]{0}', space=vmem, size = 0x400, scoped, tag = 'input window, operand 5, single buffered']
    #allocation12 [shape = 's32[1]{0}', space=sflag, size = 0x4, scoped, tag = 'scoped memory for residual_block.5']
    #allocation13 [shape = 'u8[16384]{0}', space=vmem, size = 0x4000, scoped, tag = 'output window, operand 0, single buffered']
    %11 = vsyncpa [#allocation3], 0
    %12 = vsyncpa [#allocation6], 0
    %13 = vsyncpa [#allocation9], 0
    %14 = vsyncpa [#allocation12], 0
    %15 = vsyncpa [#allocation4], 0
    // Predicated region
    $region2: #{residual_block.5} parent=1 // pred_check
      _
    $region3: #{residual_block.5} parent=1 // pred_check_branch
      %17 = sbr.rel (0) target = $region5
    $region4: #{residual_block.5} parent=1 // pred_region
      %s19 = ssub.s32 256, 256
      %20 = vsyncadd [#allocation3], %s19
      %s21 = sshll.u32 [#allocation2], 4
      %s22 = int_to_ptr.vmem [resolvable:$true] %s21
      %27 = dma.hbm_to_vmem [thread:$0]  %s0, 256, %s22, [#allocation3], 64, 64, 4
    $region5: #{residual_block.5} parent=1 // pred_fallthru
      _
    // Predicated region
    $region6: #{residual_block.5} parent=1 // pred_check
      _
    $region7: #{residual_block.5} parent=1 // pred_check_branch
      %29 = sbr.rel (0) target = $region9
    $region8: #{residual_block.5} parent=1 // pred_region
      %s31 = ssub.s32 256, 256
      %32 = vsyncadd [#allocation6], %s31
      %s33 = sshll.u32 [#allocation5], 4
      %s34 = int_to_ptr.vmem [resolvable:$true] %s33
      %39 = dma.hbm_to_vmem [thread:$0]  %s1, 256, %s34, [#allocation6], 64, 64, 4
    $region9: #{residual_block.5} parent=1 // pred_fallthru
      _
    // Predicated region
    $region10: #{residual_block.5} parent=1 // pred_check
      _
    $region11: #{residual_block.5} parent=1 // pred_check_branch
      %41 = sbr.rel (0) target = $region13
    $region12: #{residual_block.5} parent=1 // pred_region
      %s43 = ssub.s32 16, 16
      %44 = vsyncadd [#allocation6], %s43
      %s46 = sshll.u32 [#allocation7], 4
      %s47 = int_to_ptr.vmem [resolvable:$true] %s46
      %49 = dma.hbm_to_vmem [thread:$0]  %s2, 16, %s47, [#allocation6]
    $region13: #{residual_block.5} parent=1 // pred_fallthru
      _
    // Predicated region
    $region14: #{residual_block.5} parent=1 // pred_check
      _
    $region15: #{residual_block.5} parent=1 // pred_check_branch
      %51 = sbr.rel (0) target = $region17
    $region16: #{residual_block.5} parent=1 // pred_region
      %s53 = ssub.s32 16, 16
      %54 = vsyncadd [#allocation9], %s53
      %s56 = sshll.u32 [#allocation8], 4
      %s57 = int_to_ptr.vmem [resolvable:$true] %s56
      %59 = dma.hbm_to_vmem [thread:$0]  %s3, 16, %s57, [#allocation9]
    $region17: #{residual_block.5} parent=1 // pred_fallthru
      _
    // Predicated region
    $region18: #{residual_block.5} parent=1 // pred_check
      _
    $region19: #{residual_block.5} parent=1 // pred_check_branch
      %61 = sbr.rel (0) target = $region21
    $region20: #{residual_block.5} parent=1 // pred_region
      %s63 = ssub.s32 16, 16
      %64 = vsyncadd [#allocation9], %s63
      %s66 = sshll.u32 [#allocation10], 4
      %s67 = int_to_ptr.vmem [resolvable:$true] %s66
      %69 = dma.hbm_to_vmem [thread:$0]  %s4, 16, %s67, [#allocation9]
    $region21: #{residual_block.5} parent=1 // pred_fallthru
      _
    // Predicated region
    $region22: #{residual_block.5} parent=1 // pred_check
      _
    $region23: #{residual_block.5} parent=1 // pred_check_branch
      %71 = sbr.rel (0) target = $region25
    $region24: #{residual_block.5} parent=1 // pred_region
      %s73 = ssub.s32 16, 16
      %74 = vsyncadd [#allocation12], %s73
      %s76 = sshll.u32 [#allocation11], 4
      %s77 = int_to_ptr.vmem [resolvable:$true] %s76
      %79 = dma.hbm_to_vmem [thread:$0]  %s5, 16, %s77, [#allocation12]
    $region25: #{residual_block.5} parent=1 // pred_fallthru
      _
    // Predicated region
    $region26: #{residual_block.5} parent=1 // pred_check
      _
    $region27: #{residual_block.5} parent=1 // pred_check_branch
      %81 = sbr.rel (0) target = $region29
    $region28: #{residual_block.5} parent=1 // pred_region
      %82 = dma.done [#allocation3], 256
    $region29: #{residual_block.5} parent=1 // pred_fallthru
      _
    // Predicated region
    $region30: #{residual_block.5} parent=1 // pred_check
      _
    $region31: #{residual_block.5} parent=1 // pred_check_branch
      %84 = sbr.rel (0) target = $region33
    $region32: #{residual_block.5} parent=1 // pred_region
      %85 = dma.done [#allocation6], 256
    $region33: #{residual_block.5} parent=1 // pred_fallthru
      _
    // Predicated region
    $region34: #{residual_block.5} parent=1 // pred_check
      _
    $region35: #{residual_block.5} parent=1 // pred_check_branch
      %87 = sbr.rel (0) target = $region37
    $region36: #{residual_block.5} parent=1 // pred_region
      %88 = dma.done [#allocation6], 16
    $region37: #{residual_block.5} parent=1 // pred_fallthru
      _
    // Predicated region
    $region38: #{residual_block.5} parent=1 // pred_check
      _
    $region39: #{residual_block.5} parent=1 // pred_check_branch
      %90 = sbr.rel (0) target = $region41
    $region40: #{residual_block.5} parent=1 // pred_region
      %91 = dma.done [#allocation9], 16
    $region41: #{residual_block.5} parent=1 // pred_fallthru
      _
    // Predicated region
    $region42: #{residual_block.5} parent=1 // pred_check
      _
    $region43: #{residual_block.5} parent=1 // pred_check_branch
      %93 = sbr.rel (0) target = $region45
    $region44: #{residual_block.5} parent=1 // pred_region
      %94 = dma.done [#allocation9], 16
    $region45: #{residual_block.5} parent=1 // pred_fallthru
      _
    // Predicated region
    $region46: #{residual_block.5} parent=1 // pred_check
      _
    $region47: #{residual_block.5} parent=1 // pred_check_branch
      %96 = sbr.rel (0) target = $region49
    $region48: #{residual_block.5} parent=1 // pred_region
      %97 = dma.done [#allocation12], 16
    $region49: #{residual_block.5} parent=1 // pred_fallthru
      _
    %v98 = vld [vmem:[#allocation2] sm:$0xf]
    %v99 = vld [vmem:[#allocation2 + $0x4] sm:$0xf]
    %v100 = vld [vmem:[#allocation2 + $0x8] sm:$0xf]
    %v101 = vld [vmem:[#allocation2 + $0xc] sm:$0xf]
    %v102 = vunpack.c.l.bf16 %v98
    %v103 = vunpack.c.l.bf16 %v99
    %v104 = vunpack.c.l.bf16 %v100
    %v105 = vunpack.c.l.bf16 %v101
    %v106 = vld [vmem:[#allocation5] sm:$0xf]
    %v107 = vld [vmem:[#allocation5 + $0x4] sm:$0xf]
    %v108 = vld [vmem:[#allocation5 + $0x8] sm:$0xf]
    %v109 = vld [vmem:[#allocation5 + $0xc] sm:$0xf]
    %v110 = vunpack.c.l.bf16 %v106
    %v111 = vunpack.c.l.bf16 %v107
    %v112 = vunpack.c.l.bf16 %v108
    %v113 = vunpack.c.l.bf16 %v109
    %v114 = vld [vmem:[#allocation7] sm:$0x1]
    %v116 = vlaneseq
    %v117 = vshrl.u32 %v116, 7
    %v118 = vsub.s32 0, %v117
    %v119 = vrot.slane %v114, %v118
    %v121 = vmul.f32 %v102, %v119
    %v122 = vmul.f32 %v103, %v119
    %v123 = vmul.f32 %v104, %v119
    %v124 = vmul.f32 %v105, %v119
    %v125 = vld [vmem:[#allocation8] sm:$0x1]
    %v127 = vlaneseq
    %v128 = vshrl.u32 %v127, 7
    %v129 = vsub.s32 0, %v128
    %v130 = vrot.slane %v125, %v129
    %v132 = vadd.f32 %v121, %v130
    %v133 = vadd.f32 %v122, %v130
    %v134 = vadd.f32 %v123, %v130
    %v135 = vadd.f32 %v124, %v130
    %v136 = vld [vmem:[#allocation10] sm:$0x1]
    %v138 = vlaneseq
    %v139 = vshrl.u32 %v138, 7
    %v140 = vsub.s32 0, %v139
    %v141 = vrot.slane %v136, %v140
    %v143 = vmul.f32 %v110, %v141
    %v144 = vmul.f32 %v111, %v141
    %v145 = vmul.f32 %v112, %v141
    %v146 = vmul.f32 %v113, %v141
    %v147 = vadd.f32 %v132, %v143
    %v148 = vadd.f32 %v133, %v144
    %v149 = vadd.f32 %v134, %v145
    %v150 = vadd.f32 %v135, %v146
    %v151 = vld [vmem:[#allocation11] sm:$0x1]
    %v153 = vlaneseq
    %v154 = vshrl.u32 %v153, 7
    %v155 = vsub.s32 0, %v154
    %v156 = vrot.slane %v151, %v155
    %v158 = vadd.f32 %v147, %v156
    %v159 = vadd.f32 %v148, %v156
    %v160 = vadd.f32 %v149, %v156
    %v161 = vadd.f32 %v150, %v156
    %v162 = vmax.f32 %v158, 0.0
    %v163 = vmax.f32 %v159, 0.0
    %v164 = vmax.f32 %v160, 0.0
    %v165 = vmax.f32 %v161, 0.0
    %166 = vst [vmem:[#allocation13] sm:$0xff] %v162
    %167 = vst [vmem:[#allocation13 + $0x8] sm:$0xff] %v163
    %168 = vst [vmem:[#allocation13 + $0x10] sm:$0xff] %v164
    %169 = vst [vmem:[#allocation13 + $0x18] sm:$0xff] %v165
    // Predicated region
    $region50: #{residual_block.5} parent=1 // pred_check
      _
    $region51: #{residual_block.5} parent=1 // pred_check_branch
      %171 = sbr.rel (0) target = $region53
    $region52: #{residual_block.5} parent=1 // pred_region
      %s173 = ssub.s32 512, 512
      %174 = vsyncadd [#allocation4], %s173
      %s175 = sshll.u32 [#allocation13], 4
      %s176 = int_to_ptr.vmem [resolvable:$true] %s175
      %181 = dma.vmem_to_hbm [thread:$0]  %s176, 512, %s6, [#allocation4], 128, 128, 8
    $region53: #{residual_block.5} parent=1 // pred_fallthru
      _
    // Predicated region
    $region54: #{residual_block.5} parent=1 // pred_check
      _
    $region55: #{residual_block.5} parent=1 // pred_check_branch
      %183 = sbr.rel (0) target = $region57
    $region56: #{residual_block.5} parent=1 // pred_region
      %184 = dma.done [#allocation4], 512
    $region57: #{residual_block.5} parent=1 // pred_fallthru
      _
    %185 = vsyncpa [#allocation3], 1
    %186 = vsyncpa [#allocation6], 1
    %187 = vsyncpa [#allocation9], 1
    %188 = vsyncpa [#allocation12], 1
    %189 = vsyncpa [#allocation4], 1

// kernel: residual_block.4
$region0: #{residual_block.4}
  #allocation0 [shape = 'u32[]', space=smem, size = 0x4, offset = 0x4, fixed_abs, tag = 'smem constant byte address 0x4 - core index']
  #allocation1 [shape = 'u32[144,128]{1,0:T(1,128)}', space=vmem, size = 0x12000, scoped, tag = 'internal scratch']
  #allocation2 [shape = 'bf16[2,18,18,8]{3,2,1,0:T(8,128)(2,1)}', space=vmem, size = 0x36000, scoped, tag = 'scratch operand']
  %s0 = inlined_call_operand.hbm [shape: bf16[2,256,8], index: 0, kind: input, shape index: {}]
  %s1 = inlined_call_operand.hbm [shape: f32[1,8], index: 1, kind: input, shape index: {}]
  %s2 = inlined_call_operand.hbm [shape: f32[1,8], index: 2, kind: input, shape index: {}]
  %s3 = inlined_call_operand.hbm [shape: bf16[72,8], index: 3, kind: input, shape index: {}]
  %s4 = inlined_call_operand.hbm [shape: bf16[2,256,8], index: 4, kind: output, shape index: {0}]
  %s5 = inlined_call_operand.hbm [shape: f32[1,2,8], index: 5, kind: output, shape index: {1}]
  %6 = xla_tuple %s4, %s5
  %s7 = sld [smem:[#allocation0]]
  $region50: #{residual_block.4} parent=0
    _
  %s9 = ssub.s32 1, %s7
  %s10 = scalar_select 0, %s9, %s7
  $region1: #{residual_block.4} parent=0
    #allocation3 [shape = 'u8[131072]{0}', space=vmem, size = 0x20000, scoped, tag = 'input window, operand 0, single buffered']
    #allocation4 [shape = 's32[1]{0}', space=sflag, size = 0x4, scoped, tag = 'scoped memory for residual_block.4']
    #allocation5 [shape = 's32[1]{0}', space=sflag, size = 0x4, scoped, tag = 'scoped memory for residual_block.4']
    #allocation6 [shape = 'u8[512]{0}', space=vmem, size = 0x400, scoped, tag = 'input window, operand 1, single buffered']
    #allocation7 [shape = 's32[1]{0}', space=sflag, size = 0x4, scoped, tag = 'scoped memory for residual_block.4']
    #allocation8 [shape = 'u8[512]{0}', space=vmem, size = 0x400, scoped, tag = 'input window, operand 2, single buffered']
    #allocation9 [shape = 'u8[18432]{0}', space=vmem, size = 0x4800, scoped, tag = 'input window, operand 3, single buffered']
    #allocation10 [shape = 's32[1]{0}', space=sflag, size = 0x4, scoped, tag = 'scoped memory for residual_block.4']
    #allocation11 [shape = 'u8[131072]{0}', space=vmem, size = 0x20000, scoped, tag = 'output window, operand 0, single buffered']
    #allocation12 [shape = 'u8[1024]{0}', space=vmem, size = 0x400, scoped, tag = 'output window, operand 1, single buffered']
    #allocation13 [shape = 's32[1]{0}', space=sflag, size = 0x4, scoped, tag = 'scoped memory for residual_block.4']
    %11 = vsyncpa [#allocation4], 0
    %12 = vsyncpa [#allocation7], 0
    %13 = vsyncpa [#allocation10], 0
    %14 = vsyncpa [#allocation5], 0
    %15 = vsyncpa [#allocation13], 0
    // Predicated region
    $region2: #{residual_block.4} parent=1 // pred_check
      _
    $region3: #{residual_block.4} parent=1 // pred_check_branch
      %17 = sbr.rel (0) target = $region5
    $region4: #{residual_block.4} parent=1 // pred_region
      %s19 = ssub.s32 4096, 4096
      %20 = vsyncadd [#allocation4], %s19
      %s21 = sshll.u32 [#allocation3], 4
      %s22 = int_to_ptr.vmem [resolvable:$true] %s21
      %27 = dma.hbm_to_vmem [thread:$0]  %s0, 4096, %s22, [#allocation4], 64, 64, 4
    $region5: #{residual_block.4} parent=1 // pred_fallthru
      _
    // Predicated region
    $region6: #{residual_block.4} parent=1 // pred_check
      _
    $region7: #{residual_block.4} parent=1 // pred_check_branch
      %29 = sbr.rel (0) target = $region9
    $region8: #{residual_block.4} parent=1 // pred_region
      %s31 = ssub.s32 16, 16
      %32 = vsyncadd [#allocation7], %s31
      %s34 = sshll.u32 [#allocation6], 4
      %s35 = int_to_ptr.vmem [resolvable:$true] %s34
      %37 = dma.hbm_to_vmem [thread:$0]  %s1, 16, %s35, [#allocation7]
    $region9: #{residual_block.4} parent=1 // pred_fallthru
      _
    // Predicated region
    $region10: #{residual_block.4} parent=1 // pred_check
      _
    $region11: #{residual_block.4} parent=1 // pred_check_branch
      %39 = sbr.rel (0) target = $region13
    $region12: #{residual_block.4} parent=1 // pred_region
      %s41 = ssub.s32 16, 16
      %42 = vsyncadd [#allocation7], %s41
      %s44 = sshll.u32 [#allocation8], 4
      %s45 = int_to_ptr.vmem [resolvable:$true] %s44
      %47 = dma.hbm_to_vmem [thread:$0]  %s2, 16, %s45, [#allocation7]
    $region13: #{residual_block.4} parent=1 // pred_fallthru
      _
    // Predicated region
    $region14: #{residual_block.4} parent=1 // pred_check
      _
    $region15: #{residual_block.4} parent=1 // pred_check_branch
      %49 = sbr.rel (0) target = $region17
    $region16: #{residual_block.4} parent=1 // pred_region
      %s51 = ssub.s32 576, 576
      %52 = vsyncadd [#allocation10], %s51
      %s53 = sshll.u32 [#allocation9], 4
      %s54 = int_to_ptr.vmem [resolvable:$true] %s53
      %59 = dma.hbm_to_vmem [thread:$0]  %s3, 576, %s54, [#allocation10], 64, 64, 4
    $region17: #{residual_block.4} parent=1 // pred_fallthru
      _
    // Predicated region
    $region18: #{residual_block.4} parent=1 // pred_check
      _
    $region19: #{residual_block.4} parent=1 // pred_check_branch
      %61 = sbr.rel (0) target = $region21
    $region20: #{residual_block.4} parent=1 // pred_region
      %62 = dma.done [#allocation4], 4096
    $region21: #{residual_block.4} parent=1 // pred_fallthru
      _
    // Predicated region
    $region22: #{residual_block.4} parent=1 // pred_check
      _
    $region23: #{residual_block.4} parent=1 // pred_check_branch
      %64 = sbr.rel (0) target = $region25
    $region24: #{residual_block.4} parent=1 // pred_region
      %65 = dma.done [#allocation7], 16
    $region25: #{residual_block.4} parent=1 // pred_fallthru
      _
    // Predicated region
    $region26: #{residual_block.4} parent=1 // pred_check
      _
    $region27: #{residual_block.4} parent=1 // pred_check_branch
      %67 = sbr.rel (0) target = $region29
    $region28: #{residual_block.4} parent=1 // pred_region
      %68 = dma.done [#allocation7], 16
    $region29: #{residual_block.4} parent=1 // pred_fallthru
      _
    // Predicated region
    $region30: #{residual_block.4} parent=1 // pred_check
      _
    $region31: #{residual_block.4} parent=1 // pred_check_branch
      %70 = sbr.rel (0) target = $region33
    $region32: #{residual_block.4} parent=1 // pred_region
      %71 = dma.done [#allocation10], 576
    $region33: #{residual_block.4} parent=1 // pred_fallthru
      _
    %v73 = vld [vmem:[#allocation3] sm:$0xf]
    %v74 = vld [vmem:[#allocation3 + $0x4] sm:$0xf]
    %v75 = vld [vmem:[#allocation3 + $0x8] sm:$0xf]
    %v76 = vld [vmem:[#allocation3 + $0xc] sm:$0xf]
    %v77 = vld [vmem:[#allocation3 + $0x10] sm:$0xf]
    %v78 = vld [vmem:[#allocation3 + $0x14] sm:$0xf]
    %v79 = vld [vmem:[#allocation3 + $0x18] sm:$0xf]
    %v80 = vld [vmem:[#allocation3 + $0x1c] sm:$0xf]
    %v81 = vld [vmem:[#allocation3 + $0x20] sm:$0xf]
    %v82 = vld [vmem:[#allocation3 + $0x24] sm:$0xf]
    %v83 = vld [vmem:[#allocation3 + $0x28] sm:$0xf]
    %v84 = vld [vmem:[#allocation3 + $0x2c] sm:$0xf]
    %v85 = vld [vmem:[#allocation3 + $0x30] sm:$0xf]
    %v86 = vld [vmem:[#allocation3 + $0x34] sm:$0xf]
    %v87 = vld [vmem:[#allocation3 + $0x38] sm:$0xf]
    %v88 = vld [vmem:[#allocation3 + $0x3c] sm:$0xf]
    %v89 = vld [vmem:[#allocation3 + $0x40] sm:$0xf]
    %v90 = vld [vmem:[#allocation3 + $0x44] sm:$0xf]
    %v91 = vld [vmem:[#allocation3 + $0x48] sm:$0xf]
    %v92 = vld [vmem:[#allocation3 + $0x4c] sm:$0xf]
    %v93 = vld [vmem:[#allocation3 + $0x50] sm:$0xf]
    %v94 = vld [vmem:[#allocation3 + $0x54] sm:$0xf]
    %v95 = vld [vmem:[#allocation3 + $0x58] sm:$0xf]
    %v96 = vld [vmem:[#allocation3 + $0x5c] sm:$0xf]
    %v97 = vld [vmem:[#allocation3 + $0x60] sm:$0xf]
    %v98 = vld [vmem:[#allocation3 + $0x64] sm:$0xf]
    %v99 = vld [vmem:[#allocation3 + $0x68] sm:$0xf]
    %v100 = vld [vmem:[#allocation3 + $0x6c] sm:$0xf]
    %v101 = vld [vmem:[#allocation3 + $0x70] sm:$0xf]
    %v102 = vld [vmem:[#allocation3 + $0x74] sm:$0xf]
    %v103 = vld [vmem:[#allocation3 + $0x78] sm:$0xf]
    %v104 = vld [vmem:[#allocation3 + $0x7c] sm:$0xf]
    %v105 = vld [vmem:[#allocation3 + $0x80] sm:$0xf]
    %v106 = vld [vmem:[#allocation3 + $0x84] sm:$0xf]
    %v107 = vld [vmem:[#allocation3 + $0x88] sm:$0xf]
    %v108 = vld [vmem:[#allocation3 + $0x8c] sm:$0xf]
    %v109 = vld [vmem:[#allocation3 + $0x90] sm:$0xf]
    %v110 = vld [vmem:[#allocation3 + $0x94] sm:$0xf]
    %v111 = vld [vmem:[#allocation3 + $0x98] sm:$0xf]
    %v112 = vld [vmem:[#allocation3 + $0x9c] sm:$0xf]
    %v113 = vld [vmem:[#allocation3 + $0xa0] sm:$0xf]
    %v114 = vld [vmem:[#allocation3 + $0xa4] sm:$0xf]
    %v115 = vld [vmem:[#allocation3 + $0xa8] sm:$0xf]
    %v116 = vld [vmem:[#allocation3 + $0xac] sm:$0xf]
    %v117 = vld [vmem:[#allocation3 + $0xb0] sm:$0xf]
    %v118 = vld [vmem:[#allocation3 + $0xb4] sm:$0xf]
    %v119 = vld [vmem:[#allocation3 + $0xb8] sm:$0xf]
    %v120 = vld [vmem:[#allocation3 + $0xbc] sm:$0xf]
    %v121 = vld [vmem:[#allocation3 + $0xc0] sm:$0xf]
    %v122 = vld [vmem:[#allocation3 + $0xc4] sm:$0xf]
    %v123 = vld [vmem:[#allocation3 + $0xc8] sm:$0xf]
    %v124 = vld [vmem:[#allocation3 + $0xcc] sm:$0xf]
    %v125 = vld [vmem:[#allocation3 + $0xd0] sm:$0xf]
    %v126 = vld [vmem:[#allocation3 + $0xd4] sm:$0xf]
    %v127 = vld [vmem:[#allocation3 + $0xd8] sm:$0xf]
    %v128 = vld [vmem:[#allocation3 + $0xdc] sm:$0xf]
    %v129 = vld [vmem:[#allocation3 + $0xe0] sm:$0xf]
    %v130 = vld [vmem:[#allocation3 + $0xe4] sm:$0xf]
    %v131 = vld [vmem:[#allocation3 + $0xe8] sm:$0xf]
    %v132 = vld [vmem:[#allocation3 + $0xec] sm:$0xf]
    %v133 = vld [vmem:[#allocation3 + $0xf0] sm:$0xf]
    %v134 = vld [vmem:[#allocation3 + $0xf4] sm:$0xf]
    %v135 = vld [vmem:[#allocation3 + $0xf8] sm:$0xf]
    %v136 = vld [vmem:[#allocation3 + $0xfc] sm:$0xf]
    %v137 = vunpack.c.l.bf16 %v73
    %v138 = vunpack.c.l.bf16 %v74
    %v139 = vunpack.c.l.bf16 %v75
    %v140 = vunpack.c.l.bf16 %v76
    %v141 = vunpack.c.l.bf16 %v77
    %v142 = vunpack.c.l.bf16 %v78
    %v143 = vunpack.c.l.bf16 %v79
    %v144 = vunpack.c.l.bf16 %v80
    %v145 = vunpack.c.l.bf16 %v81
    %v146 = vunpack.c.l.bf16 %v82
    %v147 = vunpack.c.l.bf16 %v83
    %v148 = vunpack.c.l.bf16 %v84
    %v149 = vunpack.c.l.bf16 %v85
    %v150 = vunpack.c.l.bf16 %v86
    %v151 = vunpack.c.l.bf16 %v87
    %v152 = vunpack.c.l.bf16 %v88
    %v153 = vunpack.c.l.bf16 %v89
    %v154 = vunpack.c.l.bf16 %v90
    %v155 = vunpack.c.l.bf16 %v91
    %v156 = vunpack.c.l.bf16 %v92
    %v157 = vunpack.c.l.bf16 %v93
    %v158 = vunpack.c.l.bf16 %v94
    %v159 = vunpack.c.l.bf16 %v95
    %v160 = vunpack.c.l.bf16 %v96
    %v161 = vunpack.c.l.bf16 %v97
    %v162 = vunpack.c.l.bf16 %v98
    %v163 = vunpack.c.l.bf16 %v99
    %v164 = vunpack.c.l.bf16 %v100
    %v165 = vunpack.c.l.bf16 %v101
    %v166 = vunpack.c.l.bf16 %v102
    %v167 = vunpack.c.l.bf16 %v103
    %v168 = vunpack.c.l.bf16 %v104
    %v169 = vunpack.c.l.bf16 %v105
    %v170 = vunpack.c.l.bf16 %v106
    %v171 = vunpack.c.l.bf16 %v107
    %v172 = vunpack.c.l.bf16 %v108
    %v173 = vunpack.c.l.bf16 %v109
    %v174 = vunpack.c.l.bf16 %v110
    %v175 = vunpack.c.l.bf16 %v111
    %v176 = vunpack.c.l.bf16 %v112
    %v177 = vunpack.c.l.bf16 %v113
    %v178 = vunpack.c.l.bf16 %v114
    %v179 = vunpack.c.l.bf16 %v115
    %v180 = vunpack.c.l.bf16 %v116
    %v181 = vunpack.c.l.bf16 %v117
    %v182 = vunpack.c.l.bf16 %v118
    %v183 = vunpack.c.l.bf16 %v119
    %v184 = vunpack.c.l.bf16 %v120
    %v185 = vunpack.c.l.bf16 %v121
    %v186 = vunpack.c.l.bf16 %v122
    %v187 = vunpack.c.l.bf16 %v123
    %v188 = vunpack.c.l.bf16 %v124
    %v189 = vunpack.c.l.bf16 %v125
    %v190 = vunpack.c.l.bf16 %v126
    %v191 = vunpack.c.l.bf16 %v127
    %v192 = vunpack.c.l.bf16 %v128
    %v193 = vunpack.c.l.bf16 %v129
    %v194 = vunpack.c.l.bf16 %v130
    %v195 = vunpack.c.l.bf16 %v131
    %v196 = vunpack.c.l.bf16 %v132
    %v197 = vunpack.c.l.bf16 %v133
    %v198 = vunpack.c.l.bf16 %v134
    %v199 = vunpack.c.l.bf16 %v135
    %v200 = vunpack.c.l.bf16 %v136
    %v201 = vld [vmem:[#allocation6] sm:$0x1]
    %v203 = vlaneseq
    %v204 = vshrl.u32 %v203, 7
    %v205 = vsub.s32 0, %v204
    %v206 = vrot.slane %v201, %v205
    %v208 = vmul.f32 %v137, %v206
    %v209 = vmul.f32 %v138, %v206
    %v210 = vmul.f32 %v139, %v206
    %v211 = vmul.f32 %v140, %v206
    %v212 = vmul.f32 %v141, %v206
    %v213 = vmul.f32 %v142, %v206
    %v214 = vmul.f32 %v143, %v206
    %v215 = vmul.f32 %v144, %v206
    %v216 = vmul.f32 %v145, %v206
    %v217 = vmul.f32 %v146, %v206
    %v218 = vmul.f32 %v147, %v206
    %v219 = vmul.f32 %v148, %v206
    %v220 = vmul.f32 %v149, %v206
    %v221 = vmul.f32 %v150, %v206
    %v222 = vmul.f32 %v151, %v206
    %v223 = vmul.f32 %v152, %v206
    %v224 = vmul.f32 %v153, %v206
    %v225 = vmul.f32 %v154, %v206
    %v226 = vmul.f32 %v155, %v206
    %v227 = vmul.f32 %v156, %v206
    %v228 = vmul.f32 %v157, %v206
    %v229 = vmul.f32 %v158, %v206
    %v230 = vmul.f32 %v159, %v206
    %v231 = vmul.f32 %v160, %v206
    %v232 = vmul.f32 %v161, %v206
    %v233 = vmul.f32 %v162, %v206
    %v234 = vmul.f32 %v163, %v206
    %v235 = vmul.f32 %v164, %v206
    %v236 = vmul.f32 %v165, %v206
    %v237 = vmul.f32 %v166, %v206
    %v238 = vmul.f32 %v167, %v206
    %v239 = vmul.f32 %v168, %v206
    %v240 = vmul.f32 %v169, %v206
    %v241 = vmul.f32 %v170, %v206
    %v242 = vmul.f32 %v171, %v206
    %v243 = vmul.f32 %v172, %v206
    %v244 = vmul.f32 %v173, %v206
    %v245 = vmul.f32 %v174, %v206
    %v246 = vmul.f32 %v175, %v206
    %v247 = vmul.f32 %v176, %v206
    %v248 = vmul.f32 %v177, %v206
    %v249 = vmul.f32 %v178, %v206
    %v250 = vmul.f32 %v179, %v206
    %v251 = vmul.f32 %v180, %v206
    %v252 = vmul.f32 %v181, %v206
    %v253 = vmul.f32 %v182, %v206
    %v254 = vmul.f32 %v183, %v206
    %v255 = vmul.f32 %v184, %v206
    %v256 = vmul.f32 %v185, %v206
    %v257 = vmul.f32 %v186, %v206
    %v258 = vmul.f32 %v187, %v206
    %v259 = vmul.f32 %v188, %v206
    %v260 = vmul.f32 %v189, %v206
    %v261 = vmul.f32 %v190, %v206
    %v262 = vmul.f32 %v191, %v206
    %v263 = vmul.f32 %v192, %v206
    %v264 = vmul.f32 %v193, %v206
    %v265 = vmul.f32 %v194, %v206
    %v266 = vmul.f32 %v195, %v206
    %v267 = vmul.f32 %v196, %v206
    %v268 = vmul.f32 %v197, %v206
    %v269 = vmul.f32 %v198, %v206
    %v270 = vmul.f32 %v199, %v206
    %v271 = vmul.f32 %v200, %v206
    %v272 = vld [vmem:[#allocation8] sm:$0x1]
    %v274 = vlaneseq
    %v275 = vshrl.u32 %v274, 7
    %v276 = vsub.s32 0, %v275
    %v277 = vrot.slane %v272, %v276
    %v279 = vadd.f32 %v208, %v277
    %v280 = vadd.f32 %v209, %v277
    %v281 = vadd.f32 %v210, %v277
    %v282 = vadd.f32 %v211, %v277
    %v283 = vadd.f32 %v212, %v277
    %v284 = vadd.f32 %v213, %v277
    %v285 = vadd.f32 %v214, %v277
    %v286 = vadd.f32 %v215, %v277
    %v287 = vadd.f32 %v216, %v277
    %v288 = vadd.f32 %v217, %v277
    %v289 = vadd.f32 %v218, %v277
    %v290 = vadd.f32 %v219, %v277
    %v291 = vadd.f32 %v220, %v277
    %v292 = vadd.f32 %v221, %v277
    %v293 = vadd.f32 %v222, %v277
    %v294 = vadd.f32 %v223, %v277
    %v295 = vadd.f32 %v224, %v277
    %v296 = vadd.f32 %v225, %v277
    %v297 = vadd.f32 %v226, %v277
    %v298 = vadd.f32 %v227, %v277
    %v299 = vadd.f32 %v228, %v277
    %v300 = vadd.f32 %v229, %v277
    %v301 = vadd.f32 %v230, %v277
    %v302 = vadd.f32 %v231, %v277
    %v303 = vadd.f32 %v232, %v277
    %v304 = vadd.f32 %v233, %v277
    %v305 = vadd.f32 %v234, %v277
    %v306 = vadd.f32 %v235, %v277
    %v307 = vadd.f32 %v236, %v277
    %v308 = vadd.f32 %v237, %v277
    %v309 = vadd.f32 %v238, %v277
    %v310 = vadd.f32 %v239, %v277
    %v311 = vadd.f32 %v240, %v277
    %v312 = vadd.f32 %v241, %v277
    %v313 = vadd.f32 %v242, %v277
    %v314 = vadd.f32 %v243, %v277
    %v315 = vadd.f32 %v244, %v277
    %v316 = vadd.f32 %v245, %v277
    %v317 = vadd.f32 %v246, %v277
    %v318 = vadd.f32 %v247, %v277
    %v319 = vadd.f32 %v248, %v277
    %v320 = vadd.f32 %v249, %v277
    %v321 = vadd.f32 %v250, %v277
    %v322 = vadd.f32 %v251, %v277
    %v323 = vadd.f32 %v252, %v277
    %v324 = vadd.f32 %v253, %v277
    %v325 = vadd.f32 %v254, %v277
    %v326 = vadd.f32 %v255, %v277
    %v327 = vadd.f32 %v256, %v277
    %v328 = vadd.f32 %v257, %v277
    %v329 = vadd.f32 %v258, %v277
    %v330 = vadd.f32 %v259, %v277
    %v331 = vadd.f32 %v260, %v277
    %v332 = vadd.f32 %v261, %v277
    %v333 = vadd.f32 %v262, %v277
    %v334 = vadd.f32 %v263, %v277
    %v335 = vadd.f32 %v264, %v277
    %v336 = vadd.f32 %v265, %v277
    %v337 = vadd.f32 %v266, %v277
    %v338 = vadd.f32 %v267, %v277
    %v339 = vadd.f32 %v268, %v277
    %v340 = vadd.f32 %v269, %v277
    %v341 = vadd.f32 %v270, %v277
    %v342 = vadd.f32 %v271, %v277
    %v343 = vmax.f32 %v279, 0.0
    %v344 = vmax.f32 %v280, 0.0
    %v345 = vmax.f32 %v281, 0.0
    %v346 = vmax.f32 %v282, 0.0
    %v347 = vmax.f32 %v283, 0.0
    %v348 = vmax.f32 %v284, 0.0
    %v349 = vmax.f32 %v285, 0.0
    %v350 = vmax.f32 %v286, 0.0
    %v351 = vmax.f32 %v287, 0.0
    %v352 = vmax.f32 %v288, 0.0
    %v353 = vmax.f32 %v289, 0.0
    %v354 = vmax.f32 %v290, 0.0
    %v355 = vmax.f32 %v291, 0.0
    %v356 = vmax.f32 %v292, 0.0
    %v357 = vmax.f32 %v293, 0.0
    %v358 = vmax.f32 %v294, 0.0
    %v359 = vmax.f32 %v295, 0.0
    %v360 = vmax.f32 %v296, 0.0
    %v361 = vmax.f32 %v297, 0.0
    %v362 = vmax.f32 %v298, 0.0
    %v363 = vmax.f32 %v299, 0.0
    %v364 = vmax.f32 %v300, 0.0
    %v365 = vmax.f32 %v301, 0.0
    %v366 = vmax.f32 %v302, 0.0
    %v367 = vmax.f32 %v303, 0.0
    %v368 = vmax.f32 %v304, 0.0
    %v369 = vmax.f32 %v305, 0.0
    %v370 = vmax.f32 %v306, 0.0
    %v371 = vmax.f32 %v307, 0.0
    %v372 = vmax.f32 %v308, 0.0
    %v373 = vmax.f32 %v309, 0.0
    %v374 = vmax.f32 %v310, 0.0
    %v375 = vmax.f32 %v311, 0.0
    %v376 = vmax.f32 %v312, 0.0
    %v377 = vmax.f32 %v313, 0.0
    %v378 = vmax.f32 %v314, 0.0
    %v379 = vmax.f32 %v315, 0.0
    %v380 = vmax.f32 %v316, 0.0
    %v381 = vmax.f32 %v317, 0.0
    %v382 = vmax.f32 %v318, 0.0
    %v383 = vmax.f32 %v319, 0.0
    %v384 = vmax.f32 %v320, 0.0
    %v385 = vmax.f32 %v321, 0.0
    %v386 = vmax.f32 %v322, 0.0
    %v387 = vmax.f32 %v323, 0.0
    %v388 = vmax.f32 %v324, 0.0
    %v389 = vmax.f32 %v325, 0.0
    %v390 = vmax.f32 %v326, 0.0
    %v391 = vmax.f32 %v327, 0.0
    %v392 = vmax.f32 %v328, 0.0
    %v393 = vmax.f32 %v329, 0.0
    %v394 = vmax.f32 %v330, 0.0
    %v395 = vmax.f32 %v331, 0.0
    %v396 = vmax.f32 %v332, 0.0
    %v397 = vmax.f32 %v333, 0.0
    %v398 = vmax.f32 %v334, 0.0
    %v399 = vmax.f32 %v335, 0.0
    %v400 = vmax.f32 %v336, 0.0
    %v401 = vmax.f32 %v337, 0.0
    %v402 = vmax.f32 %v338, 0.0
    %v403 = vmax.f32 %v339, 0.0
    %v404 = vmax.f32 %v340, 0.0
    %v405 = vmax.f32 %v341, 0.0
    %v406 = vmax.f32 %v342, 0.0
    %v407 = vpack.c.bf16 %v344, %v343
    %v408 = vpack.c.bf16 %v346, %v345
    %v409 = vpack.c.bf16 %v348, %v347
    %v410 = vpack.c.bf16 %v350, %v349
    %v411 = vpack.c.bf16 %v352, %v351
    %v412 = vpack.c.bf16 %v354, %v353
    %v413 = vpack.c.bf16 %v356, %v355
    %v414 = vpack.c.bf16 %v358, %v357
    %v415 = vpack.c.bf16 %v360, %v359
    %v416 = vpack.c.bf16 %v362, %v361
    %v417 = vpack.c.bf16 %v364, %v363
    %v418 = vpack.c.bf16 %v366, %v365
    %v419 = vpack.c.bf16 %v368, %v367
    %v420 = vpack.c.bf16 %v370, %v369
    %v421 = vpack.c.bf16 %v372, %v371
    %v422 = vpack.c.bf16 %v374, %v373
    %v423 = vpack.c.bf16 %v376, %v375
    %v424 = vpack.c.bf16 %v378, %v377
    %v425 = vpack.c.bf16 %v380, %v379
    %v426 = vpack.c.bf16 %v382, %v381
    %v427 = vpack.c.bf16 %v384, %v383
    %v428 = vpack.c.bf16 %v386, %v385
    %v429 = vpack.c.bf16 %v388, %v387
    %v430 = vpack.c.bf16 %v390, %v389
    %v431 = vpack.c.bf16 %v392, %v391
    %v432 = vpack.c.bf16 %v394, %v393
    %v433 = vpack.c.bf16 %v396, %v395
    %v434 = vpack.c.bf16 %v398, %v397
    %v435 = vpack.c.bf16 %v400, %v399
    %v436 = vpack.c.bf16 %v402, %v401
    %v437 = vpack.c.bf16 %v404, %v403
    %v438 = vpack.c.bf16 %v406, %v405
    %vm439 = vcmask 60416
    %440 = vst.msk [vmem:[#allocation2] sm:$0xf] %vm439, 0
    %441 = vst.msk [vmem:[#allocation2 + $0x4] sm:$0xf] %vm439, 0
    %vm442 = vcmask 57344
    %443 = vst.msk [vmem:[#allocation2 + $0x8] sm:$0x1] %vm442, 0
    %444 = vst.msk [vmem:[#allocation2 + $0xd8] sm:$0xf] %vm439, 0
    %445 = vst.msk [vmem:[#allocation2 + $0xdc] sm:$0xf] %vm439, 0
    %446 = vst.msk [vmem:[#allocation2 + $0xe0] sm:$0x1] %vm442, 0
    %s447 = scalar_lea.vmem [#allocation2], 204
    %448 = vst.msk [vmem:[%s447] sm:$0xf] %vm439, 0
    %449 = vst.msk [vmem:[%s447 + $0x4] sm:$0xf] %vm439, 0
    %450 = vst.msk [vmem:[%s447 + $0x8] sm:$0x1] %vm442, 0
    %451 = vst.msk [vmem:[%s447 + $0xd8] sm:$0xf] %vm439, 0
    %452 = vst.msk [vmem:[%s447 + $0xdc] sm:$0xf] %vm439, 0
    %453 = vst.msk [vmem:[%s447 + $0xe0] sm:$0x1] %vm442, 0
    %v455 = vshrl.u32 %v407, 16
    %v457 = vrot.slane %v455, 7
    %v458 = vshll.u32 %v407, 16
    %v460 = vor.u32 %v457, %v458
    %v462 = vshrl.u32 %v408, 16
    %v464 = vrot.slane %v462, 7
    %v465 = vshll.u32 %v408, 16
    %v467 = vor.u32 %v464, %v465
    %v469 = vshrl.u32 %v409, 16
    %v471 = vrot.slane %v469, 7
    %v472 = vshll.u32 %v409, 16
    %v474 = vor.u32 %v471, %v472
    %v476 = vshrl.u32 %v410, 16
    %v478 = vrot.slane %v476, 7
    %v479 = vshll.u32 %v410, 16
    %v481 = vor.u32 %v478, %v479
    %v483 = vshrl.u32 %v411, 16
    %v485 = vrot.slane %v483, 7
    %v486 = vshll.u32 %v411, 16
    %v488 = vor.u32 %v485, %v486
    %v490 = vshrl.u32 %v412, 16
    %v492 = vrot.slane %v490, 7
    %v493 = vshll.u32 %v412, 16
    %v495 = vor.u32 %v492, %v493
    %v497 = vshrl.u32 %v413, 16
    %v499 = vrot.slane %v497, 7
    %v500 = vshll.u32 %v413, 16
    %v502 = vor.u32 %v499, %v500
    %v504 = vshrl.u32 %v414, 16
    %v506 = vrot.slane %v504, 7
    %v507 = vshll.u32 %v414, 16
    %v509 = vor.u32 %v506, %v507
    %v511 = vshrl.u32 %v415, 16
    %v513 = vrot.slane %v511, 7
    %v514 = vshll.u32 %v415, 16
    %v516 = vor.u32 %v513, %v514
    %v518 = vshrl.u32 %v416, 16
    %v520 = vrot.slane %v518, 7
    %v521 = vshll.u32 %v416, 16
    %v523 = vor.u32 %v520, %v521
    %v525 = vshrl.u32 %v417, 16
    %v527 = vrot.slane %v525, 7
    %v528 = vshll.u32 %v417, 16
    %v530 = vor.u32 %v527, %v528
    %v532 = vshrl.u32 %v418, 16
    %v534 = vrot.slane %v532, 7
    %v535 = vshll.u32 %v418, 16
    %v537 = vor.u32 %v534, %v535
    %v539 = vshrl.u32 %v419, 16
    %v541 = vrot.slane %v539, 7
    %v542 = vshll.u32 %v419, 16
    %v544 = vor.u32 %v541, %v542
    %v546 = vshrl.u32 %v420, 16
    %v548 = vrot.slane %v546, 7
    %v549 = vshll.u32 %v420, 16
    %v551 = vor.u32 %v548, %v549
    %v553 = vshrl.u32 %v421, 16
    %v555 = vrot.slane %v553, 7
    %v556 = vshll.u32 %v421, 16
    %v558 = vor.u32 %v555, %v556
    %v560 = vshrl.u32 %v422, 16
    %v562 = vrot.slane %v560, 7
    %v563 = vshll.u32 %v422, 16
    %v565 = vor.u32 %v562, %v563
    %v567 = vshrl.u32 %v423, 16
    %v569 = vrot.slane %v567, 7
    %v570 = vshll.u32 %v423, 16
    %v572 = vor.u32 %v569, %v570
    %v574 = vshrl.u32 %v424, 16
    %v576 = vrot.slane %v574, 7
    %v577 = vshll.u32 %v424, 16
    %v579 = vor.u32 %v576, %v577
    %v581 = vshrl.u32 %v425, 16
    %v583 = vrot.slane %v581, 7
    %v584 = vshll.u32 %v425, 16
    %v586 = vor.u32 %v583, %v584
    %v588 = vshrl.u32 %v426, 16
    %v590 = vrot.slane %v588, 7
    %v591 = vshll.u32 %v426, 16
    %v593 = vor.u32 %v590, %v591
    %v595 = vshrl.u32 %v427, 16
    %v597 = vrot.slane %v595, 7
    %v598 = vshll.u32 %v427, 16
    %v600 = vor.u32 %v597, %v598
    %v602 = vshrl.u32 %v428, 16
    %v604 = vrot.slane %v602, 7
    %v605 = vshll.u32 %v428, 16
    %v607 = vor.u32 %v604, %v605
    %v609 = vshrl.u32 %v429, 16
    %v611 = vrot.slane %v609, 7
    %v612 = vshll.u32 %v429, 16
    %v614 = vor.u32 %v611, %v612
    %v616 = vshrl.u32 %v430, 16
    %v618 = vrot.slane %v616, 7
    %v619 = vshll.u32 %v430, 16
    %v621 = vor.u32 %v618, %v619
    %v623 = vshrl.u32 %v431, 16
    %v625 = vrot.slane %v623, 7
    %v626 = vshll.u32 %v431, 16
    %v628 = vor.u32 %v625, %v626
    %v630 = vshrl.u32 %v432, 16
    %v632 = vrot.slane %v630, 7
    %v633 = vshll.u32 %v432, 16
    %v635 = vor.u32 %v632, %v633
    %v637 = vshrl.u32 %v433, 16
    %v639 = vrot.slane %v637, 7
    %v640 = vshll.u32 %v433, 16
    %v642 = vor.u32 %v639, %v640
    %v644 = vshrl.u32 %v434, 16
    %v646 = vrot.slane %v644, 7
    %v647 = vshll.u32 %v434, 16
    %v649 = vor.u32 %v646, %v647
    %v651 = vshrl.u32 %v435, 16
    %v653 = vrot.slane %v651, 7
    %v654 = vshll.u32 %v435, 16
    %v656 = vor.u32 %v653, %v654
    %v658 = vshrl.u32 %v436, 16
    %v660 = vrot.slane %v658, 7
    %v661 = vshll.u32 %v436, 16
    %v663 = vor.u32 %v660, %v661
    %v665 = vshrl.u32 %v437, 16
    %v667 = vrot.slane %v665, 7
    %v668 = vshll.u32 %v437, 16
    %v670 = vor.u32 %v667, %v668
    %v672 = vshrl.u32 %v438, 16
    %v674 = vrot.slane %v672, 7
    %v675 = vshll.u32 %v438, 16
    %v677 = vor.u32 %v674, %v675
    %vm742 = vcmask 1040384
    %vm743 = vsmask.f32 256
    %vm744 = vmand %vm742, %vm743
    %v745 = vsel %vm744, 0, %v460
    %v746 = vsel %vm744, 0, %v467
    %v747 = vsel %vm744, 0, %v474
    %v748 = vsel %vm744, 0, %v481
    %v749 = vsel %vm744, 0, %v488
    %v750 = vsel %vm744, 0, %v495
    %v751 = vsel %vm744, 0, %v502
    %v752 = vsel %vm744, 0, %v509
    %v753 = vsel %vm744, 0, %v516
    %v754 = vsel %vm744, 0, %v523
    %v755 = vsel %vm744, 0, %v530
    %v756 = vsel %vm744, 0, %v537
    %v757 = vsel %vm744, 0, %v544
    %v758 = vsel %vm744, 0, %v551
    %v759 = vsel %vm744, 0, %v558
    %v760 = vsel %vm744, 0, %v565
    %v761 = vsel %vm744, 0, %v572
    %v762 = vsel %vm744, 0, %v579
    %v763 = vsel %vm744, 0, %v586
    %v764 = vsel %vm744, 0, %v593
    %v765 = vsel %vm744, 0, %v600
    %v766 = vsel %vm744, 0, %v607
    %v767 = vsel %vm744, 0, %v614
    %v768 = vsel %vm744, 0, %v621
    %v769 = vsel %vm744, 0, %v628
    %v770 = vsel %vm744, 0, %v635
    %v771 = vsel %vm744, 0, %v642
    %v772 = vsel %vm744, 0, %v649
    %v773 = vsel %vm744, 0, %v656
    %v774 = vsel %vm744, 0, %v663
    %v775 = vsel %vm744, 0, %v670
    %v776 = vsel %vm744, 0, %v677
    %v777 = vsel %vm744, %v457, 0
    %v778 = vsel %vm744, %v464, 0
    %v779 = vsel %vm744, %v471, 0
    %v780 = vsel %vm744, %v478, 0
    %v781 = vsel %vm744, %v485, 0
    %v782 = vsel %vm744, %v492, 0
    %v783 = vsel %vm744, %v499, 0
    %v784 = vsel %vm744, %v506, 0
    %v785 = vsel %vm744, %v513, 0
    %v786 = vsel %vm744, %v520, 0
    %v787 = vsel %vm744, %v527, 0
    %v788 = vsel %vm744, %v534, 0
    %v789 = vsel %vm744, %v541, 0
    %v790 = vsel %vm744, %v548, 0
    %v791 = vsel %vm744, %v555, 0
    %v792 = vsel %vm744, %v562, 0
    %v793 = vsel %vm744, %v569, 0
    %v794 = vsel %vm744, %v576, 0
    %v795 = vsel %vm744, %v583, 0
    %v796 = vsel %vm744, %v590, 0
    %v797 = vsel %vm744, %v597, 0
    %v798 = vsel %vm744, %v604, 0
    %v799 = vsel %vm744, %v611, 0
    %v800 = vsel %vm744, %v618, 0
    %v801 = vsel %vm744, %v625, 0
    %v802 = vsel %vm744, %v632, 0
    %v803 = vsel %vm744, %v639, 0
    %v804 = vsel %vm744, %v646, 0
    %v805 = vsel %vm744, %v653, 0
    %v806 = vsel %vm744, %v660, 0
    %v807 = vsel %vm744, %v667, 0
    %v808 = vsel %vm744, %v674, 0
    %v873 = vunpack.c.l.b16 %v745
    %v874 = vunpack.c.h.b16 %v745
    %v875 = vunpack.c.l.b16 %v777
    %v876 = vunpack.c.l.b16 %v746
    %v877 = vunpack.c.h.b16 %v746
    %v878 = vunpack.c.l.b16 %v778
    %v879 = vunpack.c.l.b16 %v747
    %v880 = vunpack.c.h.b16 %v747
    %v881 = vunpack.c.l.b16 %v779
    %v882 = vunpack.c.l.b16 %v748
    %v883 = vunpack.c.h.b16 %v748
    %v884 = vunpack.c.l.b16 %v780
    %v885 = vunpack.c.l.b16 %v749
    %v886 = vunpack.c.h.b16 %v749
    %v887 = vunpack.c.l.b16 %v781
    %v888 = vunpack.c.l.b16 %v750
    %v889 = vunpack.c.h.b16 %v750
    %v890 = vunpack.c.l.b16 %v782
    %v891 = vunpack.c.l.b16 %v751
    %v892 = vunpack.c.h.b16 %v751
    %v893 = vunpack.c.l.b16 %v783
    %v894 = vunpack.c.l.b16 %v752
    %v895 = vunpack.c.h.b16 %v752
    %v896 = vunpack.c.l.b16 %v784
    %v897 = vunpack.c.l.b16 %v753
    %v898 = vunpack.c.h.b16 %v753
    %v899 = vunpack.c.l.b16 %v785
    %v900 = vunpack.c.l.b16 %v754
    %v901 = vunpack.c.h.b16 %v754
    %v902 = vunpack.c.l.b16 %v786
    %v903 = vunpack.c.l.b16 %v755
    %v904 = vunpack.c.h.b16 %v755
    %v905 = vunpack.c.l.b16 %v787
    %v906 = vunpack.c.l.b16 %v756
    %v907 = vunpack.c.h.b16 %v756
    %v908 = vunpack.c.l.b16 %v788
    %v909 = vunpack.c.l.b16 %v757
    %v910 = vunpack.c.h.b16 %v757
    %v911 = vunpack.c.l.b16 %v789
    %v912 = vunpack.c.l.b16 %v758
    %v913 = vunpack.c.h.b16 %v758
    %v914 = vunpack.c.l.b16 %v790
    %v915 = vunpack.c.l.b16 %v759
    %v916 = vunpack.c.h.b16 %v759
    %v917 = vunpack.c.l.b16 %v791
    %v918 = vunpack.c.l.b16 %v760
    %v919 = vunpack.c.h.b16 %v760
    %v920 = vunpack.c.l.b16 %v792
    %v921 = vunpack.c.l.b16 %v761
    %v922 = vunpack.c.h.b16 %v761
    %v923 = vunpack.c.l.b16 %v793
    %v924 = vunpack.c.l.b16 %v762
    %v925 = vunpack.c.h.b16 %v762
    %v926 = vunpack.c.l.b16 %v794
    %v927 = vunpack.c.l.b16 %v763
    %v928 = vunpack.c.h.b16 %v763
    %v929 = vunpack.c.l.b16 %v795
    %v930 = vunpack.c.l.b16 %v764
    %v931 = vunpack.c.h.b16 %v764
    %v932 = vunpack.c.l.b16 %v796
    %v933 = vunpack.c.l.b16 %v765
    %v934 = vunpack.c.h.b16 %v765
    %v935 = vunpack.c.l.b16 %v797
    %v936 = vunpack.c.l.b16 %v766
    %v937 = vunpack.c.h.b16 %v766
    %v938 = vunpack.c.l.b16 %v798
    %v939 = vunpack.c.l.b16 %v767
    %v940 = vunpack.c.h.b16 %v767
    %v941 = vunpack.c.l.b16 %v799
    %v942 = vunpack.c.l.b16 %v768
    %v943 = vunpack.c.h.b16 %v768
    %v944 = vunpack.c.l.b16 %v800
    %v945 = vunpack.c.l.b16 %v769
    %v946 = vunpack.c.h.b16 %v769
    %v947 = vunpack.c.l.b16 %v801
    %v948 = vunpack.c.l.b16 %v770
    %v949 = vunpack.c.h.b16 %v770
    %v950 = vunpack.c.l.b16 %v802
    %v951 = vunpack.c.l.b16 %v771
    %v952 = vunpack.c.h.b16 %v771
    %v953 = vunpack.c.l.b16 %v803
    %v954 = vunpack.c.l.b16 %v772
    %v955 = vunpack.c.h.b16 %v772
    %v956 = vunpack.c.l.b16 %v804
    %v957 = vunpack.c.l.b16 %v773
    %v958 = vunpack.c.h.b16 %v773
    %v959 = vunpack.c.l.b16 %v805
    %v960 = vunpack.c.l.b16 %v774
    %v961 = vunpack.c.h.b16 %v774
    %v962 = vunpack.c.l.b16 %v806
    %v963 = vunpack.c.l.b16 %v775
    %v964 = vunpack.c.h.b16 %v775
    %v965 = vunpack.c.l.b16 %v807
    %v966 = vunpack.c.l.b16 %v776
    %v967 = vunpack.c.h.b16 %v776
    %v968 = vunpack.c.l.b16 %v808
    %v969 = vpack.c.b16 %v873, %v873
    %v970 = vpack.c.b16 %v874, %v874
    %v971 = vpack.c.b16 %v875, %v875
    %v972 = vpack.c.b16 %v876, %v876
    %v973 = vpack.c.b16 %v877, %v877
    %v974 = vpack.c.b16 %v878, %v878
    %v975 = vpack.c.b16 %v879, %v879
    %v976 = vpack.c.b16 %v880, %v880
    %v977 = vpack.c.b16 %v881, %v881
    %v978 = vpack.c.b16 %v882, %v882
    %v979 = vpack.c.b16 %v883, %v883
    %v980 = vpack.c.b16 %v884, %v884
    %v981 = vpack.c.b16 %v885, %v885
    %v982 = vpack.c.b16 %v886, %v886
    %v983 = vpack.c.b16 %v887, %v887
    %v984 = vpack.c.b16 %v888, %v888
    %v985 = vpack.c.b16 %v889, %v889
    %v986 = vpack.c.b16 %v890, %v890
    %v987 = vpack.c.b16 %v891, %v891
    %v988 = vpack.c.b16 %v892, %v892
    %v989 = vpack.c.b16 %v893, %v893
    %v990 = vpack.c.b16 %v894, %v894
    %v991 = vpack.c.b16 %v895, %v895
    %v992 = vpack.c.b16 %v896, %v896
    %v993 = vpack.c.b16 %v897, %v897
    %v994 = vpack.c.b16 %v898, %v898
    %v995 = vpack.c.b16 %v899, %v899
    %v996 = vpack.c.b16 %v900, %v900
    %v997 = vpack.c.b16 %v901, %v901
    %v998 = vpack.c.b16 %v902, %v902
    %v999 = vpack.c.b16 %v903, %v903
    %v1000 = vpack.c.b16 %v904, %v904
    %v1001 = vpack.c.b16 %v905, %v905
    %v1002 = vpack.c.b16 %v906, %v906
    %v1003 = vpack.c.b16 %v907, %v907
    %v1004 = vpack.c.b16 %v908, %v908
    %v1005 = vpack.c.b16 %v909, %v909
    %v1006 = vpack.c.b16 %v910, %v910
    %v1007 = vpack.c.b16 %v911, %v911
    %v1008 = vpack.c.b16 %v912, %v912
    %v1009 = vpack.c.b16 %v913, %v913
    %v1010 = vpack.c.b16 %v914, %v914
    %v1011 = vpack.c.b16 %v915, %v915
    %v1012 = vpack.c.b16 %v916, %v916
    %v1013 = vpack.c.b16 %v917, %v917
    %v1014 = vpack.c.b16 %v918, %v918
    %v1015 = vpack.c.b16 %v919, %v919
    %v1016 = vpack.c.b16 %v920, %v920
    %v1017 = vpack.c.b16 %v921, %v921
    %v1018 = vpack.c.b16 %v922, %v922
    %v1019 = vpack.c.b16 %v923, %v923
    %v1020 = vpack.c.b16 %v924, %v924
    %v1021 = vpack.c.b16 %v925, %v925
    %v1022 = vpack.c.b16 %v926, %v926
    %v1023 = vpack.c.b16 %v927, %v927
    %v1024 = vpack.c.b16 %v928, %v928
    %v1025 = vpack.c.b16 %v929, %v929
    %v1026 = vpack.c.b16 %v930, %v930
    %v1027 = vpack.c.b16 %v931, %v931
    %v1028 = vpack.c.b16 %v932, %v932
    %v1029 = vpack.c.b16 %v933, %v933
    %v1030 = vpack.c.b16 %v934, %v934
    %v1031 = vpack.c.b16 %v935, %v935
    %v1032 = vpack.c.b16 %v936, %v936
    %v1033 = vpack.c.b16 %v937, %v937
    %v1034 = vpack.c.b16 %v938, %v938
    %v1035 = vpack.c.b16 %v939, %v939
    %v1036 = vpack.c.b16 %v940, %v940
    %v1037 = vpack.c.b16 %v941, %v941
    %v1038 = vpack.c.b16 %v942, %v942
    %v1039 = vpack.c.b16 %v943, %v943
    %v1040 = vpack.c.b16 %v944, %v944
    %v1041 = vpack.c.b16 %v945, %v945
    %v1042 = vpack.c.b16 %v946, %v946
    %v1043 = vpack.c.b16 %v947, %v947
    %v1044 = vpack.c.b16 %v948, %v948
    %v1045 = vpack.c.b16 %v949, %v949
    %v1046 = vpack.c.b16 %v950, %v950
    %v1047 = vpack.c.b16 %v951, %v951
    %v1048 = vpack.c.b16 %v952, %v952
    %v1049 = vpack.c.b16 %v953, %v953
    %v1050 = vpack.c.b16 %v954, %v954
    %v1051 = vpack.c.b16 %v955, %v955
    %v1052 = vpack.c.b16 %v956, %v956
    %v1053 = vpack.c.b16 %v957, %v957
    %v1054 = vpack.c.b16 %v958, %v958
    %v1055 = vpack.c.b16 %v959, %v959
    %v1056 = vpack.c.b16 %v960, %v960
    %v1057 = vpack.c.b16 %v961, %v961
    %v1058 = vpack.c.b16 %v962, %v962
    %v1059 = vpack.c.b16 %v963, %v963
    %v1060 = vpack.c.b16 %v964, %v964
    %v1061 = vpack.c.b16 %v965, %v965
    %v1062 = vpack.c.b16 %v966, %v966
    %v1063 = vpack.c.b16 %v967, %v967
    %v1064 = vpack.c.b16 %v968, %v968
    %s1161 = scalar_lea.vmem [#allocation2], 12
    %1162 = vst.msk [vmem:[%s1161] sm:$0xf] %vm439, %v969
    %1163 = vst.msk [vmem:[%s1161 + $0x4] sm:$0xf] %vm439, %v970
    %1164 = vst.msk [vmem:[%s1161 + $0x8] sm:$0x1] %vm442, %v971
    %1165 = vst.msk [vmem:[%s1161 + $0xc] sm:$0xf] %vm439, %v972
    %1166 = vst.msk [vmem:[%s1161 + $0x10] sm:$0xf] %vm439, %v973
    %1167 = vst.msk [vmem:[%s1161 + $0x14] sm:$0x1] %vm442, %v974
    %1168 = vst.msk [vmem:[%s1161 + $0x18] sm:$0xf] %vm439, %v975
    %1169 = vst.msk [vmem:[%s1161 + $0x1c] sm:$0xf] %vm439, %v976
    %1170 = vst.msk [vmem:[%s1161 + $0x20] sm:$0x1] %vm442, %v977
    %1171 = vst.msk [vmem:[%s1161 + $0x24] sm:$0xf] %vm439, %v978
    %1172 = vst.msk [vmem:[%s1161 + $0x28] sm:$0xf] %vm439, %v979
    %1173 = vst.msk [vmem:[%s1161 + $0x2c] sm:$0x1] %vm442, %v980
    %1174 = vst.msk [vmem:[%s1161 + $0x30] sm:$0xf] %vm439, %v981
    %1175 = vst.msk [vmem:[%s1161 + $0x34] sm:$0xf] %vm439, %v982
    %1176 = vst.msk [vmem:[%s1161 + $0x38] sm:$0x1] %vm442, %v983
    %1177 = vst.msk [vmem:[%s1161 + $0x3c] sm:$0xf] %vm439, %v984
    %1178 = vst.msk [vmem:[%s1161 + $0x40] sm:$0xf] %vm439, %v985
    %1179 = vst.msk [vmem:[%s1161 + $0x44] sm:$0x1] %vm442, %v986
    %1180 = vst.msk [vmem:[%s1161 + $0x48] sm:$0xf] %vm439, %v987
    %1181 = vst.msk [vmem:[%s1161 + $0x4c] sm:$0xf] %vm439, %v988
    %1182 = vst.msk [vmem:[%s1161 + $0x50] sm:$0x1] %vm442, %v989
    %1183 = vst.msk [vmem:[%s1161 + $0x54] sm:$0xf] %vm439, %v990
    %1184 = vst.msk [vmem:[%s1161 + $0x58] sm:$0xf] %vm439, %v991
    %1185 = vst.msk [vmem:[%s1161 + $0x5c] sm:$0x1] %vm442, %v992
    %1186 = vst.msk [vmem:[%s1161 + $0x60] sm:$0xf] %vm439, %v993
    %1187 = vst.msk [vmem:[%s1161 + $0x64] sm:$0xf] %vm439, %v994
    %1188 = vst.msk [vmem:[%s1161 + $0x68] sm:$0x1] %vm442, %v995
    %1189 = vst.msk [vmem:[%s1161 + $0x6c] sm:$0xf] %vm439, %v996
    %1190 = vst.msk [vmem:[%s1161 + $0x70] sm:$0xf] %vm439, %v997
    %1191 = vst.msk [vmem:[%s1161 + $0x74] sm:$0x1] %vm442, %v998
    %1192 = vst.msk [vmem:[%s1161 + $0x78] sm:$0xf] %vm439, %v999
    %1193 = vst.msk [vmem:[%s1161 + $0x7c] sm:$0xf] %vm439, %v1000
    %1194 = vst.msk [vmem:[%s1161 + $0x80] sm:$0x1] %vm442, %v1001
    %1195 = vst.msk [vmem:[%s1161 + $0x84] sm:$0xf] %vm439, %v1002
    %1196 = vst.msk [vmem:[%s1161 + $0x88] sm:$0xf] %vm439, %v1003
    %1197 = vst.msk [vmem:[%s1161 + $0x8c] sm:$0x1] %vm442, %v1004
    %1198 = vst.msk [vmem:[%s1161 + $0x90] sm:$0xf] %vm439, %v1005
    %1199 = vst.msk [vmem:[%s1161 + $0x94] sm:$0xf] %vm439, %v1006
    %1200 = vst.msk [vmem:[%s1161 + $0x98] sm:$0x1] %vm442, %v1007
    %1201 = vst.msk [vmem:[%s1161 + $0x9c] sm:$0xf] %vm439, %v1008
    %1202 = vst.msk [vmem:[%s1161 + $0xa0] sm:$0xf] %vm439, %v1009
    %1203 = vst.msk [vmem:[%s1161 + $0xa4] sm:$0x1] %vm442, %v1010
    %1204 = vst.msk [vmem:[%s1161 + $0xa8] sm:$0xf] %vm439, %v1011
    %1205 = vst.msk [vmem:[%s1161 + $0xac] sm:$0xf] %vm439, %v1012
    %1206 = vst.msk [vmem:[%s1161 + $0xb0] sm:$0x1] %vm442, %v1013
    %1207 = vst.msk [vmem:[%s1161 + $0xb4] sm:$0xf] %vm439, %v1014
    %1208 = vst.msk [vmem:[%s1161 + $0xb8] sm:$0xf] %vm439, %v1015
    %1209 = vst.msk [vmem:[%s1161 + $0xbc] sm:$0x1] %vm442, %v1016
    %1210 = vst.msk [vmem:[%s1161 + $0xd8] sm:$0xf] %vm439, %v1017
    %1211 = vst.msk [vmem:[%s1161 + $0xdc] sm:$0xf] %vm439, %v1018
    %1212 = vst.msk [vmem:[%s1161 + $0xe0] sm:$0x1] %vm442, %v1019
    %1213 = vst.msk [vmem:[%s1161 + $0xe4] sm:$0xf] %vm439, %v1020
    %1214 = vst.msk [vmem:[%s1161 + $0xe8] sm:$0xf] %vm439, %v1021
    %1215 = vst.msk [vmem:[%s1161 + $0xec] sm:$0x1] %vm442, %v1022
    %1216 = vst.msk [vmem:[%s1161 + $0xf0] sm:$0xf] %vm439, %v1023
    %1217 = vst.msk [vmem:[%s1161 + $0xf4] sm:$0xf] %vm439, %v1024
    %1218 = vst.msk [vmem:[%s1161 + $0xf8] sm:$0x1] %vm442, %v1025
    %1219 = vst.msk [vmem:[%s1161 + $0xfc] sm:$0xf] %vm439, %v1026
    %1220 = vst.msk [vmem:[%s1161 + $0x100] sm:$0xf] %vm439, %v1027
    %1221 = vst.msk [vmem:[%s1161 + $0x104] sm:$0x1] %vm442, %v1028
    %1222 = vst.msk [vmem:[%s1161 + $0x108] sm:$0xf] %vm439, %v1029
    %1223 = vst.msk [vmem:[%s1161 + $0x10c] sm:$0xf] %vm439, %v1030
    %1224 = vst.msk [vmem:[%s1161 + $0x110] sm:$0x1] %vm442, %v1031
    %1225 = vst.msk [vmem:[%s1161 + $0x114] sm:$0xf] %vm439, %v1032
    %1226 = vst.msk [vmem:[%s1161 + $0x118] sm:$0xf] %vm439, %v1033
    %1227 = vst.msk [vmem:[%s1161 + $0x11c] sm:$0x1] %vm442, %v1034
    %1228 = vst.msk [vmem:[%s1161 + $0x120] sm:$0xf] %vm439, %v1035
    %1229 = vst.msk [vmem:[%s1161 + $0x124] sm:$0xf] %vm439, %v1036
    %1230 = vst.msk [vmem:[%s1161 + $0x128] sm:$0x1] %vm442, %v1037
    %1231 = vst.msk [vmem:[%s1161 + $0x12c] sm:$0xf] %vm439, %v1038
    %1232 = vst.msk [vmem:[%s1161 + $0x130] sm:$0xf] %vm439, %v1039
    %1233 = vst.msk [vmem:[%s1161 + $0x134] sm:$0x1] %vm442, %v1040
    %1234 = vst.msk [vmem:[%s1161 + $0x138] sm:$0xf] %vm439, %v1041
    %1235 = vst.msk [vmem:[%s1161 + $0x13c] sm:$0xf] %vm439, %v1042
    %1236 = vst.msk [vmem:[%s1161 + $0x140] sm:$0x1] %vm442, %v1043
    %1237 = vst.msk [vmem:[%s1161 + $0x144] sm:$0xf] %vm439, %v1044
    %1238 = vst.msk [vmem:[%s1161 + $0x148] sm:$0xf] %vm439, %v1045
    %1239 = vst.msk [vmem:[%s1161 + $0x14c] sm:$0x1] %vm442, %v1046
    %1240 = vst.msk [vmem:[%s1161 + $0x150] sm:$0xf] %vm439, %v1047
    %1241 = vst.msk [vmem:[%s1161 + $0x154] sm:$0xf] %vm439, %v1048
    %1242 = vst.msk [vmem:[%s1161 + $0x158] sm:$0x1] %vm442, %v1049
    %1243 = vst.msk [vmem:[%s1161 + $0x15c] sm:$0xf] %vm439, %v1050
    %1244 = vst.msk [vmem:[%s1161 + $0x160] sm:$0xf] %vm439, %v1051
    %1245 = vst.msk [vmem:[%s1161 + $0x164] sm:$0x1] %vm442, %v1052
    %1246 = vst.msk [vmem:[%s1161 + $0x168] sm:$0xf] %vm439, %v1053
    %1247 = vst.msk [vmem:[%s1161 + $0x16c] sm:$0xf] %vm439, %v1054
    %1248 = vst.msk [vmem:[%s1161 + $0x170] sm:$0x1] %vm442, %v1055
    %1249 = vst.msk [vmem:[%s1161 + $0x174] sm:$0xf] %vm439, %v1056
    %1250 = vst.msk [vmem:[%s1161 + $0x178] sm:$0xf] %vm439, %v1057
    %1251 = vst.msk [vmem:[%s1161 + $0x17c] sm:$0x1] %vm442, %v1058
    %1252 = vst.msk [vmem:[%s1161 + $0x180] sm:$0xf] %vm439, %v1059
    %1253 = vst.msk [vmem:[%s1161 + $0x184] sm:$0xf] %vm439, %v1060
    %1254 = vst.msk [vmem:[%s1161 + $0x188] sm:$0x1] %vm442, %v1061
    %1255 = vst.msk [vmem:[%s1161 + $0x18c] sm:$0xf] %vm439, %v1062
    %1256 = vst.msk [vmem:[%s1161 + $0x190] sm:$0xf] %vm439, %v1063
    %1257 = vst.msk [vmem:[%s1161 + $0x194] sm:$0x1] %vm442, %v1064
    %v1258 = vld [vmem:[#allocation2] sm:$0xf]
    %v1259 = vld [vmem:[#allocation2 + $0x4] sm:$0xf]
    %v1260 = vld [vmem:[#allocation2 + $0xc] sm:$0xf]
    %v1261 = vld [vmem:[#allocation2 + $0x10] sm:$0xf]
    %v1262 = vld [vmem:[#allocation2 + $0x18] sm:$0xf]
    %v1263 = vld [vmem:[#allocation2 + $0x1c] sm:$0xf]
    %v1264 = vld [vmem:[#allocation2 + $0x24] sm:$0xf]
    %v1265 = vld [vmem:[#allocation2 + $0x28] sm:$0xf]
    %v1266 = vld [vmem:[#allocation2 + $0x30] sm:$0xf]
    %v1267 = vld [vmem:[#allocation2 + $0x34] sm:$0xf]
    %v1268 = vld [vmem:[#allocation2 + $0x3c] sm:$0xf]
    %v1269 = vld [vmem:[#allocation2 + $0x40] sm:$0xf]
    %v1270 = vld [vmem:[#allocation2 + $0x48] sm:$0xf]
    %v1271 = vld [vmem:[#allocation2 + $0x4c] sm:$0xf]
    %v1272 = vld [vmem:[#allocation2 + $0x54] sm:$0xf]
    %v1273 = vld [vmem:[#allocation2 + $0x58] sm:$0xf]
    %v1274 = vld [vmem:[#allocation2 + $0x60] sm:$0xf]
    %v1275 = vld [vmem:[#allocation2 + $0x64] sm:$0xf]
    %v1276 = vld [vmem:[#allocation2 + $0x6c] sm:$0xf]
    %v1277 = vld [vmem:[#allocation2 + $0x70] sm:$0xf]
    %v1278 = vld [vmem:[#allocation2 + $0x78] sm:$0xf]
    %v1279 = vld [vmem:[#allocation2 + $0x7c] sm:$0xf]
    %v1280 = vld [vmem:[#allocation2 + $0x84] sm:$0xf]
    %v1281 = vld [vmem:[#allocation2 + $0x88] sm:$0xf]
    %v1282 = vld [vmem:[#allocation2 + $0x90] sm:$0xf]
    %v1283 = vld [vmem:[#allocation2 + $0x94] sm:$0xf]
    %v1284 = vld [vmem:[#allocation2 + $0x9c] sm:$0xf]
    %v1285 = vld [vmem:[#allocation2 + $0xa0] sm:$0xf]
    %v1286 = vld [vmem:[#allocation2 + $0xa8] sm:$0xf]
    %v1287 = vld [vmem:[#allocation2 + $0xac] sm:$0xf]
    %v1288 = vld [vmem:[#allocation2 + $0xb4] sm:$0xf]
    %v1289 = vld [vmem:[#allocation2 + $0xb8] sm:$0xf]
    %v1290 = vld [vmem:[#allocation2 + $0xd8] sm:$0xf]
    %v1291 = vld [vmem:[#allocation2 + $0xdc] sm:$0xf]
    %v1292 = vld [vmem:[#allocation2 + $0xe4] sm:$0xf]
    %v1293 = vld [vmem:[#allocation2 + $0xe8] sm:$0xf]
    %v1294 = vld [vmem:[#allocation2 + $0xf0] sm:$0xf]
    %v1295 = vld [vmem:[#allocation2 + $0xf4] sm:$0xf]
    %v1296 = vld [vmem:[#allocation2 + $0xfc] sm:$0xf]
    %v1297 = vld [vmem:[#allocation2 + $0x100] sm:$0xf]
    %v1298 = vld [vmem:[#allocation2 + $0x108] sm:$0xf]
    %v1299 = vld [vmem:[#allocation2 + $0x10c] sm:$0xf]
    %v1300 = vld [vmem:[#allocation2 + $0x114] sm:$0xf]
    %v1301 = vld [vmem:[#allocation2 + $0x118] sm:$0xf]
    %v1302 = vld [vmem:[#allocation2 + $0x120] sm:$0xf]
    %v1303 = vld [vmem:[#allocation2 + $0x124] sm:$0xf]
    %v1304 = vld [vmem:[#allocation2 + $0x12c] sm:$0xf]
    %v1305 = vld [vmem:[#allocation2 + $0x130] sm:$0xf]
    %v1306 = vld [vmem:[#allocation2 + $0x138] sm:$0xf]
    %v1307 = vld [vmem:[#allocation2 + $0x13c] sm:$0xf]
    %v1308 = vld [vmem:[#allocation2 + $0x144] sm:$0xf]
    %v1309 = vld [vmem:[#allocation2 + $0x148] sm:$0xf]
    %v1310 = vld [vmem:[#allocation2 + $0x150] sm:$0xf]
    %v1311 = vld [vmem:[#allocation2 + $0x154] sm:$0xf]
    %v1312 = vld [vmem:[#allocation2 + $0x15c] sm:$0xf]
    %v1313 = vld [vmem:[#allocation2 + $0x160] sm:$0xf]
    %v1314 = vld [vmem:[#allocation2 + $0x168] sm:$0xf]
    %v1315 = vld [vmem:[#allocation2 + $0x16c] sm:$0xf]
    %v1316 = vld [vmem:[#allocation2 + $0x174] sm:$0xf]
    %v1317 = vld [vmem:[#allocation2 + $0x178] sm:$0xf]
    %v1318 = vld [vmem:[#allocation2 + $0x180] sm:$0xf]
    %v1319 = vld [vmem:[#allocation2 + $0x184] sm:$0xf]
    %v1320 = vld [vmem:[#allocation2 + $0x18c] sm:$0xf]
    %v1321 = vld [vmem:[#allocation2 + $0x190] sm:$0xf]
    %v1322 = vld [vmem:[#allocation2 + $0x8] sm:$0x1]
    %v1323 = vld [vmem:[#allocation2 + $0x14] sm:$0x1]
    %v1324 = vld [vmem:[#allocation2 + $0x20] sm:$0x1]
    %v1325 = vld [vmem:[#allocation2 + $0x2c] sm:$0x1]
    %v1326 = vld [vmem:[#allocation2 + $0x38] sm:$0x1]
    %v1327 = vld [vmem:[#allocation2 + $0x44] sm:$0x1]
    %v1328 = vld [vmem:[#allocation2 + $0x50] sm:$0x1]
    %v1329 = vld [vmem:[#allocation2 + $0x5c] sm:$0x1]
    %v1330 = vld [vmem:[#allocation2 + $0x68] sm:$0x1]
    %v1331 = vld [vmem:[#allocation2 + $0x74] sm:$0x1]
    %v1332 = vld [vmem:[#allocation2 + $0x80] sm:$0x1]
    %v1333 = vld [vmem:[#allocation2 + $0x8c] sm:$0x1]
    %v1334 = vld [vmem:[#allocation2 + $0x98] sm:$0x1]
    %v1335 = vld [vmem:[#allocation2 + $0xa4] sm:$0x1]
    %v1336 = vld [vmem:[#allocation2 + $0xb0] sm:$0x1]
    %v1337 = vld [vmem:[#allocation2 + $0xbc] sm:$0x1]
    %v1338 = vld [vmem:[#allocation2 + $0xe0] sm:$0x1]
    %v1339 = vld [vmem:[#allocation2 + $0xec] sm:$0x1]
    %v1340 = vld [vmem:[#allocation2 + $0xf8] sm:$0x1]
    %v1341 = vld [vmem:[#allocation2 + $0x104] sm:$0x1]
    %v1342 = vld [vmem:[#allocation2 + $0x110] sm:$0x1]
    %v1343 = vld [vmem:[#allocation2 + $0x11c] sm:$0x1]
    %v1344 = vld [vmem:[#allocation2 + $0x128] sm:$0x1]
    %v1345 = vld [vmem:[#allocation2 + $0x134] sm:$0x1]
    %v1346 = vld [vmem:[#allocation2 + $0x140] sm:$0x1]
    %v1347 = vld [vmem:[#allocation2 + $0x14c] sm:$0x1]
    %v1348 = vld [vmem:[#allocation2 + $0x158] sm:$0x1]
    %v1349 = vld [vmem:[#allocation2 + $0x164] sm:$0x1]
    %v1350 = vld [vmem:[#allocation2 + $0x170] sm:$0x1]
    %v1351 = vld [vmem:[#allocation2 + $0x17c] sm:$0x1]
    %v1352 = vld [vmem:[#allocation2 + $0x188] sm:$0x1]
    %v1353 = vld [vmem:[#allocation2 + $0x194] sm:$0x1]
    %v1354 = vld [vmem:[#allocation2] sm:$0xe]
    %v1355 = vld [vmem:[#allocation2 + $0xc] sm:$0xe]
    %v1356 = vld [vmem:[#allocation2 + $0x18] sm:$0xe]
    %v1357 = vld [vmem:[#allocation2 + $0x24] sm:$0xe]
    %v1358 = vld [vmem:[#allocation2 + $0x30] sm:$0xe]
    %v1359 = vld [vmem:[#allocation2 + $0x3c] sm:$0xe]
    %v1360 = vld [vmem:[#allocation2 + $0x48] sm:$0xe]
    %v1361 = vld [vmem:[#allocation2 + $0x54] sm:$0xe]
    %v1362 = vld [vmem:[#allocation2 + $0x60] sm:$0xe]
    %v1363 = vld [vmem:[#allocation2 + $0x6c] sm:$0xe]
    %v1364 = vld [vmem:[#allocation2 + $0x78] sm:$0xe]
    %v1365 = vld [vmem:[#allocation2 + $0x84] sm:$0xe]
    %v1366 = vld [vmem:[#allocation2 + $0x90] sm:$0xe]
    %v1367 = vld [vmem:[#allocation2 + $0x9c] sm:$0xe]
    %v1368 = vld [vmem:[#allocation2 + $0xa8] sm:$0xe]
    %v1369 = vld [vmem:[#allocation2 + $0xb4] sm:$0xe]
    %v1370 = vld [vmem:[#allocation2 + $0xd8] sm:$0xe]
    %v1371 = vld [vmem:[#allocation2 + $0xe4] sm:$0xe]
    %v1372 = vld [vmem:[#allocation2 + $0xf0] sm:$0xe]
    %v1373 = vld [vmem:[#allocation2 + $0xfc] sm:$0xe]
    %v1374 = vld [vmem:[#allocation2 + $0x108] sm:$0xe]
    %v1375 = vld [vmem:[#allocation2 + $0x114] sm:$0xe]
    %v1376 = vld [vmem:[#allocation2 + $0x120] sm:$0xe]
    %v1377 = vld [vmem:[#allocation2 + $0x12c] sm:$0xe]
    %v1378 = vld [vmem:[#allocation2 + $0x138] sm:$0xe]
    %v1379 = vld [vmem:[#allocation2 + $0x144] sm:$0xe]
    %v1380 = vld [vmem:[#allocation2 + $0x150] sm:$0xe]
    %v1381 = vld [vmem:[#allocation2 + $0x15c] sm:$0xe]
    %v1382 = vld [vmem:[#allocation2 + $0x168] sm:$0xe]
    %v1383 = vld [vmem:[#allocation2 + $0x174] sm:$0xe]
    %v1384 = vld [vmem:[#allocation2 + $0x180] sm:$0xe]
    %v1385 = vld [vmem:[#allocation2 + $0x18c] sm:$0xe]
    %v1386 = vld [vmem:[%s1161] sm:$0xf]
    %v1387 = vld [vmem:[%s1161 + $0x4] sm:$0xf]
    %v1388 = vld [vmem:[%s1161 + $0xc] sm:$0xf]
    %v1389 = vld [vmem:[%s1161 + $0x10] sm:$0xf]
    %v1390 = vld [vmem:[%s1161 + $0x18] sm:$0xf]
    %v1391 = vld [vmem:[%s1161 + $0x1c] sm:$0xf]
    %v1392 = vld [vmem:[%s1161 + $0x24] sm:$0xf]
    %v1393 = vld [vmem:[%s1161 + $0x28] sm:$0xf]
    %v1394 = vld [vmem:[%s1161 + $0x30] sm:$0xf]
    %v1395 = vld [vmem:[%s1161 + $0x34] sm:$0xf]
    %v1396 = vld [vmem:[%s1161 + $0x3c] sm:$0xf]
    %v1397 = vld [vmem:[%s1161 + $0x40] sm:$0xf]
    %v1398 = vld [vmem:[%s1161 + $0x48] sm:$0xf]
    %v1399 = vld [vmem:[%s1161 + $0x4c] sm:$0xf]
    %v1400 = vld [vmem:[%s1161 + $0x54] sm:$0xf]
    %v1401 = vld [vmem:[%s1161 + $0x58] sm:$0xf]
    %v1402 = vld [vmem:[%s1161 + $0x60] sm:$0xf]
    %v1403 = vld [vmem:[%s1161 + $0x64] sm:$0xf]
    %v1404 = vld [vmem:[%s1161 + $0x6c] sm:$0xf]
    %v1405 = vld [vmem:[%s1161 + $0x70] sm:$0xf]
    %v1406 = vld [vmem:[%s1161 + $0x78] sm:$0xf]
    %v1407 = vld [vmem:[%s1161 + $0x7c] sm:$0xf]
    %v1408 = vld [vmem:[%s1161 + $0x84] sm:$0xf]
    %v1409 = vld [vmem:[%s1161 + $0x88] sm:$0xf]
    %v1410 = vld [vmem:[%s1161 + $0x90] sm:$0xf]
    %v1411 = vld [vmem:[%s1161 + $0x94] sm:$0xf]
    %v1412 = vld [vmem:[%s1161 + $0x9c] sm:$0xf]
    %v1413 = vld [vmem:[%s1161 + $0xa0] sm:$0xf]
    %v1414 = vld [vmem:[%s1161 + $0xa8] sm:$0xf]
    %v1415 = vld [vmem:[%s1161 + $0xac] sm:$0xf]
    %v1416 = vld [vmem:[%s1161 + $0xb4] sm:$0xf]
    %v1417 = vld [vmem:[%s1161 + $0xb8] sm:$0xf]
    %v1418 = vld [vmem:[%s1161 + $0xd8] sm:$0xf]
    %v1419 = vld [vmem:[%s1161 + $0xdc] sm:$0xf]
    %v1420 = vld [vmem:[%s1161 + $0xe4] sm:$0xf]
    %v1421 = vld [vmem:[%s1161 + $0xe8] sm:$0xf]
    %v1422 = vld [vmem:[%s1161 + $0xf0] sm:$0xf]
    %v1423 = vld [vmem:[%s1161 + $0xf4] sm:$0xf]
    %v1424 = vld [vmem:[%s1161 + $0xfc] sm:$0xf]
    %v1425 = vld [vmem:[%s1161 + $0x100] sm:$0xf]
    %v1426 = vld [vmem:[%s1161 + $0x108] sm:$0xf]
    %v1427 = vld [vmem:[%s1161 + $0x10c] sm:$0xf]
    %v1428 = vld [vmem:[%s1161 + $0x114] sm:$0xf]
    %v1429 = vld [vmem:[%s1161 + $0x118] sm:$0xf]
    %v1430 = vld [vmem:[%s1161 + $0x120] sm:$0xf]
    %v1431 = vld [vmem:[%s1161 + $0x124] sm:$0xf]
    %v1432 = vld [vmem:[%s1161 + $0x12c] sm:$0xf]
    %v1433 = vld [vmem:[%s1161 + $0x130] sm:$0xf]
    %v1434 = vld [vmem:[%s1161 + $0x138] sm:$0xf]
    %v1435 = vld [vmem:[%s1161 + $0x13c] sm:$0xf]
    %v1436 = vld [vmem:[%s1161 + $0x144] sm:$0xf]
    %v1437 = vld [vmem:[%s1161 + $0x148] sm:$0xf]
    %v1438 = vld [vmem:[%s1161 + $0x150] sm:$0xf]
    %v1439 = vld [vmem:[%s1161 + $0x154] sm:$0xf]
    %v1440 = vld [vmem:[%s1161 + $0x15c] sm:$0xf]
    %v1441 = vld [vmem:[%s1161 + $0x160] sm:$0xf]
    %v1442 = vld [vmem:[%s1161 + $0x168] sm:$0xf]
    %v1443 = vld [vmem:[%s1161 + $0x16c] sm:$0xf]
    %v1444 = vld [vmem:[%s1161 + $0x174] sm:$0xf]
    %v1445 = vld [vmem:[%s1161 + $0x178] sm:$0xf]
    %v1446 = vld [vmem:[%s1161 + $0x180] sm:$0xf]
    %v1447 = vld [vmem:[%s1161 + $0x184] sm:$0xf]
    %v1448 = vld [vmem:[%s1161 + $0x18c] sm:$0xf]
    %v1449 = vld [vmem:[%s1161 + $0x190] sm:$0xf]
    %v1450 = vld [vmem:[%s1161 + $0x8] sm:$0x1]
    %v1451 = vld [vmem:[%s1161 + $0x14] sm:$0x1]
    %v1452 = vld [vmem:[%s1161 + $0x20] sm:$0x1]
    %v1453 = vld [vmem:[%s1161 + $0x2c] sm:$0x1]
    %v1454 = vld [vmem:[%s1161 + $0x38] sm:$0x1]
    %v1455 = vld [vmem:[%s1161 + $0x44] sm:$0x1]
    %v1456 = vld [vmem:[%s1161 + $0x50] sm:$0x1]
    %v1457 = vld [vmem:[%s1161 + $0x5c] sm:$0x1]
    %v1458 = vld [vmem:[%s1161 + $0x68] sm:$0x1]
    %v1459 = vld [vmem:[%s1161 + $0x74] sm:$0x1]
    %v1460 = vld [vmem:[%s1161 + $0x80] sm:$0x1]
    %v1461 = vld [vmem:[%s1161 + $0x8c] sm:$0x1]
    %v1462 = vld [vmem:[%s1161 + $0x98] sm:$0x1]
    %v1463 = vld [vmem:[%s1161 + $0xa4] sm:$0x1]
    %v1464 = vld [vmem:[%s1161 + $0xb0] sm:$0x1]
    %v1465 = vld [vmem:[%s1161 + $0xbc] sm:$0x1]
    %v1466 = vld [vmem:[%s1161 + $0xe0] sm:$0x1]
    %v1467 = vld [vmem:[%s1161 + $0xec] sm:$0x1]
    %v1468 = vld [vmem:[%s1161 + $0xf8] sm:$0x1]
    %v1469 = vld [vmem:[%s1161 + $0x104] sm:$0x1]
    %v1470 = vld [vmem:[%s1161 + $0x110] sm:$0x1]
    %v1471 = vld [vmem:[%s1161 + $0x11c] sm:$0x1]
    %v1472 = vld [vmem:[%s1161 + $0x128] sm:$0x1]
    %v1473 = vld [vmem:[%s1161 + $0x134] sm:$0x1]
    %v1474 = vld [vmem:[%s1161 + $0x140] sm:$0x1]
    %v1475 = vld [vmem:[%s1161 + $0x14c] sm:$0x1]
    %v1476 = vld [vmem:[%s1161 + $0x158] sm:$0x1]
    %v1477 = vld [vmem:[%s1161 + $0x164] sm:$0x1]
    %v1478 = vld [vmem:[%s1161 + $0x170] sm:$0x1]
    %v1479 = vld [vmem:[%s1161 + $0x17c] sm:$0x1]
    %v1480 = vld [vmem:[%s1161 + $0x188] sm:$0x1]
    %v1481 = vld [vmem:[%s1161 + $0x194] sm:$0x1]
    %v1482 = vld [vmem:[%s1161] sm:$0xe]
    %v1483 = vld [vmem:[%s1161 + $0xc] sm:$0xe]
    %v1484 = vld [vmem:[%s1161 + $0x18] sm:$0xe]
    %v1485 = vld [vmem:[%s1161 + $0x24] sm:$0xe]
    %v1486 = vld [vmem:[%s1161 + $0x30] sm:$0xe]
    %v1487 = vld [vmem:[%s1161 + $0x3c] sm:$0xe]
    %v1488 = vld [vmem:[%s1161 + $0x48] sm:$0xe]
    %v1489 = vld [vmem:[%s1161 + $0x54] sm:$0xe]
    %v1490 = vld [vmem:[%s1161 + $0x60] sm:$0xe]
    %v1491 = vld [vmem:[%s1161 + $0x6c] sm:$0xe]
    %v1492 = vld [vmem:[%s1161 + $0x78] sm:$0xe]
    %v1493 = vld [vmem:[%s1161 + $0x84] sm:$0xe]
    %v1494 = vld [vmem:[%s1161 + $0x90] sm:$0xe]
    %v1495 = vld [vmem:[%s1161 + $0x9c] sm:$0xe]
    %v1496 = vld [vmem:[%s1161 + $0xa8] sm:$0xe]
    %v1497 = vld [vmem:[%s1161 + $0xb4] sm:$0xe]
    %v1498 = vld [vmem:[%s1161 + $0xd8] sm:$0xe]
    %v1499 = vld [vmem:[%s1161 + $0xe4] sm:$0xe]
    %v1500 = vld [vmem:[%s1161 + $0xf0] sm:$0xe]
    %v1501 = vld [vmem:[%s1161 + $0xfc] sm:$0xe]
    %v1502 = vld [vmem:[%s1161 + $0x108] sm:$0xe]
    %v1503 = vld [vmem:[%s1161 + $0x114] sm:$0xe]
    %v1504 = vld [vmem:[%s1161 + $0x120] sm:$0xe]
    %v1505 = vld [vmem:[%s1161 + $0x12c] sm:$0xe]
    %v1506 = vld [vmem:[%s1161 + $0x138] sm:$0xe]
    %v1507 = vld [vmem:[%s1161 + $0x144] sm:$0xe]
    %v1508 = vld [vmem:[%s1161 + $0x150] sm:$0xe]
    %v1509 = vld [vmem:[%s1161 + $0x15c] sm:$0xe]
    %v1510 = vld [vmem:[%s1161 + $0x168] sm:$0xe]
    %v1511 = vld [vmem:[%s1161 + $0x174] sm:$0xe]
    %v1512 = vld [vmem:[%s1161 + $0x180] sm:$0xe]
    %v1513 = vld [vmem:[%s1161 + $0x18c] sm:$0xe]
    %s1514 = scalar_lea.vmem [#allocation2], 24
    %v1515 = vld [vmem:[%s1514] sm:$0xf]
    %v1516 = vld [vmem:[%s1514 + $0x4] sm:$0xf]
    %v1517 = vld [vmem:[%s1514 + $0xc] sm:$0xf]
    %v1518 = vld [vmem:[%s1514 + $0x10] sm:$0xf]
    %v1519 = vld [vmem:[%s1514 + $0x18] sm:$0xf]
    %v1520 = vld [vmem:[%s1514 + $0x1c] sm:$0xf]
    %v1521 = vld [vmem:[%s1514 + $0x24] sm:$0xf]
    %v1522 = vld [vmem:[%s1514 + $0x28] sm:$0xf]
    %v1523 = vld [vmem:[%s1514 + $0x30] sm:$0xf]
    %v1524 = vld [vmem:[%s1514 + $0x34] sm:$0xf]
    %v1525 = vld [vmem:[%s1514 + $0x3c] sm:$0xf]
    %v1526 = vld [vmem:[%s1514 + $0x40] sm:$0xf]
    %v1527 = vld [vmem:[%s1514 + $0x48] sm:$0xf]
    %v1528 = vld [vmem:[%s1514 + $0x4c] sm:$0xf]
    %v1529 = vld [vmem:[%s1514 + $0x54] sm:$0xf]
    %v1530 = vld [vmem:[%s1514 + $0x58] sm:$0xf]
    %v1531 = vld [vmem:[%s1514 + $0x60] sm:$0xf]
    %v1532 = vld [vmem:[%s1514 + $0x64] sm:$0xf]
    %v1533 = vld [vmem:[%s1514 + $0x6c] sm:$0xf]
    %v1534 = vld [vmem:[%s1514 + $0x70] sm:$0xf]
    %v1535 = vld [vmem:[%s1514 + $0x78] sm:$0xf]
    %v1536 = vld [vmem:[%s1514 + $0x7c] sm:$0xf]
    %v1537 = vld [vmem:[%s1514 + $0x84] sm:$0xf]
    %v1538 = vld [vmem:[%s1514 + $0x88] sm:$0xf]
    %v1539 = vld [vmem:[%s1514 + $0x90] sm:$0xf]
    %v1540 = vld [vmem:[%s1514 + $0x94] sm:$0xf]
    %v1541 = vld [vmem:[%s1514 + $0x9c] sm:$0xf]
    %v1542 = vld [vmem:[%s1514 + $0xa0] sm:$0xf]
    %v1543 = vld [vmem:[%s1514 + $0xa8] sm:$0xf]
    %v1544 = vld [vmem:[%s1514 + $0xac] sm:$0xf]
    %v1545 = vld [vmem:[%s1514 + $0xb4] sm:$0xf]
    %v1546 = vld [vmem:[%s1514 + $0xb8] sm:$0xf]
    %v1547 = vld [vmem:[%s1514 + $0xd8] sm:$0xf]
    %v1548 = vld [vmem:[%s1514 + $0xdc] sm:$0xf]
    %v1549 = vld [vmem:[%s1514 + $0xe4] sm:$0xf]
    %v1550 = vld [vmem:[%s1514 + $0xe8] sm:$0xf]
    %v1551 = vld [vmem:[%s1514 + $0xf0] sm:$0xf]
    %v1552 = vld [vmem:[%s1514 + $0xf4] sm:$0xf]
    %v1553 = vld [vmem:[%s1514 + $0xfc] sm:$0xf]
    %v1554 = vld [vmem:[%s1514 + $0x100] sm:$0xf]
    %v1555 = vld [vmem:[%s1514 + $0x108] sm:$0xf]
    %v1556 = vld [vmem:[%s1514 + $0x10c] sm:$0xf]
    %v1557 = vld [vmem:[%s1514 + $0x114] sm:$0xf]
    %v1558 = vld [vmem:[%s1514 + $0x118] sm:$0xf]
    %v1559 = vld [vmem:[%s1514 + $0x120] sm:$0xf]
    %v1560 = vld [vmem:[%s1514 + $0x124] sm:$0xf]
    %v1561 = vld [vmem:[%s1514 + $0x12c] sm:$0xf]
    %v1562 = vld [vmem:[%s1514 + $0x130] sm:$0xf]
    %v1563 = vld [vmem:[%s1514 + $0x138] sm:$0xf]
    %v1564 = vld [vmem:[%s1514 + $0x13c] sm:$0xf]
    %v1565 = vld [vmem:[%s1514 + $0x144] sm:$0xf]
    %v1566 = vld [vmem:[%s1514 + $0x148] sm:$0xf]
    %v1567 = vld [vmem:[%s1514 + $0x150] sm:$0xf]
    %v1568 = vld [vmem:[%s1514 + $0x154] sm:$0xf]
    %v1569 = vld [vmem:[%s1514 + $0x15c] sm:$0xf]
    %v1570 = vld [vmem:[%s1514 + $0x160] sm:$0xf]
    %v1571 = vld [vmem:[%s1514 + $0x168] sm:$0xf]
    %v1572 = vld [vmem:[%s1514 + $0x16c] sm:$0xf]
    %v1573 = vld [vmem:[%s1514 + $0x174] sm:$0xf]
    %v1574 = vld [vmem:[%s1514 + $0x178] sm:$0xf]
    %v1575 = vld [vmem:[%s1514 + $0x180] sm:$0xf]
    %v1576 = vld [vmem:[%s1514 + $0x184] sm:$0xf]
    %v1577 = vld [vmem:[%s1514 + $0x18c] sm:$0xf]
    %v1578 = vld [vmem:[%s1514 + $0x190] sm:$0xf]
    %v1579 = vld [vmem:[%s1514 + $0x8] sm:$0x1]
    %v1580 = vld [vmem:[%s1514 + $0x14] sm:$0x1]
    %v1581 = vld [vmem:[%s1514 + $0x20] sm:$0x1]
    %v1582 = vld [vmem:[%s1514 + $0x2c] sm:$0x1]
    %v1583 = vld [vmem:[%s1514 + $0x38] sm:$0x1]
    %v1584 = vld [vmem:[%s1514 + $0x44] sm:$0x1]
    %v1585 = vld [vmem:[%s1514 + $0x50] sm:$0x1]
    %v1586 = vld [vmem:[%s1514 + $0x5c] sm:$0x1]
    %v1587 = vld [vmem:[%s1514 + $0x68] sm:$0x1]
    %v1588 = vld [vmem:[%s1514 + $0x74] sm:$0x1]
    %v1589 = vld [vmem:[%s1514 + $0x80] sm:$0x1]
    %v1590 = vld [vmem:[%s1514 + $0x8c] sm:$0x1]
    %v1591 = vld [vmem:[%s1514 + $0x98] sm:$0x1]
    %v1592 = vld [vmem:[%s1514 + $0xa4] sm:$0x1]
    %v1593 = vld [vmem:[%s1514 + $0xb0] sm:$0x1]
    %v1594 = vld [vmem:[%s1514 + $0xbc] sm:$0x1]
    %v1595 = vld [vmem:[%s1514 + $0xe0] sm:$0x1]
    %v1596 = vld [vmem:[%s1514 + $0xec] sm:$0x1]
    %v1597 = vld [vmem:[%s1514 + $0xf8] sm:$0x1]
    %v1598 = vld [vmem:[%s1514 + $0x104] sm:$0x1]
    %v1599 = vld [vmem:[%s1514 + $0x110] sm:$0x1]
    %v1600 = vld [vmem:[%s1514 + $0x11c] sm:$0x1]
    %v1601 = vld [vmem:[%s1514 + $0x128] sm:$0x1]
    %v1602 = vld [vmem:[%s1514 + $0x134] sm:$0x1]
    %v1603 = vld [vmem:[%s1514 + $0x140] sm:$0x1]
    %v1604 = vld [vmem:[%s1514 + $0x14c] sm:$0x1]
    %v1605 = vld [vmem:[%s1514 + $0x158] sm:$0x1]
    %v1606 = vld [vmem:[%s1514 + $0x164] sm:$0x1]
    %v1607 = vld [vmem:[%s1514 + $0x170] sm:$0x1]
    %v1608 = vld [vmem:[%s1514 + $0x17c] sm:$0x1]
    %v1609 = vld [vmem:[%s1514 + $0x188] sm:$0x1]
    %v1610 = vld [vmem:[%s1514 + $0x194] sm:$0x1]
    %v1611 = vld [vmem:[%s1514] sm:$0xe]
    %v1612 = vld [vmem:[%s1514 + $0xc] sm:$0xe]
    %v1613 = vld [vmem:[%s1514 + $0x18] sm:$0xe]
    %v1614 = vld [vmem:[%s1514 + $0x24] sm:$0xe]
    %v1615 = vld [vmem:[%s1514 + $0x30] sm:$0xe]
    %v1616 = vld [vmem:[%s1514 + $0x3c] sm:$0xe]
    %v1617 = vld [vmem:[%s1514 + $0x48] sm:$0xe]
    %v1618 = vld [vmem:[%s1514 + $0x54] sm:$0xe]
    %v1619 = vld [vmem:[%s1514 + $0x60] sm:$0xe]
    %v1620 = vld [vmem:[%s1514 + $0x6c] sm:$0xe]
    %v1621 = vld [vmem:[%s1514 + $0x78] sm:$0xe]
    %v1622 = vld [vmem:[%s1514 + $0x84] sm:$0xe]
    %v1623 = vld [vmem:[%s1514 + $0x90] sm:$0xe]
    %v1624 = vld [vmem:[%s1514 + $0x9c] sm:$0xe]
    %v1625 = vld [vmem:[%s1514 + $0xa8] sm:$0xe]
    %v1626 = vld [vmem:[%s1514 + $0xb4] sm:$0xe]
    %v1627 = vld [vmem:[%s1514 + $0xd8] sm:$0xe]
    %v1628 = vld [vmem:[%s1514 + $0xe4] sm:$0xe]
    %v1629 = vld [vmem:[%s1514 + $0xf0] sm:$0xe]
    %v1630 = vld [vmem:[%s1514 + $0xfc] sm:$0xe]
    %v1631 = vld [vmem:[%s1514 + $0x108] sm:$0xe]
    %v1632 = vld [vmem:[%s1514 + $0x114] sm:$0xe]
    %v1633 = vld [vmem:[%s1514 + $0x120] sm:$0xe]
    %v1634 = vld [vmem:[%s1514 + $0x12c] sm:$0xe]
    %v1635 = vld [vmem:[%s1514 + $0x138] sm:$0xe]
    %v1636 = vld [vmem:[%s1514 + $0x144] sm:$0xe]
    %v1637 = vld [vmem:[%s1514 + $0x150] sm:$0xe]
    %v1638 = vld [vmem:[%s1514 + $0x15c] sm:$0xe]
    %v1639 = vld [vmem:[%s1514 + $0x168] sm:$0xe]
    %v1640 = vld [vmem:[%s1514 + $0x174] sm:$0xe]
    %v1641 = vld [vmem:[%s1514 + $0x180] sm:$0xe]
    %v1642 = vld [vmem:[%s1514 + $0x18c] sm:$0xe]
    %v1707 = vunpack.c.l.b16 %v1258
    %v1708 = vunpack.c.l.b16 %v1259
    %v1709 = vunpack.c.l.b16 %v1260
    %v1710 = vunpack.c.l.b16 %v1261
    %v1711 = vunpack.c.l.b16 %v1262
    %v1712 = vunpack.c.l.b16 %v1263
    %v1713 = vunpack.c.l.b16 %v1264
    %v1714 = vunpack.c.l.b16 %v1265
    %v1715 = vunpack.c.l.b16 %v1266
    %v1716 = vunpack.c.l.b16 %v1267
    %v1717 = vunpack.c.l.b16 %v1268
    %v1718 = vunpack.c.l.b16 %v1269
    %v1719 = vunpack.c.l.b16 %v1270
    %v1720 = vunpack.c.l.b16 %v1271
    %v1721 = vunpack.c.l.b16 %v1272
    %v1722 = vunpack.c.l.b16 %v1273
    %v1723 = vunpack.c.l.b16 %v1274
    %v1724 = vunpack.c.l.b16 %v1275
    %v1725 = vunpack.c.l.b16 %v1276
    %v1726 = vunpack.c.l.b16 %v1277
    %v1727 = vunpack.c.l.b16 %v1278
    %v1728 = vunpack.c.l.b16 %v1279
    %v1729 = vunpack.c.l.b16 %v1280
    %v1730 = vunpack.c.l.b16 %v1281
    %v1731 = vunpack.c.l.b16 %v1282
    %v1732 = vunpack.c.l.b16 %v1283
    %v1733 = vunpack.c.l.b16 %v1284
    %v1734 = vunpack.c.l.b16 %v1285
    %v1735 = vunpack.c.l.b16 %v1286
    %v1736 = vunpack.c.l.b16 %v1287
    %v1737 = vunpack.c.l.b16 %v1288
    %v1738 = vunpack.c.l.b16 %v1289
    %v1739 = vunpack.c.l.b16 %v1290
    %v1740 = vunpack.c.l.b16 %v1291
    %v1741 = vunpack.c.l.b16 %v1292
    %v1742 = vunpack.c.l.b16 %v1293
    %v1743 = vunpack.c.l.b16 %v1294
    %v1744 = vunpack.c.l.b16 %v1295
    %v1745 = vunpack.c.l.b16 %v1296
    %v1746 = vunpack.c.l.b16 %v1297
    %v1747 = vunpack.c.l.b16 %v1298
    %v1748 = vunpack.c.l.b16 %v1299
    %v1749 = vunpack.c.l.b16 %v1300
    %v1750 = vunpack.c.l.b16 %v1301
    %v1751 = vunpack.c.l.b16 %v1302
    %v1752 = vunpack.c.l.b16 %v1303
    %v1753 = vunpack.c.l.b16 %v1304
    %v1754 = vunpack.c.l.b16 %v1305
    %v1755 = vunpack.c.l.b16 %v1306
    %v1756 = vunpack.c.l.b16 %v1307
    %v1757 = vunpack.c.l.b16 %v1308
    %v1758 = vunpack.c.l.b16 %v1309
    %v1759 = vunpack.c.l.b16 %v1310
    %v1760 = vunpack.c.l.b16 %v1311
    %v1761 = vunpack.c.l.b16 %v1312
    %v1762 = vunpack.c.l.b16 %v1313
    %v1763 = vunpack.c.l.b16 %v1314
    %v1764 = vunpack.c.l.b16 %v1315
    %v1765 = vunpack.c.l.b16 %v1316
    %v1766 = vunpack.c.l.b16 %v1317
    %v1767 = vunpack.c.l.b16 %v1318
    %v1768 = vunpack.c.l.b16 %v1319
    %v1769 = vunpack.c.l.b16 %v1320
    %v1770 = vunpack.c.l.b16 %v1321
    %v1771 = vpack.c.b16 %v1708, %v1707
    %v1772 = vpack.c.b16 %v1710, %v1709
    %v1773 = vpack.c.b16 %v1712, %v1711
    %v1774 = vpack.c.b16 %v1714, %v1713
    %v1775 = vpack.c.b16 %v1716, %v1715
    %v1776 = vpack.c.b16 %v1718, %v1717
    %v1777 = vpack.c.b16 %v1720, %v1719
    %v1778 = vpack.c.b16 %v1722, %v1721
    %v1779 = vpack.c.b16 %v1724, %v1723
    %v1780 = vpack.c.b16 %v1726, %v1725
    %v1781 = vpack.c.b16 %v1728, %v1727
    %v1782 = vpack.c.b16 %v1730, %v1729
    %v1783 = vpack.c.b16 %v1732, %v1731
    %v1784 = vpack.c.b16 %v1734, %v1733
    %v1785 = vpack.c.b16 %v1736, %v1735
    %v1786 = vpack.c.b16 %v1738, %v1737
    %v1787 = vpack.c.b16 %v1740, %v1739
    %v1788 = vpack.c.b16 %v1742, %v1741
    %v1789 = vpack.c.b16 %v1744, %v1743
    %v1790 = vpack.c.b16 %v1746, %v1745
    %v1791 = vpack.c.b16 %v1748, %v1747
    %v1792 = vpack.c.b16 %v1750, %v1749
    %v1793 = vpack.c.b16 %v1752, %v1751
    %v1794 = vpack.c.b16 %v1754, %v1753
    %v1795 = vpack.c.b16 %v1756, %v1755
    %v1796 = vpack.c.b16 %v1758, %v1757
    %v1797 = vpack.c.b16 %v1760, %v1759
    %v1798 = vpack.c.b16 %v1762, %v1761
    %v1799 = vpack.c.b16 %v1764, %v1763
    %v1800 = vpack.c.b16 %v1766, %v1765
    %v1801 = vpack.c.b16 %v1768, %v1767
    %v1802 = vpack.c.b16 %v1770, %v1769
    %v1835 = vunpack.c.l.b16 %v1322
    %v1836 = vunpack.c.l.b16 %v1323
    %v1837 = vunpack.c.l.b16 %v1324
    %v1838 = vunpack.c.l.b16 %v1325
    %v1839 = vunpack.c.l.b16 %v1326
    %v1840 = vunpack.c.l.b16 %v1327
    %v1841 = vunpack.c.l.b16 %v1328
    %v1842 = vunpack.c.l.b16 %v1329
    %v1843 = vunpack.c.l.b16 %v1330
    %v1844 = vunpack.c.l.b16 %v1331
    %v1845 = vunpack.c.l.b16 %v1332
    %v1846 = vunpack.c.l.b16 %v1333
    %v1847 = vunpack.c.l.b16 %v1334
    %v1848 = vunpack.c.l.b16 %v1335
    %v1849 = vunpack.c.l.b16 %v1336
    %v1850 = vunpack.c.l.b16 %v1337
    %v1851 = vunpack.c.l.b16 %v1338
    %v1852 = vunpack.c.l.b16 %v1339
    %v1853 = vunpack.c.l.b16 %v1340
    %v1854 = vunpack.c.l.b16 %v1341
    %v1855 = vunpack.c.l.b16 %v1342
    %v1856 = vunpack.c.l.b16 %v1343
    %v1857 = vunpack.c.l.b16 %v1344
    %v1858 = vunpack.c.l.b16 %v1345
    %v1859 = vunpack.c.l.b16 %v1346
    %v1860 = vunpack.c.l.b16 %v1347
    %v1861 = vunpack.c.l.b16 %v1348
    %v1862 = vunpack.c.l.b16 %v1349
    %v1863 = vunpack.c.l.b16 %v1350
    %v1864 = vunpack.c.l.b16 %v1351
    %v1865 = vunpack.c.l.b16 %v1352
    %v1866 = vunpack.c.l.b16 %v1353
    %v1867 = vpack.c.b16 %v1835, %v1835
    %v1868 = vpack.c.b16 %v1836, %v1836
    %v1869 = vpack.c.b16 %v1837, %v1837
    %v1870 = vpack.c.b16 %v1838, %v1838
    %v1871 = vpack.c.b16 %v1839, %v1839
    %v1872 = vpack.c.b16 %v1840, %v1840
    %v1873 = vpack.c.b16 %v1841, %v1841
    %v1874 = vpack.c.b16 %v1842, %v1842
    %v1875 = vpack.c.b16 %v1843, %v1843
    %v1876 = vpack.c.b16 %v1844, %v1844
    %v1877 = vpack.c.b16 %v1845, %v1845
    %v1878 = vpack.c.b16 %v1846, %v1846
    %v1879 = vpack.c.b16 %v1847, %v1847
    %v1880 = vpack.c.b16 %v1848, %v1848
    %v1881 = vpack.c.b16 %v1849, %v1849
    %v1882 = vpack.c.b16 %v1850, %v1850
    %v1883 = vpack.c.b16 %v1851, %v1851
    %v1884 = vpack.c.b16 %v1852, %v1852
    %v1885 = vpack.c.b16 %v1853, %v1853
    %v1886 = vpack.c.b16 %v1854, %v1854
    %v1887 = vpack.c.b16 %v1855, %v1855
    %v1888 = vpack.c.b16 %v1856, %v1856
    %v1889 = vpack.c.b16 %v1857, %v1857
    %v1890 = vpack.c.b16 %v1858, %v1858
    %v1891 = vpack.c.b16 %v1859, %v1859
    %v1892 = vpack.c.b16 %v1860, %v1860
    %v1893 = vpack.c.b16 %v1861, %v1861
    %v1894 = vpack.c.b16 %v1862, %v1862
    %v1895 = vpack.c.b16 %v1863, %v1863
    %v1896 = vpack.c.b16 %v1864, %v1864
    %v1897 = vpack.c.b16 %v1865, %v1865
    %v1898 = vpack.c.b16 %v1866, %v1866
    %vm1899 = vsmask.f32 7424
    %v1901 = vshrl.u32 %v1771, 16
    %v1903 = vshll.u32 %v1771, 16
    %v1905 = vrot.slane %v1903, 1
    %v1906 = vor.u32 %v1901, %v1905
    %v1908 = vshll.u32 %v1867, 16
    %v1910 = vrot.slane %v1908, 1
    %v1911 = vsel %vm1899, %v1906, %v1910
    %v1913 = vshrl.u32 %v1772, 16
    %v1915 = vshll.u32 %v1772, 16
    %v1917 = vrot.slane %v1915, 1
    %v1918 = vor.u32 %v1913, %v1917
    %v1920 = vshll.u32 %v1868, 16
    %v1922 = vrot.slane %v1920, 1
    %v1923 = vsel %vm1899, %v1918, %v1922
    %v1925 = vshrl.u32 %v1773, 16
    %v1927 = vshll.u32 %v1773, 16
    %v1929 = vrot.slane %v1927, 1
    %v1930 = vor.u32 %v1925, %v1929
    %v1932 = vshll.u32 %v1869, 16
    %v1934 = vrot.slane %v1932, 1
    %v1935 = vsel %vm1899, %v1930, %v1934
    %v1937 = vshrl.u32 %v1774, 16
    %v1939 = vshll.u32 %v1774, 16
    %v1941 = vrot.slane %v1939, 1
    %v1942 = vor.u32 %v1937, %v1941
    %v1944 = vshll.u32 %v1870, 16
    %v1946 = vrot.slane %v1944, 1
    %v1947 = vsel %vm1899, %v1942, %v1946
    %v1949 = vshrl.u32 %v1775, 16
    %v1951 = vshll.u32 %v1775, 16
    %v1953 = vrot.slane %v1951, 1
    %v1954 = vor.u32 %v1949, %v1953
    %v1956 = vshll.u32 %v1871, 16
    %v1958 = vrot.slane %v1956, 1
    %v1959 = vsel %vm1899, %v1954, %v1958
    %v1961 = vshrl.u32 %v1776, 16
    %v1963 = vshll.u32 %v1776, 16
    %v1965 = vrot.slane %v1963, 1
    %v1966 = vor.u32 %v1961, %v1965
    %v1968 = vshll.u32 %v1872, 16
    %v1970 = vrot.slane %v1968, 1
    %v1971 = vsel %vm1899, %v1966, %v1970
    %v1973 = vshrl.u32 %v1777, 16
    %v1975 = vshll.u32 %v1777, 16
    %v1977 = vrot.slane %v1975, 1
    %v1978 = vor.u32 %v1973, %v1977
    %v1980 = vshll.u32 %v1873, 16
    %v1982 = vrot.slane %v1980, 1
    %v1983 = vsel %vm1899, %v1978, %v1982
    %v1985 = vshrl.u32 %v1778, 16
    %v1987 = vshll.u32 %v1778, 16
    %v1989 = vrot.slane %v1987, 1
    %v1990 = vor.u32 %v1985, %v1989
    %v1992 = vshll.u32 %v1874, 16
    %v1994 = vrot.slane %v1992, 1
    %v1995 = vsel %vm1899, %v1990, %v1994
    %v1997 = vshrl.u32 %v1779, 16
    %v1999 = vshll.u32 %v1779, 16
    %v2001 = vrot.slane %v1999, 1
    %v2002 = vor.u32 %v1997, %v2001
    %v2004 = vshll.u32 %v1875, 16
    %v2006 = vrot.slane %v2004, 1
    %v2007 = vsel %vm1899, %v2002, %v2006
    %v2009 = vshrl.u32 %v1780, 16
    %v2011 = vshll.u32 %v1780, 16
    %v2013 = vrot.slane %v2011, 1
    %v2014 = vor.u32 %v2009, %v2013
    %v2016 = vshll.u32 %v1876, 16
    %v2018 = vrot.slane %v2016, 1
    %v2019 = vsel %vm1899, %v2014, %v2018
    %v2021 = vshrl.u32 %v1781, 16
    %v2023 = vshll.u32 %v1781, 16
    %v2025 = vrot.slane %v2023, 1
    %v2026 = vor.u32 %v2021, %v2025
    %v2028 = vshll.u32 %v1877, 16
    %v2030 = vrot.slane %v2028, 1
    %v2031 = vsel %vm1899, %v2026, %v2030
    %v2033 = vshrl.u32 %v1782, 16
    %v2035 = vshll.u32 %v1782, 16
    %v2037 = vrot.slane %v2035, 1
    %v2038 = vor.u32 %v2033, %v2037
    %v2040 = vshll.u32 %v1878, 16
    %v2042 = vrot.slane %v2040, 1
    %v2043 = vsel %vm1899, %v2038, %v2042
    %v2045 = vshrl.u32 %v1783, 16
    %v2047 = vshll.u32 %v1783, 16
    %v2049 = vrot.slane %v2047, 1
    %v2050 = vor.u32 %v2045, %v2049
    %v2052 = vshll.u32 %v1879, 16
    %v2054 = vrot.slane %v2052, 1
    %v2055 = vsel %vm1899, %v2050, %v2054
    %v2057 = vshrl.u32 %v1784, 16
    %v2059 = vshll.u32 %v1784, 16
    %v2061 = vrot.slane %v2059, 1
    %v2062 = vor.u32 %v2057, %v2061
    %v2064 = vshll.u32 %v1880, 16
    %v2066 = vrot.slane %v2064, 1
    %v2067 = vsel %vm1899, %v2062, %v2066
    %v2069 = vshrl.u32 %v1785, 16
    %v2071 = vshll.u32 %v1785, 16
    %v2073 = vrot.slane %v2071, 1
    %v2074 = vor.u32 %v2069, %v2073
    %v2076 = vshll.u32 %v1881, 16
    %v2078 = vrot.slane %v2076, 1
    %v2079 = vsel %vm1899, %v2074, %v2078
    %v2081 = vshrl.u32 %v1786, 16
    %v2083 = vshll.u32 %v1786, 16
    %v2085 = vrot.slane %v2083, 1
    %v2086 = vor.u32 %v2081, %v2085
    %v2088 = vshll.u32 %v1882, 16
    %v2090 = vrot.slane %v2088, 1
    %v2091 = vsel %vm1899, %v2086, %v2090
    %v2093 = vshrl.u32 %v1787, 16
    %v2095 = vshll.u32 %v1787, 16
    %v2097 = vrot.slane %v2095, 1
    %v2098 = vor.u32 %v2093, %v2097
    %v2100 = vshll.u32 %v1883, 16
    %v2102 = vrot.slane %v2100, 1
    %v2103 = vsel %vm1899, %v2098, %v2102
    %v2105 = vshrl.u32 %v1788, 16
    %v2107 = vshll.u32 %v1788, 16
    %v2109 = vrot.slane %v2107, 1
    %v2110 = vor.u32 %v2105, %v2109
    %v2112 = vshll.u32 %v1884, 16
    %v2114 = vrot.slane %v2112, 1
    %v2115 = vsel %vm1899, %v2110, %v2114
    %v2117 = vshrl.u32 %v1789, 16
    %v2119 = vshll.u32 %v1789, 16
    %v2121 = vrot.slane %v2119, 1
    %v2122 = vor.u32 %v2117, %v2121
    %v2124 = vshll.u32 %v1885, 16
    %v2126 = vrot.slane %v2124, 1
    %v2127 = vsel %vm1899, %v2122, %v2126
    %v2129 = vshrl.u32 %v1790, 16
    %v2131 = vshll.u32 %v1790, 16
    %v2133 = vrot.slane %v2131, 1
    %v2134 = vor.u32 %v2129, %v2133
    %v2136 = vshll.u32 %v1886, 16
    %v2138 = vrot.slane %v2136, 1
    %v2139 = vsel %vm1899, %v2134, %v2138
    %v2141 = vshrl.u32 %v1791, 16
    %v2143 = vshll.u32 %v1791, 16
    %v2145 = vrot.slane %v2143, 1
    %v2146 = vor.u32 %v2141, %v2145
    %v2148 = vshll.u32 %v1887, 16
    %v2150 = vrot.slane %v2148, 1
    %v2151 = vsel %vm1899, %v2146, %v2150
    %v2153 = vshrl.u32 %v1792, 16
    %v2155 = vshll.u32 %v1792, 16
    %v2157 = vrot.slane %v2155, 1
    %v2158 = vor.u32 %v2153, %v2157
    %v2160 = vshll.u32 %v1888, 16
    %v2162 = vrot.slane %v2160, 1
    %v2163 = vsel %vm1899, %v2158, %v2162
    %v2165 = vshrl.u32 %v1793, 16
    %v2167 = vshll.u32 %v1793, 16
    %v2169 = vrot.slane %v2167, 1
    %v2170 = vor.u32 %v2165, %v2169
    %v2172 = vshll.u32 %v1889, 16
    %v2174 = vrot.slane %v2172, 1
    %v2175 = vsel %vm1899, %v2170, %v2174
    %v2177 = vshrl.u32 %v1794, 16
    %v2179 = vshll.u32 %v1794, 16
    %v2181 = vrot.slane %v2179, 1
    %v2182 = vor.u32 %v2177, %v2181
    %v2184 = vshll.u32 %v1890, 16
    %v2186 = vrot.slane %v2184, 1
    %v2187 = vsel %vm1899, %v2182, %v2186
    %v2189 = vshrl.u32 %v1795, 16
    %v2191 = vshll.u32 %v1795, 16
    %v2193 = vrot.slane %v2191, 1
    %v2194 = vor.u32 %v2189, %v2193
    %v2196 = vshll.u32 %v1891, 16
    %v2198 = vrot.slane %v2196, 1
    %v2199 = vsel %vm1899, %v2194, %v2198
    %v2201 = vshrl.u32 %v1796, 16
    %v2203 = vshll.u32 %v1796, 16
    %v2205 = vrot.slane %v2203, 1
    %v2206 = vor.u32 %v2201, %v2205
    %v2208 = vshll.u32 %v1892, 16
    %v2210 = vrot.slane %v2208, 1
    %v2211 = vsel %vm1899, %v2206, %v2210
    %v2213 = vshrl.u32 %v1797, 16
    %v2215 = vshll.u32 %v1797, 16
    %v2217 = vrot.slane %v2215, 1
    %v2218 = vor.u32 %v2213, %v2217
    %v2220 = vshll.u32 %v1893, 16
    %v2222 = vrot.slane %v2220, 1
    %v2223 = vsel %vm1899, %v2218, %v2222
    %v2225 = vshrl.u32 %v1798, 16
    %v2227 = vshll.u32 %v1798, 16
    %v2229 = vrot.slane %v2227, 1
    %v2230 = vor.u32 %v2225, %v2229
    %v2232 = vshll.u32 %v1894, 16
    %v2234 = vrot.slane %v2232, 1
    %v2235 = vsel %vm1899, %v2230, %v2234
    %v2237 = vshrl.u32 %v1799, 16
    %v2239 = vshll.u32 %v1799, 16
    %v2241 = vrot.slane %v2239, 1
    %v2242 = vor.u32 %v2237, %v2241
    %v2244 = vshll.u32 %v1895, 16
    %v2246 = vrot.slane %v2244, 1
    %v2247 = vsel %vm1899, %v2242, %v2246
    %v2249 = vshrl.u32 %v1800, 16
    %v2251 = vshll.u32 %v1800, 16
    %v2253 = vrot.slane %v2251, 1
    %v2254 = vor.u32 %v2249, %v2253
    %v2256 = vshll.u32 %v1896, 16
    %v2258 = vrot.slane %v2256, 1
    %v2259 = vsel %vm1899, %v2254, %v2258
    %v2261 = vshrl.u32 %v1801, 16
    %v2263 = vshll.u32 %v1801, 16
    %v2265 = vrot.slane %v2263, 1
    %v2266 = vor.u32 %v2261, %v2265
    %v2268 = vshll.u32 %v1897, 16
    %v2270 = vrot.slane %v2268, 1
    %v2271 = vsel %vm1899, %v2266, %v2270
    %v2273 = vshrl.u32 %v1802, 16
    %v2275 = vshll.u32 %v1802, 16
    %v2277 = vrot.slane %v2275, 1
    %v2278 = vor.u32 %v2273, %v2277
    %v2280 = vshll.u32 %v1898, 16
    %v2282 = vrot.slane %v2280, 1
    %v2283 = vsel %vm1899, %v2278, %v2282
    %2284 = vrot.lane.b32.xlu0 %v1911, 8
    %v2285 = vpop.permute.xlu0 %2284
    %2286 = vrot.lane.b32.xlu0 %v1923, 8
    %v2287 = vpop.permute.xlu0 %2286
    %2288 = vrot.lane.b32.xlu0 %v1935, 8
    %v2289 = vpop.permute.xlu0 %2288
    %2290 = vrot.lane.b32.xlu0 %v1947, 8
    %v2291 = vpop.permute.xlu0 %2290
    %2292 = vrot.lane.b32.xlu0 %v1959, 8
    %v2293 = vpop.permute.xlu0 %2292
    %2294 = vrot.lane.b32.xlu0 %v1971, 8
    %v2295 = vpop.permute.xlu0 %2294
    %2296 = vrot.lane.b32.xlu0 %v1983, 8
    %v2297 = vpop.permute.xlu0 %2296
    %2298 = vrot.lane.b32.xlu0 %v1995, 8
    %v2299 = vpop.permute.xlu0 %2298
    %2300 = vrot.lane.b32.xlu0 %v2007, 8
    %v2301 = vpop.permute.xlu0 %2300
    %2302 = vrot.lane.b32.xlu0 %v2019, 8
    %v2303 = vpop.permute.xlu0 %2302
    %2304 = vrot.lane.b32.xlu0 %v2031, 8
    %v2305 = vpop.permute.xlu0 %2304
    %2306 = vrot.lane.b32.xlu0 %v2043, 8
    %v2307 = vpop.permute.xlu0 %2306
    %2308 = vrot.lane.b32.xlu0 %v2055, 8
    %v2309 = vpop.permute.xlu0 %2308
    %2310 = vrot.lane.b32.xlu0 %v2067, 8
    %v2311 = vpop.permute.xlu0 %2310
    %2312 = vrot.lane.b32.xlu0 %v2079, 8
    %v2313 = vpop.permute.xlu0 %2312
    %2314 = vrot.lane.b32.xlu0 %v2091, 8
    %v2315 = vpop.permute.xlu0 %2314
    %2316 = vrot.lane.b32.xlu0 %v2103, 8
    %v2317 = vpop.permute.xlu0 %2316
    %2318 = vrot.lane.b32.xlu0 %v2115, 8
    %v2319 = vpop.permute.xlu0 %2318
    %2320 = vrot.lane.b32.xlu0 %v2127, 8
    %v2321 = vpop.permute.xlu0 %2320
    %2322 = vrot.lane.b32.xlu0 %v2139, 8
    %v2323 = vpop.permute.xlu0 %2322
    %2324 = vrot.lane.b32.xlu0 %v2151, 8
    %v2325 = vpop.permute.xlu0 %2324
    %2326 = vrot.lane.b32.xlu0 %v2163, 8
    %v2327 = vpop.permute.xlu0 %2326
    %2328 = vrot.lane.b32.xlu0 %v2175, 8
    %v2329 = vpop.permute.xlu0 %2328
    %2330 = vrot.lane.b32.xlu0 %v2187, 8
    %v2331 = vpop.permute.xlu0 %2330
    %2332 = vrot.lane.b32.xlu0 %v2199, 8
    %v2333 = vpop.permute.xlu0 %2332
    %2334 = vrot.lane.b32.xlu0 %v2211, 8
    %v2335 = vpop.permute.xlu0 %2334
    %2336 = vrot.lane.b32.xlu0 %v2223, 8
    %v2337 = vpop.permute.xlu0 %2336
    %2338 = vrot.lane.b32.xlu0 %v2235, 8
    %v2339 = vpop.permute.xlu0 %2338
    %2340 = vrot.lane.b32.xlu0 %v2247, 8
    %v2341 = vpop.permute.xlu0 %2340
    %2342 = vrot.lane.b32.xlu0 %v2259, 8
    %v2343 = vpop.permute.xlu0 %2342
    %2344 = vrot.lane.b32.xlu0 %v2271, 8
    %v2345 = vpop.permute.xlu0 %2344
    %2346 = vrot.lane.b32.xlu0 %v2283, 8
    %v2347 = vpop.permute.xlu0 %2346
    %v2380 = vunpack.c.l.b16 %v1354
    %v2381 = vunpack.c.l.b16 %v1355
    %v2382 = vunpack.c.l.b16 %v1356
    %v2383 = vunpack.c.l.b16 %v1357
    %v2384 = vunpack.c.l.b16 %v1358
    %v2385 = vunpack.c.l.b16 %v1359
    %v2386 = vunpack.c.l.b16 %v1360
    %v2387 = vunpack.c.l.b16 %v1361
    %v2388 = vunpack.c.l.b16 %v1362
    %v2389 = vunpack.c.l.b16 %v1363
    %v2390 = vunpack.c.l.b16 %v1364
    %v2391 = vunpack.c.l.b16 %v1365
    %v2392 = vunpack.c.l.b16 %v1366
    %v2393 = vunpack.c.l.b16 %v1367
    %v2394 = vunpack.c.l.b16 %v1368
    %v2395 = vunpack.c.l.b16 %v1369
    %v2396 = vunpack.c.l.b16 %v1370
    %v2397 = vunpack.c.l.b16 %v1371
    %v2398 = vunpack.c.l.b16 %v1372
    %v2399 = vunpack.c.l.b16 %v1373
    %v2400 = vunpack.c.l.b16 %v1374
    %v2401 = vunpack.c.l.b16 %v1375
    %v2402 = vunpack.c.l.b16 %v1376
    %v2403 = vunpack.c.l.b16 %v1377
    %v2404 = vunpack.c.l.b16 %v1378
    %v2405 = vunpack.c.l.b16 %v1379
    %v2406 = vunpack.c.l.b16 %v1380
    %v2407 = vunpack.c.l.b16 %v1381
    %v2408 = vunpack.c.l.b16 %v1382
    %v2409 = vunpack.c.l.b16 %v1383
    %v2410 = vunpack.c.l.b16 %v1384
    %v2411 = vunpack.c.l.b16 %v1385
    %v2412 = vpack.c.b16 %v1708, %v2380
    %v2413 = vpack.c.b16 %v1710, %v2381
    %v2414 = vpack.c.b16 %v1712, %v2382
    %v2415 = vpack.c.b16 %v1714, %v2383
    %v2416 = vpack.c.b16 %v1716, %v2384
    %v2417 = vpack.c.b16 %v1718, %v2385
    %v2418 = vpack.c.b16 %v1720, %v2386
    %v2419 = vpack.c.b16 %v1722, %v2387
    %v2420 = vpack.c.b16 %v1724, %v2388
    %v2421 = vpack.c.b16 %v1726, %v2389
    %v2422 = vpack.c.b16 %v1728, %v2390
    %v2423 = vpack.c.b16 %v1730, %v2391
    %v2424 = vpack.c.b16 %v1732, %v2392
    %v2425 = vpack.c.b16 %v1734, %v2393
    %v2426 = vpack.c.b16 %v1736, %v2394
    %v2427 = vpack.c.b16 %v1738, %v2395
    %v2428 = vpack.c.b16 %v1740, %v2396
    %v2429 = vpack.c.b16 %v1742, %v2397
    %v2430 = vpack.c.b16 %v1744, %v2398
    %v2431 = vpack.c.b16 %v1746, %v2399
    %v2432 = vpack.c.b16 %v1748, %v2400
    %v2433 = vpack.c.b16 %v1750, %v2401
    %v2434 = vpack.c.b16 %v1752, %v2402
    %v2435 = vpack.c.b16 %v1754, %v2403
    %v2436 = vpack.c.b16 %v1756, %v2404
    %v2437 = vpack.c.b16 %v1758, %v2405
    %v2438 = vpack.c.b16 %v1760, %v2406
    %v2439 = vpack.c.b16 %v1762, %v2407
    %v2440 = vpack.c.b16 %v1764, %v2408
    %v2441 = vpack.c.b16 %v1766, %v2409
    %v2442 = vpack.c.b16 %v1768, %v2410
    %v2443 = vpack.c.b16 %v1770, %v2411
    %vm2444 = vcmask 1046528
    %v2445 = vrot.slane %v2412, 1
    %v2446 = vrot.slane %v1867, 1
    %v2447 = vsel %vm2444, %v2445, %v2446
    %v2448 = vrot.slane %v2413, 1
    %v2449 = vrot.slane %v1868, 1
    %v2450 = vsel %vm2444, %v2448, %v2449
    %v2451 = vrot.slane %v2414, 1
    %v2452 = vrot.slane %v1869, 1
    %v2453 = vsel %vm2444, %v2451, %v2452
    %v2454 = vrot.slane %v2415, 1
    %v2455 = vrot.slane %v1870, 1
    %v2456 = vsel %vm2444, %v2454, %v2455
    %v2457 = vrot.slane %v2416, 1
    %v2458 = vrot.slane %v1871, 1
    %v2459 = vsel %vm2444, %v2457, %v2458
    %v2460 = vrot.slane %v2417, 1
    %v2461 = vrot.slane %v1872, 1
    %v2462 = vsel %vm2444, %v2460, %v2461
    %v2463 = vrot.slane %v2418, 1
    %v2464 = vrot.slane %v1873, 1
    %v2465 = vsel %vm2444, %v2463, %v2464
    %v2466 = vrot.slane %v2419, 1
    %v2467 = vrot.slane %v1874, 1
    %v2468 = vsel %vm2444, %v2466, %v2467
    %v2469 = vrot.slane %v2420, 1
    %v2470 = vrot.slane %v1875, 1
    %v2471 = vsel %vm2444, %v2469, %v2470
    %v2472 = vrot.slane %v2421, 1
    %v2473 = vrot.slane %v1876, 1
    %v2474 = vsel %vm2444, %v2472, %v2473
    %v2475 = vrot.slane %v2422, 1
    %v2476 = vrot.slane %v1877, 1
    %v2477 = vsel %vm2444, %v2475, %v2476
    %v2478 = vrot.slane %v2423, 1
    %v2479 = vrot.slane %v1878, 1
    %v2480 = vsel %vm2444, %v2478, %v2479
    %v2481 = vrot.slane %v2424, 1
    %v2482 = vrot.slane %v1879, 1
    %v2483 = vsel %vm2444, %v2481, %v2482
    %v2484 = vrot.slane %v2425, 1
    %v2485 = vrot.slane %v1880, 1
    %v2486 = vsel %vm2444, %v2484, %v2485
    %v2487 = vrot.slane %v2426, 1
    %v2488 = vrot.slane %v1881, 1
    %v2489 = vsel %vm2444, %v2487, %v2488
    %v2490 = vrot.slane %v2427, 1
    %v2491 = vrot.slane %v1882, 1
    %v2492 = vsel %vm2444, %v2490, %v2491
    %v2493 = vrot.slane %v2428, 1
    %v2494 = vrot.slane %v1883, 1
    %v2495 = vsel %vm2444, %v2493, %v2494
    %v2496 = vrot.slane %v2429, 1
    %v2497 = vrot.slane %v1884, 1
    %v2498 = vsel %vm2444, %v2496, %v2497
    %v2499 = vrot.slane %v2430, 1
    %v2500 = vrot.slane %v1885, 1
    %v2501 = vsel %vm2444, %v2499, %v2500
    %v2502 = vrot.slane %v2431, 1
    %v2503 = vrot.slane %v1886, 1
    %v2504 = vsel %vm2444, %v2502, %v2503
    %v2505 = vrot.slane %v2432, 1
    %v2506 = vrot.slane %v1887, 1
    %v2507 = vsel %vm2444, %v2505, %v2506
    %v2508 = vrot.slane %v2433, 1
    %v2509 = vrot.slane %v1888, 1
    %v2510 = vsel %vm2444, %v2508, %v2509
    %v2511 = vrot.slane %v2434, 1
    %v2512 = vrot.slane %v1889, 1
    %v2513 = vsel %vm2444, %v2511, %v2512
    %v2514 = vrot.slane %v2435, 1
    %v2515 = vrot.slane %v1890, 1
    %v2516 = vsel %vm2444, %v2514, %v2515
    %v2517 = vrot.slane %v2436, 1
    %v2518 = vrot.slane %v1891, 1
    %v2519 = vsel %vm2444, %v2517, %v2518
    %v2520 = vrot.slane %v2437, 1
    %v2521 = vrot.slane %v1892, 1
    %v2522 = vsel %vm2444, %v2520, %v2521
    %v2523 = vrot.slane %v2438, 1
    %v2524 = vrot.slane %v1893, 1
    %v2525 = vsel %vm2444, %v2523, %v2524
    %v2526 = vrot.slane %v2439, 1
    %v2527 = vrot.slane %v1894, 1
    %v2528 = vsel %vm2444, %v2526, %v2527
    %v2529 = vrot.slane %v2440, 1
    %v2530 = vrot.slane %v1895, 1
    %v2531 = vsel %vm2444, %v2529, %v2530
    %v2532 = vrot.slane %v2441, 1
    %v2533 = vrot.slane %v1896, 1
    %v2534 = vsel %vm2444, %v2532, %v2533
    %v2535 = vrot.slane %v2442, 1
    %v2536 = vrot.slane %v1897, 1
    %v2537 = vsel %vm2444, %v2535, %v2536
    %v2538 = vrot.slane %v2443, 1
    %v2539 = vrot.slane %v1898, 1
    %v2540 = vsel %vm2444, %v2538, %v2539
    %2541 = vrot.lane.b32.xlu0 %v2447, 16
    %v2542 = vpop.permute.xlu0 %2541
    %2543 = vrot.lane.b32.xlu0 %v2450, 16
    %v2544 = vpop.permute.xlu0 %2543
    %2545 = vrot.lane.b32.xlu0 %v2453, 16
    %v2546 = vpop.permute.xlu0 %2545
    %2547 = vrot.lane.b32.xlu0 %v2456, 16
    %v2548 = vpop.permute.xlu0 %2547
    %2549 = vrot.lane.b32.xlu0 %v2459, 16
    %v2550 = vpop.permute.xlu0 %2549
    %2551 = vrot.lane.b32.xlu0 %v2462, 16
    %v2552 = vpop.permute.xlu0 %2551
    %2553 = vrot.lane.b32.xlu0 %v2465, 16
    %v2554 = vpop.permute.xlu0 %2553
    %2555 = vrot.lane.b32.xlu0 %v2468, 16
    %v2556 = vpop.permute.xlu0 %2555
    %2557 = vrot.lane.b32.xlu0 %v2471, 16
    %v2558 = vpop.permute.xlu0 %2557
    %2559 = vrot.lane.b32.xlu0 %v2474, 16
    %v2560 = vpop.permute.xlu0 %2559
    %2561 = vrot.lane.b32.xlu0 %v2477, 16
    %v2562 = vpop.permute.xlu0 %2561
    %2563 = vrot.lane.b32.xlu0 %v2480, 16
    %v2564 = vpop.permute.xlu0 %2563
    %2565 = vrot.lane.b32.xlu0 %v2483, 16
    %v2566 = vpop.permute.xlu0 %2565
    %2567 = vrot.lane.b32.xlu0 %v2486, 16
    %v2568 = vpop.permute.xlu0 %2567
    %2569 = vrot.lane.b32.xlu0 %v2489, 16
    %v2570 = vpop.permute.xlu0 %2569
    %2571 = vrot.lane.b32.xlu0 %v2492, 16
    %v2572 = vpop.permute.xlu0 %2571
    %2573 = vrot.lane.b32.xlu0 %v2495, 16
    %v2574 = vpop.permute.xlu0 %2573
    %2575 = vrot.lane.b32.xlu0 %v2498, 16
    %v2576 = vpop.permute.xlu0 %2575
    %2577 = vrot.lane.b32.xlu0 %v2501, 16
    %v2578 = vpop.permute.xlu0 %2577
    %2579 = vrot.lane.b32.xlu0 %v2504, 16
    %v2580 = vpop.permute.xlu0 %2579
    %2581 = vrot.lane.b32.xlu0 %v2507, 16
    %v2582 = vpop.permute.xlu0 %2581
    %2583 = vrot.lane.b32.xlu0 %v2510, 16
    %v2584 = vpop.permute.xlu0 %2583
    %2585 = vrot.lane.b32.xlu0 %v2513, 16
    %v2586 = vpop.permute.xlu0 %2585
    %2587 = vrot.lane.b32.xlu0 %v2516, 16
    %v2588 = vpop.permute.xlu0 %2587
    %2589 = vrot.lane.b32.xlu0 %v2519, 16
    %v2590 = vpop.permute.xlu0 %2589
    %2591 = vrot.lane.b32.xlu0 %v2522, 16
    %v2592 = vpop.permute.xlu0 %2591
    %2593 = vrot.lane.b32.xlu0 %v2525, 16
    %v2594 = vpop.permute.xlu0 %2593
    %2595 = vrot.lane.b32.xlu0 %v2528, 16
    %v2596 = vpop.permute.xlu0 %2595
    %2597 = vrot.lane.b32.xlu0 %v2531, 16
    %v2598 = vpop.permute.xlu0 %2597
    %2599 = vrot.lane.b32.xlu0 %v2534, 16
    %v2600 = vpop.permute.xlu0 %2599
    %2601 = vrot.lane.b32.xlu0 %v2537, 16
    %v2602 = vpop.permute.xlu0 %2601
    %2603 = vrot.lane.b32.xlu0 %v2540, 16
    %v2604 = vpop.permute.xlu0 %2603
    %v2669 = vunpack.c.l.b16 %v1386
    %v2670 = vunpack.c.l.b16 %v1387
    %v2671 = vunpack.c.l.b16 %v1388
    %v2672 = vunpack.c.l.b16 %v1389
    %v2673 = vunpack.c.l.b16 %v1390
    %v2674 = vunpack.c.l.b16 %v1391
    %v2675 = vunpack.c.l.b16 %v1392
    %v2676 = vunpack.c.l.b16 %v1393
    %v2677 = vunpack.c.l.b16 %v1394
    %v2678 = vunpack.c.l.b16 %v1395
    %v2679 = vunpack.c.l.b16 %v1396
    %v2680 = vunpack.c.l.b16 %v1397
    %v2681 = vunpack.c.l.b16 %v1398
    %v2682 = vunpack.c.l.b16 %v1399
    %v2683 = vunpack.c.l.b16 %v1400
    %v2684 = vunpack.c.l.b16 %v1401
    %v2685 = vunpack.c.l.b16 %v1402
    %v2686 = vunpack.c.l.b16 %v1403
    %v2687 = vunpack.c.l.b16 %v1404
    %v2688 = vunpack.c.l.b16 %v1405
    %v2689 = vunpack.c.l.b16 %v1406
    %v2690 = vunpack.c.l.b16 %v1407
    %v2691 = vunpack.c.l.b16 %v1408
    %v2692 = vunpack.c.l.b16 %v1409
    %v2693 = vunpack.c.l.b16 %v1410
    %v2694 = vunpack.c.l.b16 %v1411
    %v2695 = vunpack.c.l.b16 %v1412
    %v2696 = vunpack.c.l.b16 %v1413
    %v2697 = vunpack.c.l.b16 %v1414
    %v2698 = vunpack.c.l.b16 %v1415
    %v2699 = vunpack.c.l.b16 %v1416
    %v2700 = vunpack.c.l.b16 %v1417
    %v2701 = vunpack.c.l.b16 %v1418
    %v2702 = vunpack.c.l.b16 %v1419
    %v2703 = vunpack.c.l.b16 %v1420
    %v2704 = vunpack.c.l.b16 %v1421
    %v2705 = vunpack.c.l.b16 %v1422
    %v2706 = vunpack.c.l.b16 %v1423
    %v2707 = vunpack.c.l.b16 %v1424
    %v2708 = vunpack.c.l.b16 %v1425
    %v2709 = vunpack.c.l.b16 %v1426
    %v2710 = vunpack.c.l.b16 %v1427
    %v2711 = vunpack.c.l.b16 %v1428
    %v2712 = vunpack.c.l.b16 %v1429
    %v2713 = vunpack.c.l.b16 %v1430
    %v2714 = vunpack.c.l.b16 %v1431
    %v2715 = vunpack.c.l.b16 %v1432
    %v2716 = vunpack.c.l.b16 %v1433
    %v2717 = vunpack.c.l.b16 %v1434
    %v2718 = vunpack.c.l.b16 %v1435
    %v2719 = vunpack.c.l.b16 %v1436
    %v2720 = vunpack.c.l.b16 %v1437
    %v2721 = vunpack.c.l.b16 %v1438
    %v2722 = vunpack.c.l.b16 %v1439
    %v2723 = vunpack.c.l.b16 %v1440
    %v2724 = vunpack.c.l.b16 %v1441
    %v2725 = vunpack.c.l.b16 %v1442
    %v2726 = vunpack.c.l.b16 %v1443
    %v2727 = vunpack.c.l.b16 %v1444
    %v2728 = vunpack.c.l.b16 %v1445
    %v2729 = vunpack.c.l.b16 %v1446
    %v2730 = vunpack.c.l.b16 %v1447
    %v2731 = vunpack.c.l.b16 %v1448
    %v2732 = vunpack.c.l.b16 %v1449
    %v2733 = vpack.c.b16 %v2670, %v2669
    %v2734 = vpack.c.b16 %v2672, %v2671
    %v2735 = vpack.c.b16 %v2674, %v2673
    %v2736 = vpack.c.b16 %v2676, %v2675
    %v2737 = vpack.c.b16 %v2678, %v2677
    %v2738 = vpack.c.b16 %v2680, %v2679
    %v2739 = vpack.c.b16 %v2682, %v2681
    %v2740 = vpack.c.b16 %v2684, %v2683
    %v2741 = vpack.c.b16 %v2686, %v2685
    %v2742 = vpack.c.b16 %v2688, %v2687
    %v2743 = vpack.c.b16 %v2690, %v2689
    %v2744 = vpack.c.b16 %v2692, %v2691
    %v2745 = vpack.c.b16 %v2694, %v2693
    %v2746 = vpack.c.b16 %v2696, %v2695
    %v2747 = vpack.c.b16 %v2698, %v2697
    %v2748 = vpack.c.b16 %v2700, %v2699
    %v2749 = vpack.c.b16 %v2702, %v2701
    %v2750 = vpack.c.b16 %v2704, %v2703
    %v2751 = vpack.c.b16 %v2706, %v2705
    %v2752 = vpack.c.b16 %v2708, %v2707
    %v2753 = vpack.c.b16 %v2710, %v2709
    %v2754 = vpack.c.b16 %v2712, %v2711
    %v2755 = vpack.c.b16 %v2714, %v2713
    %v2756 = vpack.c.b16 %v2716, %v2715
    %v2757 = vpack.c.b16 %v2718, %v2717
    %v2758 = vpack.c.b16 %v2720, %v2719
    %v2759 = vpack.c.b16 %v2722, %v2721
    %v2760 = vpack.c.b16 %v2724, %v2723
    %v2761 = vpack.c.b16 %v2726, %v2725
    %v2762 = vpack.c.b16 %v2728, %v2727
    %v2763 = vpack.c.b16 %v2730, %v2729
    %v2764 = vpack.c.b16 %v2732, %v2731
    %2765 = vrot.lane.b32.xlu0 %v2733, 24
    %v2766 = vpop.permute.xlu0 %2765
    %2767 = vrot.lane.b32.xlu0 %v2734, 24
    %v2768 = vpop.permute.xlu0 %2767
    %2769 = vrot.lane.b32.xlu0 %v2735, 24
    %v2770 = vpop.permute.xlu0 %2769
    %2771 = vrot.lane.b32.xlu0 %v2736, 24
    %v2772 = vpop.permute.xlu0 %2771
    %2773 = vrot.lane.b32.xlu0 %v2737, 24
    %v2774 = vpop.permute.xlu0 %2773
    %2775 = vrot.lane.b32.xlu0 %v2738, 24
    %v2776 = vpop.permute.xlu0 %2775
    %2777 = vrot.lane.b32.xlu0 %v2739, 24
    %v2778 = vpop.permute.xlu0 %2777
    %2779 = vrot.lane.b32.xlu0 %v2740, 24
    %v2780 = vpop.permute.xlu0 %2779
    %2781 = vrot.lane.b32.xlu0 %v2741, 24
    %v2782 = vpop.permute.xlu0 %2781
    %2783 = vrot.lane.b32.xlu0 %v2742, 24
    %v2784 = vpop.permute.xlu0 %2783
    %2785 = vrot.lane.b32.xlu0 %v2743, 24
    %v2786 = vpop.permute.xlu0 %2785
    %2787 = vrot.lane.b32.xlu0 %v2744, 24
    %v2788 = vpop.permute.xlu0 %2787
    %2789 = vrot.lane.b32.xlu0 %v2745, 24
    %v2790 = vpop.permute.xlu0 %2789
    %2791 = vrot.lane.b32.xlu0 %v2746, 24
    %v2792 = vpop.permute.xlu0 %2791
    %2793 = vrot.lane.b32.xlu0 %v2747, 24
    %v2794 = vpop.permute.xlu0 %2793
    %2795 = vrot.lane.b32.xlu0 %v2748, 24
    %v2796 = vpop.permute.xlu0 %2795
    %2797 = vrot.lane.b32.xlu0 %v2749, 24
    %v2798 = vpop.permute.xlu0 %2797
    %2799 = vrot.lane.b32.xlu0 %v2750, 24
    %v2800 = vpop.permute.xlu0 %2799
    %2801 = vrot.lane.b32.xlu0 %v2751, 24
    %v2802 = vpop.permute.xlu0 %2801
    %2803 = vrot.lane.b32.xlu0 %v2752, 24
    %v2804 = vpop.permute.xlu0 %2803
    %2805 = vrot.lane.b32.xlu0 %v2753, 24
    %v2806 = vpop.permute.xlu0 %2805
    %2807 = vrot.lane.b32.xlu0 %v2754, 24
    %v2808 = vpop.permute.xlu0 %2807
    %2809 = vrot.lane.b32.xlu0 %v2755, 24
    %v2810 = vpop.permute.xlu0 %2809
    %2811 = vrot.lane.b32.xlu0 %v2756, 24
    %v2812 = vpop.permute.xlu0 %2811
    %2813 = vrot.lane.b32.xlu0 %v2757, 24
    %v2814 = vpop.permute.xlu0 %2813
    %2815 = vrot.lane.b32.xlu0 %v2758, 24
    %v2816 = vpop.permute.xlu0 %2815
    %2817 = vrot.lane.b32.xlu0 %v2759, 24
    %v2818 = vpop.permute.xlu0 %2817
    %2819 = vrot.lane.b32.xlu0 %v2760, 24
    %v2820 = vpop.permute.xlu0 %2819
    %2821 = vrot.lane.b32.xlu0 %v2761, 24
    %v2822 = vpop.permute.xlu0 %2821
    %2823 = vrot.lane.b32.xlu0 %v2762, 24
    %v2824 = vpop.permute.xlu0 %2823
    %2825 = vrot.lane.b32.xlu0 %v2763, 24
    %v2826 = vpop.permute.xlu0 %2825
    %2827 = vrot.lane.b32.xlu0 %v2764, 24
    %v2828 = vpop.permute.xlu0 %2827
    %v2861 = vunpack.c.l.b16 %v1450
    %v2862 = vunpack.c.l.b16 %v1451
    %v2863 = vunpack.c.l.b16 %v1452
    %v2864 = vunpack.c.l.b16 %v1453
    %v2865 = vunpack.c.l.b16 %v1454
    %v2866 = vunpack.c.l.b16 %v1455
    %v2867 = vunpack.c.l.b16 %v1456
    %v2868 = vunpack.c.l.b16 %v1457
    %v2869 = vunpack.c.l.b16 %v1458
    %v2870 = vunpack.c.l.b16 %v1459
    %v2871 = vunpack.c.l.b16 %v1460
    %v2872 = vunpack.c.l.b16 %v1461
    %v2873 = vunpack.c.l.b16 %v1462
    %v2874 = vunpack.c.l.b16 %v1463
    %v2875 = vunpack.c.l.b16 %v1464
    %v2876 = vunpack.c.l.b16 %v1465
    %v2877 = vunpack.c.l.b16 %v1466
    %v2878 = vunpack.c.l.b16 %v1467
    %v2879 = vunpack.c.l.b16 %v1468
    %v2880 = vunpack.c.l.b16 %v1469
    %v2881 = vunpack.c.l.b16 %v1470
    %v2882 = vunpack.c.l.b16 %v1471
    %v2883 = vunpack.c.l.b16 %v1472
    %v2884 = vunpack.c.l.b16 %v1473
    %v2885 = vunpack.c.l.b16 %v1474
    %v2886 = vunpack.c.l.b16 %v1475
    %v2887 = vunpack.c.l.b16 %v1476
    %v2888 = vunpack.c.l.b16 %v1477
    %v2889 = vunpack.c.l.b16 %v1478
    %v2890 = vunpack.c.l.b16 %v1479
    %v2891 = vunpack.c.l.b16 %v1480
    %v2892 = vunpack.c.l.b16 %v1481
    %v2893 = vpack.c.b16 %v2861, %v2861
    %v2894 = vpack.c.b16 %v2862, %v2862
    %v2895 = vpack.c.b16 %v2863, %v2863
    %v2896 = vpack.c.b16 %v2864, %v2864
    %v2897 = vpack.c.b16 %v2865, %v2865
    %v2898 = vpack.c.b16 %v2866, %v2866
    %v2899 = vpack.c.b16 %v2867, %v2867
    %v2900 = vpack.c.b16 %v2868, %v2868
    %v2901 = vpack.c.b16 %v2869, %v2869
    %v2902 = vpack.c.b16 %v2870, %v2870
    %v2903 = vpack.c.b16 %v2871, %v2871
    %v2904 = vpack.c.b16 %v2872, %v2872
    %v2905 = vpack.c.b16 %v2873, %v2873
    %v2906 = vpack.c.b16 %v2874, %v2874
    %v2907 = vpack.c.b16 %v2875, %v2875
    %v2908 = vpack.c.b16 %v2876, %v2876
    %v2909 = vpack.c.b16 %v2877, %v2877
    %v2910 = vpack.c.b16 %v2878, %v2878
    %v2911 = vpack.c.b16 %v2879, %v2879
    %v2912 = vpack.c.b16 %v2880, %v2880
    %v2913 = vpack.c.b16 %v2881, %v2881
    %v2914 = vpack.c.b16 %v2882, %v2882
    %v2915 = vpack.c.b16 %v2883, %v2883
    %v2916 = vpack.c.b16 %v2884, %v2884
    %v2917 = vpack.c.b16 %v2885, %v2885
    %v2918 = vpack.c.b16 %v2886, %v2886
    %v2919 = vpack.c.b16 %v2887, %v2887
    %v2920 = vpack.c.b16 %v2888, %v2888
    %v2921 = vpack.c.b16 %v2889, %v2889
    %v2922 = vpack.c.b16 %v2890, %v2890
    %v2923 = vpack.c.b16 %v2891, %v2891
    %v2924 = vpack.c.b16 %v2892, %v2892
    %v2926 = vshrl.u32 %v2733, 16
    %v2928 = vshll.u32 %v2733, 16
    %v2930 = vrot.slane %v2928, 1
    %v2931 = vor.u32 %v2926, %v2930
    %v2933 = vshll.u32 %v2893, 16
    %v2935 = vrot.slane %v2933, 1
    %v2936 = vsel %vm1899, %v2931, %v2935
    %v2938 = vshrl.u32 %v2734, 16
    %v2940 = vshll.u32 %v2734, 16
    %v2942 = vrot.slane %v2940, 1
    %v2943 = vor.u32 %v2938, %v2942
    %v2945 = vshll.u32 %v2894, 16
    %v2947 = vrot.slane %v2945, 1
    %v2948 = vsel %vm1899, %v2943, %v2947
    %v2950 = vshrl.u32 %v2735, 16
    %v2952 = vshll.u32 %v2735, 16
    %v2954 = vrot.slane %v2952, 1
    %v2955 = vor.u32 %v2950, %v2954
    %v2957 = vshll.u32 %v2895, 16
    %v2959 = vrot.slane %v2957, 1
    %v2960 = vsel %vm1899, %v2955, %v2959
    %v2962 = vshrl.u32 %v2736, 16
    %v2964 = vshll.u32 %v2736, 16
    %v2966 = vrot.slane %v2964, 1
    %v2967 = vor.u32 %v2962, %v2966
    %v2969 = vshll.u32 %v2896, 16
    %v2971 = vrot.slane %v2969, 1
    %v2972 = vsel %vm1899, %v2967, %v2971
    %v2974 = vshrl.u32 %v2737, 16
    %v2976 = vshll.u32 %v2737, 16
    %v2978 = vrot.slane %v2976, 1
    %v2979 = vor.u32 %v2974, %v2978
    %v2981 = vshll.u32 %v2897, 16
    %v2983 = vrot.slane %v2981, 1
    %v2984 = vsel %vm1899, %v2979, %v2983
    %v2986 = vshrl.u32 %v2738, 16
    %v2988 = vshll.u32 %v2738, 16
    %v2990 = vrot.slane %v2988, 1
    %v2991 = vor.u32 %v2986, %v2990
    %v2993 = vshll.u32 %v2898, 16
    %v2995 = vrot.slane %v2993, 1
    %v2996 = vsel %vm1899, %v2991, %v2995
    %v2998 = vshrl.u32 %v2739, 16
    %v3000 = vshll.u32 %v2739, 16
    %v3002 = vrot.slane %v3000, 1
    %v3003 = vor.u32 %v2998, %v3002
    %v3005 = vshll.u32 %v2899, 16
    %v3007 = vrot.slane %v3005, 1
    %v3008 = vsel %vm1899, %v3003, %v3007
    %v3010 = vshrl.u32 %v2740, 16
    %v3012 = vshll.u32 %v2740, 16
    %v3014 = vrot.slane %v3012, 1
    %v3015 = vor.u32 %v3010, %v3014
    %v3017 = vshll.u32 %v2900, 16
    %v3019 = vrot.slane %v3017, 1
    %v3020 = vsel %vm1899, %v3015, %v3019
    %v3022 = vshrl.u32 %v2741, 16
    %v3024 = vshll.u32 %v2741, 16
    %v3026 = vrot.slane %v3024, 1
    %v3027 = vor.u32 %v3022, %v3026
    %v3029 = vshll.u32 %v2901, 16
    %v3031 = vrot.slane %v3029, 1
    %v3032 = vsel %vm1899, %v3027, %v3031
    %v3034 = vshrl.u32 %v2742, 16
    %v3036 = vshll.u32 %v2742, 16
    %v3038 = vrot.slane %v3036, 1
    %v3039 = vor.u32 %v3034, %v3038
    %v3041 = vshll.u32 %v2902, 16
    %v3043 = vrot.slane %v3041, 1
    %v3044 = vsel %vm1899, %v3039, %v3043
    %v3046 = vshrl.u32 %v2743, 16
    %v3048 = vshll.u32 %v2743, 16
    %v3050 = vrot.slane %v3048, 1
    %v3051 = vor.u32 %v3046, %v3050
    %v3053 = vshll.u32 %v2903, 16
    %v3055 = vrot.slane %v3053, 1
    %v3056 = vsel %vm1899, %v3051, %v3055
    %v3058 = vshrl.u32 %v2744, 16
    %v3060 = vshll.u32 %v2744, 16
    %v3062 = vrot.slane %v3060, 1
    %v3063 = vor.u32 %v3058, %v3062
    %v3065 = vshll.u32 %v2904, 16
    %v3067 = vrot.slane %v3065, 1
    %v3068 = vsel %vm1899, %v3063, %v3067
    %v3070 = vshrl.u32 %v2745, 16
    %v3072 = vshll.u32 %v2745, 16
    %v3074 = vrot.slane %v3072, 1
    %v3075 = vor.u32 %v3070, %v3074
    %v3077 = vshll.u32 %v2905, 16
    %v3079 = vrot.slane %v3077, 1
    %v3080 = vsel %vm1899, %v3075, %v3079
    %v3082 = vshrl.u32 %v2746, 16
    %v3084 = vshll.u32 %v2746, 16
    %v3086 = vrot.slane %v3084, 1
    %v3087 = vor.u32 %v3082, %v3086
    %v3089 = vshll.u32 %v2906, 16
    %v3091 = vrot.slane %v3089, 1
    %v3092 = vsel %vm1899, %v3087, %v3091
    %v3094 = vshrl.u32 %v2747, 16
    %v3096 = vshll.u32 %v2747, 16
    %v3098 = vrot.slane %v3096, 1
    %v3099 = vor.u32 %v3094, %v3098
    %v3101 = vshll.u32 %v2907, 16
    %v3103 = vrot.slane %v3101, 1
    %v3104 = vsel %vm1899, %v3099, %v3103
    %v3106 = vshrl.u32 %v2748, 16
    %v3108 = vshll.u32 %v2748, 16
    %v3110 = vrot.slane %v3108, 1
    %v3111 = vor.u32 %v3106, %v3110
    %v3113 = vshll.u32 %v2908, 16
    %v3115 = vrot.slane %v3113, 1
    %v3116 = vsel %vm1899, %v3111, %v3115
    %v3118 = vshrl.u32 %v2749, 16
    %v3120 = vshll.u32 %v2749, 16
    %v3122 = vrot.slane %v3120, 1
    %v3123 = vor.u32 %v3118, %v3122
    %v3125 = vshll.u32 %v2909, 16
    %v3127 = vrot.slane %v3125, 1
    %v3128 = vsel %vm1899, %v3123, %v3127
    %v3130 = vshrl.u32 %v2750, 16
    %v3132 = vshll.u32 %v2750, 16
    %v3134 = vrot.slane %v3132, 1
    %v3135 = vor.u32 %v3130, %v3134
    %v3137 = vshll.u32 %v2910, 16
    %v3139 = vrot.slane %v3137, 1
    %v3140 = vsel %vm1899, %v3135, %v3139
    %v3142 = vshrl.u32 %v2751, 16
    %v3144 = vshll.u32 %v2751, 16
    %v3146 = vrot.slane %v3144, 1
    %v3147 = vor.u32 %v3142, %v3146
    %v3149 = vshll.u32 %v2911, 16
    %v3151 = vrot.slane %v3149, 1
    %v3152 = vsel %vm1899, %v3147, %v3151
    %v3154 = vshrl.u32 %v2752, 16
    %v3156 = vshll.u32 %v2752, 16
    %v3158 = vrot.slane %v3156, 1
    %v3159 = vor.u32 %v3154, %v3158
    %v3161 = vshll.u32 %v2912, 16
    %v3163 = vrot.slane %v3161, 1
    %v3164 = vsel %vm1899, %v3159, %v3163
    %v3166 = vshrl.u32 %v2753, 16
    %v3168 = vshll.u32 %v2753, 16
    %v3170 = vrot.slane %v3168, 1
    %v3171 = vor.u32 %v3166, %v3170
    %v3173 = vshll.u32 %v2913, 16
    %v3175 = vrot.slane %v3173, 1
    %v3176 = vsel %vm1899, %v3171, %v3175
    %v3178 = vshrl.u32 %v2754, 16
    %v3180 = vshll.u32 %v2754, 16
    %v3182 = vrot.slane %v3180, 1
    %v3183 = vor.u32 %v3178, %v3182
    %v3185 = vshll.u32 %v2914, 16
    %v3187 = vrot.slane %v3185, 1
    %v3188 = vsel %vm1899, %v3183, %v3187
    %v3190 = vshrl.u32 %v2755, 16
    %v3192 = vshll.u32 %v2755, 16
    %v3194 = vrot.slane %v3192, 1
    %v3195 = vor.u32 %v3190, %v3194
    %v3197 = vshll.u32 %v2915, 16
    %v3199 = vrot.slane %v3197, 1
    %v3200 = vsel %vm1899, %v3195, %v3199
    %v3202 = vshrl.u32 %v2756, 16
    %v3204 = vshll.u32 %v2756, 16
    %v3206 = vrot.slane %v3204, 1
    %v3207 = vor.u32 %v3202, %v3206
    %v3209 = vshll.u32 %v2916, 16
    %v3211 = vrot.slane %v3209, 1
    %v3212 = vsel %vm1899, %v3207, %v3211
    %v3214 = vshrl.u32 %v2757, 16
    %v3216 = vshll.u32 %v2757, 16
    %v3218 = vrot.slane %v3216, 1
    %v3219 = vor.u32 %v3214, %v3218
    %v3221 = vshll.u32 %v2917, 16
    %v3223 = vrot.slane %v3221, 1
    %v3224 = vsel %vm1899, %v3219, %v3223
    %v3226 = vshrl.u32 %v2758, 16
    %v3228 = vshll.u32 %v2758, 16
    %v3230 = vrot.slane %v3228, 1
    %v3231 = vor.u32 %v3226, %v3230
    %v3233 = vshll.u32 %v2918, 16
    %v3235 = vrot.slane %v3233, 1
    %v3236 = vsel %vm1899, %v3231, %v3235
    %v3238 = vshrl.u32 %v2759, 16
    %v3240 = vshll.u32 %v2759, 16
    %v3242 = vrot.slane %v3240, 1
    %v3243 = vor.u32 %v3238, %v3242
    %v3245 = vshll.u32 %v2919, 16
    %v3247 = vrot.slane %v3245, 1
    %v3248 = vsel %vm1899, %v3243, %v3247
    %v3250 = vshrl.u32 %v2760, 16
    %v3252 = vshll.u32 %v2760, 16
    %v3254 = vrot.slane %v3252, 1
    %v3255 = vor.u32 %v3250, %v3254
    %v3257 = vshll.u32 %v2920, 16
    %v3259 = vrot.slane %v3257, 1
    %v3260 = vsel %vm1899, %v3255, %v3259
    %v3262 = vshrl.u32 %v2761, 16
    %v3264 = vshll.u32 %v2761, 16
    %v3266 = vrot.slane %v3264, 1
    %v3267 = vor.u32 %v3262, %v3266
    %v3269 = vshll.u32 %v2921, 16
    %v3271 = vrot.slane %v3269, 1
    %v3272 = vsel %vm1899, %v3267, %v3271
    %v3274 = vshrl.u32 %v2762, 16
    %v3276 = vshll.u32 %v2762, 16
    %v3278 = vrot.slane %v3276, 1
    %v3279 = vor.u32 %v3274, %v3278
    %v3281 = vshll.u32 %v2922, 16
    %v3283 = vrot.slane %v3281, 1
    %v3284 = vsel %vm1899, %v3279, %v3283
    %v3286 = vshrl.u32 %v2763, 16
    %v3288 = vshll.u32 %v2763, 16
    %v3290 = vrot.slane %v3288, 1
    %v3291 = vor.u32 %v3286, %v3290
    %v3293 = vshll.u32 %v2923, 16
    %v3295 = vrot.slane %v3293, 1
    %v3296 = vsel %vm1899, %v3291, %v3295
    %v3298 = vshrl.u32 %v2764, 16
    %v3300 = vshll.u32 %v2764, 16
    %v3302 = vrot.slane %v3300, 1
    %v3303 = vor.u32 %v3298, %v3302
    %v3305 = vshll.u32 %v2924, 16
    %v3307 = vrot.slane %v3305, 1
    %v3308 = vsel %vm1899, %v3303, %v3307
    %3309 = vrot.lane.b32.xlu0 %v2936, 32
    %v3310 = vpop.permute.xlu0 %3309
    %3311 = vrot.lane.b32.xlu0 %v2948, 32
    %v3312 = vpop.permute.xlu0 %3311
    %3313 = vrot.lane.b32.xlu0 %v2960, 32
    %v3314 = vpop.permute.xlu0 %3313
    %3315 = vrot.lane.b32.xlu0 %v2972, 32
    %v3316 = vpop.permute.xlu0 %3315
    %3317 = vrot.lane.b32.xlu0 %v2984, 32
    %v3318 = vpop.permute.xlu0 %3317
    %3319 = vrot.lane.b32.xlu0 %v2996, 32
    %v3320 = vpop.permute.xlu0 %3319
    %3321 = vrot.lane.b32.xlu0 %v3008, 32
    %v3322 = vpop.permute.xlu0 %3321
    %3323 = vrot.lane.b32.xlu0 %v3020, 32
    %v3324 = vpop.permute.xlu0 %3323
    %3325 = vrot.lane.b32.xlu0 %v3032, 32
    %v3326 = vpop.permute.xlu0 %3325
    %3327 = vrot.lane.b32.xlu0 %v3044, 32
    %v3328 = vpop.permute.xlu0 %3327
    %3329 = vrot.lane.b32.xlu0 %v3056, 32
    %v3330 = vpop.permute.xlu0 %3329
    %3331 = vrot.lane.b32.xlu0 %v3068, 32
    %v3332 = vpop.permute.xlu0 %3331
    %3333 = vrot.lane.b32.xlu0 %v3080, 32
    %v3334 = vpop.permute.xlu0 %3333
    %3335 = vrot.lane.b32.xlu0 %v3092, 32
    %v3336 = vpop.permute.xlu0 %3335
    %3337 = vrot.lane.b32.xlu0 %v3104, 32
    %v3338 = vpop.permute.xlu0 %3337
    %3339 = vrot.lane.b32.xlu0 %v3116, 32
    %v3340 = vpop.permute.xlu0 %3339
    %3341 = vrot.lane.b32.xlu0 %v3128, 32
    %v3342 = vpop.permute.xlu0 %3341
    %3343 = vrot.lane.b32.xlu0 %v3140, 32
    %v3344 = vpop.permute.xlu0 %3343
    %3345 = vrot.lane.b32.xlu0 %v3152, 32
    %v3346 = vpop.permute.xlu0 %3345
    %3347 = vrot.lane.b32.xlu0 %v3164, 32
    %v3348 = vpop.permute.xlu0 %3347
    %3349 = vrot.lane.b32.xlu0 %v3176, 32
    %v3350 = vpop.permute.xlu0 %3349
    %3351 = vrot.lane.b32.xlu0 %v3188, 32
    %v3352 = vpop.permute.xlu0 %3351
    %3353 = vrot.lane.b32.xlu0 %v3200, 32
    %v3354 = vpop.permute.xlu0 %3353
    %3355 = vrot.lane.b32.xlu0 %v3212, 32
    %v3356 = vpop.permute.xlu0 %3355
    %3357 = vrot.lane.b32.xlu0 %v3224, 32
    %v3358 = vpop.permute.xlu0 %3357
    %3359 = vrot.lane.b32.xlu0 %v3236, 32
    %v3360 = vpop.permute.xlu0 %3359
    %3361 = vrot.lane.b32.xlu0 %v3248, 32
    %v3362 = vpop.permute.xlu0 %3361
    %3363 = vrot.lane.b32.xlu0 %v3260, 32
    %v3364 = vpop.permute.xlu0 %3363
    %3365 = vrot.lane.b32.xlu0 %v3272, 32
    %v3366 = vpop.permute.xlu0 %3365
    %3367 = vrot.lane.b32.xlu0 %v3284, 32
    %v3368 = vpop.permute.xlu0 %3367
    %3369 = vrot.lane.b32.xlu0 %v3296, 32
    %v3370 = vpop.permute.xlu0 %3369
    %3371 = vrot.lane.b32.xlu0 %v3308, 32
    %v3372 = vpop.permute.xlu0 %3371
    %v3405 = vunpack.c.l.b16 %v1482
    %v3406 = vunpack.c.l.b16 %v1483
    %v3407 = vunpack.c.l.b16 %v1484
    %v3408 = vunpack.c.l.b16 %v1485
    %v3409 = vunpack.c.l.b16 %v1486
    %v3410 = vunpack.c.l.b16 %v1487
    %v3411 = vunpack.c.l.b16 %v1488
    %v3412 = vunpack.c.l.b16 %v1489
    %v3413 = vunpack.c.l.b16 %v1490
    %v3414 = vunpack.c.l.b16 %v1491
    %v3415 = vunpack.c.l.b16 %v1492
    %v3416 = vunpack.c.l.b16 %v1493
    %v3417 = vunpack.c.l.b16 %v1494
    %v3418 = vunpack.c.l.b16 %v1495
    %v3419 = vunpack.c.l.b16 %v1496
    %v3420 = vunpack.c.l.b16 %v1497
    %v3421 = vunpack.c.l.b16 %v1498
    %v3422 = vunpack.c.l.b16 %v1499
    %v3423 = vunpack.c.l.b16 %v1500
    %v3424 = vunpack.c.l.b16 %v1501
    %v3425 = vunpack.c.l.b16 %v1502
    %v3426 = vunpack.c.l.b16 %v1503
    %v3427 = vunpack.c.l.b16 %v1504
    %v3428 = vunpack.c.l.b16 %v1505
    %v3429 = vunpack.c.l.b16 %v1506
    %v3430 = vunpack.c.l.b16 %v1507
    %v3431 = vunpack.c.l.b16 %v1508
    %v3432 = vunpack.c.l.b16 %v1509
    %v3433 = vunpack.c.l.b16 %v1510
    %v3434 = vunpack.c.l.b16 %v1511
    %v3435 = vunpack.c.l.b16 %v1512
    %v3436 = vunpack.c.l.b16 %v1513
    %v3437 = vpack.c.b16 %v2670, %v3405
    %v3438 = vpack.c.b16 %v2672, %v3406
    %v3439 = vpack.c.b16 %v2674, %v3407
    %v3440 = vpack.c.b16 %v2676, %v3408
    %v3441 = vpack.c.b16 %v2678, %v3409
    %v3442 = vpack.c.b16 %v2680, %v3410
    %v3443 = vpack.c.b16 %v2682, %v3411
    %v3444 = vpack.c.b16 %v2684, %v3412
    %v3445 = vpack.c.b16 %v2686, %v3413
    %v3446 = vpack.c.b16 %v2688, %v3414
    %v3447 = vpack.c.b16 %v2690, %v3415
    %v3448 = vpack.c.b16 %v2692, %v3416
    %v3449 = vpack.c.b16 %v2694, %v3417
    %v3450 = vpack.c.b16 %v2696, %v3418
    %v3451 = vpack.c.b16 %v2698, %v3419
    %v3452 = vpack.c.b16 %v2700, %v3420
    %v3453 = vpack.c.b16 %v2702, %v3421
    %v3454 = vpack.c.b16 %v2704, %v3422
    %v3455 = vpack.c.b16 %v2706, %v3423
    %v3456 = vpack.c.b16 %v2708, %v3424
    %v3457 = vpack.c.b16 %v2710, %v3425
    %v3458 = vpack.c.b16 %v2712, %v3426
    %v3459 = vpack.c.b16 %v2714, %v3427
    %v3460 = vpack.c.b16 %v2716, %v3428
    %v3461 = vpack.c.b16 %v2718, %v3429
    %v3462 = vpack.c.b16 %v2720, %v3430
    %v3463 = vpack.c.b16 %v2722, %v3431
    %v3464 = vpack.c.b16 %v2724, %v3432
    %v3465 = vpack.c.b16 %v2726, %v3433
    %v3466 = vpack.c.b16 %v2728, %v3434
    %v3467 = vpack.c.b16 %v2730, %v3435
    %v3468 = vpack.c.b16 %v2732, %v3436
    %v3469 = vrot.slane %v3437, 1
    %v3470 = vrot.slane %v2893, 1
    %v3471 = vsel %vm2444, %v3469, %v3470
    %v3472 = vrot.slane %v3438, 1
    %v3473 = vrot.slane %v2894, 1
    %v3474 = vsel %vm2444, %v3472, %v3473
    %v3475 = vrot.slane %v3439, 1
    %v3476 = vrot.slane %v2895, 1
    %v3477 = vsel %vm2444, %v3475, %v3476
    %v3478 = vrot.slane %v3440, 1
    %v3479 = vrot.slane %v2896, 1
    %v3480 = vsel %vm2444, %v3478, %v3479
    %v3481 = vrot.slane %v3441, 1
    %v3482 = vrot.slane %v2897, 1
    %v3483 = vsel %vm2444, %v3481, %v3482
    %v3484 = vrot.slane %v3442, 1
    %v3485 = vrot.slane %v2898, 1
    %v3486 = vsel %vm2444, %v3484, %v3485
    %v3487 = vrot.slane %v3443, 1
    %v3488 = vrot.slane %v2899, 1
    %v3489 = vsel %vm2444, %v3487, %v3488
    %v3490 = vrot.slane %v3444, 1
    %v3491 = vrot.slane %v2900, 1
    %v3492 = vsel %vm2444, %v3490, %v3491
    %v3493 = vrot.slane %v3445, 1
    %v3494 = vrot.slane %v2901, 1
    %v3495 = vsel %vm2444, %v3493, %v3494
    %v3496 = vrot.slane %v3446, 1
    %v3497 = vrot.slane %v2902, 1
    %v3498 = vsel %vm2444, %v3496, %v3497
    %v3499 = vrot.slane %v3447, 1
    %v3500 = vrot.slane %v2903, 1
    %v3501 = vsel %vm2444, %v3499, %v3500
    %v3502 = vrot.slane %v3448, 1
    %v3503 = vrot.slane %v2904, 1
    %v3504 = vsel %vm2444, %v3502, %v3503
    %v3505 = vrot.slane %v3449, 1
    %v3506 = vrot.slane %v2905, 1
    %v3507 = vsel %vm2444, %v3505, %v3506
    %v3508 = vrot.slane %v3450, 1
    %v3509 = vrot.slane %v2906, 1
    %v3510 = vsel %vm2444, %v3508, %v3509
    %v3511 = vrot.slane %v3451, 1
    %v3512 = vrot.slane %v2907, 1
    %v3513 = vsel %vm2444, %v3511, %v3512
    %v3514 = vrot.slane %v3452, 1
    %v3515 = vrot.slane %v2908, 1
    %v3516 = vsel %vm2444, %v3514, %v3515
    %v3517 = vrot.slane %v3453, 1
    %v3518 = vrot.slane %v2909, 1
    %v3519 = vsel %vm2444, %v3517, %v3518
    %v3520 = vrot.slane %v3454, 1
    %v3521 = vrot.slane %v2910, 1
    %v3522 = vsel %vm2444, %v3520, %v3521
    %v3523 = vrot.slane %v3455, 1
    %v3524 = vrot.slane %v2911, 1
    %v3525 = vsel %vm2444, %v3523, %v3524
    %v3526 = vrot.slane %v3456, 1
    %v3527 = vrot.slane %v2912, 1
    %v3528 = vsel %vm2444, %v3526, %v3527
    %v3529 = vrot.slane %v3457, 1
    %v3530 = vrot.slane %v2913, 1
    %v3531 = vsel %vm2444, %v3529, %v3530
    %v3532 = vrot.slane %v3458, 1
    %v3533 = vrot.slane %v2914, 1
    %v3534 = vsel %vm2444, %v3532, %v3533
    %v3535 = vrot.slane %v3459, 1
    %v3536 = vrot.slane %v2915, 1
    %v3537 = vsel %vm2444, %v3535, %v3536
    %v3538 = vrot.slane %v3460, 1
    %v3539 = vrot.slane %v2916, 1
    %v3540 = vsel %vm2444, %v3538, %v3539
    %v3541 = vrot.slane %v3461, 1
    %v3542 = vrot.slane %v2917, 1
    %v3543 = vsel %vm2444, %v3541, %v3542
    %v3544 = vrot.slane %v3462, 1
    %v3545 = vrot.slane %v2918, 1
    %v3546 = vsel %vm2444, %v3544, %v3545
    %v3547 = vrot.slane %v3463, 1
    %v3548 = vrot.slane %v2919, 1
    %v3549 = vsel %vm2444, %v3547, %v3548
    %v3550 = vrot.slane %v3464, 1
    %v3551 = vrot.slane %v2920, 1
    %v3552 = vsel %vm2444, %v3550, %v3551
    %v3553 = vrot.slane %v3465, 1
    %v3554 = vrot.slane %v2921, 1
    %v3555 = vsel %vm2444, %v3553, %v3554
    %v3556 = vrot.slane %v3466, 1
    %v3557 = vrot.slane %v2922, 1
    %v3558 = vsel %vm2444, %v3556, %v3557
    %v3559 = vrot.slane %v3467, 1
    %v3560 = vrot.slane %v2923, 1
    %v3561 = vsel %vm2444, %v3559, %v3560
    %v3562 = vrot.slane %v3468, 1
    %v3563 = vrot.slane %v2924, 1
    %v3564 = vsel %vm2444, %v3562, %v3563
    %3565 = vrot.lane.b32.xlu0 %v3471, 40
    %v3566 = vpop.permute.xlu0 %3565
    %3567 = vrot.lane.b32.xlu0 %v3474, 40
    %v3568 = vpop.permute.xlu0 %3567
    %3569 = vrot.lane.b32.xlu0 %v3477, 40
    %v3570 = vpop.permute.xlu0 %3569
    %3571 = vrot.lane.b32.xlu0 %v3480, 40
    %v3572 = vpop.permute.xlu0 %3571
    %3573 = vrot.lane.b32.xlu0 %v3483, 40
    %v3574 = vpop.permute.xlu0 %3573
    %3575 = vrot.lane.b32.xlu0 %v3486, 40
    %v3576 = vpop.permute.xlu0 %3575
    %3577 = vrot.lane.b32.xlu0 %v3489, 40
    %v3578 = vpop.permute.xlu0 %3577
    %3579 = vrot.lane.b32.xlu0 %v3492, 40
    %v3580 = vpop.permute.xlu0 %3579
    %3581 = vrot.lane.b32.xlu0 %v3495, 40
    %v3582 = vpop.permute.xlu0 %3581
    %3583 = vrot.lane.b32.xlu0 %v3498, 40
    %v3584 = vpop.permute.xlu0 %3583
    %3585 = vrot.lane.b32.xlu0 %v3501, 40
    %v3586 = vpop.permute.xlu0 %3585
    %3587 = vrot.lane.b32.xlu0 %v3504, 40
    %v3588 = vpop.permute.xlu0 %3587
    %3589 = vrot.lane.b32.xlu0 %v3507, 40
    %v3590 = vpop.permute.xlu0 %3589
    %3591 = vrot.lane.b32.xlu0 %v3510, 40
    %v3592 = vpop.permute.xlu0 %3591
    %3593 = vrot.lane.b32.xlu0 %v3513, 40
    %v3594 = vpop.permute.xlu0 %3593
    %3595 = vrot.lane.b32.xlu0 %v3516, 40
    %v3596 = vpop.permute.xlu0 %3595
    %3597 = vrot.lane.b32.xlu0 %v3519, 40
    %v3598 = vpop.permute.xlu0 %3597
    %3599 = vrot.lane.b32.xlu0 %v3522, 40
    %v3600 = vpop.permute.xlu0 %3599
    %3601 = vrot.lane.b32.xlu0 %v3525, 40
    %v3602 = vpop.permute.xlu0 %3601
    %3603 = vrot.lane.b32.xlu0 %v3528, 40
    %v3604 = vpop.permute.xlu0 %3603
    %3605 = vrot.lane.b32.xlu0 %v3531, 40
    %v3606 = vpop.permute.xlu0 %3605
    %3607 = vrot.lane.b32.xlu0 %v3534, 40
    %v3608 = vpop.permute.xlu0 %3607
    %3609 = vrot.lane.b32.xlu0 %v3537, 40
    %v3610 = vpop.permute.xlu0 %3609
    %3611 = vrot.lane.b32.xlu0 %v3540, 40
    %v3612 = vpop.permute.xlu0 %3611
    %3613 = vrot.lane.b32.xlu0 %v3543, 40
    %v3614 = vpop.permute.xlu0 %3613
    %3615 = vrot.lane.b32.xlu0 %v3546, 40
    %v3616 = vpop.permute.xlu0 %3615
    %3617 = vrot.lane.b32.xlu0 %v3549, 40
    %v3618 = vpop.permute.xlu0 %3617
    %3619 = vrot.lane.b32.xlu0 %v3552, 40
    %v3620 = vpop.permute.xlu0 %3619
    %3621 = vrot.lane.b32.xlu0 %v3555, 40
    %v3622 = vpop.permute.xlu0 %3621
    %3623 = vrot.lane.b32.xlu0 %v3558, 40
    %v3624 = vpop.permute.xlu0 %3623
    %3625 = vrot.lane.b32.xlu0 %v3561, 40
    %v3626 = vpop.permute.xlu0 %3625
    %3627 = vrot.lane.b32.xlu0 %v3564, 40
    %v3628 = vpop.permute.xlu0 %3627
    %v3693 = vunpack.c.l.b16 %v1515
    %v3694 = vunpack.c.l.b16 %v1516
    %v3695 = vunpack.c.l.b16 %v1517
    %v3696 = vunpack.c.l.b16 %v1518
    %v3697 = vunpack.c.l.b16 %v1519
    %v3698 = vunpack.c.l.b16 %v1520
    %v3699 = vunpack.c.l.b16 %v1521
    %v3700 = vunpack.c.l.b16 %v1522
    %v3701 = vunpack.c.l.b16 %v1523
    %v3702 = vunpack.c.l.b16 %v1524
    %v3703 = vunpack.c.l.b16 %v1525
    %v3704 = vunpack.c.l.b16 %v1526
    %v3705 = vunpack.c.l.b16 %v1527
    %v3706 = vunpack.c.l.b16 %v1528
    %v3707 = vunpack.c.l.b16 %v1529
    %v3708 = vunpack.c.l.b16 %v1530
    %v3709 = vunpack.c.l.b16 %v1531
    %v3710 = vunpack.c.l.b16 %v1532
    %v3711 = vunpack.c.l.b16 %v1533
    %v3712 = vunpack.c.l.b16 %v1534
    %v3713 = vunpack.c.l.b16 %v1535
    %v3714 = vunpack.c.l.b16 %v1536
    %v3715 = vunpack.c.l.b16 %v1537
    %v3716 = vunpack.c.l.b16 %v1538
    %v3717 = vunpack.c.l.b16 %v1539
    %v3718 = vunpack.c.l.b16 %v1540
    %v3719 = vunpack.c.l.b16 %v1541
    %v3720 = vunpack.c.l.b16 %v1542
    %v3721 = vunpack.c.l.b16 %v1543
    %v3722 = vunpack.c.l.b16 %v1544
    %v3723 = vunpack.c.l.b16 %v1545
    %v3724 = vunpack.c.l.b16 %v1546
    %v3725 = vunpack.c.l.b16 %v1547
    %v3726 = vunpack.c.l.b16 %v1548
    %v3727 = vunpack.c.l.b16 %v1549
    %v3728 = vunpack.c.l.b16 %v1550
    %v3729 = vunpack.c.l.b16 %v1551
    %v3730 = vunpack.c.l.b16 %v1552
    %v3731 = vunpack.c.l.b16 %v1553
    %v3732 = vunpack.c.l.b16 %v1554
    %v3733 = vunpack.c.l.b16 %v1555
    %v3734 = vunpack.c.l.b16 %v1556
    %v3735 = vunpack.c.l.b16 %v1557
    %v3736 = vunpack.c.l.b16 %v1558
    %v3737 = vunpack.c.l.b16 %v1559
    %v3738 = vunpack.c.l.b16 %v1560
    %v3739 = vunpack.c.l.b16 %v1561
    %v3740 = vunpack.c.l.b16 %v1562
    %v3741 = vunpack.c.l.b16 %v1563
    %v3742 = vunpack.c.l.b16 %v1564
    %v3743 = vunpack.c.l.b16 %v1565
    %v3744 = vunpack.c.l.b16 %v1566
    %v3745 = vunpack.c.l.b16 %v1567
    %v3746 = vunpack.c.l.b16 %v1568
    %v3747 = vunpack.c.l.b16 %v1569
    %v3748 = vunpack.c.l.b16 %v1570
    %v3749 = vunpack.c.l.b16 %v1571
    %v3750 = vunpack.c.l.b16 %v1572
    %v3751 = vunpack.c.l.b16 %v1573
    %v3752 = vunpack.c.l.b16 %v1574
    %v3753 = vunpack.c.l.b16 %v1575
    %v3754 = vunpack.c.l.b16 %v1576
    %v3755 = vunpack.c.l.b16 %v1577
    %v3756 = vunpack.c.l.b16 %v1578
    %v3757 = vpack.c.b16 %v3694, %v3693
    %v3758 = vpack.c.b16 %v3696, %v3695
    %v3759 = vpack.c.b16 %v3698, %v3697
    %v3760 = vpack.c.b16 %v3700, %v3699
    %v3761 = vpack.c.b16 %v3702, %v3701
    %v3762 = vpack.c.b16 %v3704, %v3703
    %v3763 = vpack.c.b16 %v3706, %v3705
    %v3764 = vpack.c.b16 %v3708, %v3707
    %v3765 = vpack.c.b16 %v3710, %v3709
    %v3766 = vpack.c.b16 %v3712, %v3711
    %v3767 = vpack.c.b16 %v3714, %v3713
    %v3768 = vpack.c.b16 %v3716, %v3715
    %v3769 = vpack.c.b16 %v3718, %v3717
    %v3770 = vpack.c.b16 %v3720, %v3719
    %v3771 = vpack.c.b16 %v3722, %v3721
    %v3772 = vpack.c.b16 %v3724, %v3723
    %v3773 = vpack.c.b16 %v3726, %v3725
    %v3774 = vpack.c.b16 %v3728, %v3727
    %v3775 = vpack.c.b16 %v3730, %v3729
    %v3776 = vpack.c.b16 %v3732, %v3731
    %v3777 = vpack.c.b16 %v3734, %v3733
    %v3778 = vpack.c.b16 %v3736, %v3735
    %v3779 = vpack.c.b16 %v3738, %v3737
    %v3780 = vpack.c.b16 %v3740, %v3739
    %v3781 = vpack.c.b16 %v3742, %v3741
    %v3782 = vpack.c.b16 %v3744, %v3743
    %v3783 = vpack.c.b16 %v3746, %v3745
    %v3784 = vpack.c.b16 %v3748, %v3747
    %v3785 = vpack.c.b16 %v3750, %v3749
    %v3786 = vpack.c.b16 %v3752, %v3751
    %v3787 = vpack.c.b16 %v3754, %v3753
    %v3788 = vpack.c.b16 %v3756, %v3755
    %3789 = vrot.lane.b32.xlu0 %v3757, 48
    %v3790 = vpop.permute.xlu0 %3789
    %3791 = vrot.lane.b32.xlu0 %v3758, 48
    %v3792 = vpop.permute.xlu0 %3791
    %3793 = vrot.lane.b32.xlu0 %v3759, 48
    %v3794 = vpop.permute.xlu0 %3793
    %3795 = vrot.lane.b32.xlu0 %v3760, 48
    %v3796 = vpop.permute.xlu0 %3795
    %3797 = vrot.lane.b32.xlu0 %v3761, 48
    %v3798 = vpop.permute.xlu0 %3797
    %3799 = vrot.lane.b32.xlu0 %v3762, 48
    %v3800 = vpop.permute.xlu0 %3799
    %3801 = vrot.lane.b32.xlu0 %v3763, 48
    %v3802 = vpop.permute.xlu0 %3801
    %3803 = vrot.lane.b32.xlu0 %v3764, 48
    %v3804 = vpop.permute.xlu0 %3803
    %3805 = vrot.lane.b32.xlu0 %v3765, 48
    %v3806 = vpop.permute.xlu0 %3805
    %3807 = vrot.lane.b32.xlu0 %v3766, 48
    %v3808 = vpop.permute.xlu0 %3807
    %3809 = vrot.lane.b32.xlu0 %v3767, 48
    %v3810 = vpop.permute.xlu0 %3809
    %3811 = vrot.lane.b32.xlu0 %v3768, 48
    %v3812 = vpop.permute.xlu0 %3811
    %3813 = vrot.lane.b32.xlu0 %v3769, 48
    %v3814 = vpop.permute.xlu0 %3813
    %3815 = vrot.lane.b32.xlu0 %v3770, 48
    %v3816 = vpop.permute.xlu0 %3815
    %3817 = vrot.lane.b32.xlu0 %v3771, 48
    %v3818 = vpop.permute.xlu0 %3817
    %3819 = vrot.lane.b32.xlu0 %v3772, 48
    %v3820 = vpop.permute.xlu0 %3819
    %3821 = vrot.lane.b32.xlu0 %v3773, 48
    %v3822 = vpop.permute.xlu0 %3821
    %3823 = vrot.lane.b32.xlu0 %v3774, 48
    %v3824 = vpop.permute.xlu0 %3823
    %3825 = vrot.lane.b32.xlu0 %v3775, 48
    %v3826 = vpop.permute.xlu0 %3825
    %3827 = vrot.lane.b32.xlu0 %v3776, 48
    %v3828 = vpop.permute.xlu0 %3827
    %3829 = vrot.lane.b32.xlu0 %v3777, 48
    %v3830 = vpop.permute.xlu0 %3829
    %3831 = vrot.lane.b32.xlu0 %v3778, 48
    %v3832 = vpop.permute.xlu0 %3831
    %3833 = vrot.lane.b32.xlu0 %v3779, 48
    %v3834 = vpop.permute.xlu0 %3833
    %3835 = vrot.lane.b32.xlu0 %v3780, 48
    %v3836 = vpop.permute.xlu0 %3835
    %3837 = vrot.lane.b32.xlu0 %v3781, 48
    %v3838 = vpop.permute.xlu0 %3837
    %3839 = vrot.lane.b32.xlu0 %v3782, 48
    %v3840 = vpop.permute.xlu0 %3839
    %3841 = vrot.lane.b32.xlu0 %v3783, 48
    %v3842 = vpop.permute.xlu0 %3841
    %3843 = vrot.lane.b32.xlu0 %v3784, 48
    %v3844 = vpop.permute.xlu0 %3843
    %3845 = vrot.lane.b32.xlu0 %v3785, 48
    %v3846 = vpop.permute.xlu0 %3845
    %3847 = vrot.lane.b32.xlu0 %v3786, 48
    %v3848 = vpop.permute.xlu0 %3847
    %3849 = vrot.lane.b32.xlu0 %v3787, 48
    %v3850 = vpop.permute.xlu0 %3849
    %3851 = vrot.lane.b32.xlu0 %v3788, 48
    %v3852 = vpop.permute.xlu0 %3851
    %v3885 = vunpack.c.l.b16 %v1579
    %v3886 = vunpack.c.l.b16 %v1580
    %v3887 = vunpack.c.l.b16 %v1581
    %v3888 = vunpack.c.l.b16 %v1582
    %v3889 = vunpack.c.l.b16 %v1583
    %v3890 = vunpack.c.l.b16 %v1584
    %v3891 = vunpack.c.l.b16 %v1585
    %v3892 = vunpack.c.l.b16 %v1586
    %v3893 = vunpack.c.l.b16 %v1587
    %v3894 = vunpack.c.l.b16 %v1588
    %v3895 = vunpack.c.l.b16 %v1589
    %v3896 = vunpack.c.l.b16 %v1590
    %v3897 = vunpack.c.l.b16 %v1591
    %v3898 = vunpack.c.l.b16 %v1592
    %v3899 = vunpack.c.l.b16 %v1593
    %v3900 = vunpack.c.l.b16 %v1594
    %v3901 = vunpack.c.l.b16 %v1595
    %v3902 = vunpack.c.l.b16 %v1596
    %v3903 = vunpack.c.l.b16 %v1597
    %v3904 = vunpack.c.l.b16 %v1598
    %v3905 = vunpack.c.l.b16 %v1599
    %v3906 = vunpack.c.l.b16 %v1600
    %v3907 = vunpack.c.l.b16 %v1601
    %v3908 = vunpack.c.l.b16 %v1602
    %v3909 = vunpack.c.l.b16 %v1603
    %v3910 = vunpack.c.l.b16 %v1604
    %v3911 = vunpack.c.l.b16 %v1605
    %v3912 = vunpack.c.l.b16 %v1606
    %v3913 = vunpack.c.l.b16 %v1607
    %v3914 = vunpack.c.l.b16 %v1608
    %v3915 = vunpack.c.l.b16 %v1609
    %v3916 = vunpack.c.l.b16 %v1610
    %v3917 = vpack.c.b16 %v3885, %v3885
    %v3918 = vpack.c.b16 %v3886, %v3886
    %v3919 = vpack.c.b16 %v3887, %v3887
    %v3920 = vpack.c.b16 %v3888, %v3888
    %v3921 = vpack.c.b16 %v3889, %v3889
    %v3922 = vpack.c.b16 %v3890, %v3890
    %v3923 = vpack.c.b16 %v3891, %v3891
    %v3924 = vpack.c.b16 %v3892, %v3892
    %v3925 = vpack.c.b16 %v3893, %v3893
    %v3926 = vpack.c.b16 %v3894, %v3894
    %v3927 = vpack.c.b16 %v3895, %v3895
    %v3928 = vpack.c.b16 %v3896, %v3896
    %v3929 = vpack.c.b16 %v3897, %v3897
    %v3930 = vpack.c.b16 %v3898, %v3898
    %v3931 = vpack.c.b16 %v3899, %v3899
    %v3932 = vpack.c.b16 %v3900, %v3900
    %v3933 = vpack.c.b16 %v3901, %v3901
    %v3934 = vpack.c.b16 %v3902, %v3902
    %v3935 = vpack.c.b16 %v3903, %v3903
    %v3936 = vpack.c.b16 %v3904, %v3904
    %v3937 = vpack.c.b16 %v3905, %v3905
    %v3938 = vpack.c.b16 %v3906, %v3906
    %v3939 = vpack.c.b16 %v3907, %v3907
    %v3940 = vpack.c.b16 %v3908, %v3908
    %v3941 = vpack.c.b16 %v3909, %v3909
    %v3942 = vpack.c.b16 %v3910, %v3910
    %v3943 = vpack.c.b16 %v3911, %v3911
    %v3944 = vpack.c.b16 %v3912, %v3912
    %v3945 = vpack.c.b16 %v3913, %v3913
    %v3946 = vpack.c.b16 %v3914, %v3914
    %v3947 = vpack.c.b16 %v3915, %v3915
    %v3948 = vpack.c.b16 %v3916, %v3916
    %v3950 = vshrl.u32 %v3757, 16
    %v3952 = vshll.u32 %v3757, 16
    %v3954 = vrot.slane %v3952, 1
    %v3955 = vor.u32 %v3950, %v3954
    %v3957 = vshll.u32 %v3917, 16
    %v3959 = vrot.slane %v3957, 1
    %v3960 = vsel %vm1899, %v3955, %v3959
    %v3962 = vshrl.u32 %v3758, 16
    %v3964 = vshll.u32 %v3758, 16
    %v3966 = vrot.slane %v3964, 1
    %v3967 = vor.u32 %v3962, %v3966
    %v3969 = vshll.u32 %v3918, 16
    %v3971 = vrot.slane %v3969, 1
    %v3972 = vsel %vm1899, %v3967, %v3971
    %v3974 = vshrl.u32 %v3759, 16
    %v3976 = vshll.u32 %v3759, 16
    %v3978 = vrot.slane %v3976, 1
    %v3979 = vor.u32 %v3974, %v3978
    %v3981 = vshll.u32 %v3919, 16
    %v3983 = vrot.slane %v3981, 1
    %v3984 = vsel %vm1899, %v3979, %v3983
    %v3986 = vshrl.u32 %v3760, 16
    %v3988 = vshll.u32 %v3760, 16
    %v3990 = vrot.slane %v3988, 1
    %v3991 = vor.u32 %v3986, %v3990
    %v3993 = vshll.u32 %v3920, 16
    %v3995 = vrot.slane %v3993, 1
    %v3996 = vsel %vm1899, %v3991, %v3995
    %v3998 = vshrl.u32 %v3761, 16
    %v4000 = vshll.u32 %v3761, 16
    %v4002 = vrot.slane %v4000, 1
    %v4003 = vor.u32 %v3998, %v4002
    %v4005 = vshll.u32 %v3921, 16
    %v4007 = vrot.slane %v4005, 1
    %v4008 = vsel %vm1899, %v4003, %v4007
    %v4010 = vshrl.u32 %v3762, 16
    %v4012 = vshll.u32 %v3762, 16
    %v4014 = vrot.slane %v4012, 1
    %v4015 = vor.u32 %v4010, %v4014
    %v4017 = vshll.u32 %v3922, 16
    %v4019 = vrot.slane %v4017, 1
    %v4020 = vsel %vm1899, %v4015, %v4019
    %v4022 = vshrl.u32 %v3763, 16
    %v4024 = vshll.u32 %v3763, 16
    %v4026 = vrot.slane %v4024, 1
    %v4027 = vor.u32 %v4022, %v4026
    %v4029 = vshll.u32 %v3923, 16
    %v4031 = vrot.slane %v4029, 1
    %v4032 = vsel %vm1899, %v4027, %v4031
    %v4034 = vshrl.u32 %v3764, 16
    %v4036 = vshll.u32 %v3764, 16
    %v4038 = vrot.slane %v4036, 1
    %v4039 = vor.u32 %v4034, %v4038
    %v4041 = vshll.u32 %v3924, 16
    %v4043 = vrot.slane %v4041, 1
    %v4044 = vsel %vm1899, %v4039, %v4043
    %v4046 = vshrl.u32 %v3765, 16
    %v4048 = vshll.u32 %v3765, 16
    %v4050 = vrot.slane %v4048, 1
    %v4051 = vor.u32 %v4046, %v4050
    %v4053 = vshll.u32 %v3925, 16
    %v4055 = vrot.slane %v4053, 1
    %v4056 = vsel %vm1899, %v4051, %v4055
    %v4058 = vshrl.u32 %v3766, 16
    %v4060 = vshll.u32 %v3766, 16
    %v4062 = vrot.slane %v4060, 1
    %v4063 = vor.u32 %v4058, %v4062
    %v4065 = vshll.u32 %v3926, 16
    %v4067 = vrot.slane %v4065, 1
    %v4068 = vsel %vm1899, %v4063, %v4067
    %v4070 = vshrl.u32 %v3767, 16
    %v4072 = vshll.u32 %v3767, 16
    %v4074 = vrot.slane %v4072, 1
    %v4075 = vor.u32 %v4070, %v4074
    %v4077 = vshll.u32 %v3927, 16
    %v4079 = vrot.slane %v4077, 1
    %v4080 = vsel %vm1899, %v4075, %v4079
    %v4082 = vshrl.u32 %v3768, 16
    %v4084 = vshll.u32 %v3768, 16
    %v4086 = vrot.slane %v4084, 1
    %v4087 = vor.u32 %v4082, %v4086
    %v4089 = vshll.u32 %v3928, 16
    %v4091 = vrot.slane %v4089, 1
    %v4092 = vsel %vm1899, %v4087, %v4091
    %v4094 = vshrl.u32 %v3769, 16
    %v4096 = vshll.u32 %v3769, 16
    %v4098 = vrot.slane %v4096, 1
    %v4099 = vor.u32 %v4094, %v4098
    %v4101 = vshll.u32 %v3929, 16
    %v4103 = vrot.slane %v4101, 1
    %v4104 = vsel %vm1899, %v4099, %v4103
    %v4106 = vshrl.u32 %v3770, 16
    %v4108 = vshll.u32 %v3770, 16
    %v4110 = vrot.slane %v4108, 1
    %v4111 = vor.u32 %v4106, %v4110
    %v4113 = vshll.u32 %v3930, 16
    %v4115 = vrot.slane %v4113, 1
    %v4116 = vsel %vm1899, %v4111, %v4115
    %v4118 = vshrl.u32 %v3771, 16
    %v4120 = vshll.u32 %v3771, 16
    %v4122 = vrot.slane %v4120, 1
    %v4123 = vor.u32 %v4118, %v4122
    %v4125 = vshll.u32 %v3931, 16
    %v4127 = vrot.slane %v4125, 1
    %v4128 = vsel %vm1899, %v4123, %v4127
    %v4130 = vshrl.u32 %v3772, 16
    %v4132 = vshll.u32 %v3772, 16
    %v4134 = vrot.slane %v4132, 1
    %v4135 = vor.u32 %v4130, %v4134
    %v4137 = vshll.u32 %v3932, 16
    %v4139 = vrot.slane %v4137, 1
    %v4140 = vsel %vm1899, %v4135, %v4139
    %v4142 = vshrl.u32 %v3773, 16
    %v4144 = vshll.u32 %v3773, 16
    %v4146 = vrot.slane %v4144, 1
    %v4147 = vor.u32 %v4142, %v4146
    %v4149 = vshll.u32 %v3933, 16
    %v4151 = vrot.slane %v4149, 1
    %v4152 = vsel %vm1899, %v4147, %v4151
    %v4154 = vshrl.u32 %v3774, 16
    %v4156 = vshll.u32 %v3774, 16
    %v4158 = vrot.slane %v4156, 1
    %v4159 = vor.u32 %v4154, %v4158
    %v4161 = vshll.u32 %v3934, 16
    %v4163 = vrot.slane %v4161, 1
    %v4164 = vsel %vm1899, %v4159, %v4163
    %v4166 = vshrl.u32 %v3775, 16
    %v4168 = vshll.u32 %v3775, 16
    %v4170 = vrot.slane %v4168, 1
    %v4171 = vor.u32 %v4166, %v4170
    %v4173 = vshll.u32 %v3935, 16
    %v4175 = vrot.slane %v4173, 1
    %v4176 = vsel %vm1899, %v4171, %v4175
    %v4178 = vshrl.u32 %v3776, 16
    %v4180 = vshll.u32 %v3776, 16
    %v4182 = vrot.slane %v4180, 1
    %v4183 = vor.u32 %v4178, %v4182
    %v4185 = vshll.u32 %v3936, 16
    %v4187 = vrot.slane %v4185, 1
    %v4188 = vsel %vm1899, %v4183, %v4187
    %v4190 = vshrl.u32 %v3777, 16
    %v4192 = vshll.u32 %v3777, 16
    %v4194 = vrot.slane %v4192, 1
    %v4195 = vor.u32 %v4190, %v4194
    %v4197 = vshll.u32 %v3937, 16
    %v4199 = vrot.slane %v4197, 1
    %v4200 = vsel %vm1899, %v4195, %v4199
    %v4202 = vshrl.u32 %v3778, 16
    %v4204 = vshll.u32 %v3778, 16
    %v4206 = vrot.slane %v4204, 1
    %v4207 = vor.u32 %v4202, %v4206
    %v4209 = vshll.u32 %v3938, 16
    %v4211 = vrot.slane %v4209, 1
    %v4212 = vsel %vm1899, %v4207, %v4211
    %v4214 = vshrl.u32 %v3779, 16
    %v4216 = vshll.u32 %v3779, 16
    %v4218 = vrot.slane %v4216, 1
    %v4219 = vor.u32 %v4214, %v4218
    %v4221 = vshll.u32 %v3939, 16
    %v4223 = vrot.slane %v4221, 1
    %v4224 = vsel %vm1899, %v4219, %v4223
    %v4226 = vshrl.u32 %v3780, 16
    %v4228 = vshll.u32 %v3780, 16
    %v4230 = vrot.slane %v4228, 1
    %v4231 = vor.u32 %v4226, %v4230
    %v4233 = vshll.u32 %v3940, 16
    %v4235 = vrot.slane %v4233, 1
    %v4236 = vsel %vm1899, %v4231, %v4235
    %v4238 = vshrl.u32 %v3781, 16
    %v4240 = vshll.u32 %v3781, 16
    %v4242 = vrot.slane %v4240, 1
    %v4243 = vor.u32 %v4238, %v4242
    %v4245 = vshll.u32 %v3941, 16
    %v4247 = vrot.slane %v4245, 1
    %v4248 = vsel %vm1899, %v4243, %v4247
    %v4250 = vshrl.u32 %v3782, 16
    %v4252 = vshll.u32 %v3782, 16
    %v4254 = vrot.slane %v4252, 1
    %v4255 = vor.u32 %v4250, %v4254
    %v4257 = vshll.u32 %v3942, 16
    %v4259 = vrot.slane %v4257, 1
    %v4260 = vsel %vm1899, %v4255, %v4259
    %v4262 = vshrl.u32 %v3783, 16
    %v4264 = vshll.u32 %v3783, 16
    %v4266 = vrot.slane %v4264, 1
    %v4267 = vor.u32 %v4262, %v4266
    %v4269 = vshll.u32 %v3943, 16
    %v4271 = vrot.slane %v4269, 1
    %v4272 = vsel %vm1899, %v4267, %v4271
    %v4274 = vshrl.u32 %v3784, 16
    %v4276 = vshll.u32 %v3784, 16
    %v4278 = vrot.slane %v4276, 1
    %v4279 = vor.u32 %v4274, %v4278
    %v4281 = vshll.u32 %v3944, 16
    %v4283 = vrot.slane %v4281, 1
    %v4284 = vsel %vm1899, %v4279, %v4283
    %v4286 = vshrl.u32 %v3785, 16
    %v4288 = vshll.u32 %v3785, 16
    %v4290 = vrot.slane %v4288, 1
    %v4291 = vor.u32 %v4286, %v4290
    %v4293 = vshll.u32 %v3945, 16
    %v4295 = vrot.slane %v4293, 1
    %v4296 = vsel %vm1899, %v4291, %v4295
    %v4298 = vshrl.u32 %v3786, 16
    %v4300 = vshll.u32 %v3786, 16
    %v4302 = vrot.slane %v4300, 1
    %v4303 = vor.u32 %v4298, %v4302
    %v4305 = vshll.u32 %v3946, 16
    %v4307 = vrot.slane %v4305, 1
    %v4308 = vsel %vm1899, %v4303, %v4307
    %v4310 = vshrl.u32 %v3787, 16
    %v4312 = vshll.u32 %v3787, 16
    %v4314 = vrot.slane %v4312, 1
    %v4315 = vor.u32 %v4310, %v4314
    %v4317 = vshll.u32 %v3947, 16
    %v4319 = vrot.slane %v4317, 1
    %v4320 = vsel %vm1899, %v4315, %v4319
    %v4322 = vshrl.u32 %v3788, 16
    %v4324 = vshll.u32 %v3788, 16
    %v4326 = vrot.slane %v4324, 1
    %v4327 = vor.u32 %v4322, %v4326
    %v4329 = vshll.u32 %v3948, 16
    %v4331 = vrot.slane %v4329, 1
    %v4332 = vsel %vm1899, %v4327, %v4331
    %4333 = vrot.lane.b32.xlu0 %v3960, 56
    %v4334 = vpop.permute.xlu0 %4333
    %4335 = vrot.lane.b32.xlu0 %v3972, 56
    %v4336 = vpop.permute.xlu0 %4335
    %4337 = vrot.lane.b32.xlu0 %v3984, 56
    %v4338 = vpop.permute.xlu0 %4337
    %4339 = vrot.lane.b32.xlu0 %v3996, 56
    %v4340 = vpop.permute.xlu0 %4339
    %4341 = vrot.lane.b32.xlu0 %v4008, 56
    %v4342 = vpop.permute.xlu0 %4341
    %4343 = vrot.lane.b32.xlu0 %v4020, 56
    %v4344 = vpop.permute.xlu0 %4343
    %4345 = vrot.lane.b32.xlu0 %v4032, 56
    %v4346 = vpop.permute.xlu0 %4345
    %4347 = vrot.lane.b32.xlu0 %v4044, 56
    %v4348 = vpop.permute.xlu0 %4347
    %4349 = vrot.lane.b32.xlu0 %v4056, 56
    %v4350 = vpop.permute.xlu0 %4349
    %4351 = vrot.lane.b32.xlu0 %v4068, 56
    %v4352 = vpop.permute.xlu0 %4351
    %4353 = vrot.lane.b32.xlu0 %v4080, 56
    %v4354 = vpop.permute.xlu0 %4353
    %4355 = vrot.lane.b32.xlu0 %v4092, 56
    %v4356 = vpop.permute.xlu0 %4355
    %4357 = vrot.lane.b32.xlu0 %v4104, 56
    %v4358 = vpop.permute.xlu0 %4357
    %4359 = vrot.lane.b32.xlu0 %v4116, 56
    %v4360 = vpop.permute.xlu0 %4359
    %4361 = vrot.lane.b32.xlu0 %v4128, 56
    %v4362 = vpop.permute.xlu0 %4361
    %4363 = vrot.lane.b32.xlu0 %v4140, 56
    %v4364 = vpop.permute.xlu0 %4363
    %4365 = vrot.lane.b32.xlu0 %v4152, 56
    %v4366 = vpop.permute.xlu0 %4365
    %4367 = vrot.lane.b32.xlu0 %v4164, 56
    %v4368 = vpop.permute.xlu0 %4367
    %4369 = vrot.lane.b32.xlu0 %v4176, 56
    %v4370 = vpop.permute.xlu0 %4369
    %4371 = vrot.lane.b32.xlu0 %v4188, 56
    %v4372 = vpop.permute.xlu0 %4371
    %4373 = vrot.lane.b32.xlu0 %v4200, 56
    %v4374 = vpop.permute.xlu0 %4373
    %4375 = vrot.lane.b32.xlu0 %v4212, 56
    %v4376 = vpop.permute.xlu0 %4375
    %4377 = vrot.lane.b32.xlu0 %v4224, 56
    %v4378 = vpop.permute.xlu0 %4377
    %4379 = vrot.lane.b32.xlu0 %v4236, 56
    %v4380 = vpop.permute.xlu0 %4379
    %4381 = vrot.lane.b32.xlu0 %v4248, 56
    %v4382 = vpop.permute.xlu0 %4381
    %4383 = vrot.lane.b32.xlu0 %v4260, 56
    %v4384 = vpop.permute.xlu0 %4383
    %4385 = vrot.lane.b32.xlu0 %v4272, 56
    %v4386 = vpop.permute.xlu0 %4385
    %4387 = vrot.lane.b32.xlu0 %v4284, 56
    %v4388 = vpop.permute.xlu0 %4387
    %4389 = vrot.lane.b32.xlu0 %v4296, 56
    %v4390 = vpop.permute.xlu0 %4389
    %4391 = vrot.lane.b32.xlu0 %v4308, 56
    %v4392 = vpop.permute.xlu0 %4391
    %4393 = vrot.lane.b32.xlu0 %v4320, 56
    %v4394 = vpop.permute.xlu0 %4393
    %4395 = vrot.lane.b32.xlu0 %v4332, 56
    %v4396 = vpop.permute.xlu0 %4395
    %v4429 = vunpack.c.l.b16 %v1611
    %v4430 = vunpack.c.l.b16 %v1612
    %v4431 = vunpack.c.l.b16 %v1613
    %v4432 = vunpack.c.l.b16 %v1614
    %v4433 = vunpack.c.l.b16 %v1615
    %v4434 = vunpack.c.l.b16 %v1616
    %v4435 = vunpack.c.l.b16 %v1617
    %v4436 = vunpack.c.l.b16 %v1618
    %v4437 = vunpack.c.l.b16 %v1619
    %v4438 = vunpack.c.l.b16 %v1620
    %v4439 = vunpack.c.l.b16 %v1621
    %v4440 = vunpack.c.l.b16 %v1622
    %v4441 = vunpack.c.l.b16 %v1623
    %v4442 = vunpack.c.l.b16 %v1624
    %v4443 = vunpack.c.l.b16 %v1625
    %v4444 = vunpack.c.l.b16 %v1626
    %v4445 = vunpack.c.l.b16 %v1627
    %v4446 = vunpack.c.l.b16 %v1628
    %v4447 = vunpack.c.l.b16 %v1629
    %v4448 = vunpack.c.l.b16 %v1630
    %v4449 = vunpack.c.l.b16 %v1631
    %v4450 = vunpack.c.l.b16 %v1632
    %v4451 = vunpack.c.l.b16 %v1633
    %v4452 = vunpack.c.l.b16 %v1634
    %v4453 = vunpack.c.l.b16 %v1635
    %v4454 = vunpack.c.l.b16 %v1636
    %v4455 = vunpack.c.l.b16 %v1637
    %v4456 = vunpack.c.l.b16 %v1638
    %v4457 = vunpack.c.l.b16 %v1639
    %v4458 = vunpack.c.l.b16 %v1640
    %v4459 = vunpack.c.l.b16 %v1641
    %v4460 = vunpack.c.l.b16 %v1642
    %v4461 = vpack.c.b16 %v3694, %v4429
    %v4462 = vpack.c.b16 %v3696, %v4430
    %v4463 = vpack.c.b16 %v3698, %v4431
    %v4464 = vpack.c.b16 %v3700, %v4432
    %v4465 = vpack.c.b16 %v3702, %v4433
    %v4466 = vpack.c.b16 %v3704, %v4434
    %v4467 = vpack.c.b16 %v3706, %v4435
    %v4468 = vpack.c.b16 %v3708, %v4436
    %v4469 = vpack.c.b16 %v3710, %v4437
    %v4470 = vpack.c.b16 %v3712, %v4438
    %v4471 = vpack.c.b16 %v3714, %v4439
    %v4472 = vpack.c.b16 %v3716, %v4440
    %v4473 = vpack.c.b16 %v3718, %v4441
    %v4474 = vpack.c.b16 %v3720, %v4442
    %v4475 = vpack.c.b16 %v3722, %v4443
    %v4476 = vpack.c.b16 %v3724, %v4444
    %v4477 = vpack.c.b16 %v3726, %v4445
    %v4478 = vpack.c.b16 %v3728, %v4446
    %v4479 = vpack.c.b16 %v3730, %v4447
    %v4480 = vpack.c.b16 %v3732, %v4448
    %v4481 = vpack.c.b16 %v3734, %v4449
    %v4482 = vpack.c.b16 %v3736, %v4450
    %v4483 = vpack.c.b16 %v3738, %v4451
    %v4484 = vpack.c.b16 %v3740, %v4452
    %v4485 = vpack.c.b16 %v3742, %v4453
    %v4486 = vpack.c.b16 %v3744, %v4454
    %v4487 = vpack.c.b16 %v3746, %v4455
    %v4488 = vpack.c.b16 %v3748, %v4456
    %v4489 = vpack.c.b16 %v3750, %v4457
    %v4490 = vpack.c.b16 %v3752, %v4458
    %v4491 = vpack.c.b16 %v3754, %v4459
    %v4492 = vpack.c.b16 %v3756, %v4460
    %v4493 = vrot.slane %v4461, 1
    %v4494 = vrot.slane %v3917, 1
    %v4495 = vsel %vm2444, %v4493, %v4494
    %v4496 = vrot.slane %v4462, 1
    %v4497 = vrot.slane %v3918, 1
    %v4498 = vsel %vm2444, %v4496, %v4497
    %v4499 = vrot.slane %v4463, 1
    %v4500 = vrot.slane %v3919, 1
    %v4501 = vsel %vm2444, %v4499, %v4500
    %v4502 = vrot.slane %v4464, 1
    %v4503 = vrot.slane %v3920, 1
    %v4504 = vsel %vm2444, %v4502, %v4503
    %v4505 = vrot.slane %v4465, 1
    %v4506 = vrot.slane %v3921, 1
    %v4507 = vsel %vm2444, %v4505, %v4506
    %v4508 = vrot.slane %v4466, 1
    %v4509 = vrot.slane %v3922, 1
    %v4510 = vsel %vm2444, %v4508, %v4509
    %v4511 = vrot.slane %v4467, 1
    %v4512 = vrot.slane %v3923, 1
    %v4513 = vsel %vm2444, %v4511, %v4512
    %v4514 = vrot.slane %v4468, 1
    %v4515 = vrot.slane %v3924, 1
    %v4516 = vsel %vm2444, %v4514, %v4515
    %v4517 = vrot.slane %v4469, 1
    %v4518 = vrot.slane %v3925, 1
    %v4519 = vsel %vm2444, %v4517, %v4518
    %v4520 = vrot.slane %v4470, 1
    %v4521 = vrot.slane %v3926, 1
    %v4522 = vsel %vm2444, %v4520, %v4521
    %v4523 = vrot.slane %v4471, 1
    %v4524 = vrot.slane %v3927, 1
    %v4525 = vsel %vm2444, %v4523, %v4524
    %v4526 = vrot.slane %v4472, 1
    %v4527 = vrot.slane %v3928, 1
    %v4528 = vsel %vm2444, %v4526, %v4527
    %v4529 = vrot.slane %v4473, 1
    %v4530 = vrot.slane %v3929, 1
    %v4531 = vsel %vm2444, %v4529, %v4530
    %v4532 = vrot.slane %v4474, 1
    %v4533 = vrot.slane %v3930, 1
    %v4534 = vsel %vm2444, %v4532, %v4533
    %v4535 = vrot.slane %v4475, 1
    %v4536 = vrot.slane %v3931, 1
    %v4537 = vsel %vm2444, %v4535, %v4536
    %v4538 = vrot.slane %v4476, 1
    %v4539 = vrot.slane %v3932, 1
    %v4540 = vsel %vm2444, %v4538, %v4539
    %v4541 = vrot.slane %v4477, 1
    %v4542 = vrot.slane %v3933, 1
    %v4543 = vsel %vm2444, %v4541, %v4542
    %v4544 = vrot.slane %v4478, 1
    %v4545 = vrot.slane %v3934, 1
    %v4546 = vsel %vm2444, %v4544, %v4545
    %v4547 = vrot.slane %v4479, 1
    %v4548 = vrot.slane %v3935, 1
    %v4549 = vsel %vm2444, %v4547, %v4548
    %v4550 = vrot.slane %v4480, 1
    %v4551 = vrot.slane %v3936, 1
    %v4552 = vsel %vm2444, %v4550, %v4551
    %v4553 = vrot.slane %v4481, 1
    %v4554 = vrot.slane %v3937, 1
    %v4555 = vsel %vm2444, %v4553, %v4554
    %v4556 = vrot.slane %v4482, 1
    %v4557 = vrot.slane %v3938, 1
    %v4558 = vsel %vm2444, %v4556, %v4557
    %v4559 = vrot.slane %v4483, 1
    %v4560 = vrot.slane %v3939, 1
    %v4561 = vsel %vm2444, %v4559, %v4560
    %v4562 = vrot.slane %v4484, 1
    %v4563 = vrot.slane %v3940, 1
    %v4564 = vsel %vm2444, %v4562, %v4563
    %v4565 = vrot.slane %v4485, 1
    %v4566 = vrot.slane %v3941, 1
    %v4567 = vsel %vm2444, %v4565, %v4566
    %v4568 = vrot.slane %v4486, 1
    %v4569 = vrot.slane %v3942, 1
    %v4570 = vsel %vm2444, %v4568, %v4569
    %v4571 = vrot.slane %v4487, 1
    %v4572 = vrot.slane %v3943, 1
    %v4573 = vsel %vm2444, %v4571, %v4572
    %v4574 = vrot.slane %v4488, 1
    %v4575 = vrot.slane %v3944, 1
    %v4576 = vsel %vm2444, %v4574, %v4575
    %v4577 = vrot.slane %v4489, 1
    %v4578 = vrot.slane %v3945, 1
    %v4579 = vsel %vm2444, %v4577, %v4578
    %v4580 = vrot.slane %v4490, 1
    %v4581 = vrot.slane %v3946, 1
    %v4582 = vsel %vm2444, %v4580, %v4581
    %v4583 = vrot.slane %v4491, 1
    %v4584 = vrot.slane %v3947, 1
    %v4585 = vsel %vm2444, %v4583, %v4584
    %v4586 = vrot.slane %v4492, 1
    %v4587 = vrot.slane %v3948, 1
    %v4588 = vsel %vm2444, %v4586, %v4587
    %4589 = vrot.lane.b32.xlu0 %v4495, 64
    %v4590 = vpop.permute.xlu0 %4589
    %4591 = vrot.lane.b32.xlu0 %v4498, 64
    %v4592 = vpop.permute.xlu0 %4591
    %4593 = vrot.lane.b32.xlu0 %v4501, 64
    %v4594 = vpop.permute.xlu0 %4593
    %4595 = vrot.lane.b32.xlu0 %v4504, 64
    %v4596 = vpop.permute.xlu0 %4595
    %4597 = vrot.lane.b32.xlu0 %v4507, 64
    %v4598 = vpop.permute.xlu0 %4597
    %4599 = vrot.lane.b32.xlu0 %v4510, 64
    %v4600 = vpop.permute.xlu0 %4599
    %4601 = vrot.lane.b32.xlu0 %v4513, 64
    %v4602 = vpop.permute.xlu0 %4601
    %4603 = vrot.lane.b32.xlu0 %v4516, 64
    %v4604 = vpop.permute.xlu0 %4603
    %4605 = vrot.lane.b32.xlu0 %v4519, 64
    %v4606 = vpop.permute.xlu0 %4605
    %4607 = vrot.lane.b32.xlu0 %v4522, 64
    %v4608 = vpop.permute.xlu0 %4607
    %4609 = vrot.lane.b32.xlu0 %v4525, 64
    %v4610 = vpop.permute.xlu0 %4609
    %4611 = vrot.lane.b32.xlu0 %v4528, 64
    %v4612 = vpop.permute.xlu0 %4611
    %4613 = vrot.lane.b32.xlu0 %v4531, 64
    %v4614 = vpop.permute.xlu0 %4613
    %4615 = vrot.lane.b32.xlu0 %v4534, 64
    %v4616 = vpop.permute.xlu0 %4615
    %4617 = vrot.lane.b32.xlu0 %v4537, 64
    %v4618 = vpop.permute.xlu0 %4617
    %4619 = vrot.lane.b32.xlu0 %v4540, 64
    %v4620 = vpop.permute.xlu0 %4619
    %4621 = vrot.lane.b32.xlu0 %v4543, 64
    %v4622 = vpop.permute.xlu0 %4621
    %4623 = vrot.lane.b32.xlu0 %v4546, 64
    %v4624 = vpop.permute.xlu0 %4623
    %4625 = vrot.lane.b32.xlu0 %v4549, 64
    %v4626 = vpop.permute.xlu0 %4625
    %4627 = vrot.lane.b32.xlu0 %v4552, 64
    %v4628 = vpop.permute.xlu0 %4627
    %4629 = vrot.lane.b32.xlu0 %v4555, 64
    %v4630 = vpop.permute.xlu0 %4629
    %4631 = vrot.lane.b32.xlu0 %v4558, 64
    %v4632 = vpop.permute.xlu0 %4631
    %4633 = vrot.lane.b32.xlu0 %v4561, 64
    %v4634 = vpop.permute.xlu0 %4633
    %4635 = vrot.lane.b32.xlu0 %v4564, 64
    %v4636 = vpop.permute.xlu0 %4635
    %4637 = vrot.lane.b32.xlu0 %v4567, 64
    %v4638 = vpop.permute.xlu0 %4637
    %4639 = vrot.lane.b32.xlu0 %v4570, 64
    %v4640 = vpop.permute.xlu0 %4639
    %4641 = vrot.lane.b32.xlu0 %v4573, 64
    %v4642 = vpop.permute.xlu0 %4641
    %4643 = vrot.lane.b32.xlu0 %v4576, 64
    %v4644 = vpop.permute.xlu0 %4643
    %4645 = vrot.lane.b32.xlu0 %v4579, 64
    %v4646 = vpop.permute.xlu0 %4645
    %4647 = vrot.lane.b32.xlu0 %v4582, 64
    %v4648 = vpop.permute.xlu0 %4647
    %4649 = vrot.lane.b32.xlu0 %v4585, 64
    %v4650 = vpop.permute.xlu0 %4649
    %4651 = vrot.lane.b32.xlu0 %v4588, 64
    %v4652 = vpop.permute.xlu0 %4651
    %vm4653 = vcmask 64512
    %v4655 = vsel %vm4653, %v1771, %v2285
    %v4657 = vsel %vm4653, %v1772, %v2287
    %v4659 = vsel %vm4653, %v1773, %v2289
    %v4661 = vsel %vm4653, %v1774, %v2291
    %v4663 = vsel %vm4653, %v1775, %v2293
    %v4665 = vsel %vm4653, %v1776, %v2295
    %v4667 = vsel %vm4653, %v1777, %v2297
    %v4669 = vsel %vm4653, %v1778, %v2299
    %v4671 = vsel %vm4653, %v1779, %v2301
    %v4673 = vsel %vm4653, %v1780, %v2303
    %v4675 = vsel %vm4653, %v1781, %v2305
    %v4677 = vsel %vm4653, %v1782, %v2307
    %v4679 = vsel %vm4653, %v1783, %v2309
    %v4681 = vsel %vm4653, %v1784, %v2311
    %v4683 = vsel %vm4653, %v1785, %v2313
    %v4685 = vsel %vm4653, %v1786, %v2315
    %v4687 = vsel %vm4653, %v1787, %v2317
    %v4689 = vsel %vm4653, %v1788, %v2319
    %v4691 = vsel %vm4653, %v1789, %v2321
    %v4693 = vsel %vm4653, %v1790, %v2323
    %v4695 = vsel %vm4653, %v1791, %v2325
    %v4697 = vsel %vm4653, %v1792, %v2327
    %v4699 = vsel %vm4653, %v1793, %v2329
    %v4701 = vsel %vm4653, %v1794, %v2331
    %v4703 = vsel %vm4653, %v1795, %v2333
    %v4705 = vsel %vm4653, %v1796, %v2335
    %v4707 = vsel %vm4653, %v1797, %v2337
    %v4709 = vsel %vm4653, %v1798, %v2339
    %v4711 = vsel %vm4653, %v1799, %v2341
    %v4713 = vsel %vm4653, %v1800, %v2343
    %v4715 = vsel %vm4653, %v1801, %v2345
    %v4717 = vsel %vm4653, %v1802, %v2347
    %vm4718 = vcmask 130048
    %v4720 = vsel %vm4718, %v4655, %v2542
    %v4722 = vsel %vm4718, %v4657, %v2544
    %v4724 = vsel %vm4718, %v4659, %v2546
    %v4726 = vsel %vm4718, %v4661, %v2548
    %v4728 = vsel %vm4718, %v4663, %v2550
    %v4730 = vsel %vm4718, %v4665, %v2552
    %v4732 = vsel %vm4718, %v4667, %v2554
    %v4734 = vsel %vm4718, %v4669, %v2556
    %v4736 = vsel %vm4718, %v4671, %v2558
    %v4738 = vsel %vm4718, %v4673, %v2560
    %v4740 = vsel %vm4718, %v4675, %v2562
    %v4742 = vsel %vm4718, %v4677, %v2564
    %v4744 = vsel %vm4718, %v4679, %v2566
    %v4746 = vsel %vm4718, %v4681, %v2568
    %v4748 = vsel %vm4718, %v4683, %v2570
    %v4750 = vsel %vm4718, %v4685, %v2572
    %v4752 = vsel %vm4718, %v4687, %v2574
    %v4754 = vsel %vm4718, %v4689, %v2576
    %v4756 = vsel %vm4718, %v4691, %v2578
    %v4758 = vsel %vm4718, %v4693, %v2580
    %v4760 = vsel %vm4718, %v4695, %v2582
    %v4762 = vsel %vm4718, %v4697, %v2584
    %v4764 = vsel %vm4718, %v4699, %v2586
    %v4766 = vsel %vm4718, %v4701, %v2588
    %v4768 = vsel %vm4718, %v4703, %v2590
    %v4770 = vsel %vm4718, %v4705, %v2592
    %v4772 = vsel %vm4718, %v4707, %v2594
    %v4774 = vsel %vm4718, %v4709, %v2596
    %v4776 = vsel %vm4718, %v4711, %v2598
    %v4778 = vsel %vm4718, %v4713, %v2600
    %v4780 = vsel %vm4718, %v4715, %v2602
    %v4782 = vsel %vm4718, %v4717, %v2604
    %vm4783 = vcmask 195584
    %v4785 = vsel %vm4783, %v4720, %v2766
    %v4787 = vsel %vm4783, %v4722, %v2768
    %v4789 = vsel %vm4783, %v4724, %v2770
    %v4791 = vsel %vm4783, %v4726, %v2772
    %v4793 = vsel %vm4783, %v4728, %v2774
    %v4795 = vsel %vm4783, %v4730, %v2776
    %v4797 = vsel %vm4783, %v4732, %v2778
    %v4799 = vsel %vm4783, %v4734, %v2780
    %v4801 = vsel %vm4783, %v4736, %v2782
    %v4803 = vsel %vm4783, %v4738, %v2784
    %v4805 = vsel %vm4783, %v4740, %v2786
    %v4807 = vsel %vm4783, %v4742, %v2788
    %v4809 = vsel %vm4783, %v4744, %v2790
    %v4811 = vsel %vm4783, %v4746, %v2792
    %v4813 = vsel %vm4783, %v4748, %v2794
    %v4815 = vsel %vm4783, %v4750, %v2796
    %v4817 = vsel %vm4783, %v4752, %v2798
    %v4819 = vsel %vm4783, %v4754, %v2800
    %v4821 = vsel %vm4783, %v4756, %v2802
    %v4823 = vsel %vm4783, %v4758, %v2804
    %v4825 = vsel %vm4783, %v4760, %v2806
    %v4827 = vsel %vm4783, %v4762, %v2808
    %v4829 = vsel %vm4783, %v4764, %v2810
    %v4831 = vsel %vm4783, %v4766, %v2812
    %v4833 = vsel %vm4783, %v4768, %v2814
    %v4835 = vsel %vm4783, %v4770, %v2816
    %v4837 = vsel %vm4783, %v4772, %v2818
    %v4839 = vsel %vm4783, %v4774, %v2820
    %v4841 = vsel %vm4783, %v4776, %v2822
    %v4843 = vsel %vm4783, %v4778, %v2824
    %v4845 = vsel %vm4783, %v4780, %v2826
    %v4847 = vsel %vm4783, %v4782, %v2828
    %vm4848 = vcmask 261120
    %v4850 = vsel %vm4848, %v4785, %v3310
    %v4852 = vsel %vm4848, %v4787, %v3312
    %v4854 = vsel %vm4848, %v4789, %v3314
    %v4856 = vsel %vm4848, %v4791, %v3316
    %v4858 = vsel %vm4848, %v4793, %v3318
    %v4860 = vsel %vm4848, %v4795, %v3320
    %v4862 = vsel %vm4848, %v4797, %v3322
    %v4864 = vsel %vm4848, %v4799, %v3324
    %v4866 = vsel %vm4848, %v4801, %v3326
    %v4868 = vsel %vm4848, %v4803, %v3328
    %v4870 = vsel %vm4848, %v4805, %v3330
    %v4872 = vsel %vm4848, %v4807, %v3332
    %v4874 = vsel %vm4848, %v4809, %v3334
    %v4876 = vsel %vm4848, %v4811, %v3336
    %v4878 = vsel %vm4848, %v4813, %v3338
    %v4880 = vsel %vm4848, %v4815, %v3340
    %v4882 = vsel %vm4848, %v4817, %v3342
    %v4884 = vsel %vm4848, %v4819, %v3344
    %v4886 = vsel %vm4848, %v4821, %v3346
    %v4888 = vsel %vm4848, %v4823, %v3348
    %v4890 = vsel %vm4848, %v4825, %v3350
    %v4892 = vsel %vm4848, %v4827, %v3352
    %v4894 = vsel %vm4848, %v4829, %v3354
    %v4896 = vsel %vm4848, %v4831, %v3356
    %v4898 = vsel %vm4848, %v4833, %v3358
    %v4900 = vsel %vm4848, %v4835, %v3360
    %v4902 = vsel %vm4848, %v4837, %v3362
    %v4904 = vsel %vm4848, %v4839, %v3364
    %v4906 = vsel %vm4848, %v4841, %v3366
    %v4908 = vsel %vm4848, %v4843, %v3368
    %v4910 = vsel %vm4848, %v4845, %v3370
    %v4912 = vsel %vm4848, %v4847, %v3372
    %vm4913 = vcmask 326656
    %v4915 = vsel %vm4913, %v4850, %v3566
    %v4917 = vsel %vm4913, %v4852, %v3568
    %v4919 = vsel %vm4913, %v4854, %v3570
    %v4921 = vsel %vm4913, %v4856, %v3572
    %v4923 = vsel %vm4913, %v4858, %v3574
    %v4925 = vsel %vm4913, %v4860, %v3576
    %v4927 = vsel %vm4913, %v4862, %v3578
    %v4929 = vsel %vm4913, %v4864, %v3580
    %v4931 = vsel %vm4913, %v4866, %v3582
    %v4933 = vsel %vm4913, %v4868, %v3584
    %v4935 = vsel %vm4913, %v4870, %v3586
    %v4937 = vsel %vm4913, %v4872, %v3588
    %v4939 = vsel %vm4913, %v4874, %v3590
    %v4941 = vsel %vm4913, %v4876, %v3592
    %v4943 = vsel %vm4913, %v4878, %v3594
    %v4945 = vsel %vm4913, %v4880, %v3596
    %v4947 = vsel %vm4913, %v4882, %v3598
    %v4949 = vsel %vm4913, %v4884, %v3600
    %v4951 = vsel %vm4913, %v4886, %v3602
    %v4953 = vsel %vm4913, %v4888, %v3604
    %v4955 = vsel %vm4913, %v4890, %v3606
    %v4957 = vsel %vm4913, %v4892, %v3608
    %v4959 = vsel %vm4913, %v4894, %v3610
    %v4961 = vsel %vm4913, %v4896, %v3612
    %v4963 = vsel %vm4913, %v4898, %v3614
    %v4965 = vsel %vm4913, %v4900, %v3616
    %v4967 = vsel %vm4913, %v4902, %v3618
    %v4969 = vsel %vm4913, %v4904, %v3620
    %v4971 = vsel %vm4913, %v4906, %v3622
    %v4973 = vsel %vm4913, %v4908, %v3624
    %v4975 = vsel %vm4913, %v4910, %v3626
    %v4977 = vsel %vm4913, %v4912, %v3628
    %vm4978 = vcmask 392192
    %v4980 = vsel %vm4978, %v4915, %v3790
    %v4982 = vsel %vm4978, %v4917, %v3792
    %v4984 = vsel %vm4978, %v4919, %v3794
    %v4986 = vsel %vm4978, %v4921, %v3796
    %v4988 = vsel %vm4978, %v4923, %v3798
    %v4990 = vsel %vm4978, %v4925, %v3800
    %v4992 = vsel %vm4978, %v4927, %v3802
    %v4994 = vsel %vm4978, %v4929, %v3804
    %v4996 = vsel %vm4978, %v4931, %v3806
    %v4998 = vsel %vm4978, %v4933, %v3808
    %v5000 = vsel %vm4978, %v4935, %v3810
    %v5002 = vsel %vm4978, %v4937, %v3812
    %v5004 = vsel %vm4978, %v4939, %v3814
    %v5006 = vsel %vm4978, %v4941, %v3816
    %v5008 = vsel %vm4978, %v4943, %v3818
    %v5010 = vsel %vm4978, %v4945, %v3820
    %v5012 = vsel %vm4978, %v4947, %v3822
    %v5014 = vsel %vm4978, %v4949, %v3824
    %v5016 = vsel %vm4978, %v4951, %v3826
    %v5018 = vsel %vm4978, %v4953, %v3828
    %v5020 = vsel %vm4978, %v4955, %v3830
    %v5022 = vsel %vm4978, %v4957, %v3832
    %v5024 = vsel %vm4978, %v4959, %v3834
    %v5026 = vsel %vm4978, %v4961, %v3836
    %v5028 = vsel %vm4978, %v4963, %v3838
    %v5030 = vsel %vm4978, %v4965, %v3840
    %v5032 = vsel %vm4978, %v4967, %v3842
    %v5034 = vsel %vm4978, %v4969, %v3844
    %v5036 = vsel %vm4978, %v4971, %v3846
    %v5038 = vsel %vm4978, %v4973, %v3848
    %v5040 = vsel %vm4978, %v4975, %v3850
    %v5042 = vsel %vm4978, %v4977, %v3852
    %vm5043 = vcmask 457728
    %v5045 = vsel %vm5043, %v4980, %v4334
    %v5047 = vsel %vm5043, %v4982, %v4336
    %v5049 = vsel %vm5043, %v4984, %v4338
    %v5051 = vsel %vm5043, %v4986, %v4340
    %v5053 = vsel %vm5043, %v4988, %v4342
    %v5055 = vsel %vm5043, %v4990, %v4344
    %v5057 = vsel %vm5043, %v4992, %v4346
    %v5059 = vsel %vm5043, %v4994, %v4348
    %v5061 = vsel %vm5043, %v4996, %v4350
    %v5063 = vsel %vm5043, %v4998, %v4352
    %v5065 = vsel %vm5043, %v5000, %v4354
    %v5067 = vsel %vm5043, %v5002, %v4356
    %v5069 = vsel %vm5043, %v5004, %v4358
    %v5071 = vsel %vm5043, %v5006, %v4360
    %v5073 = vsel %vm5043, %v5008, %v4362
    %v5075 = vsel %vm5043, %v5010, %v4364
    %v5077 = vsel %vm5043, %v5012, %v4366
    %v5079 = vsel %vm5043, %v5014, %v4368
    %v5081 = vsel %vm5043, %v5016, %v4370
    %v5083 = vsel %vm5043, %v5018, %v4372
    %v5085 = vsel %vm5043, %v5020, %v4374
    %v5087 = vsel %vm5043, %v5022, %v4376
    %v5089 = vsel %vm5043, %v5024, %v4378
    %v5091 = vsel %vm5043, %v5026, %v4380
    %v5093 = vsel %vm5043, %v5028, %v4382
    %v5095 = vsel %vm5043, %v5030, %v4384
    %v5097 = vsel %vm5043, %v5032, %v4386
    %v5099 = vsel %vm5043, %v5034, %v4388
    %v5101 = vsel %vm5043, %v5036, %v4390
    %v5103 = vsel %vm5043, %v5038, %v4392
    %v5105 = vsel %vm5043, %v5040, %v4394
    %v5107 = vsel %vm5043, %v5042, %v4396
    %vm5108 = vcmask 523264
    %v5110 = vsel %vm5108, %v5045, %v4590
    %v5112 = vsel %vm5108, %v5047, %v4592
    %v5114 = vsel %vm5108, %v5049, %v4594
    %v5116 = vsel %vm5108, %v5051, %v4596
    %v5118 = vsel %vm5108, %v5053, %v4598
    %v5120 = vsel %vm5108, %v5055, %v4600
    %v5122 = vsel %vm5108, %v5057, %v4602
    %v5124 = vsel %vm5108, %v5059, %v4604
    %v5126 = vsel %vm5108, %v5061, %v4606
    %v5128 = vsel %vm5108, %v5063, %v4608
    %v5130 = vsel %vm5108, %v5065, %v4610
    %v5132 = vsel %vm5108, %v5067, %v4612
    %v5134 = vsel %vm5108, %v5069, %v4614
    %v5136 = vsel %vm5108, %v5071, %v4616
    %v5138 = vsel %vm5108, %v5073, %v4618
    %v5140 = vsel %vm5108, %v5075, %v4620
    %v5142 = vsel %vm5108, %v5077, %v4622
    %v5144 = vsel %vm5108, %v5079, %v4624
    %v5146 = vsel %vm5108, %v5081, %v4626
    %v5148 = vsel %vm5108, %v5083, %v4628
    %v5150 = vsel %vm5108, %v5085, %v4630
    %v5152 = vsel %vm5108, %v5087, %v4632
    %v5154 = vsel %vm5108, %v5089, %v4634
    %v5156 = vsel %vm5108, %v5091, %v4636
    %v5158 = vsel %vm5108, %v5093, %v4638
    %v5160 = vsel %vm5108, %v5095, %v4640
    %v5162 = vsel %vm5108, %v5097, %v4642
    %v5164 = vsel %vm5108, %v5099, %v4644
    %v5166 = vsel %vm5108, %v5101, %v4646
    %v5168 = vsel %vm5108, %v5103, %v4648
    %v5170 = vsel %vm5108, %v5105, %v4650
    %v5172 = vsel %vm5108, %v5107, %v4652
    %v5173 = vld [vmem:[#allocation9] sm:$0xf]
    %v5174 = vld [vmem:[#allocation9 + $0x4] sm:$0xf]
    %v5175 = vld [vmem:[#allocation9 + $0x8] sm:$0xf]
    %v5176 = vld [vmem:[#allocation9 + $0xc] sm:$0xf]
    %v5177 = vld [vmem:[#allocation9 + $0x10] sm:$0xf]
    %v5178 = vld [vmem:[#allocation9 + $0x14] sm:$0xf]
    %v5179 = vld [vmem:[#allocation9 + $0x18] sm:$0xf]
    %v5180 = vld [vmem:[#allocation9 + $0x1c] sm:$0xf]
    %v5181 = vld [vmem:[#allocation9 + $0x20] sm:$0xf]
    %v5191 = vunpack.c.l.b16 %v5173
    %v5192 = vunpack.c.l.b16 %v5174
    %v5193 = vunpack.c.l.b16 %v5175
    %v5194 = vunpack.c.l.b16 %v5176
    %v5195 = vunpack.c.l.b16 %v5177
    %v5196 = vunpack.c.l.b16 %v5178
    %v5197 = vunpack.c.l.b16 %v5179
    %v5198 = vunpack.c.l.b16 %v5180
    %v5199 = vunpack.c.l.b16 %v5181
    %v5200 = vpack.c.b16 %v5192, %v5191
    %v5201 = vpack.c.b16 %v5194, %v5193
    %v5202 = vpack.c.b16 %v5196, %v5195
    %v5203 = vpack.c.b16 %v5198, %v5197
    %v5204 = vpack.c.b16 %v5199, %v5199
    %vm5209 = vcmask 588800
    %v5210 = vsel %vm5209, %v5110, 0
    %v5212 = vsel %vm5209, %v5112, 0
    %v5214 = vsel %vm5209, %v5114, 0
    %v5216 = vsel %vm5209, %v5116, 0
    %v5218 = vsel %vm5209, %v5118, 0
    %v5220 = vsel %vm5209, %v5120, 0
    %v5222 = vsel %vm5209, %v5122, 0
    %v5224 = vsel %vm5209, %v5124, 0
    %v5226 = vsel %vm5209, %v5126, 0
    %v5228 = vsel %vm5209, %v5128, 0
    %v5230 = vsel %vm5209, %v5130, 0
    %v5232 = vsel %vm5209, %v5132, 0
    %v5234 = vsel %vm5209, %v5134, 0
    %v5236 = vsel %vm5209, %v5136, 0
    %v5238 = vsel %vm5209, %v5138, 0
    %v5240 = vsel %vm5209, %v5140, 0
    %v5242 = vsel %vm5209, %v5142, 0
    %v5244 = vsel %vm5209, %v5144, 0
    %v5246 = vsel %vm5209, %v5146, 0
    %v5248 = vsel %vm5209, %v5148, 0
    %v5250 = vsel %vm5209, %v5150, 0
    %v5252 = vsel %vm5209, %v5152, 0
    %v5254 = vsel %vm5209, %v5154, 0
    %v5256 = vsel %vm5209, %v5156, 0
    %v5258 = vsel %vm5209, %v5158, 0
    %v5260 = vsel %vm5209, %v5160, 0
    %v5262 = vsel %vm5209, %v5162, 0
    %v5264 = vsel %vm5209, %v5164, 0
    %v5266 = vsel %vm5209, %v5166, 0
    %v5268 = vsel %vm5209, %v5168, 0
    %v5270 = vsel %vm5209, %v5170, 0
    %v5272 = vsel %vm5209, %v5172, 0
    %vm5274 = vcmask 1043456
    %v5276 = vsel %vm5274, %v5204, 0
    %5278 = vmatprep.subr.bf16.mxu0 0
    %5279 = vmatpush1.bf16.msra.mxu0 %v5200
    %5280 = vmatprep.subr.bf16.mxu0 0
    %5281 = vmatpush1.bf16.msra.mxu0 %v5201
    %5282 = vmatprep.subr.bf16.mxu0 0
    %5283 = vmatpush1.bf16.msra.mxu0 %v5202
    %5284 = vmatprep.subr.bf16.mxu0 0
    %5285 = vmatpush1.bf16.msra.mxu0 %v5203
    %5286 = vmatprep.subr.bf16.mxu0 0
    %5287 = vmatpush1.bf16.msra.mxu0 %v5276
    %5288 = vmatprep.subr.bf16.mxu0 0
    %5289 = vmatpush1.bf16.msra.mxu0 0
    %5290 = vmatprep.subr.bf16.mxu0 0
    %5291 = vmatpush1.bf16.msra.mxu0 0
    %5292 = vmatprep.subr.bf16.mxu0 0
    %5293 = vmatpush1.bf16.msra.mxu0 0
    %5294 = vmatprep.subr.bf16.mxu0 0
    %5295 = vmatpush1.bf16.msra.mxu0 0
    %5296 = vmatprep.subr.bf16.mxu0 0
    %5297 = vmatpush1.bf16.msra.mxu0 0
    %5298 = vmatprep.subr.bf16.mxu0 0
    %5299 = vmatpush1.bf16.msra.mxu0 0
    %5300 = vmatprep.subr.bf16.mxu0 0
    %5301 = vmatpush1.bf16.msra.mxu0 0
    %5302 = vmatprep.subr.bf16.mxu0 0
    %5303 = vmatpush1.bf16.msra.mxu0 0
    %5304 = vmatprep.subr.bf16.mxu0 0
    %5305 = vmatpush1.bf16.msra.mxu0 0
    %5306 = vmatprep.subr.bf16.mxu0 0
    %5307 = vmatpush1.bf16.msra.mxu0 0
    %5308 = vmatprep.subr.bf16.mxu0 0
    %5309 = vmatpush1.bf16.msra.mxu0 0
    %5310 = vmatprep.mubr.bf16.mxu0 0
    %5311 = vmatmul.mubr.bf16.gmra.mrb[0].mxu0 %v5210
    %v5312 = vpop.f32.mrb[0].mxu0
    %v5313 = vadd.f32 0.0, %v5312
    %v5314 = vpop.f32.mrb[0].mxu0
    %v5315 = vpop.f32.mrb[0].mxu0
    %v5316 = vadd.f32 0.0, %v5315
    %v5317 = vpop.f32.mrb[0].mxu0
    %5318 = vmatprep.mubr.bf16.mxu0 0
    %5319 = vmatmul.mubr.bf16.gmra.mrb[0].mxu0 %v5212
    %v5320 = vpop.f32.mrb[0].mxu0
    %v5321 = vadd.f32 0.0, %v5320
    %v5322 = vpop.f32.mrb[0].mxu0
    %v5323 = vpop.f32.mrb[0].mxu0
    %v5324 = vadd.f32 0.0, %v5323
    %v5325 = vpop.f32.mrb[0].mxu0
    %5326 = vmatprep.mubr.bf16.mxu0 0
    %5327 = vmatmul.mubr.bf16.gmra.mrb[0].mxu0 %v5214
    %v5328 = vpop.f32.mrb[0].mxu0
    %v5329 = vadd.f32 0.0, %v5328
    %v5330 = vpop.f32.mrb[0].mxu0
    %v5331 = vpop.f32.mrb[0].mxu0
    %v5332 = vadd.f32 0.0, %v5331
    %v5333 = vpop.f32.mrb[0].mxu0
    %5334 = vmatprep.mubr.bf16.mxu0 0
    %5335 = vmatmul.mubr.bf16.gmra.mrb[0].mxu0 %v5216
    %v5336 = vpop.f32.mrb[0].mxu0
    %v5337 = vadd.f32 0.0, %v5336
    %v5338 = vpop.f32.mrb[0].mxu0
    %v5339 = vpop.f32.mrb[0].mxu0
    %v5340 = vadd.f32 0.0, %v5339
    %v5341 = vpop.f32.mrb[0].mxu0
    %5342 = vmatprep.mubr.bf16.mxu0 0
    %5343 = vmatmul.mubr.bf16.gmra.mrb[0].mxu0 %v5218
    %v5344 = vpop.f32.mrb[0].mxu0
    %v5345 = vadd.f32 0.0, %v5344
    %v5346 = vpop.f32.mrb[0].mxu0
    %v5347 = vpop.f32.mrb[0].mxu0
    %v5348 = vadd.f32 0.0, %v5347
    %v5349 = vpop.f32.mrb[0].mxu0
    %5350 = vmatprep.mubr.bf16.mxu0 0
    %5351 = vmatmul.mubr.bf16.gmra.mrb[0].mxu0 %v5220
    %v5352 = vpop.f32.mrb[0].mxu0
    %v5353 = vadd.f32 0.0, %v5352
    %v5354 = vpop.f32.mrb[0].mxu0
    %v5355 = vpop.f32.mrb[0].mxu0
    %v5356 = vadd.f32 0.0, %v5355
    %v5357 = vpop.f32.mrb[0].mxu0
    %5358 = vmatprep.mubr.bf16.mxu0 0
    %5359 = vmatmul.mubr.bf16.gmra.mrb[0].mxu0 %v5222
    %v5360 = vpop.f32.mrb[0].mxu0
    %v5361 = vadd.f32 0.0, %v5360
    %v5362 = vpop.f32.mrb[0].mxu0
    %v5363 = vpop.f32.mrb[0].mxu0
    %v5364 = vadd.f32 0.0, %v5363
    %v5365 = vpop.f32.mrb[0].mxu0
    %5366 = vmatprep.mubr.bf16.mxu0 0
    %5367 = vmatmul.mubr.bf16.gmra.mrb[0].mxu0 %v5224
    %v5368 = vpop.f32.mrb[0].mxu0
    %v5369 = vadd.f32 0.0, %v5368
    %v5370 = vpop.f32.mrb[0].mxu0
    %v5371 = vpop.f32.mrb[0].mxu0
    %v5372 = vadd.f32 0.0, %v5371
    %v5373 = vpop.f32.mrb[0].mxu0
    %5374 = vmatprep.mubr.bf16.mxu0 0
    %5375 = vmatmul.mubr.bf16.gmra.mrb[0].mxu0 %v5226
    %v5376 = vpop.f32.mrb[0].mxu0
    %v5377 = vadd.f32 0.0, %v5376
    %v5378 = vpop.f32.mrb[0].mxu0
    %v5379 = vpop.f32.mrb[0].mxu0
    %v5380 = vadd.f32 0.0, %v5379
    %v5381 = vpop.f32.mrb[0].mxu0
    %5382 = vmatprep.mubr.bf16.mxu0 0
    %5383 = vmatmul.mubr.bf16.gmra.mrb[0].mxu0 %v5228
    %v5384 = vpop.f32.mrb[0].mxu0
    %v5385 = vadd.f32 0.0, %v5384
    %v5386 = vpop.f32.mrb[0].mxu0
    %v5387 = vpop.f32.mrb[0].mxu0
    %v5388 = vadd.f32 0.0, %v5387
    %v5389 = vpop.f32.mrb[0].mxu0
    %5390 = vmatprep.mubr.bf16.mxu0 0
    %5391 = vmatmul.mubr.bf16.gmra.mrb[0].mxu0 %v5230
    %v5392 = vpop.f32.mrb[0].mxu0
    %v5393 = vadd.f32 0.0, %v5392
    %v5394 = vpop.f32.mrb[0].mxu0
    %v5395 = vpop.f32.mrb[0].mxu0
    %v5396 = vadd.f32 0.0, %v5395
    %v5397 = vpop.f32.mrb[0].mxu0
    %5398 = vmatprep.mubr.bf16.mxu0 0
    %5399 = vmatmul.mubr.bf16.gmra.mrb[0].mxu0 %v5232
    %v5400 = vpop.f32.mrb[0].mxu0
    %v5401 = vadd.f32 0.0, %v5400
    %v5402 = vpop.f32.mrb[0].mxu0
    %v5403 = vpop.f32.mrb[0].mxu0
    %v5404 = vadd.f32 0.0, %v5403
    %v5405 = vpop.f32.mrb[0].mxu0
    %5406 = vmatprep.mubr.bf16.mxu0 0
    %5407 = vmatmul.mubr.bf16.gmra.mrb[0].mxu0 %v5234
    %v5408 = vpop.f32.mrb[0].mxu0
    %v5409 = vadd.f32 0.0, %v5408
    %v5410 = vpop.f32.mrb[0].mxu0
    %v5411 = vpop.f32.mrb[0].mxu0
    %v5412 = vadd.f32 0.0, %v5411
    %v5413 = vpop.f32.mrb[0].mxu0
    %5414 = vmatprep.mubr.bf16.mxu0 0
    %5415 = vmatmul.mubr.bf16.gmra.mrb[0].mxu0 %v5236
    %v5416 = vpop.f32.mrb[0].mxu0
    %v5417 = vadd.f32 0.0, %v5416
    %v5418 = vpop.f32.mrb[0].mxu0
    %v5419 = vpop.f32.mrb[0].mxu0
    %v5420 = vadd.f32 0.0, %v5419
    %v5421 = vpop.f32.mrb[0].mxu0
    %5422 = vmatprep.mubr.bf16.mxu0 0
    %5423 = vmatmul.mubr.bf16.gmra.mrb[0].mxu0 %v5238
    %v5424 = vpop.f32.mrb[0].mxu0
    %v5425 = vadd.f32 0.0, %v5424
    %v5426 = vpop.f32.mrb[0].mxu0
    %v5427 = vpop.f32.mrb[0].mxu0
    %v5428 = vadd.f32 0.0, %v5427
    %v5429 = vpop.f32.mrb[0].mxu0
    %5430 = vmatprep.mubr.bf16.mxu0 0
    %5431 = vmatmul.mubr.bf16.gmra.mrb[0].mxu0 %v5240
    %v5432 = vpop.f32.mrb[0].mxu0
    %v5433 = vadd.f32 0.0, %v5432
    %v5434 = vpop.f32.mrb[0].mxu0
    %v5435 = vpop.f32.mrb[0].mxu0
    %v5436 = vadd.f32 0.0, %v5435
    %v5437 = vpop.f32.mrb[0].mxu0
    %5438 = vmatprep.mubr.bf16.mxu0 0
    %5439 = vmatmul.mubr.bf16.gmra.mrb[0].mxu0 %v5242
    %v5440 = vpop.f32.mrb[0].mxu0
    %v5441 = vadd.f32 0.0, %v5440
    %v5442 = vpop.f32.mrb[0].mxu0
    %v5443 = vpop.f32.mrb[0].mxu0
    %v5444 = vadd.f32 0.0, %v5443
    %v5445 = vpop.f32.mrb[0].mxu0
    %5446 = vmatprep.mubr.bf16.mxu0 0
    %5447 = vmatmul.mubr.bf16.gmra.mrb[0].mxu0 %v5244
    %v5448 = vpop.f32.mrb[0].mxu0
    %v5449 = vadd.f32 0.0, %v5448
    %v5450 = vpop.f32.mrb[0].mxu0
    %v5451 = vpop.f32.mrb[0].mxu0
    %v5452 = vadd.f32 0.0, %v5451
    %v5453 = vpop.f32.mrb[0].mxu0
    %5454 = vmatprep.mubr.bf16.mxu0 0
    %5455 = vmatmul.mubr.bf16.gmra.mrb[0].mxu0 %v5246
    %v5456 = vpop.f32.mrb[0].mxu0
    %v5457 = vadd.f32 0.0, %v5456
    %v5458 = vpop.f32.mrb[0].mxu0
    %v5459 = vpop.f32.mrb[0].mxu0
    %v5460 = vadd.f32 0.0, %v5459
    %v5461 = vpop.f32.mrb[0].mxu0
    %5462 = vmatprep.mubr.bf16.mxu0 0
    %5463 = vmatmul.mubr.bf16.gmra.mrb[0].mxu0 %v5248
    %v5464 = vpop.f32.mrb[0].mxu0
    %v5465 = vadd.f32 0.0, %v5464
    %v5466 = vpop.f32.mrb[0].mxu0
    %v5467 = vpop.f32.mrb[0].mxu0
    %v5468 = vadd.f32 0.0, %v5467
    %v5469 = vpop.f32.mrb[0].mxu0
    %5470 = vmatprep.mubr.bf16.mxu0 0
    %5471 = vmatmul.mubr.bf16.gmra.mrb[0].mxu0 %v5250
    %v5472 = vpop.f32.mrb[0].mxu0
    %v5473 = vadd.f32 0.0, %v5472
    %v5474 = vpop.f32.mrb[0].mxu0
    %v5475 = vpop.f32.mrb[0].mxu0
    %v5476 = vadd.f32 0.0, %v5475
    %v5477 = vpop.f32.mrb[0].mxu0
    %5478 = vmatprep.mubr.bf16.mxu0 0
    %5479 = vmatmul.mubr.bf16.gmra.mrb[0].mxu0 %v5252
    %v5480 = vpop.f32.mrb[0].mxu0
    %v5481 = vadd.f32 0.0, %v5480
    %v5482 = vpop.f32.mrb[0].mxu0
    %v5483 = vpop.f32.mrb[0].mxu0
    %v5484 = vadd.f32 0.0, %v5483
    %v5485 = vpop.f32.mrb[0].mxu0
    %5486 = vmatprep.mubr.bf16.mxu0 0
    %5487 = vmatmul.mubr.bf16.gmra.mrb[0].mxu0 %v5254
    %v5488 = vpop.f32.mrb[0].mxu0
    %v5489 = vadd.f32 0.0, %v5488
    %v5490 = vpop.f32.mrb[0].mxu0
    %v5491 = vpop.f32.mrb[0].mxu0
    %v5492 = vadd.f32 0.0, %v5491
    %v5493 = vpop.f32.mrb[0].mxu0
    %5494 = vmatprep.mubr.bf16.mxu0 0
    %5495 = vmatmul.mubr.bf16.gmra.mrb[0].mxu0 %v5256
    %v5496 = vpop.f32.mrb[0].mxu0
    %v5497 = vadd.f32 0.0, %v5496
    %v5498 = vpop.f32.mrb[0].mxu0
    %v5499 = vpop.f32.mrb[0].mxu0
    %v5500 = vadd.f32 0.0, %v5499
    %v5501 = vpop.f32.mrb[0].mxu0
    %5502 = vmatprep.mubr.bf16.mxu0 0
    %5503 = vmatmul.mubr.bf16.gmra.mrb[0].mxu0 %v5258
    %v5504 = vpop.f32.mrb[0].mxu0
    %v5505 = vadd.f32 0.0, %v5504
    %v5506 = vpop.f32.mrb[0].mxu0
    %v5507 = vpop.f32.mrb[0].mxu0
    %v5508 = vadd.f32 0.0, %v5507
    %v5509 = vpop.f32.mrb[0].mxu0
    %5510 = vmatprep.mubr.bf16.mxu0 0
    %5511 = vmatmul.mubr.bf16.gmra.mrb[0].mxu0 %v5260
    %v5512 = vpop.f32.mrb[0].mxu0
    %v5513 = vadd.f32 0.0, %v5512
    %v5514 = vpop.f32.mrb[0].mxu0
    %v5515 = vpop.f32.mrb[0].mxu0
    %v5516 = vadd.f32 0.0, %v5515
    %v5517 = vpop.f32.mrb[0].mxu0
    %5518 = vmatprep.mubr.bf16.mxu0 0
    %5519 = vmatmul.mubr.bf16.gmra.mrb[0].mxu0 %v5262
    %v5520 = vpop.f32.mrb[0].mxu0
    %v5521 = vadd.f32 0.0, %v5520
    %v5522 = vpop.f32.mrb[0].mxu0
    %v5523 = vpop.f32.mrb[0].mxu0
    %v5524 = vadd.f32 0.0, %v5523
    %v5525 = vpop.f32.mrb[0].mxu0
    %5526 = vmatprep.mubr.bf16.mxu0 0
    %5527 = vmatmul.mubr.bf16.gmra.mrb[0].mxu0 %v5264
    %v5528 = vpop.f32.mrb[0].mxu0
    %v5529 = vadd.f32 0.0, %v5528
    %v5530 = vpop.f32.mrb[0].mxu0
    %v5531 = vpop.f32.mrb[0].mxu0
    %v5532 = vadd.f32 0.0, %v5531
    %v5533 = vpop.f32.mrb[0].mxu0
    %5534 = vmatprep.mubr.bf16.mxu0 0
    %5535 = vmatmul.mubr.bf16.gmra.mrb[0].mxu0 %v5266
    %v5536 = vpop.f32.mrb[0].mxu0
    %v5537 = vadd.f32 0.0, %v5536
    %v5538 = vpop.f32.mrb[0].mxu0
    %v5539 = vpop.f32.mrb[0].mxu0
    %v5540 = vadd.f32 0.0, %v5539
    %v5541 = vpop.f32.mrb[0].mxu0
    %5542 = vmatprep.mubr.bf16.mxu0 0
    %5543 = vmatmul.mubr.bf16.gmra.mrb[0].mxu0 %v5268
    %v5544 = vpop.f32.mrb[0].mxu0
    %v5545 = vadd.f32 0.0, %v5544
    %v5546 = vpop.f32.mrb[0].mxu0
    %v5547 = vpop.f32.mrb[0].mxu0
    %v5548 = vadd.f32 0.0, %v5547
    %v5549 = vpop.f32.mrb[0].mxu0
    %5550 = vmatprep.mubr.bf16.mxu0 0
    %5551 = vmatmul.mubr.bf16.gmra.mrb[0].mxu0 %v5270
    %v5552 = vpop.f32.mrb[0].mxu0
    %v5553 = vadd.f32 0.0, %v5552
    %v5554 = vpop.f32.mrb[0].mxu0
    %v5555 = vpop.f32.mrb[0].mxu0
    %v5556 = vadd.f32 0.0, %v5555
    %v5557 = vpop.f32.mrb[0].mxu0
    %5558 = vmatprep.mubr.bf16.mxu0 0
    %5559 = vmatmul.mubr.bf16.gmra.mrb[0].mxu0 %v5272
    %v5560 = vpop.f32.mrb[0].mxu0
    %v5561 = vadd.f32 0.0, %v5560
    %v5562 = vpop.f32.mrb[0].mxu0
    %v5563 = vpop.f32.mrb[0].mxu0
    %v5564 = vadd.f32 0.0, %v5563
    %v5565 = vpop.f32.mrb[0].mxu0
    %5566 = vdwg.mxu0
    %v5567 = vpack.c.bf16 %v5316, %v5313
    %v5568 = vpack.c.bf16 %v5324, %v5321
    %v5569 = vpack.c.bf16 %v5332, %v5329
    %v5570 = vpack.c.bf16 %v5340, %v5337
    %v5571 = vpack.c.bf16 %v5348, %v5345
    %v5572 = vpack.c.bf16 %v5356, %v5353
    %v5573 = vpack.c.bf16 %v5364, %v5361
    %v5574 = vpack.c.bf16 %v5372, %v5369
    %v5575 = vpack.c.bf16 %v5380, %v5377
    %v5576 = vpack.c.bf16 %v5388, %v5385
    %v5577 = vpack.c.bf16 %v5396, %v5393
    %v5578 = vpack.c.bf16 %v5404, %v5401
    %v5579 = vpack.c.bf16 %v5412, %v5409
    %v5580 = vpack.c.bf16 %v5420, %v5417
    %v5581 = vpack.c.bf16 %v5428, %v5425
    %v5582 = vpack.c.bf16 %v5436, %v5433
    %v5583 = vpack.c.bf16 %v5444, %v5441
    %v5584 = vpack.c.bf16 %v5452, %v5449
    %v5585 = vpack.c.bf16 %v5460, %v5457
    %v5586 = vpack.c.bf16 %v5468, %v5465
    %v5587 = vpack.c.bf16 %v5476, %v5473
    %v5588 = vpack.c.bf16 %v5484, %v5481
    %v5589 = vpack.c.bf16 %v5492, %v5489
    %v5590 = vpack.c.bf16 %v5500, %v5497
    %v5591 = vpack.c.bf16 %v5508, %v5505
    %v5592 = vpack.c.bf16 %v5516, %v5513
    %v5593 = vpack.c.bf16 %v5524, %v5521
    %v5594 = vpack.c.bf16 %v5532, %v5529
    %v5595 = vpack.c.bf16 %v5540, %v5537
    %v5596 = vpack.c.bf16 %v5548, %v5545
    %v5597 = vpack.c.bf16 %v5556, %v5553
    %v5598 = vpack.c.bf16 %v5564, %v5561
    %v5631 = vunpack.c.l.b16 %v5567
    %v5632 = vunpack.c.h.b16 %v5567
    %v5633 = vunpack.c.l.b16 %v5568
    %v5634 = vunpack.c.h.b16 %v5568
    %v5635 = vunpack.c.l.b16 %v5569
    %v5636 = vunpack.c.h.b16 %v5569
    %v5637 = vunpack.c.l.b16 %v5570
    %v5638 = vunpack.c.h.b16 %v5570
    %v5639 = vunpack.c.l.b16 %v5571
    %v5640 = vunpack.c.h.b16 %v5571
    %v5641 = vunpack.c.l.b16 %v5572
    %v5642 = vunpack.c.h.b16 %v5572
    %v5643 = vunpack.c.l.b16 %v5573
    %v5644 = vunpack.c.h.b16 %v5573
    %v5645 = vunpack.c.l.b16 %v5574
    %v5646 = vunpack.c.h.b16 %v5574
    %v5647 = vunpack.c.l.b16 %v5575
    %v5648 = vunpack.c.h.b16 %v5575
    %v5649 = vunpack.c.l.b16 %v5576
    %v5650 = vunpack.c.h.b16 %v5576
    %v5651 = vunpack.c.l.b16 %v5577
    %v5652 = vunpack.c.h.b16 %v5577
    %v5653 = vunpack.c.l.b16 %v5578
    %v5654 = vunpack.c.h.b16 %v5578
    %v5655 = vunpack.c.l.b16 %v5579
    %v5656 = vunpack.c.h.b16 %v5579
    %v5657 = vunpack.c.l.b16 %v5580
    %v5658 = vunpack.c.h.b16 %v5580
    %v5659 = vunpack.c.l.b16 %v5581
    %v5660 = vunpack.c.h.b16 %v5581
    %v5661 = vunpack.c.l.b16 %v5582
    %v5662 = vunpack.c.h.b16 %v5582
    %v5663 = vunpack.c.l.b16 %v5583
    %v5664 = vunpack.c.h.b16 %v5583
    %v5665 = vunpack.c.l.b16 %v5584
    %v5666 = vunpack.c.h.b16 %v5584
    %v5667 = vunpack.c.l.b16 %v5585
    %v5668 = vunpack.c.h.b16 %v5585
    %v5669 = vunpack.c.l.b16 %v5586
    %v5670 = vunpack.c.h.b16 %v5586
    %v5671 = vunpack.c.l.b16 %v5587
    %v5672 = vunpack.c.h.b16 %v5587
    %v5673 = vunpack.c.l.b16 %v5588
    %v5674 = vunpack.c.h.b16 %v5588
    %v5675 = vunpack.c.l.b16 %v5589
    %v5676 = vunpack.c.h.b16 %v5589
    %v5677 = vunpack.c.l.b16 %v5590
    %v5678 = vunpack.c.h.b16 %v5590
    %v5679 = vunpack.c.l.b16 %v5591
    %v5680 = vunpack.c.h.b16 %v5591
    %v5681 = vunpack.c.l.b16 %v5592
    %v5682 = vunpack.c.h.b16 %v5592
    %v5683 = vunpack.c.l.b16 %v5593
    %v5684 = vunpack.c.h.b16 %v5593
    %v5685 = vunpack.c.l.b16 %v5594
    %v5686 = vunpack.c.h.b16 %v5594
    %v5687 = vunpack.c.l.b16 %v5595
    %v5688 = vunpack.c.h.b16 %v5595
    %v5689 = vunpack.c.l.b16 %v5596
    %v5690 = vunpack.c.h.b16 %v5596
    %v5691 = vunpack.c.l.b16 %v5597
    %v5692 = vunpack.c.h.b16 %v5597
    %v5693 = vunpack.c.l.b16 %v5598
    %v5694 = vunpack.c.h.b16 %v5598
    %v5695 = vpack.c.b16 %v5631, %v5631
    %v5696 = vpack.c.b16 %v5632, %v5632
    %v5697 = vpack.c.b16 %v5633, %v5633
    %v5698 = vpack.c.b16 %v5634, %v5634
    %v5699 = vpack.c.b16 %v5635, %v5635
    %v5700 = vpack.c.b16 %v5636, %v5636
    %v5701 = vpack.c.b16 %v5637, %v5637
    %v5702 = vpack.c.b16 %v5638, %v5638
    %v5703 = vpack.c.b16 %v5639, %v5639
    %v5704 = vpack.c.b16 %v5640, %v5640
    %v5705 = vpack.c.b16 %v5641, %v5641
    %v5706 = vpack.c.b16 %v5642, %v5642
    %v5707 = vpack.c.b16 %v5643, %v5643
    %v5708 = vpack.c.b16 %v5644, %v5644
    %v5709 = vpack.c.b16 %v5645, %v5645
    %v5710 = vpack.c.b16 %v5646, %v5646
    %v5711 = vpack.c.b16 %v5647, %v5647
    %v5712 = vpack.c.b16 %v5648, %v5648
    %v5713 = vpack.c.b16 %v5649, %v5649
    %v5714 = vpack.c.b16 %v5650, %v5650
    %v5715 = vpack.c.b16 %v5651, %v5651
    %v5716 = vpack.c.b16 %v5652, %v5652
    %v5717 = vpack.c.b16 %v5653, %v5653
    %v5718 = vpack.c.b16 %v5654, %v5654
    %v5719 = vpack.c.b16 %v5655, %v5655
    %v5720 = vpack.c.b16 %v5656, %v5656
    %v5721 = vpack.c.b16 %v5657, %v5657
    %v5722 = vpack.c.b16 %v5658, %v5658
    %v5723 = vpack.c.b16 %v5659, %v5659
    %v5724 = vpack.c.b16 %v5660, %v5660
    %v5725 = vpack.c.b16 %v5661, %v5661
    %v5726 = vpack.c.b16 %v5662, %v5662
    %v5727 = vpack.c.b16 %v5663, %v5663
    %v5728 = vpack.c.b16 %v5664, %v5664
    %v5729 = vpack.c.b16 %v5665, %v5665
    %v5730 = vpack.c.b16 %v5666, %v5666
    %v5731 = vpack.c.b16 %v5667, %v5667
    %v5732 = vpack.c.b16 %v5668, %v5668
    %v5733 = vpack.c.b16 %v5669, %v5669
    %v5734 = vpack.c.b16 %v5670, %v5670
    %v5735 = vpack.c.b16 %v5671, %v5671
    %v5736 = vpack.c.b16 %v5672, %v5672
    %v5737 = vpack.c.b16 %v5673, %v5673
    %v5738 = vpack.c.b16 %v5674, %v5674
    %v5739 = vpack.c.b16 %v5675, %v5675
    %v5740 = vpack.c.b16 %v5676, %v5676
    %v5741 = vpack.c.b16 %v5677, %v5677
    %v5742 = vpack.c.b16 %v5678, %v5678
    %v5743 = vpack.c.b16 %v5679, %v5679
    %v5744 = vpack.c.b16 %v5680, %v5680
    %v5745 = vpack.c.b16 %v5681, %v5681
    %v5746 = vpack.c.b16 %v5682, %v5682
    %v5747 = vpack.c.b16 %v5683, %v5683
    %v5748 = vpack.c.b16 %v5684, %v5684
    %v5749 = vpack.c.b16 %v5685, %v5685
    %v5750 = vpack.c.b16 %v5686, %v5686
    %v5751 = vpack.c.b16 %v5687, %v5687
    %v5752 = vpack.c.b16 %v5688, %v5688
    %v5753 = vpack.c.b16 %v5689, %v5689
    %v5754 = vpack.c.b16 %v5690, %v5690
    %v5755 = vpack.c.b16 %v5691, %v5691
    %v5756 = vpack.c.b16 %v5692, %v5692
    %v5757 = vpack.c.b16 %v5693, %v5693
    %v5758 = vpack.c.b16 %v5694, %v5694
    %5823 = vst.msk [vmem:[#allocation11] sm:$0xf] %vm439, %v5695
    %5824 = vst.msk [vmem:[#allocation11 + $0x4] sm:$0xf] %vm439, %v5696
    %5825 = vst.msk [vmem:[#allocation11 + $0x8] sm:$0xf] %vm439, %v5697
    %5826 = vst.msk [vmem:[#allocation11 + $0xc] sm:$0xf] %vm439, %v5698
    %5827 = vst.msk [vmem:[#allocation11 + $0x10] sm:$0xf] %vm439, %v5699
    %5828 = vst.msk [vmem:[#allocation11 + $0x14] sm:$0xf] %vm439, %v5700
    %5829 = vst.msk [vmem:[#allocation11 + $0x18] sm:$0xf] %vm439, %v5701
    %5830 = vst.msk [vmem:[#allocation11 + $0x1c] sm:$0xf] %vm439, %v5702
    %5831 = vst.msk [vmem:[#allocation11 + $0x20] sm:$0xf] %vm439, %v5703
    %5832 = vst.msk [vmem:[#allocation11 + $0x24] sm:$0xf] %vm439, %v5704
    %5833 = vst.msk [vmem:[#allocation11 + $0x28] sm:$0xf] %vm439, %v5705
    %5834 = vst.msk [vmem:[#allocation11 + $0x2c] sm:$0xf] %vm439, %v5706
    %5835 = vst.msk [vmem:[#allocation11 + $0x30] sm:$0xf] %vm439, %v5707
    %5836 = vst.msk [vmem:[#allocation11 + $0x34] sm:$0xf] %vm439, %v5708
    %5837 = vst.msk [vmem:[#allocation11 + $0x38] sm:$0xf] %vm439, %v5709
    %5838 = vst.msk [vmem:[#allocation11 + $0x3c] sm:$0xf] %vm439, %v5710
    %5839 = vst.msk [vmem:[#allocation11 + $0x40] sm:$0xf] %vm439, %v5711
    %5840 = vst.msk [vmem:[#allocation11 + $0x44] sm:$0xf] %vm439, %v5712
    %5841 = vst.msk [vmem:[#allocation11 + $0x48] sm:$0xf] %vm439, %v5713
    %5842 = vst.msk [vmem:[#allocation11 + $0x4c] sm:$0xf] %vm439, %v5714
    %5843 = vst.msk [vmem:[#allocation11 + $0x50] sm:$0xf] %vm439, %v5715
    %5844 = vst.msk [vmem:[#allocation11 + $0x54] sm:$0xf] %vm439, %v5716
    %5845 = vst.msk [vmem:[#allocation11 + $0x58] sm:$0xf] %vm439, %v5717
    %5846 = vst.msk [vmem:[#allocation11 + $0x5c] sm:$0xf] %vm439, %v5718
    %5847 = vst.msk [vmem:[#allocation11 + $0x60] sm:$0xf] %vm439, %v5719
    %5848 = vst.msk [vmem:[#allocation11 + $0x64] sm:$0xf] %vm439, %v5720
    %5849 = vst.msk [vmem:[#allocation11 + $0x68] sm:$0xf] %vm439, %v5721
    %5850 = vst.msk [vmem:[#allocation11 + $0x6c] sm:$0xf] %vm439, %v5722
    %5851 = vst.msk [vmem:[#allocation11 + $0x70] sm:$0xf] %vm439, %v5723
    %5852 = vst.msk [vmem:[#allocation11 + $0x74] sm:$0xf] %vm439, %v5724
    %5853 = vst.msk [vmem:[#allocation11 + $0x78] sm:$0xf] %vm439, %v5725
    %5854 = vst.msk [vmem:[#allocation11 + $0x7c] sm:$0xf] %vm439, %v5726
    %5855 = vst.msk [vmem:[#allocation11 + $0x80] sm:$0xf] %vm439, %v5727
    %5856 = vst.msk [vmem:[#allocation11 + $0x84] sm:$0xf] %vm439, %v5728
    %5857 = vst.msk [vmem:[#allocation11 + $0x88] sm:$0xf] %vm439, %v5729
    %5858 = vst.msk [vmem:[#allocation11 + $0x8c] sm:$0xf] %vm439, %v5730
    %5859 = vst.msk [vmem:[#allocation11 + $0x90] sm:$0xf] %vm439, %v5731
    %5860 = vst.msk [vmem:[#allocation11 + $0x94] sm:$0xf] %vm439, %v5732
    %5861 = vst.msk [vmem:[#allocation11 + $0x98] sm:$0xf] %vm439, %v5733
    %5862 = vst.msk [vmem:[#allocation11 + $0x9c] sm:$0xf] %vm439, %v5734
    %5863 = vst.msk [vmem:[#allocation11 + $0xa0] sm:$0xf] %vm439, %v5735
    %5864 = vst.msk [vmem:[#allocation11 + $0xa4] sm:$0xf] %vm439, %v5736
    %5865 = vst.msk [vmem:[#allocation11 + $0xa8] sm:$0xf] %vm439, %v5737
    %5866 = vst.msk [vmem:[#allocation11 + $0xac] sm:$0xf] %vm439, %v5738
    %5867 = vst.msk [vmem:[#allocation11 + $0xb0] sm:$0xf] %vm439, %v5739
    %5868 = vst.msk [vmem:[#allocation11 + $0xb4] sm:$0xf] %vm439, %v5740
    %5869 = vst.msk [vmem:[#allocation11 + $0xb8] sm:$0xf] %vm439, %v5741
    %5870 = vst.msk [vmem:[#allocation11 + $0xbc] sm:$0xf] %vm439, %v5742
    %5871 = vst.msk [vmem:[#allocation11 + $0xc0] sm:$0xf] %vm439, %v5743
    %5872 = vst.msk [vmem:[#allocation11 + $0xc4] sm:$0xf] %vm439, %v5744
    %5873 = vst.msk [vmem:[#allocation11 + $0xc8] sm:$0xf] %vm439, %v5745
    %5874 = vst.msk [vmem:[#allocation11 + $0xcc] sm:$0xf] %vm439, %v5746
    %5875 = vst.msk [vmem:[#allocation11 + $0xd0] sm:$0xf] %vm439, %v5747
    %5876 = vst.msk [vmem:[#allocation11 + $0xd4] sm:$0xf] %vm439, %v5748
    %5877 = vst.msk [vmem:[#allocation11 + $0xd8] sm:$0xf] %vm439, %v5749
    %5878 = vst.msk [vmem:[#allocation11 + $0xdc] sm:$0xf] %vm439, %v5750
    %5879 = vst.msk [vmem:[#allocation11 + $0xe0] sm:$0xf] %vm439, %v5751
    %5880 = vst.msk [vmem:[#allocation11 + $0xe4] sm:$0xf] %vm439, %v5752
    %5881 = vst.msk [vmem:[#allocation11 + $0xe8] sm:$0xf] %vm439, %v5753
    %5882 = vst.msk [vmem:[#allocation11 + $0xec] sm:$0xf] %vm439, %v5754
    %5883 = vst.msk [vmem:[#allocation11 + $0xf0] sm:$0xf] %vm439, %v5755
    %5884 = vst.msk [vmem:[#allocation11 + $0xf4] sm:$0xf] %vm439, %v5756
    %5885 = vst.msk [vmem:[#allocation11 + $0xf8] sm:$0xf] %vm439, %v5757
    %5886 = vst.msk [vmem:[#allocation11 + $0xfc] sm:$0xf] %vm439, %v5758
    %5887 = vmatprep.subr.mxu0 0.0
    %5888 = vmatpush1.msra.mxu0 %v5313
    %5889 = vmatprep.subr.mxu0 0.0
    %5890 = vmatpush1.msra.mxu0 %v5316
    %5891 = vmatprep.subr.mxu0 0.0
    %5892 = vmatpush1.msra.mxu0 %v5321
    %5893 = vmatprep.subr.mxu0 0.0
    %5894 = vmatpush1.msra.mxu0 %v5324
    %5895 = vmatprep.subr.mxu0 0.0
    %5896 = vmatpush1.msra.mxu0 %v5329
    %5897 = vmatprep.subr.mxu0 0.0
    %5898 = vmatpush1.msra.mxu0 %v5332
    %5899 = vmatprep.subr.mxu0 0.0
    %5900 = vmatpush1.msra.mxu0 %v5337
    %5901 = vmatprep.subr.mxu0 0.0
    %5902 = vmatpush1.msra.mxu0 %v5340
    %5903 = vmatprep.subr.mxu0 0.0
    %5904 = vmatpush1.msra.mxu0 %v5345
    %5905 = vmatprep.subr.mxu0 0.0
    %5906 = vmatpush1.msra.mxu0 %v5348
    %5907 = vmatprep.subr.mxu0 0.0
    %5908 = vmatpush1.msra.mxu0 %v5353
    %5909 = vmatprep.subr.mxu0 0.0
    %5910 = vmatpush1.msra.mxu0 %v5356
    %5911 = vmatprep.subr.mxu0 0.0
    %5912 = vmatpush1.msra.mxu0 %v5361
    %5913 = vmatprep.subr.mxu0 0.0
    %5914 = vmatpush1.msra.mxu0 %v5364
    %5915 = vmatprep.subr.mxu0 0.0
    %5916 = vmatpush1.msra.mxu0 %v5369
    %5917 = vmatprep.subr.mxu0 0.0
    %5918 = vmatpush1.msra.mxu0 %v5372
    %5919 = vmatprep.subr.mxu0 0.0
    %5920 = vmatpush1.msra.mxu0 %v5377
    %5921 = vmatprep.subr.mxu0 0.0
    %5922 = vmatpush1.msra.mxu0 %v5380
    %5923 = vmatprep.subr.mxu0 0.0
    %5924 = vmatpush1.msra.mxu0 %v5385
    %5925 = vmatprep.subr.mxu0 0.0
    %5926 = vmatpush1.msra.mxu0 %v5388
    %5927 = vmatprep.subr.mxu0 0.0
    %5928 = vmatpush1.msra.mxu0 %v5393
    %5929 = vmatprep.subr.mxu0 0.0
    %5930 = vmatpush1.msra.mxu0 %v5396
    %5931 = vmatprep.subr.mxu0 0.0
    %5932 = vmatpush1.msra.mxu0 %v5401
    %5933 = vmatprep.subr.mxu0 0.0
    %5934 = vmatpush1.msra.mxu0 %v5404
    %5935 = vmatprep.subr.mxu0 0.0
    %5936 = vmatpush1.msra.mxu0 %v5409
    %5937 = vmatprep.subr.mxu0 0.0
    %5938 = vmatpush1.msra.mxu0 %v5412
    %5939 = vmatprep.subr.mxu0 0.0
    %5940 = vmatpush1.msra.mxu0 %v5417
    %5941 = vmatprep.subr.mxu0 0.0
    %5942 = vmatpush1.msra.mxu0 %v5420
    %5943 = vmatprep.subr.mxu0 0.0
    %5944 = vmatpush1.msra.mxu0 %v5425
    %5945 = vmatprep.subr.mxu0 0.0
    %5946 = vmatpush1.msra.mxu0 %v5428
    %5947 = vmatprep.subr.mxu0 0.0
    %5948 = vmatpush1.msra.mxu0 %v5433
    %5949 = vmatprep.subr.mxu0 0.0
    %5950 = vmatpush1.msra.mxu0 %v5436
    %5951 = vmatprep.mubr.f32.mxu0 1.0
    %5952 = vmatmul.mubr.f32.gmra.mrb[0].mxu0 1.0
    %v5953 = vpop.f32.mrb[0].mxu0
    %v5954 = vadd.f32 0.0, %v5953
    %v5955 = vpop.f32.mrb[0].mxu0
    %5956 = vdwg.mxu0
    %5957 = vmatprep.subr.mxu0 0.0
    %5958 = vmatpush1.msra.mxu0 %v5441
    %5959 = vmatprep.subr.mxu0 0.0
    %5960 = vmatpush1.msra.mxu0 %v5444
    %5961 = vmatprep.subr.mxu0 0.0
    %5962 = vmatpush1.msra.mxu0 %v5449
    %5963 = vmatprep.subr.mxu0 0.0
    %5964 = vmatpush1.msra.mxu0 %v5452
    %5965 = vmatprep.subr.mxu0 0.0
    %5966 = vmatpush1.msra.mxu0 %v5457
    %5967 = vmatprep.subr.mxu0 0.0
    %5968 = vmatpush1.msra.mxu0 %v5460
    %5969 = vmatprep.subr.mxu0 0.0
    %5970 = vmatpush1.msra.mxu0 %v5465
    %5971 = vmatprep.subr.mxu0 0.0
    %5972 = vmatpush1.msra.mxu0 %v5468
    %5973 = vmatprep.subr.mxu0 0.0
    %5974 = vmatpush1.msra.mxu0 %v5473
    %5975 = vmatprep.subr.mxu0 0.0
    %5976 = vmatpush1.msra.mxu0 %v5476
    %5977 = vmatprep.subr.mxu0 0.0
    %5978 = vmatpush1.msra.mxu0 %v5481
    %5979 = vmatprep.subr.mxu0 0.0
    %5980 = vmatpush1.msra.mxu0 %v5484
    %5981 = vmatprep.subr.mxu0 0.0
    %5982 = vmatpush1.msra.mxu0 %v5489
    %5983 = vmatprep.subr.mxu0 0.0
    %5984 = vmatpush1.msra.mxu0 %v5492
    %5985 = vmatprep.subr.mxu0 0.0
    %5986 = vmatpush1.msra.mxu0 %v5497
    %5987 = vmatprep.subr.mxu0 0.0
    %5988 = vmatpush1.msra.mxu0 %v5500
    %5989 = vmatprep.subr.mxu0 0.0
    %5990 = vmatpush1.msra.mxu0 %v5505
    %5991 = vmatprep.subr.mxu0 0.0
    %5992 = vmatpush1.msra.mxu0 %v5508
    %5993 = vmatprep.subr.mxu0 0.0
    %5994 = vmatpush1.msra.mxu0 %v5513
    %5995 = vmatprep.subr.mxu0 0.0
    %5996 = vmatpush1.msra.mxu0 %v5516
    %5997 = vmatprep.subr.mxu0 0.0
    %5998 = vmatpush1.msra.mxu0 %v5521
    %5999 = vmatprep.subr.mxu0 0.0
    %6000 = vmatpush1.msra.mxu0 %v5524
    %6001 = vmatprep.subr.mxu0 0.0
    %6002 = vmatpush1.msra.mxu0 %v5529
    %6003 = vmatprep.subr.mxu0 0.0
    %6004 = vmatpush1.msra.mxu0 %v5532
    %6005 = vmatprep.subr.mxu0 0.0
    %6006 = vmatpush1.msra.mxu0 %v5537
    %6007 = vmatprep.subr.mxu0 0.0
    %6008 = vmatpush1.msra.mxu0 %v5540
    %6009 = vmatprep.subr.mxu0 0.0
    %6010 = vmatpush1.msra.mxu0 %v5545
    %6011 = vmatprep.subr.mxu0 0.0
    %6012 = vmatpush1.msra.mxu0 %v5548
    %6013 = vmatprep.subr.mxu0 0.0
    %6014 = vmatpush1.msra.mxu0 %v5553
    %6015 = vmatprep.subr.mxu0 0.0
    %6016 = vmatpush1.msra.mxu0 %v5556
    %6017 = vmatprep.subr.mxu0 0.0
    %6018 = vmatpush1.msra.mxu0 %v5561
    %6019 = vmatprep.subr.mxu0 0.0
    %6020 = vmatpush1.msra.mxu0 %v5564
    %6021 = vmatprep.mubr.f32.mxu0 1.0
    %6022 = vmatmul.mubr.f32.gmra.mrb[0].mxu0 1.0
    %v6023 = vpop.f32.mrb[0].mxu0
    %v6024 = vadd.f32 %v5954, %v6023
    %v6025 = vpop.f32.mrb[0].mxu0
    %6026 = vdwg.mxu0
    %v6027 = vmul.f32 %v5313, %v5313
    %v6028 = vmul.f32 %v5316, %v5316
    %v6029 = vmul.f32 %v5321, %v5321
    %v6030 = vmul.f32 %v5324, %v5324
    %v6031 = vmul.f32 %v5329, %v5329
    %v6032 = vmul.f32 %v5332, %v5332
    %v6033 = vmul.f32 %v5337, %v5337
    %v6034 = vmul.f32 %v5340, %v5340
    %v6035 = vmul.f32 %v5345, %v5345
    %v6036 = vmul.f32 %v5348, %v5348
    %v6037 = vmul.f32 %v5353, %v5353
    %v6038 = vmul.f32 %v5356, %v5356
    %v6039 = vmul.f32 %v5361, %v5361
    %v6040 = vmul.f32 %v5364, %v5364
    %v6041 = vmul.f32 %v5369, %v5369
    %v6042 = vmul.f32 %v5372, %v5372
    %v6043 = vmul.f32 %v5377, %v5377
    %v6044 = vmul.f32 %v5380, %v5380
    %v6045 = vmul.f32 %v5385, %v5385
    %v6046 = vmul.f32 %v5388, %v5388
    %v6047 = vmul.f32 %v5393, %v5393
    %v6048 = vmul.f32 %v5396, %v5396
    %v6049 = vmul.f32 %v5401, %v5401
    %v6050 = vmul.f32 %v5404, %v5404
    %v6051 = vmul.f32 %v5409, %v5409
    %v6052 = vmul.f32 %v5412, %v5412
    %v6053 = vmul.f32 %v5417, %v5417
    %v6054 = vmul.f32 %v5420, %v5420
    %v6055 = vmul.f32 %v5425, %v5425
    %v6056 = vmul.f32 %v5428, %v5428
    %v6057 = vmul.f32 %v5433, %v5433
    %v6058 = vmul.f32 %v5436, %v5436
    %v6059 = vmul.f32 %v5441, %v5441
    %v6060 = vmul.f32 %v5444, %v5444
    %v6061 = vmul.f32 %v5449, %v5449
    %v6062 = vmul.f32 %v5452, %v5452
    %v6063 = vmul.f32 %v5457, %v5457
    %v6064 = vmul.f32 %v5460, %v5460
    %v6065 = vmul.f32 %v5465, %v5465
    %v6066 = vmul.f32 %v5468, %v5468
    %v6067 = vmul.f32 %v5473, %v5473
    %v6068 = vmul.f32 %v5476, %v5476
    %v6069 = vmul.f32 %v5481, %v5481
    %v6070 = vmul.f32 %v5484, %v5484
    %v6071 = vmul.f32 %v5489, %v5489
    %v6072 = vmul.f32 %v5492, %v5492
    %v6073 = vmul.f32 %v5497, %v5497
    %v6074 = vmul.f32 %v5500, %v5500
    %v6075 = vmul.f32 %v5505, %v5505
    %v6076 = vmul.f32 %v5508, %v5508
    %v6077 = vmul.f32 %v5513, %v5513
    %v6078 = vmul.f32 %v5516, %v5516
    %v6079 = vmul.f32 %v5521, %v5521
    %v6080 = vmul.f32 %v5524, %v5524
    %v6081 = vmul.f32 %v5529, %v5529
    %v6082 = vmul.f32 %v5532, %v5532
    %v6083 = vmul.f32 %v5537, %v5537
    %v6084 = vmul.f32 %v5540, %v5540
    %v6085 = vmul.f32 %v5545, %v5545
    %v6086 = vmul.f32 %v5548, %v5548
    %v6087 = vmul.f32 %v5553, %v5553
    %v6088 = vmul.f32 %v5556, %v5556
    %v6089 = vmul.f32 %v5561, %v5561
    %v6090 = vmul.f32 %v5564, %v5564
    %6091 = vmatprep.subr.mxu0 0.0
    %6092 = vmatpush1.msra.mxu0 %v6027
    %6093 = vmatprep.subr.mxu0 0.0
    %6094 = vmatpush1.msra.mxu0 %v6028
    %6095 = vmatprep.subr.mxu0 0.0
    %6096 = vmatpush1.msra.mxu0 %v6029
    %6097 = vmatprep.subr.mxu0 0.0
    %6098 = vmatpush1.msra.mxu0 %v6030
    %6099 = vmatprep.subr.mxu0 0.0
    %6100 = vmatpush1.msra.mxu0 %v6031
    %6101 = vmatprep.subr.mxu0 0.0
    %6102 = vmatpush1.msra.mxu0 %v6032
    %6103 = vmatprep.subr.mxu0 0.0
    %6104 = vmatpush1.msra.mxu0 %v6033
    %6105 = vmatprep.subr.mxu0 0.0
    %6106 = vmatpush1.msra.mxu0 %v6034
    %6107 = vmatprep.subr.mxu0 0.0
    %6108 = vmatpush1.msra.mxu0 %v6035
    %6109 = vmatprep.subr.mxu0 0.0
    %6110 = vmatpush1.msra.mxu0 %v6036
    %6111 = vmatprep.subr.mxu0 0.0
    %6112 = vmatpush1.msra.mxu0 %v6037
    %6113 = vmatprep.subr.mxu0 0.0
    %6114 = vmatpush1.msra.mxu0 %v6038
    %6115 = vmatprep.subr.mxu0 0.0
    %6116 = vmatpush1.msra.mxu0 %v6039
    %6117 = vmatprep.subr.mxu0 0.0
    %6118 = vmatpush1.msra.mxu0 %v6040
    %6119 = vmatprep.subr.mxu0 0.0
    %6120 = vmatpush1.msra.mxu0 %v6041
    %6121 = vmatprep.subr.mxu0 0.0
    %6122 = vmatpush1.msra.mxu0 %v6042
    %6123 = vmatprep.subr.mxu0 0.0
    %6124 = vmatpush1.msra.mxu0 %v6043
    %6125 = vmatprep.subr.mxu0 0.0
    %6126 = vmatpush1.msra.mxu0 %v6044
    %6127 = vmatprep.subr.mxu0 0.0
    %6128 = vmatpush1.msra.mxu0 %v6045
    %6129 = vmatprep.subr.mxu0 0.0
    %6130 = vmatpush1.msra.mxu0 %v6046
    %6131 = vmatprep.subr.mxu0 0.0
    %6132 = vmatpush1.msra.mxu0 %v6047
    %6133 = vmatprep.subr.mxu0 0.0
    %6134 = vmatpush1.msra.mxu0 %v6048
    %6135 = vmatprep.subr.mxu0 0.0
    %6136 = vmatpush1.msra.mxu0 %v6049
    %6137 = vmatprep.subr.mxu0 0.0
    %6138 = vmatpush1.msra.mxu0 %v6050
    %6139 = vmatprep.subr.mxu0 0.0
    %6140 = vmatpush1.msra.mxu0 %v6051
    %6141 = vmatprep.subr.mxu0 0.0
    %6142 = vmatpush1.msra.mxu0 %v6052
    %6143 = vmatprep.subr.mxu0 0.0
    %6144 = vmatpush1.msra.mxu0 %v6053
    %6145 = vmatprep.subr.mxu0 0.0
    %6146 = vmatpush1.msra.mxu0 %v6054
    %6147 = vmatprep.subr.mxu0 0.0
    %6148 = vmatpush1.msra.mxu0 %v6055
    %6149 = vmatprep.subr.mxu0 0.0
    %6150 = vmatpush1.msra.mxu0 %v6056
    %6151 = vmatprep.subr.mxu0 0.0
    %6152 = vmatpush1.msra.mxu0 %v6057
    %6153 = vmatprep.subr.mxu0 0.0
    %6154 = vmatpush1.msra.mxu0 %v6058
    %6155 = vmatprep.mubr.f32.mxu0 1.0
    %6156 = vmatmul.mubr.f32.gmra.mrb[0].mxu0 1.0
    %v6157 = vpop.f32.mrb[0].mxu0
    %v6158 = vadd.f32 0.0, %v6157
    %v6159 = vpop.f32.mrb[0].mxu0
    %6160 = vdwg.mxu0
    %6161 = vmatprep.subr.mxu0 0.0
    %6162 = vmatpush1.msra.mxu0 %v6059
    %6163 = vmatprep.subr.mxu0 0.0
    %6164 = vmatpush1.msra.mxu0 %v6060
    %6165 = vmatprep.subr.mxu0 0.0
    %6166 = vmatpush1.msra.mxu0 %v6061
    %6167 = vmatprep.subr.mxu0 0.0
    %6168 = vmatpush1.msra.mxu0 %v6062
    %6169 = vmatprep.subr.mxu0 0.0
    %6170 = vmatpush1.msra.mxu0 %v6063
    %6171 = vmatprep.subr.mxu0 0.0
    %6172 = vmatpush1.msra.mxu0 %v6064
    %6173 = vmatprep.subr.mxu0 0.0
    %6174 = vmatpush1.msra.mxu0 %v6065
    %6175 = vmatprep.subr.mxu0 0.0
    %6176 = vmatpush1.msra.mxu0 %v6066
    %6177 = vmatprep.subr.mxu0 0.0
    %6178 = vmatpush1.msra.mxu0 %v6067
    %6179 = vmatprep.subr.mxu0 0.0
    %6180 = vmatpush1.msra.mxu0 %v6068
    %6181 = vmatprep.subr.mxu0 0.0
    %6182 = vmatpush1.msra.mxu0 %v6069
    %6183 = vmatprep.subr.mxu0 0.0
    %6184 = vmatpush1.msra.mxu0 %v6070
    %6185 = vmatprep.subr.mxu0 0.0
    %6186 = vmatpush1.msra.mxu0 %v6071
    %6187 = vmatprep.subr.mxu0 0.0
    %6188 = vmatpush1.msra.mxu0 %v6072
    %6189 = vmatprep.subr.mxu0 0.0
    %6190 = vmatpush1.msra.mxu0 %v6073
    %6191 = vmatprep.subr.mxu0 0.0
    %6192 = vmatpush1.msra.mxu0 %v6074
    %6193 = vmatprep.subr.mxu0 0.0
    %6194 = vmatpush1.msra.mxu0 %v6075
    %6195 = vmatprep.subr.mxu0 0.0
    %6196 = vmatpush1.msra.mxu0 %v6076
    %6197 = vmatprep.subr.mxu0 0.0
    %6198 = vmatpush1.msra.mxu0 %v6077
    %6199 = vmatprep.subr.mxu0 0.0
    %6200 = vmatpush1.msra.mxu0 %v6078
    %6201 = vmatprep.subr.mxu0 0.0
    %6202 = vmatpush1.msra.mxu0 %v6079
    %6203 = vmatprep.subr.mxu0 0.0
    %6204 = vmatpush1.msra.mxu0 %v6080
    %6205 = vmatprep.subr.mxu0 0.0
    %6206 = vmatpush1.msra.mxu0 %v6081
    %6207 = vmatprep.subr.mxu0 0.0
    %6208 = vmatpush1.msra.mxu0 %v6082
    %6209 = vmatprep.subr.mxu0 0.0
    %6210 = vmatpush1.msra.mxu0 %v6083
    %6211 = vmatprep.subr.mxu0 0.0
    %6212 = vmatpush1.msra.mxu0 %v6084
    %6213 = vmatprep.subr.mxu0 0.0
    %6214 = vmatpush1.msra.mxu0 %v6085
    %6215 = vmatprep.subr.mxu0 0.0
    %6216 = vmatpush1.msra.mxu0 %v6086
    %6217 = vmatprep.subr.mxu0 0.0
    %6218 = vmatpush1.msra.mxu0 %v6087
    %6219 = vmatprep.subr.mxu0 0.0
    %6220 = vmatpush1.msra.mxu0 %v6088
    %6221 = vmatprep.subr.mxu0 0.0
    %6222 = vmatpush1.msra.mxu0 %v6089
    %6223 = vmatprep.subr.mxu0 0.0
    %6224 = vmatpush1.msra.mxu0 %v6090
    %6225 = vmatprep.mubr.f32.mxu0 1.0
    %6226 = vmatmul.mubr.f32.gmra.mrb[0].mxu0 1.0
    %v6227 = vpop.f32.mrb[0].mxu0
    %v6228 = vadd.f32 %v6158, %v6227
    %v6229 = vpop.f32.mrb[0].mxu0
    %6230 = vdwg.mxu0
    %v6232 = vrot.slane %v6228, 7
    %vm6234 = vcmask 1040384
    %v6235 = vsel %vm6234, %v6024, %v6232
    %vm6236 = vcmask 58368
    %6237 = vst.msk [vmem:[#allocation12] sm:$0x3] %vm6236, %v6235
    // Predicated region
    $region34: #{residual_block.4} parent=1 // pred_check
      _
    $region35: #{residual_block.4} parent=1 // pred_check_branch
      %6239 = sbr.rel (0) target = $region37
    $region36: #{residual_block.4} parent=1 // pred_region
      %s6241 = ssub.s32 4096, 4096
      %6242 = vsyncadd [#allocation5], %s6241
      %s6243 = sshll.u32 [#allocation11], 4
      %s6244 = int_to_ptr.vmem [resolvable:$true] %s6243
      %6249 = dma.vmem_to_hbm [thread:$0]  %s6244, 4096, %s4, [#allocation5], 64, 64, 4
    $region37: #{residual_block.4} parent=1 // pred_fallthru
      _
    // Predicated region
    $region38: #{residual_block.4} parent=1 // pred_check
      _
    $region39: #{residual_block.4} parent=1 // pred_check_branch
      %6251 = sbr.rel (0) target = $region41
    $region40: #{residual_block.4} parent=1 // pred_region
      %s6253 = ssub.s32 32, 32
      %6254 = vsyncadd [#allocation13], %s6253
      %s6256 = sshll.u32 [#allocation12], 4
      %s6257 = int_to_ptr.vmem [resolvable:$true] %s6256
      %6259 = dma.vmem_to_hbm [thread:$0]  %s6257, 32, %s5, [#allocation13]
    $region41: #{residual_block.4} parent=1 // pred_fallthru
      _
    // Predicated region
    $region42: #{residual_block.4} parent=1 // pred_check
      _
    $region43: #{residual_block.4} parent=1 // pred_check_branch
      %6261 = sbr.rel (0) target = $region45
    $region44: #{residual_block.4} parent=1 // pred_region
      %6262 = dma.done [#allocation5], 4096
    $region45: #{residual_block.4} parent=1 // pred_fallthru
      _
    // Predicated region
    $region46: #{residual_block.4} parent=1 // pred_check
      _
    $region47: #{residual_block.4} parent=1 // pred_check_branch
      %6264 = sbr.rel (0) target = $region49
    $region48: #{residual_block.4} parent=1 // pred_region
      %6265 = dma.done [#allocation13], 32
    $region49: #{residual_block.4} parent=1 // pred_fallthru
      _
    %6266 = vsyncpa [#allocation4], 1
    %6267 = vsyncpa [#allocation7], 1
    %6268 = vsyncpa [#allocation10], 1
    %6269 = vsyncpa [#allocation5], 1
    %6270 = vsyncpa [#allocation13], 1

// kernel: residual_block.3
$region0: #{residual_block.3}
  #allocation0 [shape = 'u32[]', space=smem, size = 0x4, offset = 0x4, fixed_abs, tag = 'smem constant byte address 0x4 - core index']
  #allocation1 [shape = 'u32[144,128]{1,0:T(1,128)}', space=vmem, size = 0x12000, scoped, tag = 'internal scratch']
  #allocation2 [shape = 'bf16[2,18,18,4]{3,2,1,0:T(8,128)(2,1)}', space=vmem, size = 0x36000, scoped, tag = 'scratch operand']
  %s0 = inlined_call_operand.hbm [shape: f32[2,16,16,4], index: 0, kind: input, shape index: {}]
  %s1 = inlined_call_operand.hbm [shape: bf16[36,16], index: 1, kind: input, shape index: {}]
  %s2 = inlined_call_operand.hbm [shape: bf16[2,256,8], index: 2, kind: output, shape index: {0}]
  %s3 = inlined_call_operand.hbm [shape: bf16[2,256,8], index: 3, kind: output, shape index: {1}]
  %s4 = inlined_call_operand.hbm [shape: f32[1,2,16], index: 4, kind: output, shape index: {2}]
  %5 = xla_tuple %s2, %s3, %s4
  %s6 = sld [smem:[#allocation0]]
  $region42: #{residual_block.3} parent=0
    _
  %s8 = ssub.s32 1, %s6
  %s9 = scalar_select 0, %s8, %s6
  $region1: #{residual_block.3} parent=0
    #allocation3 [shape = 'u8[262144]{0}', space=vmem, size = 0x40000, scoped, tag = 'input window, operand 0, single buffered']
    #allocation4 [shape = 's32[1]{0}', space=sflag, size = 0x4, scoped, tag = 'scoped memory for residual_block.3']
    #allocation5 [shape = 's32[1]{0}', space=sflag, size = 0x4, scoped, tag = 'scoped memory for residual_block.3']
    #allocation6 [shape = 'u8[10240]{0}', space=vmem, size = 0x2800, scoped, tag = 'input window, operand 1, single buffered']
    #allocation7 [shape = 's32[1]{0}', space=sflag, size = 0x4, scoped, tag = 'scoped memory for residual_block.3']
    #allocation8 [shape = 'u8[131072]{0}', space=vmem, size = 0x20000, scoped, tag = 'output window, operand 0, single buffered']
    #allocation9 [shape = 'u8[131072]{0}', space=vmem, size = 0x20000, scoped, tag = 'output window, operand 1, single buffered']
    #allocation10 [shape = 's32[1]{0}', space=sflag, size = 0x4, scoped, tag = 'scoped memory for residual_block.3']
    #allocation11 [shape = 'u8[1024]{0}', space=vmem, size = 0x400, scoped, tag = 'output window, operand 2, single buffered']
    %10 = vsyncpa [#allocation4], 0
    %11 = vsyncpa [#allocation7], 0
    %12 = vsyncpa [#allocation5], 0
    %13 = vsyncpa [#allocation10], 0
    // Predicated region
    $region2: #{residual_block.3} parent=1 // pred_check
      _
    $region3: #{residual_block.3} parent=1 // pred_check_branch
      %15 = sbr.rel (0) target = $region5
    $region4: #{residual_block.3} parent=1 // pred_region
      %s17 = ssub.s32 8192, 8192
      %18 = vsyncadd [#allocation4], %s17
      %s19 = sshll.u32 [#allocation3], 4
      %s20 = int_to_ptr.vmem [resolvable:$true] %s19
      %25 = dma.hbm_to_vmem [thread:$0]  %s0, 8192, %s20, [#allocation4], 128, 128, 8
    $region5: #{residual_block.3} parent=1 // pred_fallthru
      _
    // Predicated region
    $region6: #{residual_block.3} parent=1 // pred_check
      _
    $region7: #{residual_block.3} parent=1 // pred_check_branch
      %27 = sbr.rel (0) target = $region9
    $region8: #{residual_block.3} parent=1 // pred_region
      %s29 = ssub.s32 320, 320
      %30 = vsyncadd [#allocation7], %s29
      %s31 = sshll.u32 [#allocation6], 4
      %s32 = int_to_ptr.vmem [resolvable:$true] %s31
      %37 = dma.hbm_to_vmem [thread:$0]  %s1, 320, %s32, [#allocation7], 64, 64, 4
    $region9: #{residual_block.3} parent=1 // pred_fallthru
      _
    // Predicated region
    $region10: #{residual_block.3} parent=1 // pred_check
      _
    $region11: #{residual_block.3} parent=1 // pred_check_branch
      %39 = sbr.rel (0) target = $region13
    $region12: #{residual_block.3} parent=1 // pred_region
      %40 = dma.done [#allocation4], 8192
    $region13: #{residual_block.3} parent=1 // pred_fallthru
      _
    // Predicated region
    $region14: #{residual_block.3} parent=1 // pred_check
      _
    $region15: #{residual_block.3} parent=1 // pred_check_branch
      %42 = sbr.rel (0) target = $region17
    $region16: #{residual_block.3} parent=1 // pred_region
      %43 = dma.done [#allocation7], 320
    $region17: #{residual_block.3} parent=1 // pred_fallthru
      _
    %v45 = vld [vmem:[#allocation3] sm:$0xff]
    %v46 = vld [vmem:[#allocation3 + $0x8] sm:$0xff]
    %v47 = vld [vmem:[#allocation3 + $0x10] sm:$0xff]
    %v48 = vld [vmem:[#allocation3 + $0x18] sm:$0xff]
    %v49 = vld [vmem:[#allocation3 + $0x20] sm:$0xff]
    %v50 = vld [vmem:[#allocation3 + $0x28] sm:$0xff]
    %v51 = vld [vmem:[#allocation3 + $0x30] sm:$0xff]
    %v52 = vld [vmem:[#allocation3 + $0x38] sm:$0xff]
    %v53 = vld [vmem:[#allocation3 + $0x40] sm:$0xff]
    %v54 = vld [vmem:[#allocation3 + $0x48] sm:$0xff]
    %v55 = vld [vmem:[#allocation3 + $0x50] sm:$0xff]
    %v56 = vld [vmem:[#allocation3 + $0x58] sm:$0xff]
    %v57 = vld [vmem:[#allocation3 + $0x60] sm:$0xff]
    %v58 = vld [vmem:[#allocation3 + $0x68] sm:$0xff]
    %v59 = vld [vmem:[#allocation3 + $0x70] sm:$0xff]
    %v60 = vld [vmem:[#allocation3 + $0x78] sm:$0xff]
    %v61 = vld [vmem:[#allocation3 + $0x80] sm:$0xff]
    %v62 = vld [vmem:[#allocation3 + $0x88] sm:$0xff]
    %v63 = vld [vmem:[#allocation3 + $0x90] sm:$0xff]
    %v64 = vld [vmem:[#allocation3 + $0x98] sm:$0xff]
    %v65 = vld [vmem:[#allocation3 + $0xa0] sm:$0xff]
    %v66 = vld [vmem:[#allocation3 + $0xa8] sm:$0xff]
    %v67 = vld [vmem:[#allocation3 + $0xb0] sm:$0xff]
    %v68 = vld [vmem:[#allocation3 + $0xb8] sm:$0xff]
    %v69 = vld [vmem:[#allocation3 + $0xc0] sm:$0xff]
    %v70 = vld [vmem:[#allocation3 + $0xc8] sm:$0xff]
    %v71 = vld [vmem:[#allocation3 + $0xd0] sm:$0xff]
    %v72 = vld [vmem:[#allocation3 + $0xd8] sm:$0xff]
    %v73 = vld [vmem:[#allocation3 + $0xe0] sm:$0xff]
    %v74 = vld [vmem:[#allocation3 + $0xe8] sm:$0xff]
    %v75 = vld [vmem:[#allocation3 + $0xf0] sm:$0xff]
    %v76 = vld [vmem:[#allocation3 + $0xf8] sm:$0xff]
    %v77 = vld [vmem:[#allocation3 + $0x100] sm:$0xff]
    %v78 = vld [vmem:[#allocation3 + $0x108] sm:$0xff]
    %v79 = vld [vmem:[#allocation3 + $0x110] sm:$0xff]
    %v80 = vld [vmem:[#allocation3 + $0x118] sm:$0xff]
    %v81 = vld [vmem:[#allocation3 + $0x120] sm:$0xff]
    %v82 = vld [vmem:[#allocation3 + $0x128] sm:$0xff]
    %v83 = vld [vmem:[#allocation3 + $0x130] sm:$0xff]
    %v84 = vld [vmem:[#allocation3 + $0x138] sm:$0xff]
    %v85 = vld [vmem:[#allocation3 + $0x140] sm:$0xff]
    %v86 = vld [vmem:[#allocation3 + $0x148] sm:$0xff]
    %v87 = vld [vmem:[#allocation3 + $0x150] sm:$0xff]
    %v88 = vld [vmem:[#allocation3 + $0x158] sm:$0xff]
    %v89 = vld [vmem:[#allocation3 + $0x160] sm:$0xff]
    %v90 = vld [vmem:[#allocation3 + $0x168] sm:$0xff]
    %v91 = vld [vmem:[#allocation3 + $0x170] sm:$0xff]
    %v92 = vld [vmem:[#allocation3 + $0x178] sm:$0xff]
    %v93 = vld [vmem:[#allocation3 + $0x180] sm:$0xff]
    %v94 = vld [vmem:[#allocation3 + $0x188] sm:$0xff]
    %v95 = vld [vmem:[#allocation3 + $0x190] sm:$0xff]
    %v96 = vld [vmem:[#allocation3 + $0x198] sm:$0xff]
    %v97 = vld [vmem:[#allocation3 + $0x1a0] sm:$0xff]
    %v98 = vld [vmem:[#allocation3 + $0x1a8] sm:$0xff]
    %v99 = vld [vmem:[#allocation3 + $0x1b0] sm:$0xff]
    %v100 = vld [vmem:[#allocation3 + $0x1b8] sm:$0xff]
    %v101 = vld [vmem:[#allocation3 + $0x1c0] sm:$0xff]
    %v102 = vld [vmem:[#allocation3 + $0x1c8] sm:$0xff]
    %v103 = vld [vmem:[#allocation3 + $0x1d0] sm:$0xff]
    %v104 = vld [vmem:[#allocation3 + $0x1d8] sm:$0xff]
    %v105 = vld [vmem:[#allocation3 + $0x1e0] sm:$0xff]
    %v106 = vld [vmem:[#allocation3 + $0x1e8] sm:$0xff]
    %v107 = vld [vmem:[#allocation3 + $0x1f0] sm:$0xff]
    %v108 = vld [vmem:[#allocation3 + $0x1f8] sm:$0xff]
    %v109 = vpack.c.bf16 %v46, %v45
    %v110 = vpack.c.bf16 %v48, %v47
    %v111 = vpack.c.bf16 %v50, %v49
    %v112 = vpack.c.bf16 %v52, %v51
    %v113 = vpack.c.bf16 %v54, %v53
    %v114 = vpack.c.bf16 %v56, %v55
    %v115 = vpack.c.bf16 %v58, %v57
    %v116 = vpack.c.bf16 %v60, %v59
    %v117 = vpack.c.bf16 %v62, %v61
    %v118 = vpack.c.bf16 %v64, %v63
    %v119 = vpack.c.bf16 %v66, %v65
    %v120 = vpack.c.bf16 %v68, %v67
    %v121 = vpack.c.bf16 %v70, %v69
    %v122 = vpack.c.bf16 %v72, %v71
    %v123 = vpack.c.bf16 %v74, %v73
    %v124 = vpack.c.bf16 %v76, %v75
    %v125 = vpack.c.bf16 %v78, %v77
    %v126 = vpack.c.bf16 %v80, %v79
    %v127 = vpack.c.bf16 %v82, %v81
    %v128 = vpack.c.bf16 %v84, %v83
    %v129 = vpack.c.bf16 %v86, %v85
    %v130 = vpack.c.bf16 %v88, %v87
    %v131 = vpack.c.bf16 %v90, %v89
    %v132 = vpack.c.bf16 %v92, %v91
    %v133 = vpack.c.bf16 %v94, %v93
    %v134 = vpack.c.bf16 %v96, %v95
    %v135 = vpack.c.bf16 %v98, %v97
    %v136 = vpack.c.bf16 %v100, %v99
    %v137 = vpack.c.bf16 %v102, %v101
    %v138 = vpack.c.bf16 %v104, %v103
    %v139 = vpack.c.bf16 %v106, %v105
    %v140 = vpack.c.bf16 %v108, %v107
    %vm141 = vcmask 27648
    %142 = vst.msk [vmem:[#allocation2] sm:$0xf] %vm141, 0
    %143 = vst.msk [vmem:[#allocation2 + $0x4] sm:$0xf] %vm141, 0
    %vm144 = vcmask 24576
    %145 = vst.msk [vmem:[#allocation2 + $0x8] sm:$0x1] %vm144, 0
    %146 = vst.msk [vmem:[#allocation2 + $0xd8] sm:$0xf] %vm141, 0
    %147 = vst.msk [vmem:[#allocation2 + $0xdc] sm:$0xf] %vm141, 0
    %148 = vst.msk [vmem:[#allocation2 + $0xe0] sm:$0x1] %vm144, 0
    %s149 = scalar_lea.vmem [#allocation2], 204
    %150 = vst.msk [vmem:[%s149] sm:$0xf] %vm141, 0
    %151 = vst.msk [vmem:[%s149 + $0x4] sm:$0xf] %vm141, 0
    %152 = vst.msk [vmem:[%s149 + $0x8] sm:$0x1] %vm144, 0
    %153 = vst.msk [vmem:[%s149 + $0xd8] sm:$0xf] %vm141, 0
    %154 = vst.msk [vmem:[%s149 + $0xdc] sm:$0xf] %vm141, 0
    %155 = vst.msk [vmem:[%s149 + $0xe0] sm:$0x1] %vm144, 0
    %v157 = vshrl.u32 %v109, 16
    %v159 = vrot.slane %v157, 7
    %v160 = vshll.u32 %v109, 16
    %v162 = vor.u32 %v159, %v160
    %v164 = vshrl.u32 %v110, 16
    %v166 = vrot.slane %v164, 7
    %v167 = vshll.u32 %v110, 16
    %v169 = vor.u32 %v166, %v167
    %v171 = vshrl.u32 %v111, 16
    %v173 = vrot.slane %v171, 7
    %v174 = vshll.u32 %v111, 16
    %v176 = vor.u32 %v173, %v174
    %v178 = vshrl.u32 %v112, 16
    %v180 = vrot.slane %v178, 7
    %v181 = vshll.u32 %v112, 16
    %v183 = vor.u32 %v180, %v181
    %v185 = vshrl.u32 %v113, 16
    %v187 = vrot.slane %v185, 7
    %v188 = vshll.u32 %v113, 16
    %v190 = vor.u32 %v187, %v188
    %v192 = vshrl.u32 %v114, 16
    %v194 = vrot.slane %v192, 7
    %v195 = vshll.u32 %v114, 16
    %v197 = vor.u32 %v194, %v195
    %v199 = vshrl.u32 %v115, 16
    %v201 = vrot.slane %v199, 7
    %v202 = vshll.u32 %v115, 16
    %v204 = vor.u32 %v201, %v202
    %v206 = vshrl.u32 %v116, 16
    %v208 = vrot.slane %v206, 7
    %v209 = vshll.u32 %v116, 16
    %v211 = vor.u32 %v208, %v209
    %v213 = vshrl.u32 %v117, 16
    %v215 = vrot.slane %v213, 7
    %v216 = vshll.u32 %v117, 16
    %v218 = vor.u32 %v215, %v216
    %v220 = vshrl.u32 %v118, 16
    %v222 = vrot.slane %v220, 7
    %v223 = vshll.u32 %v118, 16
    %v225 = vor.u32 %v222, %v223
    %v227 = vshrl.u32 %v119, 16
    %v229 = vrot.slane %v227, 7
    %v230 = vshll.u32 %v119, 16
    %v232 = vor.u32 %v229, %v230
    %v234 = vshrl.u32 %v120, 16
    %v236 = vrot.slane %v234, 7
    %v237 = vshll.u32 %v120, 16
    %v239 = vor.u32 %v236, %v237
    %v241 = vshrl.u32 %v121, 16
    %v243 = vrot.slane %v241, 7
    %v244 = vshll.u32 %v121, 16
    %v246 = vor.u32 %v243, %v244
    %v248 = vshrl.u32 %v122, 16
    %v250 = vrot.slane %v248, 7
    %v251 = vshll.u32 %v122, 16
    %v253 = vor.u32 %v250, %v251
    %v255 = vshrl.u32 %v123, 16
    %v257 = vrot.slane %v255, 7
    %v258 = vshll.u32 %v123, 16
    %v260 = vor.u32 %v257, %v258
    %v262 = vshrl.u32 %v124, 16
    %v264 = vrot.slane %v262, 7
    %v265 = vshll.u32 %v124, 16
    %v267 = vor.u32 %v264, %v265
    %v269 = vshrl.u32 %v125, 16
    %v271 = vrot.slane %v269, 7
    %v272 = vshll.u32 %v125, 16
    %v274 = vor.u32 %v271, %v272
    %v276 = vshrl.u32 %v126, 16
    %v278 = vrot.slane %v276, 7
    %v279 = vshll.u32 %v126, 16
    %v281 = vor.u32 %v278, %v279
    %v283 = vshrl.u32 %v127, 16
    %v285 = vrot.slane %v283, 7
    %v286 = vshll.u32 %v127, 16
    %v288 = vor.u32 %v285, %v286
    %v290 = vshrl.u32 %v128, 16
    %v292 = vrot.slane %v290, 7
    %v293 = vshll.u32 %v128, 16
    %v295 = vor.u32 %v292, %v293
    %v297 = vshrl.u32 %v129, 16
    %v299 = vrot.slane %v297, 7
    %v300 = vshll.u32 %v129, 16
    %v302 = vor.u32 %v299, %v300
    %v304 = vshrl.u32 %v130, 16
    %v306 = vrot.slane %v304, 7
    %v307 = vshll.u32 %v130, 16
    %v309 = vor.u32 %v306, %v307
    %v311 = vshrl.u32 %v131, 16
    %v313 = vrot.slane %v311, 7
    %v314 = vshll.u32 %v131, 16
    %v316 = vor.u32 %v313, %v314
    %v318 = vshrl.u32 %v132, 16
    %v320 = vrot.slane %v318, 7
    %v321 = vshll.u32 %v132, 16
    %v323 = vor.u32 %v320, %v321
    %v325 = vshrl.u32 %v133, 16
    %v327 = vrot.slane %v325, 7
    %v328 = vshll.u32 %v133, 16
    %v330 = vor.u32 %v327, %v328
    %v332 = vshrl.u32 %v134, 16
    %v334 = vrot.slane %v332, 7
    %v335 = vshll.u32 %v134, 16
    %v337 = vor.u32 %v334, %v335
    %v339 = vshrl.u32 %v135, 16
    %v341 = vrot.slane %v339, 7
    %v342 = vshll.u32 %v135, 16
    %v344 = vor.u32 %v341, %v342
    %v346 = vshrl.u32 %v136, 16
    %v348 = vrot.slane %v346, 7
    %v349 = vshll.u32 %v136, 16
    %v351 = vor.u32 %v348, %v349
    %v353 = vshrl.u32 %v137, 16
    %v355 = vrot.slane %v353, 7
    %v356 = vshll.u32 %v137, 16
    %v358 = vor.u32 %v355, %v356
    %v360 = vshrl.u32 %v138, 16
    %v362 = vrot.slane %v360, 7
    %v363 = vshll.u32 %v138, 16
    %v365 = vor.u32 %v362, %v363
    %v367 = vshrl.u32 %v139, 16
    %v369 = vrot.slane %v367, 7
    %v370 = vshll.u32 %v139, 16
    %v372 = vor.u32 %v369, %v370
    %v374 = vshrl.u32 %v140, 16
    %v376 = vrot.slane %v374, 7
    %v377 = vshll.u32 %v140, 16
    %v379 = vor.u32 %v376, %v377
    %vm444 = vcmask 1040384
    %vm445 = vsmask.f32 256
    %vm446 = vmand %vm444, %vm445
    %v447 = vsel %vm446, 0, %v162
    %v448 = vsel %vm446, 0, %v169
    %v449 = vsel %vm446, 0, %v176
    %v450 = vsel %vm446, 0, %v183
    %v451 = vsel %vm446, 0, %v190
    %v452 = vsel %vm446, 0, %v197
    %v453 = vsel %vm446, 0, %v204
    %v454 = vsel %vm446, 0, %v211
    %v455 = vsel %vm446, 0, %v218
    %v456 = vsel %vm446, 0, %v225
    %v457 = vsel %vm446, 0, %v232
    %v458 = vsel %vm446, 0, %v239
    %v459 = vsel %vm446, 0, %v246
    %v460 = vsel %vm446, 0, %v253
    %v461 = vsel %vm446, 0, %v260
    %v462 = vsel %vm446, 0, %v267
    %v463 = vsel %vm446, 0, %v274
    %v464 = vsel %vm446, 0, %v281
    %v465 = vsel %vm446, 0, %v288
    %v466 = vsel %vm446, 0, %v295
    %v467 = vsel %vm446, 0, %v302
    %v468 = vsel %vm446, 0, %v309
    %v469 = vsel %vm446, 0, %v316
    %v470 = vsel %vm446, 0, %v323
    %v471 = vsel %vm446, 0, %v330
    %v472 = vsel %vm446, 0, %v337
    %v473 = vsel %vm446, 0, %v344
    %v474 = vsel %vm446, 0, %v351
    %v475 = vsel %vm446, 0, %v358
    %v476 = vsel %vm446, 0, %v365
    %v477 = vsel %vm446, 0, %v372
    %v478 = vsel %vm446, 0, %v379
    %v479 = vsel %vm446, %v159, 0
    %v480 = vsel %vm446, %v166, 0
    %v481 = vsel %vm446, %v173, 0
    %v482 = vsel %vm446, %v180, 0
    %v483 = vsel %vm446, %v187, 0
    %v484 = vsel %vm446, %v194, 0
    %v485 = vsel %vm446, %v201, 0
    %v486 = vsel %vm446, %v208, 0
    %v487 = vsel %vm446, %v215, 0
    %v488 = vsel %vm446, %v222, 0
    %v489 = vsel %vm446, %v229, 0
    %v490 = vsel %vm446, %v236, 0
    %v491 = vsel %vm446, %v243, 0
    %v492 = vsel %vm446, %v250, 0
    %v493 = vsel %vm446, %v257, 0
    %v494 = vsel %vm446, %v264, 0
    %v495 = vsel %vm446, %v271, 0
    %v496 = vsel %vm446, %v278, 0
    %v497 = vsel %vm446, %v285, 0
    %v498 = vsel %vm446, %v292, 0
    %v499 = vsel %vm446, %v299, 0
    %v500 = vsel %vm446, %v306, 0
    %v501 = vsel %vm446, %v313, 0
    %v502 = vsel %vm446, %v320, 0
    %v503 = vsel %vm446, %v327, 0
    %v504 = vsel %vm446, %v334, 0
    %v505 = vsel %vm446, %v341, 0
    %v506 = vsel %vm446, %v348, 0
    %v507 = vsel %vm446, %v355, 0
    %v508 = vsel %vm446, %v362, 0
    %v509 = vsel %vm446, %v369, 0
    %v510 = vsel %vm446, %v376, 0
    %v575 = vunpack.c.l.b16 %v447
    %v576 = vunpack.c.h.b16 %v447
    %v577 = vunpack.c.l.b16 %v479
    %v578 = vunpack.c.l.b16 %v448
    %v579 = vunpack.c.h.b16 %v448
    %v580 = vunpack.c.l.b16 %v480
    %v581 = vunpack.c.l.b16 %v449
    %v582 = vunpack.c.h.b16 %v449
    %v583 = vunpack.c.l.b16 %v481
    %v584 = vunpack.c.l.b16 %v450
    %v585 = vunpack.c.h.b16 %v450
    %v586 = vunpack.c.l.b16 %v482
    %v587 = vunpack.c.l.b16 %v451
    %v588 = vunpack.c.h.b16 %v451
    %v589 = vunpack.c.l.b16 %v483
    %v590 = vunpack.c.l.b16 %v452
    %v591 = vunpack.c.h.b16 %v452
    %v592 = vunpack.c.l.b16 %v484
    %v593 = vunpack.c.l.b16 %v453
    %v594 = vunpack.c.h.b16 %v453
    %v595 = vunpack.c.l.b16 %v485
    %v596 = vunpack.c.l.b16 %v454
    %v597 = vunpack.c.h.b16 %v454
    %v598 = vunpack.c.l.b16 %v486
    %v599 = vunpack.c.l.b16 %v455
    %v600 = vunpack.c.h.b16 %v455
    %v601 = vunpack.c.l.b16 %v487
    %v602 = vunpack.c.l.b16 %v456
    %v603 = vunpack.c.h.b16 %v456
    %v604 = vunpack.c.l.b16 %v488
    %v605 = vunpack.c.l.b16 %v457
    %v606 = vunpack.c.h.b16 %v457
    %v607 = vunpack.c.l.b16 %v489
    %v608 = vunpack.c.l.b16 %v458
    %v609 = vunpack.c.h.b16 %v458
    %v610 = vunpack.c.l.b16 %v490
    %v611 = vunpack.c.l.b16 %v459
    %v612 = vunpack.c.h.b16 %v459
    %v613 = vunpack.c.l.b16 %v491
    %v614 = vunpack.c.l.b16 %v460
    %v615 = vunpack.c.h.b16 %v460
    %v616 = vunpack.c.l.b16 %v492
    %v617 = vunpack.c.l.b16 %v461
    %v618 = vunpack.c.h.b16 %v461
    %v619 = vunpack.c.l.b16 %v493
    %v620 = vunpack.c.l.b16 %v462
    %v621 = vunpack.c.h.b16 %v462
    %v622 = vunpack.c.l.b16 %v494
    %v623 = vunpack.c.l.b16 %v463
    %v624 = vunpack.c.h.b16 %v463
    %v625 = vunpack.c.l.b16 %v495
    %v626 = vunpack.c.l.b16 %v464
    %v627 = vunpack.c.h.b16 %v464
    %v628 = vunpack.c.l.b16 %v496
    %v629 = vunpack.c.l.b16 %v465
    %v630 = vunpack.c.h.b16 %v465
    %v631 = vunpack.c.l.b16 %v497
    %v632 = vunpack.c.l.b16 %v466
    %v633 = vunpack.c.h.b16 %v466
    %v634 = vunpack.c.l.b16 %v498
    %v635 = vunpack.c.l.b16 %v467
    %v636 = vunpack.c.h.b16 %v467
    %v637 = vunpack.c.l.b16 %v499
    %v638 = vunpack.c.l.b16 %v468
    %v639 = vunpack.c.h.b16 %v468
    %v640 = vunpack.c.l.b16 %v500
    %v641 = vunpack.c.l.b16 %v469
    %v642 = vunpack.c.h.b16 %v469
    %v643 = vunpack.c.l.b16 %v501
    %v644 = vunpack.c.l.b16 %v470
    %v645 = vunpack.c.h.b16 %v470
    %v646 = vunpack.c.l.b16 %v502
    %v647 = vunpack.c.l.b16 %v471
    %v648 = vunpack.c.h.b16 %v471
    %v649 = vunpack.c.l.b16 %v503
    %v650 = vunpack.c.l.b16 %v472
    %v651 = vunpack.c.h.b16 %v472
    %v652 = vunpack.c.l.b16 %v504
    %v653 = vunpack.c.l.b16 %v473
    %v654 = vunpack.c.h.b16 %v473
    %v655 = vunpack.c.l.b16 %v505
    %v656 = vunpack.c.l.b16 %v474
    %v657 = vunpack.c.h.b16 %v474
    %v658 = vunpack.c.l.b16 %v506
    %v659 = vunpack.c.l.b16 %v475
    %v660 = vunpack.c.h.b16 %v475
    %v661 = vunpack.c.l.b16 %v507
    %v662 = vunpack.c.l.b16 %v476
    %v663 = vunpack.c.h.b16 %v476
    %v664 = vunpack.c.l.b16 %v508
    %v665 = vunpack.c.l.b16 %v477
    %v666 = vunpack.c.h.b16 %v477
    %v667 = vunpack.c.l.b16 %v509
    %v668 = vunpack.c.l.b16 %v478
    %v669 = vunpack.c.h.b16 %v478
    %v670 = vunpack.c.l.b16 %v510
    %v671 = vpack.c.b16 %v575, %v575
    %v672 = vpack.c.b16 %v576, %v576
    %v673 = vpack.c.b16 %v577, %v577
    %v674 = vpack.c.b16 %v578, %v578
    %v675 = vpack.c.b16 %v579, %v579
    %v676 = vpack.c.b16 %v580, %v580
    %v677 = vpack.c.b16 %v581, %v581
    %v678 = vpack.c.b16 %v582, %v582
    %v679 = vpack.c.b16 %v583, %v583
    %v680 = vpack.c.b16 %v584, %v584
    %v681 = vpack.c.b16 %v585, %v585
    %v682 = vpack.c.b16 %v586, %v586
    %v683 = vpack.c.b16 %v587, %v587
    %v684 = vpack.c.b16 %v588, %v588
    %v685 = vpack.c.b16 %v589, %v589
    %v686 = vpack.c.b16 %v590, %v590
    %v687 = vpack.c.b16 %v591, %v591
    %v688 = vpack.c.b16 %v592, %v592
    %v689 = vpack.c.b16 %v593, %v593
    %v690 = vpack.c.b16 %v594, %v594
    %v691 = vpack.c.b16 %v595, %v595
    %v692 = vpack.c.b16 %v596, %v596
    %v693 = vpack.c.b16 %v597, %v597
    %v694 = vpack.c.b16 %v598, %v598
    %v695 = vpack.c.b16 %v599, %v599
    %v696 = vpack.c.b16 %v600, %v600
    %v697 = vpack.c.b16 %v601, %v601
    %v698 = vpack.c.b16 %v602, %v602
    %v699 = vpack.c.b16 %v603, %v603
    %v700 = vpack.c.b16 %v604, %v604
    %v701 = vpack.c.b16 %v605, %v605
    %v702 = vpack.c.b16 %v606, %v606
    %v703 = vpack.c.b16 %v607, %v607
    %v704 = vpack.c.b16 %v608, %v608
    %v705 = vpack.c.b16 %v609, %v609
    %v706 = vpack.c.b16 %v610, %v610
    %v707 = vpack.c.b16 %v611, %v611
    %v708 = vpack.c.b16 %v612, %v612
    %v709 = vpack.c.b16 %v613, %v613
    %v710 = vpack.c.b16 %v614, %v614
    %v711 = vpack.c.b16 %v615, %v615
    %v712 = vpack.c.b16 %v616, %v616
    %v713 = vpack.c.b16 %v617, %v617
    %v714 = vpack.c.b16 %v618, %v618
    %v715 = vpack.c.b16 %v619, %v619
    %v716 = vpack.c.b16 %v620, %v620
    %v717 = vpack.c.b16 %v621, %v621
    %v718 = vpack.c.b16 %v622, %v622
    %v719 = vpack.c.b16 %v623, %v623
    %v720 = vpack.c.b16 %v624, %v624
    %v721 = vpack.c.b16 %v625, %v625
    %v722 = vpack.c.b16 %v626, %v626
    %v723 = vpack.c.b16 %v627, %v627
    %v724 = vpack.c.b16 %v628, %v628
    %v725 = vpack.c.b16 %v629, %v629
    %v726 = vpack.c.b16 %v630, %v630
    %v727 = vpack.c.b16 %v631, %v631
    %v728 = vpack.c.b16 %v632, %v632
    %v729 = vpack.c.b16 %v633, %v633
    %v730 = vpack.c.b16 %v634, %v634
    %v731 = vpack.c.b16 %v635, %v635
    %v732 = vpack.c.b16 %v636, %v636
    %v733 = vpack.c.b16 %v637, %v637
    %v734 = vpack.c.b16 %v638, %v638
    %v735 = vpack.c.b16 %v639, %v639
    %v736 = vpack.c.b16 %v640, %v640
    %v737 = vpack.c.b16 %v641, %v641
    %v738 = vpack.c.b16 %v642, %v642
    %v739 = vpack.c.b16 %v643, %v643
    %v740 = vpack.c.b16 %v644, %v644
    %v741 = vpack.c.b16 %v645, %v645
    %v742 = vpack.c.b16 %v646, %v646
    %v743 = vpack.c.b16 %v647, %v647
    %v744 = vpack.c.b16 %v648, %v648
    %v745 = vpack.c.b16 %v649, %v649
    %v746 = vpack.c.b16 %v650, %v650
    %v747 = vpack.c.b16 %v651, %v651
    %v748 = vpack.c.b16 %v652, %v652
    %v749 = vpack.c.b16 %v653, %v653
    %v750 = vpack.c.b16 %v654, %v654
    %v751 = vpack.c.b16 %v655, %v655
    %v752 = vpack.c.b16 %v656, %v656
    %v753 = vpack.c.b16 %v657, %v657
    %v754 = vpack.c.b16 %v658, %v658
    %v755 = vpack.c.b16 %v659, %v659
    %v756 = vpack.c.b16 %v660, %v660
    %v757 = vpack.c.b16 %v661, %v661
    %v758 = vpack.c.b16 %v662, %v662
    %v759 = vpack.c.b16 %v663, %v663
    %v760 = vpack.c.b16 %v664, %v664
    %v761 = vpack.c.b16 %v665, %v665
    %v762 = vpack.c.b16 %v666, %v666
    %v763 = vpack.c.b16 %v667, %v667
    %v764 = vpack.c.b16 %v668, %v668
    %v765 = vpack.c.b16 %v669, %v669
    %v766 = vpack.c.b16 %v670, %v670
    %s863 = scalar_lea.vmem [#allocation2], 12
    %864 = vst.msk [vmem:[%s863] sm:$0xf] %vm141, %v671
    %865 = vst.msk [vmem:[%s863 + $0x4] sm:$0xf] %vm141, %v672
    %866 = vst.msk [vmem:[%s863 + $0x8] sm:$0x1] %vm144, %v673
    %867 = vst.msk [vmem:[%s863 + $0xc] sm:$0xf] %vm141, %v674
    %868 = vst.msk [vmem:[%s863 + $0x10] sm:$0xf] %vm141, %v675
    %869 = vst.msk [vmem:[%s863 + $0x14] sm:$0x1] %vm144, %v676
    %870 = vst.msk [vmem:[%s863 + $0x18] sm:$0xf] %vm141, %v677
    %871 = vst.msk [vmem:[%s863 + $0x1c] sm:$0xf] %vm141, %v678
    %872 = vst.msk [vmem:[%s863 + $0x20] sm:$0x1] %vm144, %v679
    %873 = vst.msk [vmem:[%s863 + $0x24] sm:$0xf] %vm141, %v680
    %874 = vst.msk [vmem:[%s863 + $0x28] sm:$0xf] %vm141, %v681
    %875 = vst.msk [vmem:[%s863 + $0x2c] sm:$0x1] %vm144, %v682
    %876 = vst.msk [vmem:[%s863 + $0x30] sm:$0xf] %vm141, %v683
    %877 = vst.msk [vmem:[%s863 + $0x34] sm:$0xf] %vm141, %v684
    %878 = vst.msk [vmem:[%s863 + $0x38] sm:$0x1] %vm144, %v685
    %879 = vst.msk [vmem:[%s863 + $0x3c] sm:$0xf] %vm141, %v686
    %880 = vst.msk [vmem:[%s863 + $0x40] sm:$0xf] %vm141, %v687
    %881 = vst.msk [vmem:[%s863 + $0x44] sm:$0x1] %vm144, %v688
    %882 = vst.msk [vmem:[%s863 + $0x48] sm:$0xf] %vm141, %v689
    %883 = vst.msk [vmem:[%s863 + $0x4c] sm:$0xf] %vm141, %v690
    %884 = vst.msk [vmem:[%s863 + $0x50] sm:$0x1] %vm144, %v691
    %885 = vst.msk [vmem:[%s863 + $0x54] sm:$0xf] %vm141, %v692
    %886 = vst.msk [vmem:[%s863 + $0x58] sm:$0xf] %vm141, %v693
    %887 = vst.msk [vmem:[%s863 + $0x5c] sm:$0x1] %vm144, %v694
    %888 = vst.msk [vmem:[%s863 + $0x60] sm:$0xf] %vm141, %v695
    %889 = vst.msk [vmem:[%s863 + $0x64] sm:$0xf] %vm141, %v696
    %890 = vst.msk [vmem:[%s863 + $0x68] sm:$0x1] %vm144, %v697
    %891 = vst.msk [vmem:[%s863 + $0x6c] sm:$0xf] %vm141, %v698
    %892 = vst.msk [vmem:[%s863 + $0x70] sm:$0xf] %vm141, %v699
    %893 = vst.msk [vmem:[%s863 + $0x74] sm:$0x1] %vm144, %v700
    %894 = vst.msk [vmem:[%s863 + $0x78] sm:$0xf] %vm141, %v701
    %895 = vst.msk [vmem:[%s863 + $0x7c] sm:$0xf] %vm141, %v702
    %896 = vst.msk [vmem:[%s863 + $0x80] sm:$0x1] %vm144, %v703
    %897 = vst.msk [vmem:[%s863 + $0x84] sm:$0xf] %vm141, %v704
    %898 = vst.msk [vmem:[%s863 + $0x88] sm:$0xf] %vm141, %v705
    %899 = vst.msk [vmem:[%s863 + $0x8c] sm:$0x1] %vm144, %v706
    %900 = vst.msk [vmem:[%s863 + $0x90] sm:$0xf] %vm141, %v707
    %901 = vst.msk [vmem:[%s863 + $0x94] sm:$0xf] %vm141, %v708
    %902 = vst.msk [vmem:[%s863 + $0x98] sm:$0x1] %vm144, %v709
    %903 = vst.msk [vmem:[%s863 + $0x9c] sm:$0xf] %vm141, %v710
    %904 = vst.msk [vmem:[%s863 + $0xa0] sm:$0xf] %vm141, %v711
    %905 = vst.msk [vmem:[%s863 + $0xa4] sm:$0x1] %vm144, %v712
    %906 = vst.msk [vmem:[%s863 + $0xa8] sm:$0xf] %vm141, %v713
    %907 = vst.msk [vmem:[%s863 + $0xac] sm:$0xf] %vm141, %v714
    %908 = vst.msk [vmem:[%s863 + $0xb0] sm:$0x1] %vm144, %v715
    %909 = vst.msk [vmem:[%s863 + $0xb4] sm:$0xf] %vm141, %v716
    %910 = vst.msk [vmem:[%s863 + $0xb8] sm:$0xf] %vm141, %v717
    %911 = vst.msk [vmem:[%s863 + $0xbc] sm:$0x1] %vm144, %v718
    %912 = vst.msk [vmem:[%s863 + $0xd8] sm:$0xf] %vm141, %v719
    %913 = vst.msk [vmem:[%s863 + $0xdc] sm:$0xf] %vm141, %v720
    %914 = vst.msk [vmem:[%s863 + $0xe0] sm:$0x1] %vm144, %v721
    %915 = vst.msk [vmem:[%s863 + $0xe4] sm:$0xf] %vm141, %v722
    %916 = vst.msk [vmem:[%s863 + $0xe8] sm:$0xf] %vm141, %v723
    %917 = vst.msk [vmem:[%s863 + $0xec] sm:$0x1] %vm144, %v724
    %918 = vst.msk [vmem:[%s863 + $0xf0] sm:$0xf] %vm141, %v725
    %919 = vst.msk [vmem:[%s863 + $0xf4] sm:$0xf] %vm141, %v726
    %920 = vst.msk [vmem:[%s863 + $0xf8] sm:$0x1] %vm144, %v727
    %921 = vst.msk [vmem:[%s863 + $0xfc] sm:$0xf] %vm141, %v728
    %922 = vst.msk [vmem:[%s863 + $0x100] sm:$0xf] %vm141, %v729
    %923 = vst.msk [vmem:[%s863 + $0x104] sm:$0x1] %vm144, %v730
    %924 = vst.msk [vmem:[%s863 + $0x108] sm:$0xf] %vm141, %v731
    %925 = vst.msk [vmem:[%s863 + $0x10c] sm:$0xf] %vm141, %v732
    %926 = vst.msk [vmem:[%s863 + $0x110] sm:$0x1] %vm144, %v733
    %927 = vst.msk [vmem:[%s863 + $0x114] sm:$0xf] %vm141, %v734
    %928 = vst.msk [vmem:[%s863 + $0x118] sm:$0xf] %vm141, %v735
    %929 = vst.msk [vmem:[%s863 + $0x11c] sm:$0x1] %vm144, %v736
    %930 = vst.msk [vmem:[%s863 + $0x120] sm:$0xf] %vm141, %v737
    %931 = vst.msk [vmem:[%s863 + $0x124] sm:$0xf] %vm141, %v738
    %932 = vst.msk [vmem:[%s863 + $0x128] sm:$0x1] %vm144, %v739
    %933 = vst.msk [vmem:[%s863 + $0x12c] sm:$0xf] %vm141, %v740
    %934 = vst.msk [vmem:[%s863 + $0x130] sm:$0xf] %vm141, %v741
    %935 = vst.msk [vmem:[%s863 + $0x134] sm:$0x1] %vm144, %v742
    %936 = vst.msk [vmem:[%s863 + $0x138] sm:$0xf] %vm141, %v743
    %937 = vst.msk [vmem:[%s863 + $0x13c] sm:$0xf] %vm141, %v744
    %938 = vst.msk [vmem:[%s863 + $0x140] sm:$0x1] %vm144, %v745
    %939 = vst.msk [vmem:[%s863 + $0x144] sm:$0xf] %vm141, %v746
    %940 = vst.msk [vmem:[%s863 + $0x148] sm:$0xf] %vm141, %v747
    %941 = vst.msk [vmem:[%s863 + $0x14c] sm:$0x1] %vm144, %v748
    %942 = vst.msk [vmem:[%s863 + $0x150] sm:$0xf] %vm141, %v749
    %943 = vst.msk [vmem:[%s863 + $0x154] sm:$0xf] %vm141, %v750
    %944 = vst.msk [vmem:[%s863 + $0x158] sm:$0x1] %vm144, %v751
    %945 = vst.msk [vmem:[%s863 + $0x15c] sm:$0xf] %vm141, %v752
    %946 = vst.msk [vmem:[%s863 + $0x160] sm:$0xf] %vm141, %v753
    %947 = vst.msk [vmem:[%s863 + $0x164] sm:$0x1] %vm144, %v754
    %948 = vst.msk [vmem:[%s863 + $0x168] sm:$0xf] %vm141, %v755
    %949 = vst.msk [vmem:[%s863 + $0x16c] sm:$0xf] %vm141, %v756
    %950 = vst.msk [vmem:[%s863 + $0x170] sm:$0x1] %vm144, %v757
    %951 = vst.msk [vmem:[%s863 + $0x174] sm:$0xf] %vm141, %v758
    %952 = vst.msk [vmem:[%s863 + $0x178] sm:$0xf] %vm141, %v759
    %953 = vst.msk [vmem:[%s863 + $0x17c] sm:$0x1] %vm144, %v760
    %954 = vst.msk [vmem:[%s863 + $0x180] sm:$0xf] %vm141, %v761
    %955 = vst.msk [vmem:[%s863 + $0x184] sm:$0xf] %vm141, %v762
    %956 = vst.msk [vmem:[%s863 + $0x188] sm:$0x1] %vm144, %v763
    %957 = vst.msk [vmem:[%s863 + $0x18c] sm:$0xf] %vm141, %v764
    %958 = vst.msk [vmem:[%s863 + $0x190] sm:$0xf] %vm141, %v765
    %959 = vst.msk [vmem:[%s863 + $0x194] sm:$0x1] %vm144, %v766
    %v960 = vld [vmem:[#allocation2] sm:$0xf]
    %v961 = vld [vmem:[#allocation2 + $0x4] sm:$0xf]
    %v962 = vld [vmem:[#allocation2 + $0xc] sm:$0xf]
    %v963 = vld [vmem:[#allocation2 + $0x10] sm:$0xf]
    %v964 = vld [vmem:[#allocation2 + $0x18] sm:$0xf]
    %v965 = vld [vmem:[#allocation2 + $0x1c] sm:$0xf]
    %v966 = vld [vmem:[#allocation2 + $0x24] sm:$0xf]
    %v967 = vld [vmem:[#allocation2 + $0x28] sm:$0xf]
    %v968 = vld [vmem:[#allocation2 + $0x30] sm:$0xf]
    %v969 = vld [vmem:[#allocation2 + $0x34] sm:$0xf]
    %v970 = vld [vmem:[#allocation2 + $0x3c] sm:$0xf]
    %v971 = vld [vmem:[#allocation2 + $0x40] sm:$0xf]
    %v972 = vld [vmem:[#allocation2 + $0x48] sm:$0xf]
    %v973 = vld [vmem:[#allocation2 + $0x4c] sm:$0xf]
    %v974 = vld [vmem:[#allocation2 + $0x54] sm:$0xf]
    %v975 = vld [vmem:[#allocation2 + $0x58] sm:$0xf]
    %v976 = vld [vmem:[#allocation2 + $0x60] sm:$0xf]
    %v977 = vld [vmem:[#allocation2 + $0x64] sm:$0xf]
    %v978 = vld [vmem:[#allocation2 + $0x6c] sm:$0xf]
    %v979 = vld [vmem:[#allocation2 + $0x70] sm:$0xf]
    %v980 = vld [vmem:[#allocation2 + $0x78] sm:$0xf]
    %v981 = vld [vmem:[#allocation2 + $0x7c] sm:$0xf]
    %v982 = vld [vmem:[#allocation2 + $0x84] sm:$0xf]
    %v983 = vld [vmem:[#allocation2 + $0x88] sm:$0xf]
    %v984 = vld [vmem:[#allocation2 + $0x90] sm:$0xf]
    %v985 = vld [vmem:[#allocation2 + $0x94] sm:$0xf]
    %v986 = vld [vmem:[#allocation2 + $0x9c] sm:$0xf]
    %v987 = vld [vmem:[#allocation2 + $0xa0] sm:$0xf]
    %v988 = vld [vmem:[#allocation2 + $0xa8] sm:$0xf]
    %v989 = vld [vmem:[#allocation2 + $0xac] sm:$0xf]
    %v990 = vld [vmem:[#allocation2 + $0xb4] sm:$0xf]
    %v991 = vld [vmem:[#allocation2 + $0xb8] sm:$0xf]
    %v992 = vld [vmem:[#allocation2 + $0xd8] sm:$0xf]
    %v993 = vld [vmem:[#allocation2 + $0xdc] sm:$0xf]
    %v994 = vld [vmem:[#allocation2 + $0xe4] sm:$0xf]
    %v995 = vld [vmem:[#allocation2 + $0xe8] sm:$0xf]
    %v996 = vld [vmem:[#allocation2 + $0xf0] sm:$0xf]
    %v997 = vld [vmem:[#allocation2 + $0xf4] sm:$0xf]
    %v998 = vld [vmem:[#allocation2 + $0xfc] sm:$0xf]
    %v999 = vld [vmem:[#allocation2 + $0x100] sm:$0xf]
    %v1000 = vld [vmem:[#allocation2 + $0x108] sm:$0xf]
    %v1001 = vld [vmem:[#allocation2 + $0x10c] sm:$0xf]
    %v1002 = vld [vmem:[#allocation2 + $0x114] sm:$0xf]
    %v1003 = vld [vmem:[#allocation2 + $0x118] sm:$0xf]
    %v1004 = vld [vmem:[#allocation2 + $0x120] sm:$0xf]
    %v1005 = vld [vmem:[#allocation2 + $0x124] sm:$0xf]
    %v1006 = vld [vmem:[#allocation2 + $0x12c] sm:$0xf]
    %v1007 = vld [vmem:[#allocation2 + $0x130] sm:$0xf]
    %v1008 = vld [vmem:[#allocation2 + $0x138] sm:$0xf]
    %v1009 = vld [vmem:[#allocation2 + $0x13c] sm:$0xf]
    %v1010 = vld [vmem:[#allocation2 + $0x144] sm:$0xf]
    %v1011 = vld [vmem:[#allocation2 + $0x148] sm:$0xf]
    %v1012 = vld [vmem:[#allocation2 + $0x150] sm:$0xf]
    %v1013 = vld [vmem:[#allocation2 + $0x154] sm:$0xf]
    %v1014 = vld [vmem:[#allocation2 + $0x15c] sm:$0xf]
    %v1015 = vld [vmem:[#allocation2 + $0x160] sm:$0xf]
    %v1016 = vld [vmem:[#allocation2 + $0x168] sm:$0xf]
    %v1017 = vld [vmem:[#allocation2 + $0x16c] sm:$0xf]
    %v1018 = vld [vmem:[#allocation2 + $0x174] sm:$0xf]
    %v1019 = vld [vmem:[#allocation2 + $0x178] sm:$0xf]
    %v1020 = vld [vmem:[#allocation2 + $0x180] sm:$0xf]
    %v1021 = vld [vmem:[#allocation2 + $0x184] sm:$0xf]
    %v1022 = vld [vmem:[#allocation2 + $0x18c] sm:$0xf]
    %v1023 = vld [vmem:[#allocation2 + $0x190] sm:$0xf]
    %v1024 = vld [vmem:[#allocation2 + $0x8] sm:$0x1]
    %v1025 = vld [vmem:[#allocation2 + $0x14] sm:$0x1]
    %v1026 = vld [vmem:[#allocation2 + $0x20] sm:$0x1]
    %v1027 = vld [vmem:[#allocation2 + $0x2c] sm:$0x1]
    %v1028 = vld [vmem:[#allocation2 + $0x38] sm:$0x1]
    %v1029 = vld [vmem:[#allocation2 + $0x44] sm:$0x1]
    %v1030 = vld [vmem:[#allocation2 + $0x50] sm:$0x1]
    %v1031 = vld [vmem:[#allocation2 + $0x5c] sm:$0x1]
    %v1032 = vld [vmem:[#allocation2 + $0x68] sm:$0x1]
    %v1033 = vld [vmem:[#allocation2 + $0x74] sm:$0x1]
    %v1034 = vld [vmem:[#allocation2 + $0x80] sm:$0x1]
    %v1035 = vld [vmem:[#allocation2 + $0x8c] sm:$0x1]
    %v1036 = vld [vmem:[#allocation2 + $0x98] sm:$0x1]
    %v1037 = vld [vmem:[#allocation2 + $0xa4] sm:$0x1]
    %v1038 = vld [vmem:[#allocation2 + $0xb0] sm:$0x1]
    %v1039 = vld [vmem:[#allocation2 + $0xbc] sm:$0x1]
    %v1040 = vld [vmem:[#allocation2 + $0xe0] sm:$0x1]
    %v1041 = vld [vmem:[#allocation2 + $0xec] sm:$0x1]
    %v1042 = vld [vmem:[#allocation2 + $0xf8] sm:$0x1]
    %v1043 = vld [vmem:[#allocation2 + $0x104] sm:$0x1]
    %v1044 = vld [vmem:[#allocation2 + $0x110] sm:$0x1]
    %v1045 = vld [vmem:[#allocation2 + $0x11c] sm:$0x1]
    %v1046 = vld [vmem:[#allocation2 + $0x128] sm:$0x1]
    %v1047 = vld [vmem:[#allocation2 + $0x134] sm:$0x1]
    %v1048 = vld [vmem:[#allocation2 + $0x140] sm:$0x1]
    %v1049 = vld [vmem:[#allocation2 + $0x14c] sm:$0x1]
    %v1050 = vld [vmem:[#allocation2 + $0x158] sm:$0x1]
    %v1051 = vld [vmem:[#allocation2 + $0x164] sm:$0x1]
    %v1052 = vld [vmem:[#allocation2 + $0x170] sm:$0x1]
    %v1053 = vld [vmem:[#allocation2 + $0x17c] sm:$0x1]
    %v1054 = vld [vmem:[#allocation2 + $0x188] sm:$0x1]
    %v1055 = vld [vmem:[#allocation2 + $0x194] sm:$0x1]
    %v1056 = vld [vmem:[#allocation2] sm:$0xe]
    %v1057 = vld [vmem:[#allocation2 + $0xc] sm:$0xe]
    %v1058 = vld [vmem:[#allocation2 + $0x18] sm:$0xe]
    %v1059 = vld [vmem:[#allocation2 + $0x24] sm:$0xe]
    %v1060 = vld [vmem:[#allocation2 + $0x30] sm:$0xe]
    %v1061 = vld [vmem:[#allocation2 + $0x3c] sm:$0xe]
    %v1062 = vld [vmem:[#allocation2 + $0x48] sm:$0xe]
    %v1063 = vld [vmem:[#allocation2 + $0x54] sm:$0xe]
    %v1064 = vld [vmem:[#allocation2 + $0x60] sm:$0xe]
    %v1065 = vld [vmem:[#allocation2 + $0x6c] sm:$0xe]
    %v1066 = vld [vmem:[#allocation2 + $0x78] sm:$0xe]
    %v1067 = vld [vmem:[#allocation2 + $0x84] sm:$0xe]
    %v1068 = vld [vmem:[#allocation2 + $0x90] sm:$0xe]
    %v1069 = vld [vmem:[#allocation2 + $0x9c] sm:$0xe]
    %v1070 = vld [vmem:[#allocation2 + $0xa8] sm:$0xe]
    %v1071 = vld [vmem:[#allocation2 + $0xb4] sm:$0xe]
    %v1072 = vld [vmem:[#allocation2 + $0xd8] sm:$0xe]
    %v1073 = vld [vmem:[#allocation2 + $0xe4] sm:$0xe]
    %v1074 = vld [vmem:[#allocation2 + $0xf0] sm:$0xe]
    %v1075 = vld [vmem:[#allocation2 + $0xfc] sm:$0xe]
    %v1076 = vld [vmem:[#allocation2 + $0x108] sm:$0xe]
    %v1077 = vld [vmem:[#allocation2 + $0x114] sm:$0xe]
    %v1078 = vld [vmem:[#allocation2 + $0x120] sm:$0xe]
    %v1079 = vld [vmem:[#allocation2 + $0x12c] sm:$0xe]
    %v1080 = vld [vmem:[#allocation2 + $0x138] sm:$0xe]
    %v1081 = vld [vmem:[#allocation2 + $0x144] sm:$0xe]
    %v1082 = vld [vmem:[#allocation2 + $0x150] sm:$0xe]
    %v1083 = vld [vmem:[#allocation2 + $0x15c] sm:$0xe]
    %v1084 = vld [vmem:[#allocation2 + $0x168] sm:$0xe]
    %v1085 = vld [vmem:[#allocation2 + $0x174] sm:$0xe]
    %v1086 = vld [vmem:[#allocation2 + $0x180] sm:$0xe]
    %v1087 = vld [vmem:[#allocation2 + $0x18c] sm:$0xe]
    %v1088 = vld [vmem:[%s863] sm:$0xf]
    %v1089 = vld [vmem:[%s863 + $0x4] sm:$0xf]
    %v1090 = vld [vmem:[%s863 + $0xc] sm:$0xf]
    %v1091 = vld [vmem:[%s863 + $0x10] sm:$0xf]
    %v1092 = vld [vmem:[%s863 + $0x18] sm:$0xf]
    %v1093 = vld [vmem:[%s863 + $0x1c] sm:$0xf]
    %v1094 = vld [vmem:[%s863 + $0x24] sm:$0xf]
    %v1095 = vld [vmem:[%s863 + $0x28] sm:$0xf]
    %v1096 = vld [vmem:[%s863 + $0x30] sm:$0xf]
    %v1097 = vld [vmem:[%s863 + $0x34] sm:$0xf]
    %v1098 = vld [vmem:[%s863 + $0x3c] sm:$0xf]
    %v1099 = vld [vmem:[%s863 + $0x40] sm:$0xf]
    %v1100 = vld [vmem:[%s863 + $0x48] sm:$0xf]
    %v1101 = vld [vmem:[%s863 + $0x4c] sm:$0xf]
    %v1102 = vld [vmem:[%s863 + $0x54] sm:$0xf]
    %v1103 = vld [vmem:[%s863 + $0x58] sm:$0xf]
    %v1104 = vld [vmem:[%s863 + $0x60] sm:$0xf]
    %v1105 = vld [vmem:[%s863 + $0x64] sm:$0xf]
    %v1106 = vld [vmem:[%s863 + $0x6c] sm:$0xf]
    %v1107 = vld [vmem:[%s863 + $0x70] sm:$0xf]
    %v1108 = vld [vmem:[%s863 + $0x78] sm:$0xf]
    %v1109 = vld [vmem:[%s863 + $0x7c] sm:$0xf]
    %v1110 = vld [vmem:[%s863 + $0x84] sm:$0xf]
    %v1111 = vld [vmem:[%s863 + $0x88] sm:$0xf]
    %v1112 = vld [vmem:[%s863 + $0x90] sm:$0xf]
    %v1113 = vld [vmem:[%s863 + $0x94] sm:$0xf]
    %v1114 = vld [vmem:[%s863 + $0x9c] sm:$0xf]
    %v1115 = vld [vmem:[%s863 + $0xa0] sm:$0xf]
    %v1116 = vld [vmem:[%s863 + $0xa8] sm:$0xf]
    %v1117 = vld [vmem:[%s863 + $0xac] sm:$0xf]
    %v1118 = vld [vmem:[%s863 + $0xb4] sm:$0xf]
    %v1119 = vld [vmem:[%s863 + $0xb8] sm:$0xf]
    %v1120 = vld [vmem:[%s863 + $0xd8] sm:$0xf]
    %v1121 = vld [vmem:[%s863 + $0xdc] sm:$0xf]
    %v1122 = vld [vmem:[%s863 + $0xe4] sm:$0xf]
    %v1123 = vld [vmem:[%s863 + $0xe8] sm:$0xf]
    %v1124 = vld [vmem:[%s863 + $0xf0] sm:$0xf]
    %v1125 = vld [vmem:[%s863 + $0xf4] sm:$0xf]
    %v1126 = vld [vmem:[%s863 + $0xfc] sm:$0xf]
    %v1127 = vld [vmem:[%s863 + $0x100] sm:$0xf]
    %v1128 = vld [vmem:[%s863 + $0x108] sm:$0xf]
    %v1129 = vld [vmem:[%s863 + $0x10c] sm:$0xf]
    %v1130 = vld [vmem:[%s863 + $0x114] sm:$0xf]
    %v1131 = vld [vmem:[%s863 + $0x118] sm:$0xf]
    %v1132 = vld [vmem:[%s863 + $0x120] sm:$0xf]
    %v1133 = vld [vmem:[%s863 + $0x124] sm:$0xf]
    %v1134 = vld [vmem:[%s863 + $0x12c] sm:$0xf]
    %v1135 = vld [vmem:[%s863 + $0x130] sm:$0xf]
    %v1136 = vld [vmem:[%s863 + $0x138] sm:$0xf]
    %v1137 = vld [vmem:[%s863 + $0x13c] sm:$0xf]
    %v1138 = vld [vmem:[%s863 + $0x144] sm:$0xf]
    %v1139 = vld [vmem:[%s863 + $0x148] sm:$0xf]
    %v1140 = vld [vmem:[%s863 + $0x150] sm:$0xf]
    %v1141 = vld [vmem:[%s863 + $0x154] sm:$0xf]
    %v1142 = vld [vmem:[%s863 + $0x15c] sm:$0xf]
    %v1143 = vld [vmem:[%s863 + $0x160] sm:$0xf]
    %v1144 = vld [vmem:[%s863 + $0x168] sm:$0xf]
    %v1145 = vld [vmem:[%s863 + $0x16c] sm:$0xf]
    %v1146 = vld [vmem:[%s863 + $0x174] sm:$0xf]
    %v1147 = vld [vmem:[%s863 + $0x178] sm:$0xf]
    %v1148 = vld [vmem:[%s863 + $0x180] sm:$0xf]
    %v1149 = vld [vmem:[%s863 + $0x184] sm:$0xf]
    %v1150 = vld [vmem:[%s863 + $0x18c] sm:$0xf]
    %v1151 = vld [vmem:[%s863 + $0x190] sm:$0xf]
    %v1152 = vld [vmem:[%s863 + $0x8] sm:$0x1]
    %v1153 = vld [vmem:[%s863 + $0x14] sm:$0x1]
    %v1154 = vld [vmem:[%s863 + $0x20] sm:$0x1]
    %v1155 = vld [vmem:[%s863 + $0x2c] sm:$0x1]
    %v1156 = vld [vmem:[%s863 + $0x38] sm:$0x1]
    %v1157 = vld [vmem:[%s863 + $0x44] sm:$0x1]
    %v1158 = vld [vmem:[%s863 + $0x50] sm:$0x1]
    %v1159 = vld [vmem:[%s863 + $0x5c] sm:$0x1]
    %v1160 = vld [vmem:[%s863 + $0x68] sm:$0x1]
    %v1161 = vld [vmem:[%s863 + $0x74] sm:$0x1]
    %v1162 = vld [vmem:[%s863 + $0x80] sm:$0x1]
    %v1163 = vld [vmem:[%s863 + $0x8c] sm:$0x1]
    %v1164 = vld [vmem:[%s863 + $0x98] sm:$0x1]
    %v1165 = vld [vmem:[%s863 + $0xa4] sm:$0x1]
    %v1166 = vld [vmem:[%s863 + $0xb0] sm:$0x1]
    %v1167 = vld [vmem:[%s863 + $0xbc] sm:$0x1]
    %v1168 = vld [vmem:[%s863 + $0xe0] sm:$0x1]
    %v1169 = vld [vmem:[%s863 + $0xec] sm:$0x1]
    %v1170 = vld [vmem:[%s863 + $0xf8] sm:$0x1]
    %v1171 = vld [vmem:[%s863 + $0x104] sm:$0x1]
    %v1172 = vld [vmem:[%s863 + $0x110] sm:$0x1]
    %v1173 = vld [vmem:[%s863 + $0x11c] sm:$0x1]
    %v1174 = vld [vmem:[%s863 + $0x128] sm:$0x1]
    %v1175 = vld [vmem:[%s863 + $0x134] sm:$0x1]
    %v1176 = vld [vmem:[%s863 + $0x140] sm:$0x1]
    %v1177 = vld [vmem:[%s863 + $0x14c] sm:$0x1]
    %v1178 = vld [vmem:[%s863 + $0x158] sm:$0x1]
    %v1179 = vld [vmem:[%s863 + $0x164] sm:$0x1]
    %v1180 = vld [vmem:[%s863 + $0x170] sm:$0x1]
    %v1181 = vld [vmem:[%s863 + $0x17c] sm:$0x1]
    %v1182 = vld [vmem:[%s863 + $0x188] sm:$0x1]
    %v1183 = vld [vmem:[%s863 + $0x194] sm:$0x1]
    %v1184 = vld [vmem:[%s863] sm:$0xe]
    %v1185 = vld [vmem:[%s863 + $0xc] sm:$0xe]
    %v1186 = vld [vmem:[%s863 + $0x18] sm:$0xe]
    %v1187 = vld [vmem:[%s863 + $0x24] sm:$0xe]
    %v1188 = vld [vmem:[%s863 + $0x30] sm:$0xe]
    %v1189 = vld [vmem:[%s863 + $0x3c] sm:$0xe]
    %v1190 = vld [vmem:[%s863 + $0x48] sm:$0xe]
    %v1191 = vld [vmem:[%s863 + $0x54] sm:$0xe]
    %v1192 = vld [vmem:[%s863 + $0x60] sm:$0xe]
    %v1193 = vld [vmem:[%s863 + $0x6c] sm:$0xe]
    %v1194 = vld [vmem:[%s863 + $0x78] sm:$0xe]
    %v1195 = vld [vmem:[%s863 + $0x84] sm:$0xe]
    %v1196 = vld [vmem:[%s863 + $0x90] sm:$0xe]
    %v1197 = vld [vmem:[%s863 + $0x9c] sm:$0xe]
    %v1198 = vld [vmem:[%s863 + $0xa8] sm:$0xe]
    %v1199 = vld [vmem:[%s863 + $0xb4] sm:$0xe]
    %v1200 = vld [vmem:[%s863 + $0xd8] sm:$0xe]
    %v1201 = vld [vmem:[%s863 + $0xe4] sm:$0xe]
    %v1202 = vld [vmem:[%s863 + $0xf0] sm:$0xe]
    %v1203 = vld [vmem:[%s863 + $0xfc] sm:$0xe]
    %v1204 = vld [vmem:[%s863 + $0x108] sm:$0xe]
    %v1205 = vld [vmem:[%s863 + $0x114] sm:$0xe]
    %v1206 = vld [vmem:[%s863 + $0x120] sm:$0xe]
    %v1207 = vld [vmem:[%s863 + $0x12c] sm:$0xe]
    %v1208 = vld [vmem:[%s863 + $0x138] sm:$0xe]
    %v1209 = vld [vmem:[%s863 + $0x144] sm:$0xe]
    %v1210 = vld [vmem:[%s863 + $0x150] sm:$0xe]
    %v1211 = vld [vmem:[%s863 + $0x15c] sm:$0xe]
    %v1212 = vld [vmem:[%s863 + $0x168] sm:$0xe]
    %v1213 = vld [vmem:[%s863 + $0x174] sm:$0xe]
    %v1214 = vld [vmem:[%s863 + $0x180] sm:$0xe]
    %v1215 = vld [vmem:[%s863 + $0x18c] sm:$0xe]
    %s1216 = scalar_lea.vmem [#allocation2], 24
    %v1217 = vld [vmem:[%s1216] sm:$0xf]
    %v1218 = vld [vmem:[%s1216 + $0x4] sm:$0xf]
    %v1219 = vld [vmem:[%s1216 + $0xc] sm:$0xf]
    %v1220 = vld [vmem:[%s1216 + $0x10] sm:$0xf]
    %v1221 = vld [vmem:[%s1216 + $0x18] sm:$0xf]
    %v1222 = vld [vmem:[%s1216 + $0x1c] sm:$0xf]
    %v1223 = vld [vmem:[%s1216 + $0x24] sm:$0xf]
    %v1224 = vld [vmem:[%s1216 + $0x28] sm:$0xf]
    %v1225 = vld [vmem:[%s1216 + $0x30] sm:$0xf]
    %v1226 = vld [vmem:[%s1216 + $0x34] sm:$0xf]
    %v1227 = vld [vmem:[%s1216 + $0x3c] sm:$0xf]
    %v1228 = vld [vmem:[%s1216 + $0x40] sm:$0xf]
    %v1229 = vld [vmem:[%s1216 + $0x48] sm:$0xf]
    %v1230 = vld [vmem:[%s1216 + $0x4c] sm:$0xf]
    %v1231 = vld [vmem:[%s1216 + $0x54] sm:$0xf]
    %v1232 = vld [vmem:[%s1216 + $0x58] sm:$0xf]
    %v1233 = vld [vmem:[%s1216 + $0x60] sm:$0xf]
    %v1234 = vld [vmem:[%s1216 + $0x64] sm:$0xf]
    %v1235 = vld [vmem:[%s1216 + $0x6c] sm:$0xf]
    %v1236 = vld [vmem:[%s1216 + $0x70] sm:$0xf]
    %v1237 = vld [vmem:[%s1216 + $0x78] sm:$0xf]
    %v1238 = vld [vmem:[%s1216 + $0x7c] sm:$0xf]
    %v1239 = vld [vmem:[%s1216 + $0x84] sm:$0xf]
    %v1240 = vld [vmem:[%s1216 + $0x88] sm:$0xf]
    %v1241 = vld [vmem:[%s1216 + $0x90] sm:$0xf]
    %v1242 = vld [vmem:[%s1216 + $0x94] sm:$0xf]
    %v1243 = vld [vmem:[%s1216 + $0x9c] sm:$0xf]
    %v1244 = vld [vmem:[%s1216 + $0xa0] sm:$0xf]
    %v1245 = vld [vmem:[%s1216 + $0xa8] sm:$0xf]
    %v1246 = vld [vmem:[%s1216 + $0xac] sm:$0xf]
    %v1247 = vld [vmem:[%s1216 + $0xb4] sm:$0xf]
    %v1248 = vld [vmem:[%s1216 + $0xb8] sm:$0xf]
    %v1249 = vld [vmem:[%s1216 + $0xd8] sm:$0xf]
    %v1250 = vld [vmem:[%s1216 + $0xdc] sm:$0xf]
    %v1251 = vld [vmem:[%s1216 + $0xe4] sm:$0xf]
    %v1252 = vld [vmem:[%s1216 + $0xe8] sm:$0xf]
    %v1253 = vld [vmem:[%s1216 + $0xf0] sm:$0xf]
    %v1254 = vld [vmem:[%s1216 + $0xf4] sm:$0xf]
    %v1255 = vld [vmem:[%s1216 + $0xfc] sm:$0xf]
    %v1256 = vld [vmem:[%s1216 + $0x100] sm:$0xf]
    %v1257 = vld [vmem:[%s1216 + $0x108] sm:$0xf]
    %v1258 = vld [vmem:[%s1216 + $0x10c] sm:$0xf]
    %v1259 = vld [vmem:[%s1216 + $0x114] sm:$0xf]
    %v1260 = vld [vmem:[%s1216 + $0x118] sm:$0xf]
    %v1261 = vld [vmem:[%s1216 + $0x120] sm:$0xf]
    %v1262 = vld [vmem:[%s1216 + $0x124] sm:$0xf]
    %v1263 = vld [vmem:[%s1216 + $0x12c] sm:$0xf]
    %v1264 = vld [vmem:[%s1216 + $0x130] sm:$0xf]
    %v1265 = vld [vmem:[%s1216 + $0x138] sm:$0xf]
    %v1266 = vld [vmem:[%s1216 + $0x13c] sm:$0xf]
    %v1267 = vld [vmem:[%s1216 + $0x144] sm:$0xf]
    %v1268 = vld [vmem:[%s1216 + $0x148] sm:$0xf]
    %v1269 = vld [vmem:[%s1216 + $0x150] sm:$0xf]
    %v1270 = vld [vmem:[%s1216 + $0x154] sm:$0xf]
    %v1271 = vld [vmem:[%s1216 + $0x15c] sm:$0xf]
    %v1272 = vld [vmem:[%s1216 + $0x160] sm:$0xf]
    %v1273 = vld [vmem:[%s1216 + $0x168] sm:$0xf]
    %v1274 = vld [vmem:[%s1216 + $0x16c] sm:$0xf]
    %v1275 = vld [vmem:[%s1216 + $0x174] sm:$0xf]
    %v1276 = vld [vmem:[%s1216 + $0x178] sm:$0xf]
    %v1277 = vld [vmem:[%s1216 + $0x180] sm:$0xf]
    %v1278 = vld [vmem:[%s1216 + $0x184] sm:$0xf]
    %v1279 = vld [vmem:[%s1216 + $0x18c] sm:$0xf]
    %v1280 = vld [vmem:[%s1216 + $0x190] sm:$0xf]
    %v1281 = vld [vmem:[%s1216 + $0x8] sm:$0x1]
    %v1282 = vld [vmem:[%s1216 + $0x14] sm:$0x1]
    %v1283 = vld [vmem:[%s1216 + $0x20] sm:$0x1]
    %v1284 = vld [vmem:[%s1216 + $0x2c] sm:$0x1]
    %v1285 = vld [vmem:[%s1216 + $0x38] sm:$0x1]
    %v1286 = vld [vmem:[%s1216 + $0x44] sm:$0x1]
    %v1287 = vld [vmem:[%s1216 + $0x50] sm:$0x1]
    %v1288 = vld [vmem:[%s1216 + $0x5c] sm:$0x1]
    %v1289 = vld [vmem:[%s1216 + $0x68] sm:$0x1]
    %v1290 = vld [vmem:[%s1216 + $0x74] sm:$0x1]
    %v1291 = vld [vmem:[%s1216 + $0x80] sm:$0x1]
    %v1292 = vld [vmem:[%s1216 + $0x8c] sm:$0x1]
    %v1293 = vld [vmem:[%s1216 + $0x98] sm:$0x1]
    %v1294 = vld [vmem:[%s1216 + $0xa4] sm:$0x1]
    %v1295 = vld [vmem:[%s1216 + $0xb0] sm:$0x1]
    %v1296 = vld [vmem:[%s1216 + $0xbc] sm:$0x1]
    %v1297 = vld [vmem:[%s1216 + $0xe0] sm:$0x1]
    %v1298 = vld [vmem:[%s1216 + $0xec] sm:$0x1]
    %v1299 = vld [vmem:[%s1216 + $0xf8] sm:$0x1]
    %v1300 = vld [vmem:[%s1216 + $0x104] sm:$0x1]
    %v1301 = vld [vmem:[%s1216 + $0x110] sm:$0x1]
    %v1302 = vld [vmem:[%s1216 + $0x11c] sm:$0x1]
    %v1303 = vld [vmem:[%s1216 + $0x128] sm:$0x1]
    %v1304 = vld [vmem:[%s1216 + $0x134] sm:$0x1]
    %v1305 = vld [vmem:[%s1216 + $0x140] sm:$0x1]
    %v1306 = vld [vmem:[%s1216 + $0x14c] sm:$0x1]
    %v1307 = vld [vmem:[%s1216 + $0x158] sm:$0x1]
    %v1308 = vld [vmem:[%s1216 + $0x164] sm:$0x1]
    %v1309 = vld [vmem:[%s1216 + $0x170] sm:$0x1]
    %v1310 = vld [vmem:[%s1216 + $0x17c] sm:$0x1]
    %v1311 = vld [vmem:[%s1216 + $0x188] sm:$0x1]
    %v1312 = vld [vmem:[%s1216 + $0x194] sm:$0x1]
    %v1313 = vld [vmem:[%s1216] sm:$0xe]
    %v1314 = vld [vmem:[%s1216 + $0xc] sm:$0xe]
    %v1315 = vld [vmem:[%s1216 + $0x18] sm:$0xe]
    %v1316 = vld [vmem:[%s1216 + $0x24] sm:$0xe]
    %v1317 = vld [vmem:[%s1216 + $0x30] sm:$0xe]
    %v1318 = vld [vmem:[%s1216 + $0x3c] sm:$0xe]
    %v1319 = vld [vmem:[%s1216 + $0x48] sm:$0xe]
    %v1320 = vld [vmem:[%s1216 + $0x54] sm:$0xe]
    %v1321 = vld [vmem:[%s1216 + $0x60] sm:$0xe]
    %v1322 = vld [vmem:[%s1216 + $0x6c] sm:$0xe]
    %v1323 = vld [vmem:[%s1216 + $0x78] sm:$0xe]
    %v1324 = vld [vmem:[%s1216 + $0x84] sm:$0xe]
    %v1325 = vld [vmem:[%s1216 + $0x90] sm:$0xe]
    %v1326 = vld [vmem:[%s1216 + $0x9c] sm:$0xe]
    %v1327 = vld [vmem:[%s1216 + $0xa8] sm:$0xe]
    %v1328 = vld [vmem:[%s1216 + $0xb4] sm:$0xe]
    %v1329 = vld [vmem:[%s1216 + $0xd8] sm:$0xe]
    %v1330 = vld [vmem:[%s1216 + $0xe4] sm:$0xe]
    %v1331 = vld [vmem:[%s1216 + $0xf0] sm:$0xe]
    %v1332 = vld [vmem:[%s1216 + $0xfc] sm:$0xe]
    %v1333 = vld [vmem:[%s1216 + $0x108] sm:$0xe]
    %v1334 = vld [vmem:[%s1216 + $0x114] sm:$0xe]
    %v1335 = vld [vmem:[%s1216 + $0x120] sm:$0xe]
    %v1336 = vld [vmem:[%s1216 + $0x12c] sm:$0xe]
    %v1337 = vld [vmem:[%s1216 + $0x138] sm:$0xe]
    %v1338 = vld [vmem:[%s1216 + $0x144] sm:$0xe]
    %v1339 = vld [vmem:[%s1216 + $0x150] sm:$0xe]
    %v1340 = vld [vmem:[%s1216 + $0x15c] sm:$0xe]
    %v1341 = vld [vmem:[%s1216 + $0x168] sm:$0xe]
    %v1342 = vld [vmem:[%s1216 + $0x174] sm:$0xe]
    %v1343 = vld [vmem:[%s1216 + $0x180] sm:$0xe]
    %v1344 = vld [vmem:[%s1216 + $0x18c] sm:$0xe]
    %v1409 = vunpack.c.l.b16 %v960
    %v1410 = vunpack.c.l.b16 %v961
    %v1411 = vunpack.c.l.b16 %v962
    %v1412 = vunpack.c.l.b16 %v963
    %v1413 = vunpack.c.l.b16 %v964
    %v1414 = vunpack.c.l.b16 %v965
    %v1415 = vunpack.c.l.b16 %v966
    %v1416 = vunpack.c.l.b16 %v967
    %v1417 = vunpack.c.l.b16 %v968
    %v1418 = vunpack.c.l.b16 %v969
    %v1419 = vunpack.c.l.b16 %v970
    %v1420 = vunpack.c.l.b16 %v971
    %v1421 = vunpack.c.l.b16 %v972
    %v1422 = vunpack.c.l.b16 %v973
    %v1423 = vunpack.c.l.b16 %v974
    %v1424 = vunpack.c.l.b16 %v975
    %v1425 = vunpack.c.l.b16 %v976
    %v1426 = vunpack.c.l.b16 %v977
    %v1427 = vunpack.c.l.b16 %v978
    %v1428 = vunpack.c.l.b16 %v979
    %v1429 = vunpack.c.l.b16 %v980
    %v1430 = vunpack.c.l.b16 %v981
    %v1431 = vunpack.c.l.b16 %v982
    %v1432 = vunpack.c.l.b16 %v983
    %v1433 = vunpack.c.l.b16 %v984
    %v1434 = vunpack.c.l.b16 %v985
    %v1435 = vunpack.c.l.b16 %v986
    %v1436 = vunpack.c.l.b16 %v987
    %v1437 = vunpack.c.l.b16 %v988
    %v1438 = vunpack.c.l.b16 %v989
    %v1439 = vunpack.c.l.b16 %v990
    %v1440 = vunpack.c.l.b16 %v991
    %v1441 = vunpack.c.l.b16 %v992
    %v1442 = vunpack.c.l.b16 %v993
    %v1443 = vunpack.c.l.b16 %v994
    %v1444 = vunpack.c.l.b16 %v995
    %v1445 = vunpack.c.l.b16 %v996
    %v1446 = vunpack.c.l.b16 %v997
    %v1447 = vunpack.c.l.b16 %v998
    %v1448 = vunpack.c.l.b16 %v999
    %v1449 = vunpack.c.l.b16 %v1000
    %v1450 = vunpack.c.l.b16 %v1001
    %v1451 = vunpack.c.l.b16 %v1002
    %v1452 = vunpack.c.l.b16 %v1003
    %v1453 = vunpack.c.l.b16 %v1004
    %v1454 = vunpack.c.l.b16 %v1005
    %v1455 = vunpack.c.l.b16 %v1006
    %v1456 = vunpack.c.l.b16 %v1007
    %v1457 = vunpack.c.l.b16 %v1008
    %v1458 = vunpack.c.l.b16 %v1009
    %v1459 = vunpack.c.l.b16 %v1010
    %v1460 = vunpack.c.l.b16 %v1011
    %v1461 = vunpack.c.l.b16 %v1012
    %v1462 = vunpack.c.l.b16 %v1013
    %v1463 = vunpack.c.l.b16 %v1014
    %v1464 = vunpack.c.l.b16 %v1015
    %v1465 = vunpack.c.l.b16 %v1016
    %v1466 = vunpack.c.l.b16 %v1017
    %v1467 = vunpack.c.l.b16 %v1018
    %v1468 = vunpack.c.l.b16 %v1019
    %v1469 = vunpack.c.l.b16 %v1020
    %v1470 = vunpack.c.l.b16 %v1021
    %v1471 = vunpack.c.l.b16 %v1022
    %v1472 = vunpack.c.l.b16 %v1023
    %v1473 = vpack.c.b16 %v1410, %v1409
    %v1474 = vpack.c.b16 %v1412, %v1411
    %v1475 = vpack.c.b16 %v1414, %v1413
    %v1476 = vpack.c.b16 %v1416, %v1415
    %v1477 = vpack.c.b16 %v1418, %v1417
    %v1478 = vpack.c.b16 %v1420, %v1419
    %v1479 = vpack.c.b16 %v1422, %v1421
    %v1480 = vpack.c.b16 %v1424, %v1423
    %v1481 = vpack.c.b16 %v1426, %v1425
    %v1482 = vpack.c.b16 %v1428, %v1427
    %v1483 = vpack.c.b16 %v1430, %v1429
    %v1484 = vpack.c.b16 %v1432, %v1431
    %v1485 = vpack.c.b16 %v1434, %v1433
    %v1486 = vpack.c.b16 %v1436, %v1435
    %v1487 = vpack.c.b16 %v1438, %v1437
    %v1488 = vpack.c.b16 %v1440, %v1439
    %v1489 = vpack.c.b16 %v1442, %v1441
    %v1490 = vpack.c.b16 %v1444, %v1443
    %v1491 = vpack.c.b16 %v1446, %v1445
    %v1492 = vpack.c.b16 %v1448, %v1447
    %v1493 = vpack.c.b16 %v1450, %v1449
    %v1494 = vpack.c.b16 %v1452, %v1451
    %v1495 = vpack.c.b16 %v1454, %v1453
    %v1496 = vpack.c.b16 %v1456, %v1455
    %v1497 = vpack.c.b16 %v1458, %v1457
    %v1498 = vpack.c.b16 %v1460, %v1459
    %v1499 = vpack.c.b16 %v1462, %v1461
    %v1500 = vpack.c.b16 %v1464, %v1463
    %v1501 = vpack.c.b16 %v1466, %v1465
    %v1502 = vpack.c.b16 %v1468, %v1467
    %v1503 = vpack.c.b16 %v1470, %v1469
    %v1504 = vpack.c.b16 %v1472, %v1471
    %v1537 = vunpack.c.l.b16 %v1024
    %v1538 = vunpack.c.l.b16 %v1025
    %v1539 = vunpack.c.l.b16 %v1026
    %v1540 = vunpack.c.l.b16 %v1027
    %v1541 = vunpack.c.l.b16 %v1028
    %v1542 = vunpack.c.l.b16 %v1029
    %v1543 = vunpack.c.l.b16 %v1030
    %v1544 = vunpack.c.l.b16 %v1031
    %v1545 = vunpack.c.l.b16 %v1032
    %v1546 = vunpack.c.l.b16 %v1033
    %v1547 = vunpack.c.l.b16 %v1034
    %v1548 = vunpack.c.l.b16 %v1035
    %v1549 = vunpack.c.l.b16 %v1036
    %v1550 = vunpack.c.l.b16 %v1037
    %v1551 = vunpack.c.l.b16 %v1038
    %v1552 = vunpack.c.l.b16 %v1039
    %v1553 = vunpack.c.l.b16 %v1040
    %v1554 = vunpack.c.l.b16 %v1041
    %v1555 = vunpack.c.l.b16 %v1042
    %v1556 = vunpack.c.l.b16 %v1043
    %v1557 = vunpack.c.l.b16 %v1044
    %v1558 = vunpack.c.l.b16 %v1045
    %v1559 = vunpack.c.l.b16 %v1046
    %v1560 = vunpack.c.l.b16 %v1047
    %v1561 = vunpack.c.l.b16 %v1048
    %v1562 = vunpack.c.l.b16 %v1049
    %v1563 = vunpack.c.l.b16 %v1050
    %v1564 = vunpack.c.l.b16 %v1051
    %v1565 = vunpack.c.l.b16 %v1052
    %v1566 = vunpack.c.l.b16 %v1053
    %v1567 = vunpack.c.l.b16 %v1054
    %v1568 = vunpack.c.l.b16 %v1055
    %v1569 = vpack.c.b16 %v1537, %v1537
    %v1570 = vpack.c.b16 %v1538, %v1538
    %v1571 = vpack.c.b16 %v1539, %v1539
    %v1572 = vpack.c.b16 %v1540, %v1540
    %v1573 = vpack.c.b16 %v1541, %v1541
    %v1574 = vpack.c.b16 %v1542, %v1542
    %v1575 = vpack.c.b16 %v1543, %v1543
    %v1576 = vpack.c.b16 %v1544, %v1544
    %v1577 = vpack.c.b16 %v1545, %v1545
    %v1578 = vpack.c.b16 %v1546, %v1546
    %v1579 = vpack.c.b16 %v1547, %v1547
    %v1580 = vpack.c.b16 %v1548, %v1548
    %v1581 = vpack.c.b16 %v1549, %v1549
    %v1582 = vpack.c.b16 %v1550, %v1550
    %v1583 = vpack.c.b16 %v1551, %v1551
    %v1584 = vpack.c.b16 %v1552, %v1552
    %v1585 = vpack.c.b16 %v1553, %v1553
    %v1586 = vpack.c.b16 %v1554, %v1554
    %v1587 = vpack.c.b16 %v1555, %v1555
    %v1588 = vpack.c.b16 %v1556, %v1556
    %v1589 = vpack.c.b16 %v1557, %v1557
    %v1590 = vpack.c.b16 %v1558, %v1558
    %v1591 = vpack.c.b16 %v1559, %v1559
    %v1592 = vpack.c.b16 %v1560, %v1560
    %v1593 = vpack.c.b16 %v1561, %v1561
    %v1594 = vpack.c.b16 %v1562, %v1562
    %v1595 = vpack.c.b16 %v1563, %v1563
    %v1596 = vpack.c.b16 %v1564, %v1564
    %v1597 = vpack.c.b16 %v1565, %v1565
    %v1598 = vpack.c.b16 %v1566, %v1566
    %v1599 = vpack.c.b16 %v1567, %v1567
    %v1600 = vpack.c.b16 %v1568, %v1568
    %vm1601 = vsmask.f32 7424
    %v1603 = vshrl.u32 %v1473, 16
    %v1605 = vshll.u32 %v1473, 16
    %v1607 = vrot.slane %v1605, 1
    %v1608 = vor.u32 %v1603, %v1607
    %v1610 = vshll.u32 %v1569, 16
    %v1612 = vrot.slane %v1610, 1
    %v1613 = vsel %vm1601, %v1608, %v1612
    %v1615 = vshrl.u32 %v1474, 16
    %v1617 = vshll.u32 %v1474, 16
    %v1619 = vrot.slane %v1617, 1
    %v1620 = vor.u32 %v1615, %v1619
    %v1622 = vshll.u32 %v1570, 16
    %v1624 = vrot.slane %v1622, 1
    %v1625 = vsel %vm1601, %v1620, %v1624
    %v1627 = vshrl.u32 %v1475, 16
    %v1629 = vshll.u32 %v1475, 16
    %v1631 = vrot.slane %v1629, 1
    %v1632 = vor.u32 %v1627, %v1631
    %v1634 = vshll.u32 %v1571, 16
    %v1636 = vrot.slane %v1634, 1
    %v1637 = vsel %vm1601, %v1632, %v1636
    %v1639 = vshrl.u32 %v1476, 16
    %v1641 = vshll.u32 %v1476, 16
    %v1643 = vrot.slane %v1641, 1
    %v1644 = vor.u32 %v1639, %v1643
    %v1646 = vshll.u32 %v1572, 16
    %v1648 = vrot.slane %v1646, 1
    %v1649 = vsel %vm1601, %v1644, %v1648
    %v1651 = vshrl.u32 %v1477, 16
    %v1653 = vshll.u32 %v1477, 16
    %v1655 = vrot.slane %v1653, 1
    %v1656 = vor.u32 %v1651, %v1655
    %v1658 = vshll.u32 %v1573, 16
    %v1660 = vrot.slane %v1658, 1
    %v1661 = vsel %vm1601, %v1656, %v1660
    %v1663 = vshrl.u32 %v1478, 16
    %v1665 = vshll.u32 %v1478, 16
    %v1667 = vrot.slane %v1665, 1
    %v1668 = vor.u32 %v1663, %v1667
    %v1670 = vshll.u32 %v1574, 16
    %v1672 = vrot.slane %v1670, 1
    %v1673 = vsel %vm1601, %v1668, %v1672
    %v1675 = vshrl.u32 %v1479, 16
    %v1677 = vshll.u32 %v1479, 16
    %v1679 = vrot.slane %v1677, 1
    %v1680 = vor.u32 %v1675, %v1679
    %v1682 = vshll.u32 %v1575, 16
    %v1684 = vrot.slane %v1682, 1
    %v1685 = vsel %vm1601, %v1680, %v1684
    %v1687 = vshrl.u32 %v1480, 16
    %v1689 = vshll.u32 %v1480, 16
    %v1691 = vrot.slane %v1689, 1
    %v1692 = vor.u32 %v1687, %v1691
    %v1694 = vshll.u32 %v1576, 16
    %v1696 = vrot.slane %v1694, 1
    %v1697 = vsel %vm1601, %v1692, %v1696
    %v1699 = vshrl.u32 %v1481, 16
    %v1701 = vshll.u32 %v1481, 16
    %v1703 = vrot.slane %v1701, 1
    %v1704 = vor.u32 %v1699, %v1703
    %v1706 = vshll.u32 %v1577, 16
    %v1708 = vrot.slane %v1706, 1
    %v1709 = vsel %vm1601, %v1704, %v1708
    %v1711 = vshrl.u32 %v1482, 16
    %v1713 = vshll.u32 %v1482, 16
    %v1715 = vrot.slane %v1713, 1
    %v1716 = vor.u32 %v1711, %v1715
    %v1718 = vshll.u32 %v1578, 16
    %v1720 = vrot.slane %v1718, 1
    %v1721 = vsel %vm1601, %v1716, %v1720
    %v1723 = vshrl.u32 %v1483, 16
    %v1725 = vshll.u32 %v1483, 16
    %v1727 = vrot.slane %v1725, 1
    %v1728 = vor.u32 %v1723, %v1727
    %v1730 = vshll.u32 %v1579, 16
    %v1732 = vrot.slane %v1730, 1
    %v1733 = vsel %vm1601, %v1728, %v1732
    %v1735 = vshrl.u32 %v1484, 16
    %v1737 = vshll.u32 %v1484, 16
    %v1739 = vrot.slane %v1737, 1
    %v1740 = vor.u32 %v1735, %v1739
    %v1742 = vshll.u32 %v1580, 16
    %v1744 = vrot.slane %v1742, 1
    %v1745 = vsel %vm1601, %v1740, %v1744
    %v1747 = vshrl.u32 %v1485, 16
    %v1749 = vshll.u32 %v1485, 16
    %v1751 = vrot.slane %v1749, 1
    %v1752 = vor.u32 %v1747, %v1751
    %v1754 = vshll.u32 %v1581, 16
    %v1756 = vrot.slane %v1754, 1
    %v1757 = vsel %vm1601, %v1752, %v1756
    %v1759 = vshrl.u32 %v1486, 16
    %v1761 = vshll.u32 %v1486, 16
    %v1763 = vrot.slane %v1761, 1
    %v1764 = vor.u32 %v1759, %v1763
    %v1766 = vshll.u32 %v1582, 16
    %v1768 = vrot.slane %v1766, 1
    %v1769 = vsel %vm1601, %v1764, %v1768
    %v1771 = vshrl.u32 %v1487, 16
    %v1773 = vshll.u32 %v1487, 16
    %v1775 = vrot.slane %v1773, 1
    %v1776 = vor.u32 %v1771, %v1775
    %v1778 = vshll.u32 %v1583, 16
    %v1780 = vrot.slane %v1778, 1
    %v1781 = vsel %vm1601, %v1776, %v1780
    %v1783 = vshrl.u32 %v1488, 16
    %v1785 = vshll.u32 %v1488, 16
    %v1787 = vrot.slane %v1785, 1
    %v1788 = vor.u32 %v1783, %v1787
    %v1790 = vshll.u32 %v1584, 16
    %v1792 = vrot.slane %v1790, 1
    %v1793 = vsel %vm1601, %v1788, %v1792
    %v1795 = vshrl.u32 %v1489, 16
    %v1797 = vshll.u32 %v1489, 16
    %v1799 = vrot.slane %v1797, 1
    %v1800 = vor.u32 %v1795, %v1799
    %v1802 = vshll.u32 %v1585, 16
    %v1804 = vrot.slane %v1802, 1
    %v1805 = vsel %vm1601, %v1800, %v1804
    %v1807 = vshrl.u32 %v1490, 16
    %v1809 = vshll.u32 %v1490, 16
    %v1811 = vrot.slane %v1809, 1
    %v1812 = vor.u32 %v1807, %v1811
    %v1814 = vshll.u32 %v1586, 16
    %v1816 = vrot.slane %v1814, 1
    %v1817 = vsel %vm1601, %v1812, %v1816
    %v1819 = vshrl.u32 %v1491, 16
    %v1821 = vshll.u32 %v1491, 16
    %v1823 = vrot.slane %v1821, 1
    %v1824 = vor.u32 %v1819, %v1823
    %v1826 = vshll.u32 %v1587, 16
    %v1828 = vrot.slane %v1826, 1
    %v1829 = vsel %vm1601, %v1824, %v1828
    %v1831 = vshrl.u32 %v1492, 16
    %v1833 = vshll.u32 %v1492, 16
    %v1835 = vrot.slane %v1833, 1
    %v1836 = vor.u32 %v1831, %v1835
    %v1838 = vshll.u32 %v1588, 16
    %v1840 = vrot.slane %v1838, 1
    %v1841 = vsel %vm1601, %v1836, %v1840
    %v1843 = vshrl.u32 %v1493, 16
    %v1845 = vshll.u32 %v1493, 16
    %v1847 = vrot.slane %v1845, 1
    %v1848 = vor.u32 %v1843, %v1847
    %v1850 = vshll.u32 %v1589, 16
    %v1852 = vrot.slane %v1850, 1
    %v1853 = vsel %vm1601, %v1848, %v1852
    %v1855 = vshrl.u32 %v1494, 16
    %v1857 = vshll.u32 %v1494, 16
    %v1859 = vrot.slane %v1857, 1
    %v1860 = vor.u32 %v1855, %v1859
    %v1862 = vshll.u32 %v1590, 16
    %v1864 = vrot.slane %v1862, 1
    %v1865 = vsel %vm1601, %v1860, %v1864
    %v1867 = vshrl.u32 %v1495, 16
    %v1869 = vshll.u32 %v1495, 16
    %v1871 = vrot.slane %v1869, 1
    %v1872 = vor.u32 %v1867, %v1871
    %v1874 = vshll.u32 %v1591, 16
    %v1876 = vrot.slane %v1874, 1
    %v1877 = vsel %vm1601, %v1872, %v1876
    %v1879 = vshrl.u32 %v1496, 16
    %v1881 = vshll.u32 %v1496, 16
    %v1883 = vrot.slane %v1881, 1
    %v1884 = vor.u32 %v1879, %v1883
    %v1886 = vshll.u32 %v1592, 16
    %v1888 = vrot.slane %v1886, 1
    %v1889 = vsel %vm1601, %v1884, %v1888
    %v1891 = vshrl.u32 %v1497, 16
    %v1893 = vshll.u32 %v1497, 16
    %v1895 = vrot.slane %v1893, 1
    %v1896 = vor.u32 %v1891, %v1895
    %v1898 = vshll.u32 %v1593, 16
    %v1900 = vrot.slane %v1898, 1
    %v1901 = vsel %vm1601, %v1896, %v1900
    %v1903 = vshrl.u32 %v1498, 16
    %v1905 = vshll.u32 %v1498, 16
    %v1907 = vrot.slane %v1905, 1
    %v1908 = vor.u32 %v1903, %v1907
    %v1910 = vshll.u32 %v1594, 16
    %v1912 = vrot.slane %v1910, 1
    %v1913 = vsel %vm1601, %v1908, %v1912
    %v1915 = vshrl.u32 %v1499, 16
    %v1917 = vshll.u32 %v1499, 16
    %v1919 = vrot.slane %v1917, 1
    %v1920 = vor.u32 %v1915, %v1919
    %v1922 = vshll.u32 %v1595, 16
    %v1924 = vrot.slane %v1922, 1
    %v1925 = vsel %vm1601, %v1920, %v1924
    %v1927 = vshrl.u32 %v1500, 16
    %v1929 = vshll.u32 %v1500, 16
    %v1931 = vrot.slane %v1929, 1
    %v1932 = vor.u32 %v1927, %v1931
    %v1934 = vshll.u32 %v1596, 16
    %v1936 = vrot.slane %v1934, 1
    %v1937 = vsel %vm1601, %v1932, %v1936
    %v1939 = vshrl.u32 %v1501, 16
    %v1941 = vshll.u32 %v1501, 16
    %v1943 = vrot.slane %v1941, 1
    %v1944 = vor.u32 %v1939, %v1943
    %v1946 = vshll.u32 %v1597, 16
    %v1948 = vrot.slane %v1946, 1
    %v1949 = vsel %vm1601, %v1944, %v1948
    %v1951 = vshrl.u32 %v1502, 16
    %v1953 = vshll.u32 %v1502, 16
    %v1955 = vrot.slane %v1953, 1
    %v1956 = vor.u32 %v1951, %v1955
    %v1958 = vshll.u32 %v1598, 16
    %v1960 = vrot.slane %v1958, 1
    %v1961 = vsel %vm1601, %v1956, %v1960
    %v1963 = vshrl.u32 %v1503, 16
    %v1965 = vshll.u32 %v1503, 16
    %v1967 = vrot.slane %v1965, 1
    %v1968 = vor.u32 %v1963, %v1967
    %v1970 = vshll.u32 %v1599, 16
    %v1972 = vrot.slane %v1970, 1
    %v1973 = vsel %vm1601, %v1968, %v1972
    %v1975 = vshrl.u32 %v1504, 16
    %v1977 = vshll.u32 %v1504, 16
    %v1979 = vrot.slane %v1977, 1
    %v1980 = vor.u32 %v1975, %v1979
    %v1982 = vshll.u32 %v1600, 16
    %v1984 = vrot.slane %v1982, 1
    %v1985 = vsel %vm1601, %v1980, %v1984
    %1986 = vrot.lane.b32.xlu0 %v1613, 4
    %v1987 = vpop.permute.xlu0 %1986
    %1988 = vrot.lane.b32.xlu0 %v1625, 4
    %v1989 = vpop.permute.xlu0 %1988
    %1990 = vrot.lane.b32.xlu0 %v1637, 4
    %v1991 = vpop.permute.xlu0 %1990
    %1992 = vrot.lane.b32.xlu0 %v1649, 4
    %v1993 = vpop.permute.xlu0 %1992
    %1994 = vrot.lane.b32.xlu0 %v1661, 4
    %v1995 = vpop.permute.xlu0 %1994
    %1996 = vrot.lane.b32.xlu0 %v1673, 4
    %v1997 = vpop.permute.xlu0 %1996
    %1998 = vrot.lane.b32.xlu0 %v1685, 4
    %v1999 = vpop.permute.xlu0 %1998
    %2000 = vrot.lane.b32.xlu0 %v1697, 4
    %v2001 = vpop.permute.xlu0 %2000
    %2002 = vrot.lane.b32.xlu0 %v1709, 4
    %v2003 = vpop.permute.xlu0 %2002
    %2004 = vrot.lane.b32.xlu0 %v1721, 4
    %v2005 = vpop.permute.xlu0 %2004
    %2006 = vrot.lane.b32.xlu0 %v1733, 4
    %v2007 = vpop.permute.xlu0 %2006
    %2008 = vrot.lane.b32.xlu0 %v1745, 4
    %v2009 = vpop.permute.xlu0 %2008
    %2010 = vrot.lane.b32.xlu0 %v1757, 4
    %v2011 = vpop.permute.xlu0 %2010
    %2012 = vrot.lane.b32.xlu0 %v1769, 4
    %v2013 = vpop.permute.xlu0 %2012
    %2014 = vrot.lane.b32.xlu0 %v1781, 4
    %v2015 = vpop.permute.xlu0 %2014
    %2016 = vrot.lane.b32.xlu0 %v1793, 4
    %v2017 = vpop.permute.xlu0 %2016
    %2018 = vrot.lane.b32.xlu0 %v1805, 4
    %v2019 = vpop.permute.xlu0 %2018
    %2020 = vrot.lane.b32.xlu0 %v1817, 4
    %v2021 = vpop.permute.xlu0 %2020
    %2022 = vrot.lane.b32.xlu0 %v1829, 4
    %v2023 = vpop.permute.xlu0 %2022
    %2024 = vrot.lane.b32.xlu0 %v1841, 4
    %v2025 = vpop.permute.xlu0 %2024
    %2026 = vrot.lane.b32.xlu0 %v1853, 4
    %v2027 = vpop.permute.xlu0 %2026
    %2028 = vrot.lane.b32.xlu0 %v1865, 4
    %v2029 = vpop.permute.xlu0 %2028
    %2030 = vrot.lane.b32.xlu0 %v1877, 4
    %v2031 = vpop.permute.xlu0 %2030
    %2032 = vrot.lane.b32.xlu0 %v1889, 4
    %v2033 = vpop.permute.xlu0 %2032
    %2034 = vrot.lane.b32.xlu0 %v1901, 4
    %v2035 = vpop.permute.xlu0 %2034
    %2036 = vrot.lane.b32.xlu0 %v1913, 4
    %v2037 = vpop.permute.xlu0 %2036
    %2038 = vrot.lane.b32.xlu0 %v1925, 4
    %v2039 = vpop.permute.xlu0 %2038
    %2040 = vrot.lane.b32.xlu0 %v1937, 4
    %v2041 = vpop.permute.xlu0 %2040
    %2042 = vrot.lane.b32.xlu0 %v1949, 4
    %v2043 = vpop.permute.xlu0 %2042
    %2044 = vrot.lane.b32.xlu0 %v1961, 4
    %v2045 = vpop.permute.xlu0 %2044
    %2046 = vrot.lane.b32.xlu0 %v1973, 4
    %v2047 = vpop.permute.xlu0 %2046
    %2048 = vrot.lane.b32.xlu0 %v1985, 4
    %v2049 = vpop.permute.xlu0 %2048
    %v2082 = vunpack.c.l.b16 %v1056
    %v2083 = vunpack.c.l.b16 %v1057
    %v2084 = vunpack.c.l.b16 %v1058
    %v2085 = vunpack.c.l.b16 %v1059
    %v2086 = vunpack.c.l.b16 %v1060
    %v2087 = vunpack.c.l.b16 %v1061
    %v2088 = vunpack.c.l.b16 %v1062
    %v2089 = vunpack.c.l.b16 %v1063
    %v2090 = vunpack.c.l.b16 %v1064
    %v2091 = vunpack.c.l.b16 %v1065
    %v2092 = vunpack.c.l.b16 %v1066
    %v2093 = vunpack.c.l.b16 %v1067
    %v2094 = vunpack.c.l.b16 %v1068
    %v2095 = vunpack.c.l.b16 %v1069
    %v2096 = vunpack.c.l.b16 %v1070
    %v2097 = vunpack.c.l.b16 %v1071
    %v2098 = vunpack.c.l.b16 %v1072
    %v2099 = vunpack.c.l.b16 %v1073
    %v2100 = vunpack.c.l.b16 %v1074
    %v2101 = vunpack.c.l.b16 %v1075
    %v2102 = vunpack.c.l.b16 %v1076
    %v2103 = vunpack.c.l.b16 %v1077
    %v2104 = vunpack.c.l.b16 %v1078
    %v2105 = vunpack.c.l.b16 %v1079
    %v2106 = vunpack.c.l.b16 %v1080
    %v2107 = vunpack.c.l.b16 %v1081
    %v2108 = vunpack.c.l.b16 %v1082
    %v2109 = vunpack.c.l.b16 %v1083
    %v2110 = vunpack.c.l.b16 %v1084
    %v2111 = vunpack.c.l.b16 %v1085
    %v2112 = vunpack.c.l.b16 %v1086
    %v2113 = vunpack.c.l.b16 %v1087
    %v2114 = vpack.c.b16 %v1410, %v2082
    %v2115 = vpack.c.b16 %v1412, %v2083
    %v2116 = vpack.c.b16 %v1414, %v2084
    %v2117 = vpack.c.b16 %v1416, %v2085
    %v2118 = vpack.c.b16 %v1418, %v2086
    %v2119 = vpack.c.b16 %v1420, %v2087
    %v2120 = vpack.c.b16 %v1422, %v2088
    %v2121 = vpack.c.b16 %v1424, %v2089
    %v2122 = vpack.c.b16 %v1426, %v2090
    %v2123 = vpack.c.b16 %v1428, %v2091
    %v2124 = vpack.c.b16 %v1430, %v2092
    %v2125 = vpack.c.b16 %v1432, %v2093
    %v2126 = vpack.c.b16 %v1434, %v2094
    %v2127 = vpack.c.b16 %v1436, %v2095
    %v2128 = vpack.c.b16 %v1438, %v2096
    %v2129 = vpack.c.b16 %v1440, %v2097
    %v2130 = vpack.c.b16 %v1442, %v2098
    %v2131 = vpack.c.b16 %v1444, %v2099
    %v2132 = vpack.c.b16 %v1446, %v2100
    %v2133 = vpack.c.b16 %v1448, %v2101
    %v2134 = vpack.c.b16 %v1450, %v2102
    %v2135 = vpack.c.b16 %v1452, %v2103
    %v2136 = vpack.c.b16 %v1454, %v2104
    %v2137 = vpack.c.b16 %v1456, %v2105
    %v2138 = vpack.c.b16 %v1458, %v2106
    %v2139 = vpack.c.b16 %v1460, %v2107
    %v2140 = vpack.c.b16 %v1462, %v2108
    %v2141 = vpack.c.b16 %v1464, %v2109
    %v2142 = vpack.c.b16 %v1466, %v2110
    %v2143 = vpack.c.b16 %v1468, %v2111
    %v2144 = vpack.c.b16 %v1470, %v2112
    %v2145 = vpack.c.b16 %v1472, %v2113
    %vm2146 = vcmask 1046528
    %v2147 = vrot.slane %v2114, 1
    %v2148 = vrot.slane %v1569, 1
    %v2149 = vsel %vm2146, %v2147, %v2148
    %v2150 = vrot.slane %v2115, 1
    %v2151 = vrot.slane %v1570, 1
    %v2152 = vsel %vm2146, %v2150, %v2151
    %v2153 = vrot.slane %v2116, 1
    %v2154 = vrot.slane %v1571, 1
    %v2155 = vsel %vm2146, %v2153, %v2154
    %v2156 = vrot.slane %v2117, 1
    %v2157 = vrot.slane %v1572, 1
    %v2158 = vsel %vm2146, %v2156, %v2157
    %v2159 = vrot.slane %v2118, 1
    %v2160 = vrot.slane %v1573, 1
    %v2161 = vsel %vm2146, %v2159, %v2160
    %v2162 = vrot.slane %v2119, 1
    %v2163 = vrot.slane %v1574, 1
    %v2164 = vsel %vm2146, %v2162, %v2163
    %v2165 = vrot.slane %v2120, 1
    %v2166 = vrot.slane %v1575, 1
    %v2167 = vsel %vm2146, %v2165, %v2166
    %v2168 = vrot.slane %v2121, 1
    %v2169 = vrot.slane %v1576, 1
    %v2170 = vsel %vm2146, %v2168, %v2169
    %v2171 = vrot.slane %v2122, 1
    %v2172 = vrot.slane %v1577, 1
    %v2173 = vsel %vm2146, %v2171, %v2172
    %v2174 = vrot.slane %v2123, 1
    %v2175 = vrot.slane %v1578, 1
    %v2176 = vsel %vm2146, %v2174, %v2175
    %v2177 = vrot.slane %v2124, 1
    %v2178 = vrot.slane %v1579, 1
    %v2179 = vsel %vm2146, %v2177, %v2178
    %v2180 = vrot.slane %v2125, 1
    %v2181 = vrot.slane %v1580, 1
    %v2182 = vsel %vm2146, %v2180, %v2181
    %v2183 = vrot.slane %v2126, 1
    %v2184 = vrot.slane %v1581, 1
    %v2185 = vsel %vm2146, %v2183, %v2184
    %v2186 = vrot.slane %v2127, 1
    %v2187 = vrot.slane %v1582, 1
    %v2188 = vsel %vm2146, %v2186, %v2187
    %v2189 = vrot.slane %v2128, 1
    %v2190 = vrot.slane %v1583, 1
    %v2191 = vsel %vm2146, %v2189, %v2190
    %v2192 = vrot.slane %v2129, 1
    %v2193 = vrot.slane %v1584, 1
    %v2194 = vsel %vm2146, %v2192, %v2193
    %v2195 = vrot.slane %v2130, 1
    %v2196 = vrot.slane %v1585, 1
    %v2197 = vsel %vm2146, %v2195, %v2196
    %v2198 = vrot.slane %v2131, 1
    %v2199 = vrot.slane %v1586, 1
    %v2200 = vsel %vm2146, %v2198, %v2199
    %v2201 = vrot.slane %v2132, 1
    %v2202 = vrot.slane %v1587, 1
    %v2203 = vsel %vm2146, %v2201, %v2202
    %v2204 = vrot.slane %v2133, 1
    %v2205 = vrot.slane %v1588, 1
    %v2206 = vsel %vm2146, %v2204, %v2205
    %v2207 = vrot.slane %v2134, 1
    %v2208 = vrot.slane %v1589, 1
    %v2209 = vsel %vm2146, %v2207, %v2208
    %v2210 = vrot.slane %v2135, 1
    %v2211 = vrot.slane %v1590, 1
    %v2212 = vsel %vm2146, %v2210, %v2211
    %v2213 = vrot.slane %v2136, 1
    %v2214 = vrot.slane %v1591, 1
    %v2215 = vsel %vm2146, %v2213, %v2214
    %v2216 = vrot.slane %v2137, 1
    %v2217 = vrot.slane %v1592, 1
    %v2218 = vsel %vm2146, %v2216, %v2217
    %v2219 = vrot.slane %v2138, 1
    %v2220 = vrot.slane %v1593, 1
    %v2221 = vsel %vm2146, %v2219, %v2220
    %v2222 = vrot.slane %v2139, 1
    %v2223 = vrot.slane %v1594, 1
    %v2224 = vsel %vm2146, %v2222, %v2223
    %v2225 = vrot.slane %v2140, 1
    %v2226 = vrot.slane %v1595, 1
    %v2227 = vsel %vm2146, %v2225, %v2226
    %v2228 = vrot.slane %v2141, 1
    %v2229 = vrot.slane %v1596, 1
    %v2230 = vsel %vm2146, %v2228, %v2229
    %v2231 = vrot.slane %v2142, 1
    %v2232 = vrot.slane %v1597, 1
    %v2233 = vsel %vm2146, %v2231, %v2232
    %v2234 = vrot.slane %v2143, 1
    %v2235 = vrot.slane %v1598, 1
    %v2236 = vsel %vm2146, %v2234, %v2235
    %v2237 = vrot.slane %v2144, 1
    %v2238 = vrot.slane %v1599, 1
    %v2239 = vsel %vm2146, %v2237, %v2238
    %v2240 = vrot.slane %v2145, 1
    %v2241 = vrot.slane %v1600, 1
    %v2242 = vsel %vm2146, %v2240, %v2241
    %2243 = vrot.lane.b32.xlu0 %v2149, 8
    %v2244 = vpop.permute.xlu0 %2243
    %2245 = vrot.lane.b32.xlu0 %v2152, 8
    %v2246 = vpop.permute.xlu0 %2245
    %2247 = vrot.lane.b32.xlu0 %v2155, 8
    %v2248 = vpop.permute.xlu0 %2247
    %2249 = vrot.lane.b32.xlu0 %v2158, 8
    %v2250 = vpop.permute.xlu0 %2249
    %2251 = vrot.lane.b32.xlu0 %v2161, 8
    %v2252 = vpop.permute.xlu0 %2251
    %2253 = vrot.lane.b32.xlu0 %v2164, 8
    %v2254 = vpop.permute.xlu0 %2253
    %2255 = vrot.lane.b32.xlu0 %v2167, 8
    %v2256 = vpop.permute.xlu0 %2255
    %2257 = vrot.lane.b32.xlu0 %v2170, 8
    %v2258 = vpop.permute.xlu0 %2257
    %2259 = vrot.lane.b32.xlu0 %v2173, 8
    %v2260 = vpop.permute.xlu0 %2259
    %2261 = vrot.lane.b32.xlu0 %v2176, 8
    %v2262 = vpop.permute.xlu0 %2261
    %2263 = vrot.lane.b32.xlu0 %v2179, 8
    %v2264 = vpop.permute.xlu0 %2263
    %2265 = vrot.lane.b32.xlu0 %v2182, 8
    %v2266 = vpop.permute.xlu0 %2265
    %2267 = vrot.lane.b32.xlu0 %v2185, 8
    %v2268 = vpop.permute.xlu0 %2267
    %2269 = vrot.lane.b32.xlu0 %v2188, 8
    %v2270 = vpop.permute.xlu0 %2269
    %2271 = vrot.lane.b32.xlu0 %v2191, 8
    %v2272 = vpop.permute.xlu0 %2271
    %2273 = vrot.lane.b32.xlu0 %v2194, 8
    %v2274 = vpop.permute.xlu0 %2273
    %2275 = vrot.lane.b32.xlu0 %v2197, 8
    %v2276 = vpop.permute.xlu0 %2275
    %2277 = vrot.lane.b32.xlu0 %v2200, 8
    %v2278 = vpop.permute.xlu0 %2277
    %2279 = vrot.lane.b32.xlu0 %v2203, 8
    %v2280 = vpop.permute.xlu0 %2279
    %2281 = vrot.lane.b32.xlu0 %v2206, 8
    %v2282 = vpop.permute.xlu0 %2281
    %2283 = vrot.lane.b32.xlu0 %v2209, 8
    %v2284 = vpop.permute.xlu0 %2283
    %2285 = vrot.lane.b32.xlu0 %v2212, 8
    %v2286 = vpop.permute.xlu0 %2285
    %2287 = vrot.lane.b32.xlu0 %v2215, 8
    %v2288 = vpop.permute.xlu0 %2287
    %2289 = vrot.lane.b32.xlu0 %v2218, 8
    %v2290 = vpop.permute.xlu0 %2289
    %2291 = vrot.lane.b32.xlu0 %v2221, 8
    %v2292 = vpop.permute.xlu0 %2291
    %2293 = vrot.lane.b32.xlu0 %v2224, 8
    %v2294 = vpop.permute.xlu0 %2293
    %2295 = vrot.lane.b32.xlu0 %v2227, 8
    %v2296 = vpop.permute.xlu0 %2295
    %2297 = vrot.lane.b32.xlu0 %v2230, 8
    %v2298 = vpop.permute.xlu0 %2297
    %2299 = vrot.lane.b32.xlu0 %v2233, 8
    %v2300 = vpop.permute.xlu0 %2299
    %2301 = vrot.lane.b32.xlu0 %v2236, 8
    %v2302 = vpop.permute.xlu0 %2301
    %2303 = vrot.lane.b32.xlu0 %v2239, 8
    %v2304 = vpop.permute.xlu0 %2303
    %2305 = vrot.lane.b32.xlu0 %v2242, 8
    %v2306 = vpop.permute.xlu0 %2305
    %v2371 = vunpack.c.l.b16 %v1088
    %v2372 = vunpack.c.l.b16 %v1089
    %v2373 = vunpack.c.l.b16 %v1090
    %v2374 = vunpack.c.l.b16 %v1091
    %v2375 = vunpack.c.l.b16 %v1092
    %v2376 = vunpack.c.l.b16 %v1093
    %v2377 = vunpack.c.l.b16 %v1094
    %v2378 = vunpack.c.l.b16 %v1095
    %v2379 = vunpack.c.l.b16 %v1096
    %v2380 = vunpack.c.l.b16 %v1097
    %v2381 = vunpack.c.l.b16 %v1098
    %v2382 = vunpack.c.l.b16 %v1099
    %v2383 = vunpack.c.l.b16 %v1100
    %v2384 = vunpack.c.l.b16 %v1101
    %v2385 = vunpack.c.l.b16 %v1102
    %v2386 = vunpack.c.l.b16 %v1103
    %v2387 = vunpack.c.l.b16 %v1104
    %v2388 = vunpack.c.l.b16 %v1105
    %v2389 = vunpack.c.l.b16 %v1106
    %v2390 = vunpack.c.l.b16 %v1107
    %v2391 = vunpack.c.l.b16 %v1108
    %v2392 = vunpack.c.l.b16 %v1109
    %v2393 = vunpack.c.l.b16 %v1110
    %v2394 = vunpack.c.l.b16 %v1111
    %v2395 = vunpack.c.l.b16 %v1112
    %v2396 = vunpack.c.l.b16 %v1113
    %v2397 = vunpack.c.l.b16 %v1114
    %v2398 = vunpack.c.l.b16 %v1115
    %v2399 = vunpack.c.l.b16 %v1116
    %v2400 = vunpack.c.l.b16 %v1117
    %v2401 = vunpack.c.l.b16 %v1118
    %v2402 = vunpack.c.l.b16 %v1119
    %v2403 = vunpack.c.l.b16 %v1120
    %v2404 = vunpack.c.l.b16 %v1121
    %v2405 = vunpack.c.l.b16 %v1122
    %v2406 = vunpack.c.l.b16 %v1123
    %v2407 = vunpack.c.l.b16 %v1124
    %v2408 = vunpack.c.l.b16 %v1125
    %v2409 = vunpack.c.l.b16 %v1126
    %v2410 = vunpack.c.l.b16 %v1127
    %v2411 = vunpack.c.l.b16 %v1128
    %v2412 = vunpack.c.l.b16 %v1129
    %v2413 = vunpack.c.l.b16 %v1130
    %v2414 = vunpack.c.l.b16 %v1131
    %v2415 = vunpack.c.l.b16 %v1132
    %v2416 = vunpack.c.l.b16 %v1133
    %v2417 = vunpack.c.l.b16 %v1134
    %v2418 = vunpack.c.l.b16 %v1135
    %v2419 = vunpack.c.l.b16 %v1136
    %v2420 = vunpack.c.l.b16 %v1137
    %v2421 = vunpack.c.l.b16 %v1138
    %v2422 = vunpack.c.l.b16 %v1139
    %v2423 = vunpack.c.l.b16 %v1140
    %v2424 = vunpack.c.l.b16 %v1141
    %v2425 = vunpack.c.l.b16 %v1142
    %v2426 = vunpack.c.l.b16 %v1143
    %v2427 = vunpack.c.l.b16 %v1144
    %v2428 = vunpack.c.l.b16 %v1145
    %v2429 = vunpack.c.l.b16 %v1146
    %v2430 = vunpack.c.l.b16 %v1147
    %v2431 = vunpack.c.l.b16 %v1148
    %v2432 = vunpack.c.l.b16 %v1149
    %v2433 = vunpack.c.l.b16 %v1150
    %v2434 = vunpack.c.l.b16 %v1151
    %v2435 = vpack.c.b16 %v2372, %v2371
    %v2436 = vpack.c.b16 %v2374, %v2373
    %v2437 = vpack.c.b16 %v2376, %v2375
    %v2438 = vpack.c.b16 %v2378, %v2377
    %v2439 = vpack.c.b16 %v2380, %v2379
    %v2440 = vpack.c.b16 %v2382, %v2381
    %v2441 = vpack.c.b16 %v2384, %v2383
    %v2442 = vpack.c.b16 %v2386, %v2385
    %v2443 = vpack.c.b16 %v2388, %v2387
    %v2444 = vpack.c.b16 %v2390, %v2389
    %v2445 = vpack.c.b16 %v2392, %v2391
    %v2446 = vpack.c.b16 %v2394, %v2393
    %v2447 = vpack.c.b16 %v2396, %v2395
    %v2448 = vpack.c.b16 %v2398, %v2397
    %v2449 = vpack.c.b16 %v2400, %v2399
    %v2450 = vpack.c.b16 %v2402, %v2401
    %v2451 = vpack.c.b16 %v2404, %v2403
    %v2452 = vpack.c.b16 %v2406, %v2405
    %v2453 = vpack.c.b16 %v2408, %v2407
    %v2454 = vpack.c.b16 %v2410, %v2409
    %v2455 = vpack.c.b16 %v2412, %v2411
    %v2456 = vpack.c.b16 %v2414, %v2413
    %v2457 = vpack.c.b16 %v2416, %v2415
    %v2458 = vpack.c.b16 %v2418, %v2417
    %v2459 = vpack.c.b16 %v2420, %v2419
    %v2460 = vpack.c.b16 %v2422, %v2421
    %v2461 = vpack.c.b16 %v2424, %v2423
    %v2462 = vpack.c.b16 %v2426, %v2425
    %v2463 = vpack.c.b16 %v2428, %v2427
    %v2464 = vpack.c.b16 %v2430, %v2429
    %v2465 = vpack.c.b16 %v2432, %v2431
    %v2466 = vpack.c.b16 %v2434, %v2433
    %2467 = vrot.lane.b32.xlu0 %v2435, 12
    %v2468 = vpop.permute.xlu0 %2467
    %2469 = vrot.lane.b32.xlu0 %v2436, 12
    %v2470 = vpop.permute.xlu0 %2469
    %2471 = vrot.lane.b32.xlu0 %v2437, 12
    %v2472 = vpop.permute.xlu0 %2471
    %2473 = vrot.lane.b32.xlu0 %v2438, 12
    %v2474 = vpop.permute.xlu0 %2473
    %2475 = vrot.lane.b32.xlu0 %v2439, 12
    %v2476 = vpop.permute.xlu0 %2475
    %2477 = vrot.lane.b32.xlu0 %v2440, 12
    %v2478 = vpop.permute.xlu0 %2477
    %2479 = vrot.lane.b32.xlu0 %v2441, 12
    %v2480 = vpop.permute.xlu0 %2479
    %2481 = vrot.lane.b32.xlu0 %v2442, 12
    %v2482 = vpop.permute.xlu0 %2481
    %2483 = vrot.lane.b32.xlu0 %v2443, 12
    %v2484 = vpop.permute.xlu0 %2483
    %2485 = vrot.lane.b32.xlu0 %v2444, 12
    %v2486 = vpop.permute.xlu0 %2485
    %2487 = vrot.lane.b32.xlu0 %v2445, 12
    %v2488 = vpop.permute.xlu0 %2487
    %2489 = vrot.lane.b32.xlu0 %v2446, 12
    %v2490 = vpop.permute.xlu0 %2489
    %2491 = vrot.lane.b32.xlu0 %v2447, 12
    %v2492 = vpop.permute.xlu0 %2491
    %2493 = vrot.lane.b32.xlu0 %v2448, 12
    %v2494 = vpop.permute.xlu0 %2493
    %2495 = vrot.lane.b32.xlu0 %v2449, 12
    %v2496 = vpop.permute.xlu0 %2495
    %2497 = vrot.lane.b32.xlu0 %v2450, 12
    %v2498 = vpop.permute.xlu0 %2497
    %2499 = vrot.lane.b32.xlu0 %v2451, 12
    %v2500 = vpop.permute.xlu0 %2499
    %2501 = vrot.lane.b32.xlu0 %v2452, 12
    %v2502 = vpop.permute.xlu0 %2501
    %2503 = vrot.lane.b32.xlu0 %v2453, 12
    %v2504 = vpop.permute.xlu0 %2503
    %2505 = vrot.lane.b32.xlu0 %v2454, 12
    %v2506 = vpop.permute.xlu0 %2505
    %2507 = vrot.lane.b32.xlu0 %v2455, 12
    %v2508 = vpop.permute.xlu0 %2507
    %2509 = vrot.lane.b32.xlu0 %v2456, 12
    %v2510 = vpop.permute.xlu0 %2509
    %2511 = vrot.lane.b32.xlu0 %v2457, 12
    %v2512 = vpop.permute.xlu0 %2511
    %2513 = vrot.lane.b32.xlu0 %v2458, 12
    %v2514 = vpop.permute.xlu0 %2513
    %2515 = vrot.lane.b32.xlu0 %v2459, 12
    %v2516 = vpop.permute.xlu0 %2515
    %2517 = vrot.lane.b32.xlu0 %v2460, 12
    %v2518 = vpop.permute.xlu0 %2517
    %2519 = vrot.lane.b32.xlu0 %v2461, 12
    %v2520 = vpop.permute.xlu0 %2519
    %2521 = vrot.lane.b32.xlu0 %v2462, 12
    %v2522 = vpop.permute.xlu0 %2521
    %2523 = vrot.lane.b32.xlu0 %v2463, 12
    %v2524 = vpop.permute.xlu0 %2523
    %2525 = vrot.lane.b32.xlu0 %v2464, 12
    %v2526 = vpop.permute.xlu0 %2525
    %2527 = vrot.lane.b32.xlu0 %v2465, 12
    %v2528 = vpop.permute.xlu0 %2527
    %2529 = vrot.lane.b32.xlu0 %v2466, 12
    %v2530 = vpop.permute.xlu0 %2529
    %v2563 = vunpack.c.l.b16 %v1152
    %v2564 = vunpack.c.l.b16 %v1153
    %v2565 = vunpack.c.l.b16 %v1154
    %v2566 = vunpack.c.l.b16 %v1155
    %v2567 = vunpack.c.l.b16 %v1156
    %v2568 = vunpack.c.l.b16 %v1157
    %v2569 = vunpack.c.l.b16 %v1158
    %v2570 = vunpack.c.l.b16 %v1159
    %v2571 = vunpack.c.l.b16 %v1160
    %v2572 = vunpack.c.l.b16 %v1161
    %v2573 = vunpack.c.l.b16 %v1162
    %v2574 = vunpack.c.l.b16 %v1163
    %v2575 = vunpack.c.l.b16 %v1164
    %v2576 = vunpack.c.l.b16 %v1165
    %v2577 = vunpack.c.l.b16 %v1166
    %v2578 = vunpack.c.l.b16 %v1167
    %v2579 = vunpack.c.l.b16 %v1168
    %v2580 = vunpack.c.l.b16 %v1169
    %v2581 = vunpack.c.l.b16 %v1170
    %v2582 = vunpack.c.l.b16 %v1171
    %v2583 = vunpack.c.l.b16 %v1172
    %v2584 = vunpack.c.l.b16 %v1173
    %v2585 = vunpack.c.l.b16 %v1174
    %v2586 = vunpack.c.l.b16 %v1175
    %v2587 = vunpack.c.l.b16 %v1176
    %v2588 = vunpack.c.l.b16 %v1177
    %v2589 = vunpack.c.l.b16 %v1178
    %v2590 = vunpack.c.l.b16 %v1179
    %v2591 = vunpack.c.l.b16 %v1180
    %v2592 = vunpack.c.l.b16 %v1181
    %v2593 = vunpack.c.l.b16 %v1182
    %v2594 = vunpack.c.l.b16 %v1183
    %v2595 = vpack.c.b16 %v2563, %v2563
    %v2596 = vpack.c.b16 %v2564, %v2564
    %v2597 = vpack.c.b16 %v2565, %v2565
    %v2598 = vpack.c.b16 %v2566, %v2566
    %v2599 = vpack.c.b16 %v2567, %v2567
    %v2600 = vpack.c.b16 %v2568, %v2568
    %v2601 = vpack.c.b16 %v2569, %v2569
    %v2602 = vpack.c.b16 %v2570, %v2570
    %v2603 = vpack.c.b16 %v2571, %v2571
    %v2604 = vpack.c.b16 %v2572, %v2572
    %v2605 = vpack.c.b16 %v2573, %v2573
    %v2606 = vpack.c.b16 %v2574, %v2574
    %v2607 = vpack.c.b16 %v2575, %v2575
    %v2608 = vpack.c.b16 %v2576, %v2576
    %v2609 = vpack.c.b16 %v2577, %v2577
    %v2610 = vpack.c.b16 %v2578, %v2578
    %v2611 = vpack.c.b16 %v2579, %v2579
    %v2612 = vpack.c.b16 %v2580, %v2580
    %v2613 = vpack.c.b16 %v2581, %v2581
    %v2614 = vpack.c.b16 %v2582, %v2582
    %v2615 = vpack.c.b16 %v2583, %v2583
    %v2616 = vpack.c.b16 %v2584, %v2584
    %v2617 = vpack.c.b16 %v2585, %v2585
    %v2618 = vpack.c.b16 %v2586, %v2586
    %v2619 = vpack.c.b16 %v2587, %v2587
    %v2620 = vpack.c.b16 %v2588, %v2588
    %v2621 = vpack.c.b16 %v2589, %v2589
    %v2622 = vpack.c.b16 %v2590, %v2590
    %v2623 = vpack.c.b16 %v2591, %v2591
    %v2624 = vpack.c.b16 %v2592, %v2592
    %v2625 = vpack.c.b16 %v2593, %v2593
    %v2626 = vpack.c.b16 %v2594, %v2594
    %v2628 = vshrl.u32 %v2435, 16
    %v2630 = vshll.u32 %v2435, 16
    %v2632 = vrot.slane %v2630, 1
    %v2633 = vor.u32 %v2628, %v2632
    %v2635 = vshll.u32 %v2595, 16
    %v2637 = vrot.slane %v2635, 1
    %v2638 = vsel %vm1601, %v2633, %v2637
    %v2640 = vshrl.u32 %v2436, 16
    %v2642 = vshll.u32 %v2436, 16
    %v2644 = vrot.slane %v2642, 1
    %v2645 = vor.u32 %v2640, %v2644
    %v2647 = vshll.u32 %v2596, 16
    %v2649 = vrot.slane %v2647, 1
    %v2650 = vsel %vm1601, %v2645, %v2649
    %v2652 = vshrl.u32 %v2437, 16
    %v2654 = vshll.u32 %v2437, 16
    %v2656 = vrot.slane %v2654, 1
    %v2657 = vor.u32 %v2652, %v2656
    %v2659 = vshll.u32 %v2597, 16
    %v2661 = vrot.slane %v2659, 1
    %v2662 = vsel %vm1601, %v2657, %v2661
    %v2664 = vshrl.u32 %v2438, 16
    %v2666 = vshll.u32 %v2438, 16
    %v2668 = vrot.slane %v2666, 1
    %v2669 = vor.u32 %v2664, %v2668
    %v2671 = vshll.u32 %v2598, 16
    %v2673 = vrot.slane %v2671, 1
    %v2674 = vsel %vm1601, %v2669, %v2673
    %v2676 = vshrl.u32 %v2439, 16
    %v2678 = vshll.u32 %v2439, 16
    %v2680 = vrot.slane %v2678, 1
    %v2681 = vor.u32 %v2676, %v2680
    %v2683 = vshll.u32 %v2599, 16
    %v2685 = vrot.slane %v2683, 1
    %v2686 = vsel %vm1601, %v2681, %v2685
    %v2688 = vshrl.u32 %v2440, 16
    %v2690 = vshll.u32 %v2440, 16
    %v2692 = vrot.slane %v2690, 1
    %v2693 = vor.u32 %v2688, %v2692
    %v2695 = vshll.u32 %v2600, 16
    %v2697 = vrot.slane %v2695, 1
    %v2698 = vsel %vm1601, %v2693, %v2697
    %v2700 = vshrl.u32 %v2441, 16
    %v2702 = vshll.u32 %v2441, 16
    %v2704 = vrot.slane %v2702, 1
    %v2705 = vor.u32 %v2700, %v2704
    %v2707 = vshll.u32 %v2601, 16
    %v2709 = vrot.slane %v2707, 1
    %v2710 = vsel %vm1601, %v2705, %v2709
    %v2712 = vshrl.u32 %v2442, 16
    %v2714 = vshll.u32 %v2442, 16
    %v2716 = vrot.slane %v2714, 1
    %v2717 = vor.u32 %v2712, %v2716
    %v2719 = vshll.u32 %v2602, 16
    %v2721 = vrot.slane %v2719, 1
    %v2722 = vsel %vm1601, %v2717, %v2721
    %v2724 = vshrl.u32 %v2443, 16
    %v2726 = vshll.u32 %v2443, 16
    %v2728 = vrot.slane %v2726, 1
    %v2729 = vor.u32 %v2724, %v2728
    %v2731 = vshll.u32 %v2603, 16
    %v2733 = vrot.slane %v2731, 1
    %v2734 = vsel %vm1601, %v2729, %v2733
    %v2736 = vshrl.u32 %v2444, 16
    %v2738 = vshll.u32 %v2444, 16
    %v2740 = vrot.slane %v2738, 1
    %v2741 = vor.u32 %v2736, %v2740
    %v2743 = vshll.u32 %v2604, 16
    %v2745 = vrot.slane %v2743, 1
    %v2746 = vsel %vm1601, %v2741, %v2745
    %v2748 = vshrl.u32 %v2445, 16
    %v2750 = vshll.u32 %v2445, 16
    %v2752 = vrot.slane %v2750, 1
    %v2753 = vor.u32 %v2748, %v2752
    %v2755 = vshll.u32 %v2605, 16
    %v2757 = vrot.slane %v2755, 1
    %v2758 = vsel %vm1601, %v2753, %v2757
    %v2760 = vshrl.u32 %v2446, 16
    %v2762 = vshll.u32 %v2446, 16
    %v2764 = vrot.slane %v2762, 1
    %v2765 = vor.u32 %v2760, %v2764
    %v2767 = vshll.u32 %v2606, 16
    %v2769 = vrot.slane %v2767, 1
    %v2770 = vsel %vm1601, %v2765, %v2769
    %v2772 = vshrl.u32 %v2447, 16
    %v2774 = vshll.u32 %v2447, 16
    %v2776 = vrot.slane %v2774, 1
    %v2777 = vor.u32 %v2772, %v2776
    %v2779 = vshll.u32 %v2607, 16
    %v2781 = vrot.slane %v2779, 1
    %v2782 = vsel %vm1601, %v2777, %v2781
    %v2784 = vshrl.u32 %v2448, 16
    %v2786 = vshll.u32 %v2448, 16
    %v2788 = vrot.slane %v2786, 1
    %v2789 = vor.u32 %v2784, %v2788
    %v2791 = vshll.u32 %v2608, 16
    %v2793 = vrot.slane %v2791, 1
    %v2794 = vsel %vm1601, %v2789, %v2793
    %v2796 = vshrl.u32 %v2449, 16
    %v2798 = vshll.u32 %v2449, 16
    %v2800 = vrot.slane %v2798, 1
    %v2801 = vor.u32 %v2796, %v2800
    %v2803 = vshll.u32 %v2609, 16
    %v2805 = vrot.slane %v2803, 1
    %v2806 = vsel %vm1601, %v2801, %v2805
    %v2808 = vshrl.u32 %v2450, 16
    %v2810 = vshll.u32 %v2450, 16
    %v2812 = vrot.slane %v2810, 1
    %v2813 = vor.u32 %v2808, %v2812
    %v2815 = vshll.u32 %v2610, 16
    %v2817 = vrot.slane %v2815, 1
    %v2818 = vsel %vm1601, %v2813, %v2817
    %v2820 = vshrl.u32 %v2451, 16
    %v2822 = vshll.u32 %v2451, 16
    %v2824 = vrot.slane %v2822, 1
    %v2825 = vor.u32 %v2820, %v2824
    %v2827 = vshll.u32 %v2611, 16
    %v2829 = vrot.slane %v2827, 1
    %v2830 = vsel %vm1601, %v2825, %v2829
    %v2832 = vshrl.u32 %v2452, 16
    %v2834 = vshll.u32 %v2452, 16
    %v2836 = vrot.slane %v2834, 1
    %v2837 = vor.u32 %v2832, %v2836
    %v2839 = vshll.u32 %v2612, 16
    %v2841 = vrot.slane %v2839, 1
    %v2842 = vsel %vm1601, %v2837, %v2841
    %v2844 = vshrl.u32 %v2453, 16
    %v2846 = vshll.u32 %v2453, 16
    %v2848 = vrot.slane %v2846, 1
    %v2849 = vor.u32 %v2844, %v2848
    %v2851 = vshll.u32 %v2613, 16
    %v2853 = vrot.slane %v2851, 1
    %v2854 = vsel %vm1601, %v2849, %v2853
    %v2856 = vshrl.u32 %v2454, 16
    %v2858 = vshll.u32 %v2454, 16
    %v2860 = vrot.slane %v2858, 1
    %v2861 = vor.u32 %v2856, %v2860
    %v2863 = vshll.u32 %v2614, 16
    %v2865 = vrot.slane %v2863, 1
    %v2866 = vsel %vm1601, %v2861, %v2865
    %v2868 = vshrl.u32 %v2455, 16
    %v2870 = vshll.u32 %v2455, 16
    %v2872 = vrot.slane %v2870, 1
    %v2873 = vor.u32 %v2868, %v2872
    %v2875 = vshll.u32 %v2615, 16
    %v2877 = vrot.slane %v2875, 1
    %v2878 = vsel %vm1601, %v2873, %v2877
    %v2880 = vshrl.u32 %v2456, 16
    %v2882 = vshll.u32 %v2456, 16
    %v2884 = vrot.slane %v2882, 1
    %v2885 = vor.u32 %v2880, %v2884
    %v2887 = vshll.u32 %v2616, 16
    %v2889 = vrot.slane %v2887, 1
    %v2890 = vsel %vm1601, %v2885, %v2889
    %v2892 = vshrl.u32 %v2457, 16
    %v2894 = vshll.u32 %v2457, 16
    %v2896 = vrot.slane %v2894, 1
    %v2897 = vor.u32 %v2892, %v2896
    %v2899 = vshll.u32 %v2617, 16
    %v2901 = vrot.slane %v2899, 1
    %v2902 = vsel %vm1601, %v2897, %v2901
    %v2904 = vshrl.u32 %v2458, 16
    %v2906 = vshll.u32 %v2458, 16
    %v2908 = vrot.slane %v2906, 1
    %v2909 = vor.u32 %v2904, %v2908
    %v2911 = vshll.u32 %v2618, 16
    %v2913 = vrot.slane %v2911, 1
    %v2914 = vsel %vm1601, %v2909, %v2913
    %v2916 = vshrl.u32 %v2459, 16
    %v2918 = vshll.u32 %v2459, 16
    %v2920 = vrot.slane %v2918, 1
    %v2921 = vor.u32 %v2916, %v2920
    %v2923 = vshll.u32 %v2619, 16
    %v2925 = vrot.slane %v2923, 1
    %v2926 = vsel %vm1601, %v2921, %v2925
    %v2928 = vshrl.u32 %v2460, 16
    %v2930 = vshll.u32 %v2460, 16
    %v2932 = vrot.slane %v2930, 1
    %v2933 = vor.u32 %v2928, %v2932
    %v2935 = vshll.u32 %v2620, 16
    %v2937 = vrot.slane %v2935, 1
    %v2938 = vsel %vm1601, %v2933, %v2937
    %v2940 = vshrl.u32 %v2461, 16
    %v2942 = vshll.u32 %v2461, 16
    %v2944 = vrot.slane %v2942, 1
    %v2945 = vor.u32 %v2940, %v2944
    %v2947 = vshll.u32 %v2621, 16
    %v2949 = vrot.slane %v2947, 1
    %v2950 = vsel %vm1601, %v2945, %v2949
    %v2952 = vshrl.u32 %v2462, 16
    %v2954 = vshll.u32 %v2462, 16
    %v2956 = vrot.slane %v2954, 1
    %v2957 = vor.u32 %v2952, %v2956
    %v2959 = vshll.u32 %v2622, 16
    %v2961 = vrot.slane %v2959, 1
    %v2962 = vsel %vm1601, %v2957, %v2961
    %v2964 = vshrl.u32 %v2463, 16
    %v2966 = vshll.u32 %v2463, 16
    %v2968 = vrot.slane %v2966, 1
    %v2969 = vor.u32 %v2964, %v2968
    %v2971 = vshll.u32 %v2623, 16
    %v2973 = vrot.slane %v2971, 1
    %v2974 = vsel %vm1601, %v2969, %v2973
    %v2976 = vshrl.u32 %v2464, 16
    %v2978 = vshll.u32 %v2464, 16
    %v2980 = vrot.slane %v2978, 1
    %v2981 = vor.u32 %v2976, %v2980
    %v2983 = vshll.u32 %v2624, 16
    %v2985 = vrot.slane %v2983, 1
    %v2986 = vsel %vm1601, %v2981, %v2985
    %v2988 = vshrl.u32 %v2465, 16
    %v2990 = vshll.u32 %v2465, 16
    %v2992 = vrot.slane %v2990, 1
    %v2993 = vor.u32 %v2988, %v2992
    %v2995 = vshll.u32 %v2625, 16
    %v2997 = vrot.slane %v2995, 1
    %v2998 = vsel %vm1601, %v2993, %v2997
    %v3000 = vshrl.u32 %v2466, 16
    %v3002 = vshll.u32 %v2466, 16
    %v3004 = vrot.slane %v3002, 1
    %v3005 = vor.u32 %v3000, %v3004
    %v3007 = vshll.u32 %v2626, 16
    %v3009 = vrot.slane %v3007, 1
    %v3010 = vsel %vm1601, %v3005, %v3009
    %3011 = vrot.lane.b32.xlu0 %v2638, 16
    %v3012 = vpop.permute.xlu0 %3011
    %3013 = vrot.lane.b32.xlu0 %v2650, 16
    %v3014 = vpop.permute.xlu0 %3013
    %3015 = vrot.lane.b32.xlu0 %v2662, 16
    %v3016 = vpop.permute.xlu0 %3015
    %3017 = vrot.lane.b32.xlu0 %v2674, 16
    %v3018 = vpop.permute.xlu0 %3017
    %3019 = vrot.lane.b32.xlu0 %v2686, 16
    %v3020 = vpop.permute.xlu0 %3019
    %3021 = vrot.lane.b32.xlu0 %v2698, 16
    %v3022 = vpop.permute.xlu0 %3021
    %3023 = vrot.lane.b32.xlu0 %v2710, 16
    %v3024 = vpop.permute.xlu0 %3023
    %3025 = vrot.lane.b32.xlu0 %v2722, 16
    %v3026 = vpop.permute.xlu0 %3025
    %3027 = vrot.lane.b32.xlu0 %v2734, 16
    %v3028 = vpop.permute.xlu0 %3027
    %3029 = vrot.lane.b32.xlu0 %v2746, 16
    %v3030 = vpop.permute.xlu0 %3029
    %3031 = vrot.lane.b32.xlu0 %v2758, 16
    %v3032 = vpop.permute.xlu0 %3031
    %3033 = vrot.lane.b32.xlu0 %v2770, 16
    %v3034 = vpop.permute.xlu0 %3033
    %3035 = vrot.lane.b32.xlu0 %v2782, 16
    %v3036 = vpop.permute.xlu0 %3035
    %3037 = vrot.lane.b32.xlu0 %v2794, 16
    %v3038 = vpop.permute.xlu0 %3037
    %3039 = vrot.lane.b32.xlu0 %v2806, 16
    %v3040 = vpop.permute.xlu0 %3039
    %3041 = vrot.lane.b32.xlu0 %v2818, 16
    %v3042 = vpop.permute.xlu0 %3041
    %3043 = vrot.lane.b32.xlu0 %v2830, 16
    %v3044 = vpop.permute.xlu0 %3043
    %3045 = vrot.lane.b32.xlu0 %v2842, 16
    %v3046 = vpop.permute.xlu0 %3045
    %3047 = vrot.lane.b32.xlu0 %v2854, 16
    %v3048 = vpop.permute.xlu0 %3047
    %3049 = vrot.lane.b32.xlu0 %v2866, 16
    %v3050 = vpop.permute.xlu0 %3049
    %3051 = vrot.lane.b32.xlu0 %v2878, 16
    %v3052 = vpop.permute.xlu0 %3051
    %3053 = vrot.lane.b32.xlu0 %v2890, 16
    %v3054 = vpop.permute.xlu0 %3053
    %3055 = vrot.lane.b32.xlu0 %v2902, 16
    %v3056 = vpop.permute.xlu0 %3055
    %3057 = vrot.lane.b32.xlu0 %v2914, 16
    %v3058 = vpop.permute.xlu0 %3057
    %3059 = vrot.lane.b32.xlu0 %v2926, 16
    %v3060 = vpop.permute.xlu0 %3059
    %3061 = vrot.lane.b32.xlu0 %v2938, 16
    %v3062 = vpop.permute.xlu0 %3061
    %3063 = vrot.lane.b32.xlu0 %v2950, 16
    %v3064 = vpop.permute.xlu0 %3063
    %3065 = vrot.lane.b32.xlu0 %v2962, 16
    %v3066 = vpop.permute.xlu0 %3065
    %3067 = vrot.lane.b32.xlu0 %v2974, 16
    %v3068 = vpop.permute.xlu0 %3067
    %3069 = vrot.lane.b32.xlu0 %v2986, 16
    %v3070 = vpop.permute.xlu0 %3069
    %3071 = vrot.lane.b32.xlu0 %v2998, 16
    %v3072 = vpop.permute.xlu0 %3071
    %3073 = vrot.lane.b32.xlu0 %v3010, 16
    %v3074 = vpop.permute.xlu0 %3073
    %v3107 = vunpack.c.l.b16 %v1184
    %v3108 = vunpack.c.l.b16 %v1185
    %v3109 = vunpack.c.l.b16 %v1186
    %v3110 = vunpack.c.l.b16 %v1187
    %v3111 = vunpack.c.l.b16 %v1188
    %v3112 = vunpack.c.l.b16 %v1189
    %v3113 = vunpack.c.l.b16 %v1190
    %v3114 = vunpack.c.l.b16 %v1191
    %v3115 = vunpack.c.l.b16 %v1192
    %v3116 = vunpack.c.l.b16 %v1193
    %v3117 = vunpack.c.l.b16 %v1194
    %v3118 = vunpack.c.l.b16 %v1195
    %v3119 = vunpack.c.l.b16 %v1196
    %v3120 = vunpack.c.l.b16 %v1197
    %v3121 = vunpack.c.l.b16 %v1198
    %v3122 = vunpack.c.l.b16 %v1199
    %v3123 = vunpack.c.l.b16 %v1200
    %v3124 = vunpack.c.l.b16 %v1201
    %v3125 = vunpack.c.l.b16 %v1202
    %v3126 = vunpack.c.l.b16 %v1203
    %v3127 = vunpack.c.l.b16 %v1204
    %v3128 = vunpack.c.l.b16 %v1205
    %v3129 = vunpack.c.l.b16 %v1206
    %v3130 = vunpack.c.l.b16 %v1207
    %v3131 = vunpack.c.l.b16 %v1208
    %v3132 = vunpack.c.l.b16 %v1209
    %v3133 = vunpack.c.l.b16 %v1210
    %v3134 = vunpack.c.l.b16 %v1211
    %v3135 = vunpack.c.l.b16 %v1212
    %v3136 = vunpack.c.l.b16 %v1213
    %v3137 = vunpack.c.l.b16 %v1214
    %v3138 = vunpack.c.l.b16 %v1215
    %v3139 = vpack.c.b16 %v2372, %v3107
    %v3140 = vpack.c.b16 %v2374, %v3108
    %v3141 = vpack.c.b16 %v2376, %v3109
    %v3142 = vpack.c.b16 %v2378, %v3110
    %v3143 = vpack.c.b16 %v2380, %v3111
    %v3144 = vpack.c.b16 %v2382, %v3112
    %v3145 = vpack.c.b16 %v2384, %v3113
    %v3146 = vpack.c.b16 %v2386, %v3114
    %v3147 = vpack.c.b16 %v2388, %v3115
    %v3148 = vpack.c.b16 %v2390, %v3116
    %v3149 = vpack.c.b16 %v2392, %v3117
    %v3150 = vpack.c.b16 %v2394, %v3118
    %v3151 = vpack.c.b16 %v2396, %v3119
    %v3152 = vpack.c.b16 %v2398, %v3120
    %v3153 = vpack.c.b16 %v2400, %v3121
    %v3154 = vpack.c.b16 %v2402, %v3122
    %v3155 = vpack.c.b16 %v2404, %v3123
    %v3156 = vpack.c.b16 %v2406, %v3124
    %v3157 = vpack.c.b16 %v2408, %v3125
    %v3158 = vpack.c.b16 %v2410, %v3126
    %v3159 = vpack.c.b16 %v2412, %v3127
    %v3160 = vpack.c.b16 %v2414, %v3128
    %v3161 = vpack.c.b16 %v2416, %v3129
    %v3162 = vpack.c.b16 %v2418, %v3130
    %v3163 = vpack.c.b16 %v2420, %v3131
    %v3164 = vpack.c.b16 %v2422, %v3132
    %v3165 = vpack.c.b16 %v2424, %v3133
    %v3166 = vpack.c.b16 %v2426, %v3134
    %v3167 = vpack.c.b16 %v2428, %v3135
    %v3168 = vpack.c.b16 %v2430, %v3136
    %v3169 = vpack.c.b16 %v2432, %v3137
    %v3170 = vpack.c.b16 %v2434, %v3138
    %v3171 = vrot.slane %v3139, 1
    %v3172 = vrot.slane %v2595, 1
    %v3173 = vsel %vm2146, %v3171, %v3172
    %v3174 = vrot.slane %v3140, 1
    %v3175 = vrot.slane %v2596, 1
    %v3176 = vsel %vm2146, %v3174, %v3175
    %v3177 = vrot.slane %v3141, 1
    %v3178 = vrot.slane %v2597, 1
    %v3179 = vsel %vm2146, %v3177, %v3178
    %v3180 = vrot.slane %v3142, 1
    %v3181 = vrot.slane %v2598, 1
    %v3182 = vsel %vm2146, %v3180, %v3181
    %v3183 = vrot.slane %v3143, 1
    %v3184 = vrot.slane %v2599, 1
    %v3185 = vsel %vm2146, %v3183, %v3184
    %v3186 = vrot.slane %v3144, 1
    %v3187 = vrot.slane %v2600, 1
    %v3188 = vsel %vm2146, %v3186, %v3187
    %v3189 = vrot.slane %v3145, 1
    %v3190 = vrot.slane %v2601, 1
    %v3191 = vsel %vm2146, %v3189, %v3190
    %v3192 = vrot.slane %v3146, 1
    %v3193 = vrot.slane %v2602, 1
    %v3194 = vsel %vm2146, %v3192, %v3193
    %v3195 = vrot.slane %v3147, 1
    %v3196 = vrot.slane %v2603, 1
    %v3197 = vsel %vm2146, %v3195, %v3196
    %v3198 = vrot.slane %v3148, 1
    %v3199 = vrot.slane %v2604, 1
    %v3200 = vsel %vm2146, %v3198, %v3199
    %v3201 = vrot.slane %v3149, 1
    %v3202 = vrot.slane %v2605, 1
    %v3203 = vsel %vm2146, %v3201, %v3202
    %v3204 = vrot.slane %v3150, 1
    %v3205 = vrot.slane %v2606, 1
    %v3206 = vsel %vm2146, %v3204, %v3205
    %v3207 = vrot.slane %v3151, 1
    %v3208 = vrot.slane %v2607, 1
    %v3209 = vsel %vm2146, %v3207, %v3208
    %v3210 = vrot.slane %v3152, 1
    %v3211 = vrot.slane %v2608, 1
    %v3212 = vsel %vm2146, %v3210, %v3211
    %v3213 = vrot.slane %v3153, 1
    %v3214 = vrot.slane %v2609, 1
    %v3215 = vsel %vm2146, %v3213, %v3214
    %v3216 = vrot.slane %v3154, 1
    %v3217 = vrot.slane %v2610, 1
    %v3218 = vsel %vm2146, %v3216, %v3217
    %v3219 = vrot.slane %v3155, 1
    %v3220 = vrot.slane %v2611, 1
    %v3221 = vsel %vm2146, %v3219, %v3220
    %v3222 = vrot.slane %v3156, 1
    %v3223 = vrot.slane %v2612, 1
    %v3224 = vsel %vm2146, %v3222, %v3223
    %v3225 = vrot.slane %v3157, 1
    %v3226 = vrot.slane %v2613, 1
    %v3227 = vsel %vm2146, %v3225, %v3226
    %v3228 = vrot.slane %v3158, 1
    %v3229 = vrot.slane %v2614, 1
    %v3230 = vsel %vm2146, %v3228, %v3229
    %v3231 = vrot.slane %v3159, 1
    %v3232 = vrot.slane %v2615, 1
    %v3233 = vsel %vm2146, %v3231, %v3232
    %v3234 = vrot.slane %v3160, 1
    %v3235 = vrot.slane %v2616, 1
    %v3236 = vsel %vm2146, %v3234, %v3235
    %v3237 = vrot.slane %v3161, 1
    %v3238 = vrot.slane %v2617, 1
    %v3239 = vsel %vm2146, %v3237, %v3238
    %v3240 = vrot.slane %v3162, 1
    %v3241 = vrot.slane %v2618, 1
    %v3242 = vsel %vm2146, %v3240, %v3241
    %v3243 = vrot.slane %v3163, 1
    %v3244 = vrot.slane %v2619, 1
    %v3245 = vsel %vm2146, %v3243, %v3244
    %v3246 = vrot.slane %v3164, 1
    %v3247 = vrot.slane %v2620, 1
    %v3248 = vsel %vm2146, %v3246, %v3247
    %v3249 = vrot.slane %v3165, 1
    %v3250 = vrot.slane %v2621, 1
    %v3251 = vsel %vm2146, %v3249, %v3250
    %v3252 = vrot.slane %v3166, 1
    %v3253 = vrot.slane %v2622, 1
    %v3254 = vsel %vm2146, %v3252, %v3253
    %v3255 = vrot.slane %v3167, 1
    %v3256 = vrot.slane %v2623, 1
    %v3257 = vsel %vm2146, %v3255, %v3256
    %v3258 = vrot.slane %v3168, 1
    %v3259 = vrot.slane %v2624, 1
    %v3260 = vsel %vm2146, %v3258, %v3259
    %v3261 = vrot.slane %v3169, 1
    %v3262 = vrot.slane %v2625, 1
    %v3263 = vsel %vm2146, %v3261, %v3262
    %v3264 = vrot.slane %v3170, 1
    %v3265 = vrot.slane %v2626, 1
    %v3266 = vsel %vm2146, %v3264, %v3265
    %3267 = vrot.lane.b32.xlu0 %v3173, 20
    %v3268 = vpop.permute.xlu0 %3267
    %3269 = vrot.lane.b32.xlu0 %v3176, 20
    %v3270 = vpop.permute.xlu0 %3269
    %3271 = vrot.lane.b32.xlu0 %v3179, 20
    %v3272 = vpop.permute.xlu0 %3271
    %3273 = vrot.lane.b32.xlu0 %v3182, 20
    %v3274 = vpop.permute.xlu0 %3273
    %3275 = vrot.lane.b32.xlu0 %v3185, 20
    %v3276 = vpop.permute.xlu0 %3275
    %3277 = vrot.lane.b32.xlu0 %v3188, 20
    %v3278 = vpop.permute.xlu0 %3277
    %3279 = vrot.lane.b32.xlu0 %v3191, 20
    %v3280 = vpop.permute.xlu0 %3279
    %3281 = vrot.lane.b32.xlu0 %v3194, 20
    %v3282 = vpop.permute.xlu0 %3281
    %3283 = vrot.lane.b32.xlu0 %v3197, 20
    %v3284 = vpop.permute.xlu0 %3283
    %3285 = vrot.lane.b32.xlu0 %v3200, 20
    %v3286 = vpop.permute.xlu0 %3285
    %3287 = vrot.lane.b32.xlu0 %v3203, 20
    %v3288 = vpop.permute.xlu0 %3287
    %3289 = vrot.lane.b32.xlu0 %v3206, 20
    %v3290 = vpop.permute.xlu0 %3289
    %3291 = vrot.lane.b32.xlu0 %v3209, 20
    %v3292 = vpop.permute.xlu0 %3291
    %3293 = vrot.lane.b32.xlu0 %v3212, 20
    %v3294 = vpop.permute.xlu0 %3293
    %3295 = vrot.lane.b32.xlu0 %v3215, 20
    %v3296 = vpop.permute.xlu0 %3295
    %3297 = vrot.lane.b32.xlu0 %v3218, 20
    %v3298 = vpop.permute.xlu0 %3297
    %3299 = vrot.lane.b32.xlu0 %v3221, 20
    %v3300 = vpop.permute.xlu0 %3299
    %3301 = vrot.lane.b32.xlu0 %v3224, 20
    %v3302 = vpop.permute.xlu0 %3301
    %3303 = vrot.lane.b32.xlu0 %v3227, 20
    %v3304 = vpop.permute.xlu0 %3303
    %3305 = vrot.lane.b32.xlu0 %v3230, 20
    %v3306 = vpop.permute.xlu0 %3305
    %3307 = vrot.lane.b32.xlu0 %v3233, 20
    %v3308 = vpop.permute.xlu0 %3307
    %3309 = vrot.lane.b32.xlu0 %v3236, 20
    %v3310 = vpop.permute.xlu0 %3309
    %3311 = vrot.lane.b32.xlu0 %v3239, 20
    %v3312 = vpop.permute.xlu0 %3311
    %3313 = vrot.lane.b32.xlu0 %v3242, 20
    %v3314 = vpop.permute.xlu0 %3313
    %3315 = vrot.lane.b32.xlu0 %v3245, 20
    %v3316 = vpop.permute.xlu0 %3315
    %3317 = vrot.lane.b32.xlu0 %v3248, 20
    %v3318 = vpop.permute.xlu0 %3317
    %3319 = vrot.lane.b32.xlu0 %v3251, 20
    %v3320 = vpop.permute.xlu0 %3319
    %3321 = vrot.lane.b32.xlu0 %v3254, 20
    %v3322 = vpop.permute.xlu0 %3321
    %3323 = vrot.lane.b32.xlu0 %v3257, 20
    %v3324 = vpop.permute.xlu0 %3323
    %3325 = vrot.lane.b32.xlu0 %v3260, 20
    %v3326 = vpop.permute.xlu0 %3325
    %3327 = vrot.lane.b32.xlu0 %v3263, 20
    %v3328 = vpop.permute.xlu0 %3327
    %3329 = vrot.lane.b32.xlu0 %v3266, 20
    %v3330 = vpop.permute.xlu0 %3329
    %v3395 = vunpack.c.l.b16 %v1217
    %v3396 = vunpack.c.l.b16 %v1218
    %v3397 = vunpack.c.l.b16 %v1219
    %v3398 = vunpack.c.l.b16 %v1220
    %v3399 = vunpack.c.l.b16 %v1221
    %v3400 = vunpack.c.l.b16 %v1222
    %v3401 = vunpack.c.l.b16 %v1223
    %v3402 = vunpack.c.l.b16 %v1224
    %v3403 = vunpack.c.l.b16 %v1225
    %v3404 = vunpack.c.l.b16 %v1226
    %v3405 = vunpack.c.l.b16 %v1227
    %v3406 = vunpack.c.l.b16 %v1228
    %v3407 = vunpack.c.l.b16 %v1229
    %v3408 = vunpack.c.l.b16 %v1230
    %v3409 = vunpack.c.l.b16 %v1231
    %v3410 = vunpack.c.l.b16 %v1232
    %v3411 = vunpack.c.l.b16 %v1233
    %v3412 = vunpack.c.l.b16 %v1234
    %v3413 = vunpack.c.l.b16 %v1235
    %v3414 = vunpack.c.l.b16 %v1236
    %v3415 = vunpack.c.l.b16 %v1237
    %v3416 = vunpack.c.l.b16 %v1238
    %v3417 = vunpack.c.l.b16 %v1239
    %v3418 = vunpack.c.l.b16 %v1240
    %v3419 = vunpack.c.l.b16 %v1241
    %v3420 = vunpack.c.l.b16 %v1242
    %v3421 = vunpack.c.l.b16 %v1243
    %v3422 = vunpack.c.l.b16 %v1244
    %v3423 = vunpack.c.l.b16 %v1245
    %v3424 = vunpack.c.l.b16 %v1246
    %v3425 = vunpack.c.l.b16 %v1247
    %v3426 = vunpack.c.l.b16 %v1248
    %v3427 = vunpack.c.l.b16 %v1249
    %v3428 = vunpack.c.l.b16 %v1250
    %v3429 = vunpack.c.l.b16 %v1251
    %v3430 = vunpack.c.l.b16 %v1252
    %v3431 = vunpack.c.l.b16 %v1253
    %v3432 = vunpack.c.l.b16 %v1254
    %v3433 = vunpack.c.l.b16 %v1255
    %v3434 = vunpack.c.l.b16 %v1256
    %v3435 = vunpack.c.l.b16 %v1257
    %v3436 = vunpack.c.l.b16 %v1258
    %v3437 = vunpack.c.l.b16 %v1259
    %v3438 = vunpack.c.l.b16 %v1260
    %v3439 = vunpack.c.l.b16 %v1261
    %v3440 = vunpack.c.l.b16 %v1262
    %v3441 = vunpack.c.l.b16 %v1263
    %v3442 = vunpack.c.l.b16 %v1264
    %v3443 = vunpack.c.l.b16 %v1265
    %v3444 = vunpack.c.l.b16 %v1266
    %v3445 = vunpack.c.l.b16 %v1267
    %v3446 = vunpack.c.l.b16 %v1268
    %v3447 = vunpack.c.l.b16 %v1269
    %v3448 = vunpack.c.l.b16 %v1270
    %v3449 = vunpack.c.l.b16 %v1271
    %v3450 = vunpack.c.l.b16 %v1272
    %v3451 = vunpack.c.l.b16 %v1273
    %v3452 = vunpack.c.l.b16 %v1274
    %v3453 = vunpack.c.l.b16 %v1275
    %v3454 = vunpack.c.l.b16 %v1276
    %v3455 = vunpack.c.l.b16 %v1277
    %v3456 = vunpack.c.l.b16 %v1278
    %v3457 = vunpack.c.l.b16 %v1279
    %v3458 = vunpack.c.l.b16 %v1280
    %v3459 = vpack.c.b16 %v3396, %v3395
    %v3460 = vpack.c.b16 %v3398, %v3397
    %v3461 = vpack.c.b16 %v3400, %v3399
    %v3462 = vpack.c.b16 %v3402, %v3401
    %v3463 = vpack.c.b16 %v3404, %v3403
    %v3464 = vpack.c.b16 %v3406, %v3405
    %v3465 = vpack.c.b16 %v3408, %v3407
    %v3466 = vpack.c.b16 %v3410, %v3409
    %v3467 = vpack.c.b16 %v3412, %v3411
    %v3468 = vpack.c.b16 %v3414, %v3413
    %v3469 = vpack.c.b16 %v3416, %v3415
    %v3470 = vpack.c.b16 %v3418, %v3417
    %v3471 = vpack.c.b16 %v3420, %v3419
    %v3472 = vpack.c.b16 %v3422, %v3421
    %v3473 = vpack.c.b16 %v3424, %v3423
    %v3474 = vpack.c.b16 %v3426, %v3425
    %v3475 = vpack.c.b16 %v3428, %v3427
    %v3476 = vpack.c.b16 %v3430, %v3429
    %v3477 = vpack.c.b16 %v3432, %v3431
    %v3478 = vpack.c.b16 %v3434, %v3433
    %v3479 = vpack.c.b16 %v3436, %v3435
    %v3480 = vpack.c.b16 %v3438, %v3437
    %v3481 = vpack.c.b16 %v3440, %v3439
    %v3482 = vpack.c.b16 %v3442, %v3441
    %v3483 = vpack.c.b16 %v3444, %v3443
    %v3484 = vpack.c.b16 %v3446, %v3445
    %v3485 = vpack.c.b16 %v3448, %v3447
    %v3486 = vpack.c.b16 %v3450, %v3449
    %v3487 = vpack.c.b16 %v3452, %v3451
    %v3488 = vpack.c.b16 %v3454, %v3453
    %v3489 = vpack.c.b16 %v3456, %v3455
    %v3490 = vpack.c.b16 %v3458, %v3457
    %3491 = vrot.lane.b32.xlu0 %v3459, 24
    %v3492 = vpop.permute.xlu0 %3491
    %3493 = vrot.lane.b32.xlu0 %v3460, 24
    %v3494 = vpop.permute.xlu0 %3493
    %3495 = vrot.lane.b32.xlu0 %v3461, 24
    %v3496 = vpop.permute.xlu0 %3495
    %3497 = vrot.lane.b32.xlu0 %v3462, 24
    %v3498 = vpop.permute.xlu0 %3497
    %3499 = vrot.lane.b32.xlu0 %v3463, 24
    %v3500 = vpop.permute.xlu0 %3499
    %3501 = vrot.lane.b32.xlu0 %v3464, 24
    %v3502 = vpop.permute.xlu0 %3501
    %3503 = vrot.lane.b32.xlu0 %v3465, 24
    %v3504 = vpop.permute.xlu0 %3503
    %3505 = vrot.lane.b32.xlu0 %v3466, 24
    %v3506 = vpop.permute.xlu0 %3505
    %3507 = vrot.lane.b32.xlu0 %v3467, 24
    %v3508 = vpop.permute.xlu0 %3507
    %3509 = vrot.lane.b32.xlu0 %v3468, 24
    %v3510 = vpop.permute.xlu0 %3509
    %3511 = vrot.lane.b32.xlu0 %v3469, 24
    %v3512 = vpop.permute.xlu0 %3511
    %3513 = vrot.lane.b32.xlu0 %v3470, 24
    %v3514 = vpop.permute.xlu0 %3513
    %3515 = vrot.lane.b32.xlu0 %v3471, 24
    %v3516 = vpop.permute.xlu0 %3515
    %3517 = vrot.lane.b32.xlu0 %v3472, 24
    %v3518 = vpop.permute.xlu0 %3517
    %3519 = vrot.lane.b32.xlu0 %v3473, 24
    %v3520 = vpop.permute.xlu0 %3519
    %3521 = vrot.lane.b32.xlu0 %v3474, 24
    %v3522 = vpop.permute.xlu0 %3521
    %3523 = vrot.lane.b32.xlu0 %v3475, 24
    %v3524 = vpop.permute.xlu0 %3523
    %3525 = vrot.lane.b32.xlu0 %v3476, 24
    %v3526 = vpop.permute.xlu0 %3525
    %3527 = vrot.lane.b32.xlu0 %v3477, 24
    %v3528 = vpop.permute.xlu0 %3527
    %3529 = vrot.lane.b32.xlu0 %v3478, 24
    %v3530 = vpop.permute.xlu0 %3529
    %3531 = vrot.lane.b32.xlu0 %v3479, 24
    %v3532 = vpop.permute.xlu0 %3531
    %3533 = vrot.lane.b32.xlu0 %v3480, 24
    %v3534 = vpop.permute.xlu0 %3533
    %3535 = vrot.lane.b32.xlu0 %v3481, 24
    %v3536 = vpop.permute.xlu0 %3535
    %3537 = vrot.lane.b32.xlu0 %v3482, 24
    %v3538 = vpop.permute.xlu0 %3537
    %3539 = vrot.lane.b32.xlu0 %v3483, 24
    %v3540 = vpop.permute.xlu0 %3539
    %3541 = vrot.lane.b32.xlu0 %v3484, 24
    %v3542 = vpop.permute.xlu0 %3541
    %3543 = vrot.lane.b32.xlu0 %v3485, 24
    %v3544 = vpop.permute.xlu0 %3543
    %3545 = vrot.lane.b32.xlu0 %v3486, 24
    %v3546 = vpop.permute.xlu0 %3545
    %3547 = vrot.lane.b32.xlu0 %v3487, 24
    %v3548 = vpop.permute.xlu0 %3547
    %3549 = vrot.lane.b32.xlu0 %v3488, 24
    %v3550 = vpop.permute.xlu0 %3549
    %3551 = vrot.lane.b32.xlu0 %v3489, 24
    %v3552 = vpop.permute.xlu0 %3551
    %3553 = vrot.lane.b32.xlu0 %v3490, 24
    %v3554 = vpop.permute.xlu0 %3553
    %v3587 = vunpack.c.l.b16 %v1281
    %v3588 = vunpack.c.l.b16 %v1282
    %v3589 = vunpack.c.l.b16 %v1283
    %v3590 = vunpack.c.l.b16 %v1284
    %v3591 = vunpack.c.l.b16 %v1285
    %v3592 = vunpack.c.l.b16 %v1286
    %v3593 = vunpack.c.l.b16 %v1287
    %v3594 = vunpack.c.l.b16 %v1288
    %v3595 = vunpack.c.l.b16 %v1289
    %v3596 = vunpack.c.l.b16 %v1290
    %v3597 = vunpack.c.l.b16 %v1291
    %v3598 = vunpack.c.l.b16 %v1292
    %v3599 = vunpack.c.l.b16 %v1293
    %v3600 = vunpack.c.l.b16 %v1294
    %v3601 = vunpack.c.l.b16 %v1295
    %v3602 = vunpack.c.l.b16 %v1296
    %v3603 = vunpack.c.l.b16 %v1297
    %v3604 = vunpack.c.l.b16 %v1298
    %v3605 = vunpack.c.l.b16 %v1299
    %v3606 = vunpack.c.l.b16 %v1300
    %v3607 = vunpack.c.l.b16 %v1301
    %v3608 = vunpack.c.l.b16 %v1302
    %v3609 = vunpack.c.l.b16 %v1303
    %v3610 = vunpack.c.l.b16 %v1304
    %v3611 = vunpack.c.l.b16 %v1305
    %v3612 = vunpack.c.l.b16 %v1306
    %v3613 = vunpack.c.l.b16 %v1307
    %v3614 = vunpack.c.l.b16 %v1308
    %v3615 = vunpack.c.l.b16 %v1309
    %v3616 = vunpack.c.l.b16 %v1310
    %v3617 = vunpack.c.l.b16 %v1311
    %v3618 = vunpack.c.l.b16 %v1312
    %v3619 = vpack.c.b16 %v3587, %v3587
    %v3620 = vpack.c.b16 %v3588, %v3588
    %v3621 = vpack.c.b16 %v3589, %v3589
    %v3622 = vpack.c.b16 %v3590, %v3590
    %v3623 = vpack.c.b16 %v3591, %v3591
    %v3624 = vpack.c.b16 %v3592, %v3592
    %v3625 = vpack.c.b16 %v3593, %v3593
    %v3626 = vpack.c.b16 %v3594, %v3594
    %v3627 = vpack.c.b16 %v3595, %v3595
    %v3628 = vpack.c.b16 %v3596, %v3596
    %v3629 = vpack.c.b16 %v3597, %v3597
    %v3630 = vpack.c.b16 %v3598, %v3598
    %v3631 = vpack.c.b16 %v3599, %v3599
    %v3632 = vpack.c.b16 %v3600, %v3600
    %v3633 = vpack.c.b16 %v3601, %v3601
    %v3634 = vpack.c.b16 %v3602, %v3602
    %v3635 = vpack.c.b16 %v3603, %v3603
    %v3636 = vpack.c.b16 %v3604, %v3604
    %v3637 = vpack.c.b16 %v3605, %v3605
    %v3638 = vpack.c.b16 %v3606, %v3606
    %v3639 = vpack.c.b16 %v3607, %v3607
    %v3640 = vpack.c.b16 %v3608, %v3608
    %v3641 = vpack.c.b16 %v3609, %v3609
    %v3642 = vpack.c.b16 %v3610, %v3610
    %v3643 = vpack.c.b16 %v3611, %v3611
    %v3644 = vpack.c.b16 %v3612, %v3612
    %v3645 = vpack.c.b16 %v3613, %v3613
    %v3646 = vpack.c.b16 %v3614, %v3614
    %v3647 = vpack.c.b16 %v3615, %v3615
    %v3648 = vpack.c.b16 %v3616, %v3616
    %v3649 = vpack.c.b16 %v3617, %v3617
    %v3650 = vpack.c.b16 %v3618, %v3618
    %v3652 = vshrl.u32 %v3459, 16
    %v3654 = vshll.u32 %v3459, 16
    %v3656 = vrot.slane %v3654, 1
    %v3657 = vor.u32 %v3652, %v3656
    %v3659 = vshll.u32 %v3619, 16
    %v3661 = vrot.slane %v3659, 1
    %v3662 = vsel %vm1601, %v3657, %v3661
    %v3664 = vshrl.u32 %v3460, 16
    %v3666 = vshll.u32 %v3460, 16
    %v3668 = vrot.slane %v3666, 1
    %v3669 = vor.u32 %v3664, %v3668
    %v3671 = vshll.u32 %v3620, 16
    %v3673 = vrot.slane %v3671, 1
    %v3674 = vsel %vm1601, %v3669, %v3673
    %v3676 = vshrl.u32 %v3461, 16
    %v3678 = vshll.u32 %v3461, 16
    %v3680 = vrot.slane %v3678, 1
    %v3681 = vor.u32 %v3676, %v3680
    %v3683 = vshll.u32 %v3621, 16
    %v3685 = vrot.slane %v3683, 1
    %v3686 = vsel %vm1601, %v3681, %v3685
    %v3688 = vshrl.u32 %v3462, 16
    %v3690 = vshll.u32 %v3462, 16
    %v3692 = vrot.slane %v3690, 1
    %v3693 = vor.u32 %v3688, %v3692
    %v3695 = vshll.u32 %v3622, 16
    %v3697 = vrot.slane %v3695, 1
    %v3698 = vsel %vm1601, %v3693, %v3697
    %v3700 = vshrl.u32 %v3463, 16
    %v3702 = vshll.u32 %v3463, 16
    %v3704 = vrot.slane %v3702, 1
    %v3705 = vor.u32 %v3700, %v3704
    %v3707 = vshll.u32 %v3623, 16
    %v3709 = vrot.slane %v3707, 1
    %v3710 = vsel %vm1601, %v3705, %v3709
    %v3712 = vshrl.u32 %v3464, 16
    %v3714 = vshll.u32 %v3464, 16
    %v3716 = vrot.slane %v3714, 1
    %v3717 = vor.u32 %v3712, %v3716
    %v3719 = vshll.u32 %v3624, 16
    %v3721 = vrot.slane %v3719, 1
    %v3722 = vsel %vm1601, %v3717, %v3721
    %v3724 = vshrl.u32 %v3465, 16
    %v3726 = vshll.u32 %v3465, 16
    %v3728 = vrot.slane %v3726, 1
    %v3729 = vor.u32 %v3724, %v3728
    %v3731 = vshll.u32 %v3625, 16
    %v3733 = vrot.slane %v3731, 1
    %v3734 = vsel %vm1601, %v3729, %v3733
    %v3736 = vshrl.u32 %v3466, 16
    %v3738 = vshll.u32 %v3466, 16
    %v3740 = vrot.slane %v3738, 1
    %v3741 = vor.u32 %v3736, %v3740
    %v3743 = vshll.u32 %v3626, 16
    %v3745 = vrot.slane %v3743, 1
    %v3746 = vsel %vm1601, %v3741, %v3745
    %v3748 = vshrl.u32 %v3467, 16
    %v3750 = vshll.u32 %v3467, 16
    %v3752 = vrot.slane %v3750, 1
    %v3753 = vor.u32 %v3748, %v3752
    %v3755 = vshll.u32 %v3627, 16
    %v3757 = vrot.slane %v3755, 1
    %v3758 = vsel %vm1601, %v3753, %v3757
    %v3760 = vshrl.u32 %v3468, 16
    %v3762 = vshll.u32 %v3468, 16
    %v3764 = vrot.slane %v3762, 1
    %v3765 = vor.u32 %v3760, %v3764
    %v3767 = vshll.u32 %v3628, 16
    %v3769 = vrot.slane %v3767, 1
    %v3770 = vsel %vm1601, %v3765, %v3769
    %v3772 = vshrl.u32 %v3469, 16
    %v3774 = vshll.u32 %v3469, 16
    %v3776 = vrot.slane %v3774, 1
    %v3777 = vor.u32 %v3772, %v3776
    %v3779 = vshll.u32 %v3629, 16
    %v3781 = vrot.slane %v3779, 1
    %v3782 = vsel %vm1601, %v3777, %v3781
    %v3784 = vshrl.u32 %v3470, 16
    %v3786 = vshll.u32 %v3470, 16
    %v3788 = vrot.slane %v3786, 1
    %v3789 = vor.u32 %v3784, %v3788
    %v3791 = vshll.u32 %v3630, 16
    %v3793 = vrot.slane %v3791, 1
    %v3794 = vsel %vm1601, %v3789, %v3793
    %v3796 = vshrl.u32 %v3471, 16
    %v3798 = vshll.u32 %v3471, 16
    %v3800 = vrot.slane %v3798, 1
    %v3801 = vor.u32 %v3796, %v3800
    %v3803 = vshll.u32 %v3631, 16
    %v3805 = vrot.slane %v3803, 1
    %v3806 = vsel %vm1601, %v3801, %v3805
    %v3808 = vshrl.u32 %v3472, 16
    %v3810 = vshll.u32 %v3472, 16
    %v3812 = vrot.slane %v3810, 1
    %v3813 = vor.u32 %v3808, %v3812
    %v3815 = vshll.u32 %v3632, 16
    %v3817 = vrot.slane %v3815, 1
    %v3818 = vsel %vm1601, %v3813, %v3817
    %v3820 = vshrl.u32 %v3473, 16
    %v3822 = vshll.u32 %v3473, 16
    %v3824 = vrot.slane %v3822, 1
    %v3825 = vor.u32 %v3820, %v3824
    %v3827 = vshll.u32 %v3633, 16
    %v3829 = vrot.slane %v3827, 1
    %v3830 = vsel %vm1601, %v3825, %v3829
    %v3832 = vshrl.u32 %v3474, 16
    %v3834 = vshll.u32 %v3474, 16
    %v3836 = vrot.slane %v3834, 1
    %v3837 = vor.u32 %v3832, %v3836
    %v3839 = vshll.u32 %v3634, 16
    %v3841 = vrot.slane %v3839, 1
    %v3842 = vsel %vm1601, %v3837, %v3841
    %v3844 = vshrl.u32 %v3475, 16
    %v3846 = vshll.u32 %v3475, 16
    %v3848 = vrot.slane %v3846, 1
    %v3849 = vor.u32 %v3844, %v3848
    %v3851 = vshll.u32 %v3635, 16
    %v3853 = vrot.slane %v3851, 1
    %v3854 = vsel %vm1601, %v3849, %v3853
    %v3856 = vshrl.u32 %v3476, 16
    %v3858 = vshll.u32 %v3476, 16
    %v3860 = vrot.slane %v3858, 1
    %v3861 = vor.u32 %v3856, %v3860
    %v3863 = vshll.u32 %v3636, 16
    %v3865 = vrot.slane %v3863, 1
    %v3866 = vsel %vm1601, %v3861, %v3865
    %v3868 = vshrl.u32 %v3477, 16
    %v3870 = vshll.u32 %v3477, 16
    %v3872 = vrot.slane %v3870, 1
    %v3873 = vor.u32 %v3868, %v3872
    %v3875 = vshll.u32 %v3637, 16
    %v3877 = vrot.slane %v3875, 1
    %v3878 = vsel %vm1601, %v3873, %v3877
    %v3880 = vshrl.u32 %v3478, 16
    %v3882 = vshll.u32 %v3478, 16
    %v3884 = vrot.slane %v3882, 1
    %v3885 = vor.u32 %v3880, %v3884
    %v3887 = vshll.u32 %v3638, 16
    %v3889 = vrot.slane %v3887, 1
    %v3890 = vsel %vm1601, %v3885, %v3889
    %v3892 = vshrl.u32 %v3479, 16
    %v3894 = vshll.u32 %v3479, 16
    %v3896 = vrot.slane %v3894, 1
    %v3897 = vor.u32 %v3892, %v3896
    %v3899 = vshll.u32 %v3639, 16
    %v3901 = vrot.slane %v3899, 1
    %v3902 = vsel %vm1601, %v3897, %v3901
    %v3904 = vshrl.u32 %v3480, 16
    %v3906 = vshll.u32 %v3480, 16
    %v3908 = vrot.slane %v3906, 1
    %v3909 = vor.u32 %v3904, %v3908
    %v3911 = vshll.u32 %v3640, 16
    %v3913 = vrot.slane %v3911, 1
    %v3914 = vsel %vm1601, %v3909, %v3913
    %v3916 = vshrl.u32 %v3481, 16
    %v3918 = vshll.u32 %v3481, 16
    %v3920 = vrot.slane %v3918, 1
    %v3921 = vor.u32 %v3916, %v3920
    %v3923 = vshll.u32 %v3641, 16
    %v3925 = vrot.slane %v3923, 1
    %v3926 = vsel %vm1601, %v3921, %v3925
    %v3928 = vshrl.u32 %v3482, 16
    %v3930 = vshll.u32 %v3482, 16
    %v3932 = vrot.slane %v3930, 1
    %v3933 = vor.u32 %v3928, %v3932
    %v3935 = vshll.u32 %v3642, 16
    %v3937 = vrot.slane %v3935, 1
    %v3938 = vsel %vm1601, %v3933, %v3937
    %v3940 = vshrl.u32 %v3483, 16
    %v3942 = vshll.u32 %v3483, 16
    %v3944 = vrot.slane %v3942, 1
    %v3945 = vor.u32 %v3940, %v3944
    %v3947 = vshll.u32 %v3643, 16
    %v3949 = vrot.slane %v3947, 1
    %v3950 = vsel %vm1601, %v3945, %v3949
    %v3952 = vshrl.u32 %v3484, 16
    %v3954 = vshll.u32 %v3484, 16
    %v3956 = vrot.slane %v3954, 1
    %v3957 = vor.u32 %v3952, %v3956
    %v3959 = vshll.u32 %v3644, 16
    %v3961 = vrot.slane %v3959, 1
    %v3962 = vsel %vm1601, %v3957, %v3961
    %v3964 = vshrl.u32 %v3485, 16
    %v3966 = vshll.u32 %v3485, 16
    %v3968 = vrot.slane %v3966, 1
    %v3969 = vor.u32 %v3964, %v3968
    %v3971 = vshll.u32 %v3645, 16
    %v3973 = vrot.slane %v3971, 1
    %v3974 = vsel %vm1601, %v3969, %v3973
    %v3976 = vshrl.u32 %v3486, 16
    %v3978 = vshll.u32 %v3486, 16
    %v3980 = vrot.slane %v3978, 1
    %v3981 = vor.u32 %v3976, %v3980
    %v3983 = vshll.u32 %v3646, 16
    %v3985 = vrot.slane %v3983, 1
    %v3986 = vsel %vm1601, %v3981, %v3985
    %v3988 = vshrl.u32 %v3487, 16
    %v3990 = vshll.u32 %v3487, 16
    %v3992 = vrot.slane %v3990, 1
    %v3993 = vor.u32 %v3988, %v3992
    %v3995 = vshll.u32 %v3647, 16
    %v3997 = vrot.slane %v3995, 1
    %v3998 = vsel %vm1601, %v3993, %v3997
    %v4000 = vshrl.u32 %v3488, 16
    %v4002 = vshll.u32 %v3488, 16
    %v4004 = vrot.slane %v4002, 1
    %v4005 = vor.u32 %v4000, %v4004
    %v4007 = vshll.u32 %v3648, 16
    %v4009 = vrot.slane %v4007, 1
    %v4010 = vsel %vm1601, %v4005, %v4009
    %v4012 = vshrl.u32 %v3489, 16
    %v4014 = vshll.u32 %v3489, 16
    %v4016 = vrot.slane %v4014, 1
    %v4017 = vor.u32 %v4012, %v4016
    %v4019 = vshll.u32 %v3649, 16
    %v4021 = vrot.slane %v4019, 1
    %v4022 = vsel %vm1601, %v4017, %v4021
    %v4024 = vshrl.u32 %v3490, 16
    %v4026 = vshll.u32 %v3490, 16
    %v4028 = vrot.slane %v4026, 1
    %v4029 = vor.u32 %v4024, %v4028
    %v4031 = vshll.u32 %v3650, 16
    %v4033 = vrot.slane %v4031, 1
    %v4034 = vsel %vm1601, %v4029, %v4033
    %4035 = vrot.lane.b32.xlu0 %v3662, 28
    %v4036 = vpop.permute.xlu0 %4035
    %4037 = vrot.lane.b32.xlu0 %v3674, 28
    %v4038 = vpop.permute.xlu0 %4037
    %4039 = vrot.lane.b32.xlu0 %v3686, 28
    %v4040 = vpop.permute.xlu0 %4039
    %4041 = vrot.lane.b32.xlu0 %v3698, 28
    %v4042 = vpop.permute.xlu0 %4041
    %4043 = vrot.lane.b32.xlu0 %v3710, 28
    %v4044 = vpop.permute.xlu0 %4043
    %4045 = vrot.lane.b32.xlu0 %v3722, 28
    %v4046 = vpop.permute.xlu0 %4045
    %4047 = vrot.lane.b32.xlu0 %v3734, 28
    %v4048 = vpop.permute.xlu0 %4047
    %4049 = vrot.lane.b32.xlu0 %v3746, 28
    %v4050 = vpop.permute.xlu0 %4049
    %4051 = vrot.lane.b32.xlu0 %v3758, 28
    %v4052 = vpop.permute.xlu0 %4051
    %4053 = vrot.lane.b32.xlu0 %v3770, 28
    %v4054 = vpop.permute.xlu0 %4053
    %4055 = vrot.lane.b32.xlu0 %v3782, 28
    %v4056 = vpop.permute.xlu0 %4055
    %4057 = vrot.lane.b32.xlu0 %v3794, 28
    %v4058 = vpop.permute.xlu0 %4057
    %4059 = vrot.lane.b32.xlu0 %v3806, 28
    %v4060 = vpop.permute.xlu0 %4059
    %4061 = vrot.lane.b32.xlu0 %v3818, 28
    %v4062 = vpop.permute.xlu0 %4061
    %4063 = vrot.lane.b32.xlu0 %v3830, 28
    %v4064 = vpop.permute.xlu0 %4063
    %4065 = vrot.lane.b32.xlu0 %v3842, 28
    %v4066 = vpop.permute.xlu0 %4065
    %4067 = vrot.lane.b32.xlu0 %v3854, 28
    %v4068 = vpop.permute.xlu0 %4067
    %4069 = vrot.lane.b32.xlu0 %v3866, 28
    %v4070 = vpop.permute.xlu0 %4069
    %4071 = vrot.lane.b32.xlu0 %v3878, 28
    %v4072 = vpop.permute.xlu0 %4071
    %4073 = vrot.lane.b32.xlu0 %v3890, 28
    %v4074 = vpop.permute.xlu0 %4073
    %4075 = vrot.lane.b32.xlu0 %v3902, 28
    %v4076 = vpop.permute.xlu0 %4075
    %4077 = vrot.lane.b32.xlu0 %v3914, 28
    %v4078 = vpop.permute.xlu0 %4077
    %4079 = vrot.lane.b32.xlu0 %v3926, 28
    %v4080 = vpop.permute.xlu0 %4079
    %4081 = vrot.lane.b32.xlu0 %v3938, 28
    %v4082 = vpop.permute.xlu0 %4081
    %4083 = vrot.lane.b32.xlu0 %v3950, 28
    %v4084 = vpop.permute.xlu0 %4083
    %4085 = vrot.lane.b32.xlu0 %v3962, 28
    %v4086 = vpop.permute.xlu0 %4085
    %4087 = vrot.lane.b32.xlu0 %v3974, 28
    %v4088 = vpop.permute.xlu0 %4087
    %4089 = vrot.lane.b32.xlu0 %v3986, 28
    %v4090 = vpop.permute.xlu0 %4089
    %4091 = vrot.lane.b32.xlu0 %v3998, 28
    %v4092 = vpop.permute.xlu0 %4091
    %4093 = vrot.lane.b32.xlu0 %v4010, 28
    %v4094 = vpop.permute.xlu0 %4093
    %4095 = vrot.lane.b32.xlu0 %v4022, 28
    %v4096 = vpop.permute.xlu0 %4095
    %4097 = vrot.lane.b32.xlu0 %v4034, 28
    %v4098 = vpop.permute.xlu0 %4097
    %v4131 = vunpack.c.l.b16 %v1313
    %v4132 = vunpack.c.l.b16 %v1314
    %v4133 = vunpack.c.l.b16 %v1315
    %v4134 = vunpack.c.l.b16 %v1316
    %v4135 = vunpack.c.l.b16 %v1317
    %v4136 = vunpack.c.l.b16 %v1318
    %v4137 = vunpack.c.l.b16 %v1319
    %v4138 = vunpack.c.l.b16 %v1320
    %v4139 = vunpack.c.l.b16 %v1321
    %v4140 = vunpack.c.l.b16 %v1322
    %v4141 = vunpack.c.l.b16 %v1323
    %v4142 = vunpack.c.l.b16 %v1324
    %v4143 = vunpack.c.l.b16 %v1325
    %v4144 = vunpack.c.l.b16 %v1326
    %v4145 = vunpack.c.l.b16 %v1327
    %v4146 = vunpack.c.l.b16 %v1328
    %v4147 = vunpack.c.l.b16 %v1329
    %v4148 = vunpack.c.l.b16 %v1330
    %v4149 = vunpack.c.l.b16 %v1331
    %v4150 = vunpack.c.l.b16 %v1332
    %v4151 = vunpack.c.l.b16 %v1333
    %v4152 = vunpack.c.l.b16 %v1334
    %v4153 = vunpack.c.l.b16 %v1335
    %v4154 = vunpack.c.l.b16 %v1336
    %v4155 = vunpack.c.l.b16 %v1337
    %v4156 = vunpack.c.l.b16 %v1338
    %v4157 = vunpack.c.l.b16 %v1339
    %v4158 = vunpack.c.l.b16 %v1340
    %v4159 = vunpack.c.l.b16 %v1341
    %v4160 = vunpack.c.l.b16 %v1342
    %v4161 = vunpack.c.l.b16 %v1343
    %v4162 = vunpack.c.l.b16 %v1344
    %v4163 = vpack.c.b16 %v3396, %v4131
    %v4164 = vpack.c.b16 %v3398, %v4132
    %v4165 = vpack.c.b16 %v3400, %v4133
    %v4166 = vpack.c.b16 %v3402, %v4134
    %v4167 = vpack.c.b16 %v3404, %v4135
    %v4168 = vpack.c.b16 %v3406, %v4136
    %v4169 = vpack.c.b16 %v3408, %v4137
    %v4170 = vpack.c.b16 %v3410, %v4138
    %v4171 = vpack.c.b16 %v3412, %v4139
    %v4172 = vpack.c.b16 %v3414, %v4140
    %v4173 = vpack.c.b16 %v3416, %v4141
    %v4174 = vpack.c.b16 %v3418, %v4142
    %v4175 = vpack.c.b16 %v3420, %v4143
    %v4176 = vpack.c.b16 %v3422, %v4144
    %v4177 = vpack.c.b16 %v3424, %v4145
    %v4178 = vpack.c.b16 %v3426, %v4146
    %v4179 = vpack.c.b16 %v3428, %v4147
    %v4180 = vpack.c.b16 %v3430, %v4148
    %v4181 = vpack.c.b16 %v3432, %v4149
    %v4182 = vpack.c.b16 %v3434, %v4150
    %v4183 = vpack.c.b16 %v3436, %v4151
    %v4184 = vpack.c.b16 %v3438, %v4152
    %v4185 = vpack.c.b16 %v3440, %v4153
    %v4186 = vpack.c.b16 %v3442, %v4154
    %v4187 = vpack.c.b16 %v3444, %v4155
    %v4188 = vpack.c.b16 %v3446, %v4156
    %v4189 = vpack.c.b16 %v3448, %v4157
    %v4190 = vpack.c.b16 %v3450, %v4158
    %v4191 = vpack.c.b16 %v3452, %v4159
    %v4192 = vpack.c.b16 %v3454, %v4160
    %v4193 = vpack.c.b16 %v3456, %v4161
    %v4194 = vpack.c.b16 %v3458, %v4162
    %v4195 = vrot.slane %v4163, 1
    %v4196 = vrot.slane %v3619, 1
    %v4197 = vsel %vm2146, %v4195, %v4196
    %v4198 = vrot.slane %v4164, 1
    %v4199 = vrot.slane %v3620, 1
    %v4200 = vsel %vm2146, %v4198, %v4199
    %v4201 = vrot.slane %v4165, 1
    %v4202 = vrot.slane %v3621, 1
    %v4203 = vsel %vm2146, %v4201, %v4202
    %v4204 = vrot.slane %v4166, 1
    %v4205 = vrot.slane %v3622, 1
    %v4206 = vsel %vm2146, %v4204, %v4205
    %v4207 = vrot.slane %v4167, 1
    %v4208 = vrot.slane %v3623, 1
    %v4209 = vsel %vm2146, %v4207, %v4208
    %v4210 = vrot.slane %v4168, 1
    %v4211 = vrot.slane %v3624, 1
    %v4212 = vsel %vm2146, %v4210, %v4211
    %v4213 = vrot.slane %v4169, 1
    %v4214 = vrot.slane %v3625, 1
    %v4215 = vsel %vm2146, %v4213, %v4214
    %v4216 = vrot.slane %v4170, 1
    %v4217 = vrot.slane %v3626, 1
    %v4218 = vsel %vm2146, %v4216, %v4217
    %v4219 = vrot.slane %v4171, 1
    %v4220 = vrot.slane %v3627, 1
    %v4221 = vsel %vm2146, %v4219, %v4220
    %v4222 = vrot.slane %v4172, 1
    %v4223 = vrot.slane %v3628, 1
    %v4224 = vsel %vm2146, %v4222, %v4223
    %v4225 = vrot.slane %v4173, 1
    %v4226 = vrot.slane %v3629, 1
    %v4227 = vsel %vm2146, %v4225, %v4226
    %v4228 = vrot.slane %v4174, 1
    %v4229 = vrot.slane %v3630, 1
    %v4230 = vsel %vm2146, %v4228, %v4229
    %v4231 = vrot.slane %v4175, 1
    %v4232 = vrot.slane %v3631, 1
    %v4233 = vsel %vm2146, %v4231, %v4232
    %v4234 = vrot.slane %v4176, 1
    %v4235 = vrot.slane %v3632, 1
    %v4236 = vsel %vm2146, %v4234, %v4235
    %v4237 = vrot.slane %v4177, 1
    %v4238 = vrot.slane %v3633, 1
    %v4239 = vsel %vm2146, %v4237, %v4238
    %v4240 = vrot.slane %v4178, 1
    %v4241 = vrot.slane %v3634, 1
    %v4242 = vsel %vm2146, %v4240, %v4241
    %v4243 = vrot.slane %v4179, 1
    %v4244 = vrot.slane %v3635, 1
    %v4245 = vsel %vm2146, %v4243, %v4244
    %v4246 = vrot.slane %v4180, 1
    %v4247 = vrot.slane %v3636, 1
    %v4248 = vsel %vm2146, %v4246, %v4247
    %v4249 = vrot.slane %v4181, 1
    %v4250 = vrot.slane %v3637, 1
    %v4251 = vsel %vm2146, %v4249, %v4250
    %v4252 = vrot.slane %v4182, 1
    %v4253 = vrot.slane %v3638, 1
    %v4254 = vsel %vm2146, %v4252, %v4253
    %v4255 = vrot.slane %v4183, 1
    %v4256 = vrot.slane %v3639, 1
    %v4257 = vsel %vm2146, %v4255, %v4256
    %v4258 = vrot.slane %v4184, 1
    %v4259 = vrot.slane %v3640, 1
    %v4260 = vsel %vm2146, %v4258, %v4259
    %v4261 = vrot.slane %v4185, 1
    %v4262 = vrot.slane %v3641, 1
    %v4263 = vsel %vm2146, %v4261, %v4262
    %v4264 = vrot.slane %v4186, 1
    %v4265 = vrot.slane %v3642, 1
    %v4266 = vsel %vm2146, %v4264, %v4265
    %v4267 = vrot.slane %v4187, 1
    %v4268 = vrot.slane %v3643, 1
    %v4269 = vsel %vm2146, %v4267, %v4268
    %v4270 = vrot.slane %v4188, 1
    %v4271 = vrot.slane %v3644, 1
    %v4272 = vsel %vm2146, %v4270, %v4271
    %v4273 = vrot.slane %v4189, 1
    %v4274 = vrot.slane %v3645, 1
    %v4275 = vsel %vm2146, %v4273, %v4274
    %v4276 = vrot.slane %v4190, 1
    %v4277 = vrot.slane %v3646, 1
    %v4278 = vsel %vm2146, %v4276, %v4277
    %v4279 = vrot.slane %v4191, 1
    %v4280 = vrot.slane %v3647, 1
    %v4281 = vsel %vm2146, %v4279, %v4280
    %v4282 = vrot.slane %v4192, 1
    %v4283 = vrot.slane %v3648, 1
    %v4284 = vsel %vm2146, %v4282, %v4283
    %v4285 = vrot.slane %v4193, 1
    %v4286 = vrot.slane %v3649, 1
    %v4287 = vsel %vm2146, %v4285, %v4286
    %v4288 = vrot.slane %v4194, 1
    %v4289 = vrot.slane %v3650, 1
    %v4290 = vsel %vm2146, %v4288, %v4289
    %4291 = vrot.lane.b32.xlu0 %v4197, 32
    %v4292 = vpop.permute.xlu0 %4291
    %4293 = vrot.lane.b32.xlu0 %v4200, 32
    %v4294 = vpop.permute.xlu0 %4293
    %4295 = vrot.lane.b32.xlu0 %v4203, 32
    %v4296 = vpop.permute.xlu0 %4295
    %4297 = vrot.lane.b32.xlu0 %v4206, 32
    %v4298 = vpop.permute.xlu0 %4297
    %4299 = vrot.lane.b32.xlu0 %v4209, 32
    %v4300 = vpop.permute.xlu0 %4299
    %4301 = vrot.lane.b32.xlu0 %v4212, 32
    %v4302 = vpop.permute.xlu0 %4301
    %4303 = vrot.lane.b32.xlu0 %v4215, 32
    %v4304 = vpop.permute.xlu0 %4303
    %4305 = vrot.lane.b32.xlu0 %v4218, 32
    %v4306 = vpop.permute.xlu0 %4305
    %4307 = vrot.lane.b32.xlu0 %v4221, 32
    %v4308 = vpop.permute.xlu0 %4307
    %4309 = vrot.lane.b32.xlu0 %v4224, 32
    %v4310 = vpop.permute.xlu0 %4309
    %4311 = vrot.lane.b32.xlu0 %v4227, 32
    %v4312 = vpop.permute.xlu0 %4311
    %4313 = vrot.lane.b32.xlu0 %v4230, 32
    %v4314 = vpop.permute.xlu0 %4313
    %4315 = vrot.lane.b32.xlu0 %v4233, 32
    %v4316 = vpop.permute.xlu0 %4315
    %4317 = vrot.lane.b32.xlu0 %v4236, 32
    %v4318 = vpop.permute.xlu0 %4317
    %4319 = vrot.lane.b32.xlu0 %v4239, 32
    %v4320 = vpop.permute.xlu0 %4319
    %4321 = vrot.lane.b32.xlu0 %v4242, 32
    %v4322 = vpop.permute.xlu0 %4321
    %4323 = vrot.lane.b32.xlu0 %v4245, 32
    %v4324 = vpop.permute.xlu0 %4323
    %4325 = vrot.lane.b32.xlu0 %v4248, 32
    %v4326 = vpop.permute.xlu0 %4325
    %4327 = vrot.lane.b32.xlu0 %v4251, 32
    %v4328 = vpop.permute.xlu0 %4327
    %4329 = vrot.lane.b32.xlu0 %v4254, 32
    %v4330 = vpop.permute.xlu0 %4329
    %4331 = vrot.lane.b32.xlu0 %v4257, 32
    %v4332 = vpop.permute.xlu0 %4331
    %4333 = vrot.lane.b32.xlu0 %v4260, 32
    %v4334 = vpop.permute.xlu0 %4333
    %4335 = vrot.lane.b32.xlu0 %v4263, 32
    %v4336 = vpop.permute.xlu0 %4335
    %4337 = vrot.lane.b32.xlu0 %v4266, 32
    %v4338 = vpop.permute.xlu0 %4337
    %4339 = vrot.lane.b32.xlu0 %v4269, 32
    %v4340 = vpop.permute.xlu0 %4339
    %4341 = vrot.lane.b32.xlu0 %v4272, 32
    %v4342 = vpop.permute.xlu0 %4341
    %4343 = vrot.lane.b32.xlu0 %v4275, 32
    %v4344 = vpop.permute.xlu0 %4343
    %4345 = vrot.lane.b32.xlu0 %v4278, 32
    %v4346 = vpop.permute.xlu0 %4345
    %4347 = vrot.lane.b32.xlu0 %v4281, 32
    %v4348 = vpop.permute.xlu0 %4347
    %4349 = vrot.lane.b32.xlu0 %v4284, 32
    %v4350 = vpop.permute.xlu0 %4349
    %4351 = vrot.lane.b32.xlu0 %v4287, 32
    %v4352 = vpop.permute.xlu0 %4351
    %4353 = vrot.lane.b32.xlu0 %v4290, 32
    %v4354 = vpop.permute.xlu0 %4353
    %vm4355 = vcmask 31744
    %v4357 = vsel %vm4355, %v1473, %v1987
    %v4359 = vsel %vm4355, %v1474, %v1989
    %v4361 = vsel %vm4355, %v1475, %v1991
    %v4363 = vsel %vm4355, %v1476, %v1993
    %v4365 = vsel %vm4355, %v1477, %v1995
    %v4367 = vsel %vm4355, %v1478, %v1997
    %v4369 = vsel %vm4355, %v1479, %v1999
    %v4371 = vsel %vm4355, %v1480, %v2001
    %v4373 = vsel %vm4355, %v1481, %v2003
    %v4375 = vsel %vm4355, %v1482, %v2005
    %v4377 = vsel %vm4355, %v1483, %v2007
    %v4379 = vsel %vm4355, %v1484, %v2009
    %v4381 = vsel %vm4355, %v1485, %v2011
    %v4383 = vsel %vm4355, %v1486, %v2013
    %v4385 = vsel %vm4355, %v1487, %v2015
    %v4387 = vsel %vm4355, %v1488, %v2017
    %v4389 = vsel %vm4355, %v1489, %v2019
    %v4391 = vsel %vm4355, %v1490, %v2021
    %v4393 = vsel %vm4355, %v1491, %v2023
    %v4395 = vsel %vm4355, %v1492, %v2025
    %v4397 = vsel %vm4355, %v1493, %v2027
    %v4399 = vsel %vm4355, %v1494, %v2029
    %v4401 = vsel %vm4355, %v1495, %v2031
    %v4403 = vsel %vm4355, %v1496, %v2033
    %v4405 = vsel %vm4355, %v1497, %v2035
    %v4407 = vsel %vm4355, %v1498, %v2037
    %v4409 = vsel %vm4355, %v1499, %v2039
    %v4411 = vsel %vm4355, %v1500, %v2041
    %v4413 = vsel %vm4355, %v1501, %v2043
    %v4415 = vsel %vm4355, %v1502, %v2045
    %v4417 = vsel %vm4355, %v1503, %v2047
    %v4419 = vsel %vm4355, %v1504, %v2049
    %vm4420 = vcmask 64512
    %v4422 = vsel %vm4420, %v4357, %v2244
    %v4424 = vsel %vm4420, %v4359, %v2246
    %v4426 = vsel %vm4420, %v4361, %v2248
    %v4428 = vsel %vm4420, %v4363, %v2250
    %v4430 = vsel %vm4420, %v4365, %v2252
    %v4432 = vsel %vm4420, %v4367, %v2254
    %v4434 = vsel %vm4420, %v4369, %v2256
    %v4436 = vsel %vm4420, %v4371, %v2258
    %v4438 = vsel %vm4420, %v4373, %v2260
    %v4440 = vsel %vm4420, %v4375, %v2262
    %v4442 = vsel %vm4420, %v4377, %v2264
    %v4444 = vsel %vm4420, %v4379, %v2266
    %v4446 = vsel %vm4420, %v4381, %v2268
    %v4448 = vsel %vm4420, %v4383, %v2270
    %v4450 = vsel %vm4420, %v4385, %v2272
    %v4452 = vsel %vm4420, %v4387, %v2274
    %v4454 = vsel %vm4420, %v4389, %v2276
    %v4456 = vsel %vm4420, %v4391, %v2278
    %v4458 = vsel %vm4420, %v4393, %v2280
    %v4460 = vsel %vm4420, %v4395, %v2282
    %v4462 = vsel %vm4420, %v4397, %v2284
    %v4464 = vsel %vm4420, %v4399, %v2286
    %v4466 = vsel %vm4420, %v4401, %v2288
    %v4468 = vsel %vm4420, %v4403, %v2290
    %v4470 = vsel %vm4420, %v4405, %v2292
    %v4472 = vsel %vm4420, %v4407, %v2294
    %v4474 = vsel %vm4420, %v4409, %v2296
    %v4476 = vsel %vm4420, %v4411, %v2298
    %v4478 = vsel %vm4420, %v4413, %v2300
    %v4480 = vsel %vm4420, %v4415, %v2302
    %v4482 = vsel %vm4420, %v4417, %v2304
    %v4484 = vsel %vm4420, %v4419, %v2306
    %vm4485 = vcmask 97280
    %v4487 = vsel %vm4485, %v4422, %v2468
    %v4489 = vsel %vm4485, %v4424, %v2470
    %v4491 = vsel %vm4485, %v4426, %v2472
    %v4493 = vsel %vm4485, %v4428, %v2474
    %v4495 = vsel %vm4485, %v4430, %v2476
    %v4497 = vsel %vm4485, %v4432, %v2478
    %v4499 = vsel %vm4485, %v4434, %v2480
    %v4501 = vsel %vm4485, %v4436, %v2482
    %v4503 = vsel %vm4485, %v4438, %v2484
    %v4505 = vsel %vm4485, %v4440, %v2486
    %v4507 = vsel %vm4485, %v4442, %v2488
    %v4509 = vsel %vm4485, %v4444, %v2490
    %v4511 = vsel %vm4485, %v4446, %v2492
    %v4513 = vsel %vm4485, %v4448, %v2494
    %v4515 = vsel %vm4485, %v4450, %v2496
    %v4517 = vsel %vm4485, %v4452, %v2498
    %v4519 = vsel %vm4485, %v4454, %v2500
    %v4521 = vsel %vm4485, %v4456, %v2502
    %v4523 = vsel %vm4485, %v4458, %v2504
    %v4525 = vsel %vm4485, %v4460, %v2506
    %v4527 = vsel %vm4485, %v4462, %v2508
    %v4529 = vsel %vm4485, %v4464, %v2510
    %v4531 = vsel %vm4485, %v4466, %v2512
    %v4533 = vsel %vm4485, %v4468, %v2514
    %v4535 = vsel %vm4485, %v4470, %v2516
    %v4537 = vsel %vm4485, %v4472, %v2518
    %v4539 = vsel %vm4485, %v4474, %v2520
    %v4541 = vsel %vm4485, %v4476, %v2522
    %v4543 = vsel %vm4485, %v4478, %v2524
    %v4545 = vsel %vm4485, %v4480, %v2526
    %v4547 = vsel %vm4485, %v4482, %v2528
    %v4549 = vsel %vm4485, %v4484, %v2530
    %vm4550 = vcmask 130048
    %v4552 = vsel %vm4550, %v4487, %v3012
    %v4554 = vsel %vm4550, %v4489, %v3014
    %v4556 = vsel %vm4550, %v4491, %v3016
    %v4558 = vsel %vm4550, %v4493, %v3018
    %v4560 = vsel %vm4550, %v4495, %v3020
    %v4562 = vsel %vm4550, %v4497, %v3022
    %v4564 = vsel %vm4550, %v4499, %v3024
    %v4566 = vsel %vm4550, %v4501, %v3026
    %v4568 = vsel %vm4550, %v4503, %v3028
    %v4570 = vsel %vm4550, %v4505, %v3030
    %v4572 = vsel %vm4550, %v4507, %v3032
    %v4574 = vsel %vm4550, %v4509, %v3034
    %v4576 = vsel %vm4550, %v4511, %v3036
    %v4578 = vsel %vm4550, %v4513, %v3038
    %v4580 = vsel %vm4550, %v4515, %v3040
    %v4582 = vsel %vm4550, %v4517, %v3042
    %v4584 = vsel %vm4550, %v4519, %v3044
    %v4586 = vsel %vm4550, %v4521, %v3046
    %v4588 = vsel %vm4550, %v4523, %v3048
    %v4590 = vsel %vm4550, %v4525, %v3050
    %v4592 = vsel %vm4550, %v4527, %v3052
    %v4594 = vsel %vm4550, %v4529, %v3054
    %v4596 = vsel %vm4550, %v4531, %v3056
    %v4598 = vsel %vm4550, %v4533, %v3058
    %v4600 = vsel %vm4550, %v4535, %v3060
    %v4602 = vsel %vm4550, %v4537, %v3062
    %v4604 = vsel %vm4550, %v4539, %v3064
    %v4606 = vsel %vm4550, %v4541, %v3066
    %v4608 = vsel %vm4550, %v4543, %v3068
    %v4610 = vsel %vm4550, %v4545, %v3070
    %v4612 = vsel %vm4550, %v4547, %v3072
    %v4614 = vsel %vm4550, %v4549, %v3074
    %vm4615 = vcmask 162816
    %v4617 = vsel %vm4615, %v4552, %v3268
    %v4619 = vsel %vm4615, %v4554, %v3270
    %v4621 = vsel %vm4615, %v4556, %v3272
    %v4623 = vsel %vm4615, %v4558, %v3274
    %v4625 = vsel %vm4615, %v4560, %v3276
    %v4627 = vsel %vm4615, %v4562, %v3278
    %v4629 = vsel %vm4615, %v4564, %v3280
    %v4631 = vsel %vm4615, %v4566, %v3282
    %v4633 = vsel %vm4615, %v4568, %v3284
    %v4635 = vsel %vm4615, %v4570, %v3286
    %v4637 = vsel %vm4615, %v4572, %v3288
    %v4639 = vsel %vm4615, %v4574, %v3290
    %v4641 = vsel %vm4615, %v4576, %v3292
    %v4643 = vsel %vm4615, %v4578, %v3294
    %v4645 = vsel %vm4615, %v4580, %v3296
    %v4647 = vsel %vm4615, %v4582, %v3298
    %v4649 = vsel %vm4615, %v4584, %v3300
    %v4651 = vsel %vm4615, %v4586, %v3302
    %v4653 = vsel %vm4615, %v4588, %v3304
    %v4655 = vsel %vm4615, %v4590, %v3306
    %v4657 = vsel %vm4615, %v4592, %v3308
    %v4659 = vsel %vm4615, %v4594, %v3310
    %v4661 = vsel %vm4615, %v4596, %v3312
    %v4663 = vsel %vm4615, %v4598, %v3314
    %v4665 = vsel %vm4615, %v4600, %v3316
    %v4667 = vsel %vm4615, %v4602, %v3318
    %v4669 = vsel %vm4615, %v4604, %v3320
    %v4671 = vsel %vm4615, %v4606, %v3322
    %v4673 = vsel %vm4615, %v4608, %v3324
    %v4675 = vsel %vm4615, %v4610, %v3326
    %v4677 = vsel %vm4615, %v4612, %v3328
    %v4679 = vsel %vm4615, %v4614, %v3330
    %vm4680 = vcmask 195584
    %v4682 = vsel %vm4680, %v4617, %v3492
    %v4684 = vsel %vm4680, %v4619, %v3494
    %v4686 = vsel %vm4680, %v4621, %v3496
    %v4688 = vsel %vm4680, %v4623, %v3498
    %v4690 = vsel %vm4680, %v4625, %v3500
    %v4692 = vsel %vm4680, %v4627, %v3502
    %v4694 = vsel %vm4680, %v4629, %v3504
    %v4696 = vsel %vm4680, %v4631, %v3506
    %v4698 = vsel %vm4680, %v4633, %v3508
    %v4700 = vsel %vm4680, %v4635, %v3510
    %v4702 = vsel %vm4680, %v4637, %v3512
    %v4704 = vsel %vm4680, %v4639, %v3514
    %v4706 = vsel %vm4680, %v4641, %v3516
    %v4708 = vsel %vm4680, %v4643, %v3518
    %v4710 = vsel %vm4680, %v4645, %v3520
    %v4712 = vsel %vm4680, %v4647, %v3522
    %v4714 = vsel %vm4680, %v4649, %v3524
    %v4716 = vsel %vm4680, %v4651, %v3526
    %v4718 = vsel %vm4680, %v4653, %v3528
    %v4720 = vsel %vm4680, %v4655, %v3530
    %v4722 = vsel %vm4680, %v4657, %v3532
    %v4724 = vsel %vm4680, %v4659, %v3534
    %v4726 = vsel %vm4680, %v4661, %v3536
    %v4728 = vsel %vm4680, %v4663, %v3538
    %v4730 = vsel %vm4680, %v4665, %v3540
    %v4732 = vsel %vm4680, %v4667, %v3542
    %v4734 = vsel %vm4680, %v4669, %v3544
    %v4736 = vsel %vm4680, %v4671, %v3546
    %v4738 = vsel %vm4680, %v4673, %v3548
    %v4740 = vsel %vm4680, %v4675, %v3550
    %v4742 = vsel %vm4680, %v4677, %v3552
    %v4744 = vsel %vm4680, %v4679, %v3554
    %vm4745 = vcmask 228352
    %v4747 = vsel %vm4745, %v4682, %v4036
    %v4749 = vsel %vm4745, %v4684, %v4038
    %v4751 = vsel %vm4745, %v4686, %v4040
    %v4753 = vsel %vm4745, %v4688, %v4042
    %v4755 = vsel %vm4745, %v4690, %v4044
    %v4757 = vsel %vm4745, %v4692, %v4046
    %v4759 = vsel %vm4745, %v4694, %v4048
    %v4761 = vsel %vm4745, %v4696, %v4050
    %v4763 = vsel %vm4745, %v4698, %v4052
    %v4765 = vsel %vm4745, %v4700, %v4054
    %v4767 = vsel %vm4745, %v4702, %v4056
    %v4769 = vsel %vm4745, %v4704, %v4058
    %v4771 = vsel %vm4745, %v4706, %v4060
    %v4773 = vsel %vm4745, %v4708, %v4062
    %v4775 = vsel %vm4745, %v4710, %v4064
    %v4777 = vsel %vm4745, %v4712, %v4066
    %v4779 = vsel %vm4745, %v4714, %v4068
    %v4781 = vsel %vm4745, %v4716, %v4070
    %v4783 = vsel %vm4745, %v4718, %v4072
    %v4785 = vsel %vm4745, %v4720, %v4074
    %v4787 = vsel %vm4745, %v4722, %v4076
    %v4789 = vsel %vm4745, %v4724, %v4078
    %v4791 = vsel %vm4745, %v4726, %v4080
    %v4793 = vsel %vm4745, %v4728, %v4082
    %v4795 = vsel %vm4745, %v4730, %v4084
    %v4797 = vsel %vm4745, %v4732, %v4086
    %v4799 = vsel %vm4745, %v4734, %v4088
    %v4801 = vsel %vm4745, %v4736, %v4090
    %v4803 = vsel %vm4745, %v4738, %v4092
    %v4805 = vsel %vm4745, %v4740, %v4094
    %v4807 = vsel %vm4745, %v4742, %v4096
    %v4809 = vsel %vm4745, %v4744, %v4098
    %vm4810 = vcmask 261120
    %v4812 = vsel %vm4810, %v4747, %v4292
    %v4814 = vsel %vm4810, %v4749, %v4294
    %v4816 = vsel %vm4810, %v4751, %v4296
    %v4818 = vsel %vm4810, %v4753, %v4298
    %v4820 = vsel %vm4810, %v4755, %v4300
    %v4822 = vsel %vm4810, %v4757, %v4302
    %v4824 = vsel %vm4810, %v4759, %v4304
    %v4826 = vsel %vm4810, %v4761, %v4306
    %v4828 = vsel %vm4810, %v4763, %v4308
    %v4830 = vsel %vm4810, %v4765, %v4310
    %v4832 = vsel %vm4810, %v4767, %v4312
    %v4834 = vsel %vm4810, %v4769, %v4314
    %v4836 = vsel %vm4810, %v4771, %v4316
    %v4838 = vsel %vm4810, %v4773, %v4318
    %v4840 = vsel %vm4810, %v4775, %v4320
    %v4842 = vsel %vm4810, %v4777, %v4322
    %v4844 = vsel %vm4810, %v4779, %v4324
    %v4846 = vsel %vm4810, %v4781, %v4326
    %v4848 = vsel %vm4810, %v4783, %v4328
    %v4850 = vsel %vm4810, %v4785, %v4330
    %v4852 = vsel %vm4810, %v4787, %v4332
    %v4854 = vsel %vm4810, %v4789, %v4334
    %v4856 = vsel %vm4810, %v4791, %v4336
    %v4858 = vsel %vm4810, %v4793, %v4338
    %v4860 = vsel %vm4810, %v4795, %v4340
    %v4862 = vsel %vm4810, %v4797, %v4342
    %v4864 = vsel %vm4810, %v4799, %v4344
    %v4866 = vsel %vm4810, %v4801, %v4346
    %v4868 = vsel %vm4810, %v4803, %v4348
    %v4870 = vsel %vm4810, %v4805, %v4350
    %v4872 = vsel %vm4810, %v4807, %v4352
    %v4874 = vsel %vm4810, %v4809, %v4354
    %v4875 = vld [vmem:[#allocation6] sm:$0xf]
    %v4876 = vld [vmem:[#allocation6 + $0x4] sm:$0xf]
    %v4877 = vld [vmem:[#allocation6 + $0x8] sm:$0xf]
    %v4878 = vld [vmem:[#allocation6 + $0xc] sm:$0xf]
    %v4879 = vld [vmem:[#allocation6 + $0x10] sm:$0x3]
    %v4885 = vunpack.c.l.b16 %v4875
    %v4886 = vunpack.c.l.b16 %v4876
    %v4887 = vunpack.c.l.b16 %v4877
    %v4888 = vunpack.c.l.b16 %v4878
    %v4889 = vunpack.c.l.b16 %v4879
    %v4890 = vpack.c.b16 %v4886, %v4885
    %v4891 = vpack.c.b16 %v4888, %v4887
    %v4892 = vpack.c.b16 %v4889, %v4889
    %vm4895 = vcmask 293888
    %v4896 = vsel %vm4895, %v4812, 0
    %v4898 = vsel %vm4895, %v4814, 0
    %v4900 = vsel %vm4895, %v4816, 0
    %v4902 = vsel %vm4895, %v4818, 0
    %v4904 = vsel %vm4895, %v4820, 0
    %v4906 = vsel %vm4895, %v4822, 0
    %v4908 = vsel %vm4895, %v4824, 0
    %v4910 = vsel %vm4895, %v4826, 0
    %v4912 = vsel %vm4895, %v4828, 0
    %v4914 = vsel %vm4895, %v4830, 0
    %v4916 = vsel %vm4895, %v4832, 0
    %v4918 = vsel %vm4895, %v4834, 0
    %v4920 = vsel %vm4895, %v4836, 0
    %v4922 = vsel %vm4895, %v4838, 0
    %v4924 = vsel %vm4895, %v4840, 0
    %v4926 = vsel %vm4895, %v4842, 0
    %v4928 = vsel %vm4895, %v4844, 0
    %v4930 = vsel %vm4895, %v4846, 0
    %v4932 = vsel %vm4895, %v4848, 0
    %v4934 = vsel %vm4895, %v4850, 0
    %v4936 = vsel %vm4895, %v4852, 0
    %v4938 = vsel %vm4895, %v4854, 0
    %v4940 = vsel %vm4895, %v4856, 0
    %v4942 = vsel %vm4895, %v4858, 0
    %v4944 = vsel %vm4895, %v4860, 0
    %v4946 = vsel %vm4895, %v4862, 0
    %v4948 = vsel %vm4895, %v4864, 0
    %v4950 = vsel %vm4895, %v4866, 0
    %v4952 = vsel %vm4895, %v4868, 0
    %v4954 = vsel %vm4895, %v4870, 0
    %v4956 = vsel %vm4895, %v4872, 0
    %v4958 = vsel %vm4895, %v4874, 0
    %vm4960 = vcmask 1041408
    %v4962 = vsel %vm4960, %v4892, 0
    %4964 = vmatprep.subr.bf16.mxu0 0
    %4965 = vmatpush1.bf16.msra.mxu0 %v4890
    %4966 = vmatprep.subr.bf16.mxu0 0
    %4967 = vmatpush1.bf16.msra.mxu0 %v4891
    %4968 = vmatprep.subr.bf16.mxu0 0
    %4969 = vmatpush1.bf16.msra.mxu0 %v4962
    %4970 = vmatprep.subr.bf16.mxu0 0
    %4971 = vmatpush1.bf16.msra.mxu0 0
    %4972 = vmatprep.subr.bf16.mxu0 0
    %4973 = vmatpush1.bf16.msra.mxu0 0
    %4974 = vmatprep.subr.bf16.mxu0 0
    %4975 = vmatpush1.bf16.msra.mxu0 0
    %4976 = vmatprep.subr.bf16.mxu0 0
    %4977 = vmatpush1.bf16.msra.mxu0 0
    %4978 = vmatprep.subr.bf16.mxu0 0
    %4979 = vmatpush1.bf16.msra.mxu0 0
    %4980 = vmatprep.subr.bf16.mxu0 0
    %4981 = vmatpush1.bf16.msra.mxu0 0
    %4982 = vmatprep.subr.bf16.mxu0 0
    %4983 = vmatpush1.bf16.msra.mxu0 0
    %4984 = vmatprep.subr.bf16.mxu0 0
    %4985 = vmatpush1.bf16.msra.mxu0 0
    %4986 = vmatprep.subr.bf16.mxu0 0
    %4987 = vmatpush1.bf16.msra.mxu0 0
    %4988 = vmatprep.subr.bf16.mxu0 0
    %4989 = vmatpush1.bf16.msra.mxu0 0
    %4990 = vmatprep.subr.bf16.mxu0 0
    %4991 = vmatpush1.bf16.msra.mxu0 0
    %4992 = vmatprep.subr.bf16.mxu0 0
    %4993 = vmatpush1.bf16.msra.mxu0 0
    %4994 = vmatprep.subr.bf16.mxu0 0
    %4995 = vmatpush1.bf16.msra.mxu0 0
    %4996 = vmatprep.mubr.bf16.mxu0 0
    %4997 = vmatmul.mubr.bf16.gmra.mrb[0].mxu0 %v4896
    %v4998 = vpop.f32.mrb[0].mxu0
    %v4999 = vadd.f32 0.0, %v4998
    %v5000 = vpop.f32.mrb[0].mxu0
    %v5001 = vpop.f32.mrb[0].mxu0
    %v5002 = vadd.f32 0.0, %v5001
    %v5003 = vpop.f32.mrb[0].mxu0
    %5004 = vmatprep.mubr.bf16.mxu0 0
    %5005 = vmatmul.mubr.bf16.gmra.mrb[0].mxu0 %v4898
    %v5006 = vpop.f32.mrb[0].mxu0
    %v5007 = vadd.f32 0.0, %v5006
    %v5008 = vpop.f32.mrb[0].mxu0
    %v5009 = vpop.f32.mrb[0].mxu0
    %v5010 = vadd.f32 0.0, %v5009
    %v5011 = vpop.f32.mrb[0].mxu0
    %5012 = vmatprep.mubr.bf16.mxu0 0
    %5013 = vmatmul.mubr.bf16.gmra.mrb[0].mxu0 %v4900
    %v5014 = vpop.f32.mrb[0].mxu0
    %v5015 = vadd.f32 0.0, %v5014
    %v5016 = vpop.f32.mrb[0].mxu0
    %v5017 = vpop.f32.mrb[0].mxu0
    %v5018 = vadd.f32 0.0, %v5017
    %v5019 = vpop.f32.mrb[0].mxu0
    %5020 = vmatprep.mubr.bf16.mxu0 0
    %5021 = vmatmul.mubr.bf16.gmra.mrb[0].mxu0 %v4902
    %v5022 = vpop.f32.mrb[0].mxu0
    %v5023 = vadd.f32 0.0, %v5022
    %v5024 = vpop.f32.mrb[0].mxu0
    %v5025 = vpop.f32.mrb[0].mxu0
    %v5026 = vadd.f32 0.0, %v5025
    %v5027 = vpop.f32.mrb[0].mxu0
    %5028 = vmatprep.mubr.bf16.mxu0 0
    %5029 = vmatmul.mubr.bf16.gmra.mrb[0].mxu0 %v4904
    %v5030 = vpop.f32.mrb[0].mxu0
    %v5031 = vadd.f32 0.0, %v5030
    %v5032 = vpop.f32.mrb[0].mxu0
    %v5033 = vpop.f32.mrb[0].mxu0
    %v5034 = vadd.f32 0.0, %v5033
    %v5035 = vpop.f32.mrb[0].mxu0
    %5036 = vmatprep.mubr.bf16.mxu0 0
    %5037 = vmatmul.mubr.bf16.gmra.mrb[0].mxu0 %v4906
    %v5038 = vpop.f32.mrb[0].mxu0
    %v5039 = vadd.f32 0.0, %v5038
    %v5040 = vpop.f32.mrb[0].mxu0
    %v5041 = vpop.f32.mrb[0].mxu0
    %v5042 = vadd.f32 0.0, %v5041
    %v5043 = vpop.f32.mrb[0].mxu0
    %5044 = vmatprep.mubr.bf16.mxu0 0
    %5045 = vmatmul.mubr.bf16.gmra.mrb[0].mxu0 %v4908
    %v5046 = vpop.f32.mrb[0].mxu0
    %v5047 = vadd.f32 0.0, %v5046
    %v5048 = vpop.f32.mrb[0].mxu0
    %v5049 = vpop.f32.mrb[0].mxu0
    %v5050 = vadd.f32 0.0, %v5049
    %v5051 = vpop.f32.mrb[0].mxu0
    %5052 = vmatprep.mubr.bf16.mxu0 0
    %5053 = vmatmul.mubr.bf16.gmra.mrb[0].mxu0 %v4910
    %v5054 = vpop.f32.mrb[0].mxu0
    %v5055 = vadd.f32 0.0, %v5054
    %v5056 = vpop.f32.mrb[0].mxu0
    %v5057 = vpop.f32.mrb[0].mxu0
    %v5058 = vadd.f32 0.0, %v5057
    %v5059 = vpop.f32.mrb[0].mxu0
    %5060 = vmatprep.mubr.bf16.mxu0 0
    %5061 = vmatmul.mubr.bf16.gmra.mrb[0].mxu0 %v4912
    %v5062 = vpop.f32.mrb[0].mxu0
    %v5063 = vadd.f32 0.0, %v5062
    %v5064 = vpop.f32.mrb[0].mxu0
    %v5065 = vpop.f32.mrb[0].mxu0
    %v5066 = vadd.f32 0.0, %v5065
    %v5067 = vpop.f32.mrb[0].mxu0
    %5068 = vmatprep.mubr.bf16.mxu0 0
    %5069 = vmatmul.mubr.bf16.gmra.mrb[0].mxu0 %v4914
    %v5070 = vpop.f32.mrb[0].mxu0
    %v5071 = vadd.f32 0.0, %v5070
    %v5072 = vpop.f32.mrb[0].mxu0
    %v5073 = vpop.f32.mrb[0].mxu0
    %v5074 = vadd.f32 0.0, %v5073
    %v5075 = vpop.f32.mrb[0].mxu0
    %5076 = vmatprep.mubr.bf16.mxu0 0
    %5077 = vmatmul.mubr.bf16.gmra.mrb[0].mxu0 %v4916
    %v5078 = vpop.f32.mrb[0].mxu0
    %v5079 = vadd.f32 0.0, %v5078
    %v5080 = vpop.f32.mrb[0].mxu0
    %v5081 = vpop.f32.mrb[0].mxu0
    %v5082 = vadd.f32 0.0, %v5081
    %v5083 = vpop.f32.mrb[0].mxu0
    %5084 = vmatprep.mubr.bf16.mxu0 0
    %5085 = vmatmul.mubr.bf16.gmra.mrb[0].mxu0 %v4918
    %v5086 = vpop.f32.mrb[0].mxu0
    %v5087 = vadd.f32 0.0, %v5086
    %v5088 = vpop.f32.mrb[0].mxu0
    %v5089 = vpop.f32.mrb[0].mxu0
    %v5090 = vadd.f32 0.0, %v5089
    %v5091 = vpop.f32.mrb[0].mxu0
    %5092 = vmatprep.mubr.bf16.mxu0 0
    %5093 = vmatmul.mubr.bf16.gmra.mrb[0].mxu0 %v4920
    %v5094 = vpop.f32.mrb[0].mxu0
    %v5095 = vadd.f32 0.0, %v5094
    %v5096 = vpop.f32.mrb[0].mxu0
    %v5097 = vpop.f32.mrb[0].mxu0
    %v5098 = vadd.f32 0.0, %v5097
    %v5099 = vpop.f32.mrb[0].mxu0
    %5100 = vmatprep.mubr.bf16.mxu0 0
    %5101 = vmatmul.mubr.bf16.gmra.mrb[0].mxu0 %v4922
    %v5102 = vpop.f32.mrb[0].mxu0
    %v5103 = vadd.f32 0.0, %v5102
    %v5104 = vpop.f32.mrb[0].mxu0
    %v5105 = vpop.f32.mrb[0].mxu0
    %v5106 = vadd.f32 0.0, %v5105
    %v5107 = vpop.f32.mrb[0].mxu0
    %5108 = vmatprep.mubr.bf16.mxu0 0
    %5109 = vmatmul.mubr.bf16.gmra.mrb[0].mxu0 %v4924
    %v5110 = vpop.f32.mrb[0].mxu0
    %v5111 = vadd.f32 0.0, %v5110
    %v5112 = vpop.f32.mrb[0].mxu0
    %v5113 = vpop.f32.mrb[0].mxu0
    %v5114 = vadd.f32 0.0, %v5113
    %v5115 = vpop.f32.mrb[0].mxu0
    %5116 = vmatprep.mubr.bf16.mxu0 0
    %5117 = vmatmul.mubr.bf16.gmra.mrb[0].mxu0 %v4926
    %v5118 = vpop.f32.mrb[0].mxu0
    %v5119 = vadd.f32 0.0, %v5118
    %v5120 = vpop.f32.mrb[0].mxu0
    %v5121 = vpop.f32.mrb[0].mxu0
    %v5122 = vadd.f32 0.0, %v5121
    %v5123 = vpop.f32.mrb[0].mxu0
    %5124 = vmatprep.mubr.bf16.mxu0 0
    %5125 = vmatmul.mubr.bf16.gmra.mrb[0].mxu0 %v4928
    %v5126 = vpop.f32.mrb[0].mxu0
    %v5127 = vadd.f32 0.0, %v5126
    %v5128 = vpop.f32.mrb[0].mxu0
    %v5129 = vpop.f32.mrb[0].mxu0
    %v5130 = vadd.f32 0.0, %v5129
    %v5131 = vpop.f32.mrb[0].mxu0
    %5132 = vmatprep.mubr.bf16.mxu0 0
    %5133 = vmatmul.mubr.bf16.gmra.mrb[0].mxu0 %v4930
    %v5134 = vpop.f32.mrb[0].mxu0
    %v5135 = vadd.f32 0.0, %v5134
    %v5136 = vpop.f32.mrb[0].mxu0
    %v5137 = vpop.f32.mrb[0].mxu0
    %v5138 = vadd.f32 0.0, %v5137
    %v5139 = vpop.f32.mrb[0].mxu0
    %5140 = vmatprep.mubr.bf16.mxu0 0
    %5141 = vmatmul.mubr.bf16.gmra.mrb[0].mxu0 %v4932
    %v5142 = vpop.f32.mrb[0].mxu0
    %v5143 = vadd.f32 0.0, %v5142
    %v5144 = vpop.f32.mrb[0].mxu0
    %v5145 = vpop.f32.mrb[0].mxu0
    %v5146 = vadd.f32 0.0, %v5145
    %v5147 = vpop.f32.mrb[0].mxu0
    %5148 = vmatprep.mubr.bf16.mxu0 0
    %5149 = vmatmul.mubr.bf16.gmra.mrb[0].mxu0 %v4934
    %v5150 = vpop.f32.mrb[0].mxu0
    %v5151 = vadd.f32 0.0, %v5150
    %v5152 = vpop.f32.mrb[0].mxu0
    %v5153 = vpop.f32.mrb[0].mxu0
    %v5154 = vadd.f32 0.0, %v5153
    %v5155 = vpop.f32.mrb[0].mxu0
    %5156 = vmatprep.mubr.bf16.mxu0 0
    %5157 = vmatmul.mubr.bf16.gmra.mrb[0].mxu0 %v4936
    %v5158 = vpop.f32.mrb[0].mxu0
    %v5159 = vadd.f32 0.0, %v5158
    %v5160 = vpop.f32.mrb[0].mxu0
    %v5161 = vpop.f32.mrb[0].mxu0
    %v5162 = vadd.f32 0.0, %v5161
    %v5163 = vpop.f32.mrb[0].mxu0
    %5164 = vmatprep.mubr.bf16.mxu0 0
    %5165 = vmatmul.mubr.bf16.gmra.mrb[0].mxu0 %v4938
    %v5166 = vpop.f32.mrb[0].mxu0
    %v5167 = vadd.f32 0.0, %v5166
    %v5168 = vpop.f32.mrb[0].mxu0
    %v5169 = vpop.f32.mrb[0].mxu0
    %v5170 = vadd.f32 0.0, %v5169
    %v5171 = vpop.f32.mrb[0].mxu0
    %5172 = vmatprep.mubr.bf16.mxu0 0
    %5173 = vmatmul.mubr.bf16.gmra.mrb[0].mxu0 %v4940
    %v5174 = vpop.f32.mrb[0].mxu0
    %v5175 = vadd.f32 0.0, %v5174
    %v5176 = vpop.f32.mrb[0].mxu0
    %v5177 = vpop.f32.mrb[0].mxu0
    %v5178 = vadd.f32 0.0, %v5177
    %v5179 = vpop.f32.mrb[0].mxu0
    %5180 = vmatprep.mubr.bf16.mxu0 0
    %5181 = vmatmul.mubr.bf16.gmra.mrb[0].mxu0 %v4942
    %v5182 = vpop.f32.mrb[0].mxu0
    %v5183 = vadd.f32 0.0, %v5182
    %v5184 = vpop.f32.mrb[0].mxu0
    %v5185 = vpop.f32.mrb[0].mxu0
    %v5186 = vadd.f32 0.0, %v5185
    %v5187 = vpop.f32.mrb[0].mxu0
    %5188 = vmatprep.mubr.bf16.mxu0 0
    %5189 = vmatmul.mubr.bf16.gmra.mrb[0].mxu0 %v4944
    %v5190 = vpop.f32.mrb[0].mxu0
    %v5191 = vadd.f32 0.0, %v5190
    %v5192 = vpop.f32.mrb[0].mxu0
    %v5193 = vpop.f32.mrb[0].mxu0
    %v5194 = vadd.f32 0.0, %v5193
    %v5195 = vpop.f32.mrb[0].mxu0
    %5196 = vmatprep.mubr.bf16.mxu0 0
    %5197 = vmatmul.mubr.bf16.gmra.mrb[0].mxu0 %v4946
    %v5198 = vpop.f32.mrb[0].mxu0
    %v5199 = vadd.f32 0.0, %v5198
    %v5200 = vpop.f32.mrb[0].mxu0
    %v5201 = vpop.f32.mrb[0].mxu0
    %v5202 = vadd.f32 0.0, %v5201
    %v5203 = vpop.f32.mrb[0].mxu0
    %5204 = vmatprep.mubr.bf16.mxu0 0
    %5205 = vmatmul.mubr.bf16.gmra.mrb[0].mxu0 %v4948
    %v5206 = vpop.f32.mrb[0].mxu0
    %v5207 = vadd.f32 0.0, %v5206
    %v5208 = vpop.f32.mrb[0].mxu0
    %v5209 = vpop.f32.mrb[0].mxu0
    %v5210 = vadd.f32 0.0, %v5209
    %v5211 = vpop.f32.mrb[0].mxu0
    %5212 = vmatprep.mubr.bf16.mxu0 0
    %5213 = vmatmul.mubr.bf16.gmra.mrb[0].mxu0 %v4950
    %v5214 = vpop.f32.mrb[0].mxu0
    %v5215 = vadd.f32 0.0, %v5214
    %v5216 = vpop.f32.mrb[0].mxu0
    %v5217 = vpop.f32.mrb[0].mxu0
    %v5218 = vadd.f32 0.0, %v5217
    %v5219 = vpop.f32.mrb[0].mxu0
    %5220 = vmatprep.mubr.bf16.mxu0 0
    %5221 = vmatmul.mubr.bf16.gmra.mrb[0].mxu0 %v4952
    %v5222 = vpop.f32.mrb[0].mxu0
    %v5223 = vadd.f32 0.0, %v5222
    %v5224 = vpop.f32.mrb[0].mxu0
    %v5225 = vpop.f32.mrb[0].mxu0
    %v5226 = vadd.f32 0.0, %v5225
    %v5227 = vpop.f32.mrb[0].mxu0
    %5228 = vmatprep.mubr.bf16.mxu0 0
    %5229 = vmatmul.mubr.bf16.gmra.mrb[0].mxu0 %v4954
    %v5230 = vpop.f32.mrb[0].mxu0
    %v5231 = vadd.f32 0.0, %v5230
    %v5232 = vpop.f32.mrb[0].mxu0
    %v5233 = vpop.f32.mrb[0].mxu0
    %v5234 = vadd.f32 0.0, %v5233
    %v5235 = vpop.f32.mrb[0].mxu0
    %5236 = vmatprep.mubr.bf16.mxu0 0
    %5237 = vmatmul.mubr.bf16.gmra.mrb[0].mxu0 %v4956
    %v5238 = vpop.f32.mrb[0].mxu0
    %v5239 = vadd.f32 0.0, %v5238
    %v5240 = vpop.f32.mrb[0].mxu0
    %v5241 = vpop.f32.mrb[0].mxu0
    %v5242 = vadd.f32 0.0, %v5241
    %v5243 = vpop.f32.mrb[0].mxu0
    %5244 = vmatprep.mubr.bf16.mxu0 0
    %5245 = vmatmul.mubr.bf16.gmra.mrb[0].mxu0 %v4958
    %v5246 = vpop.f32.mrb[0].mxu0
    %v5247 = vadd.f32 0.0, %v5246
    %v5248 = vpop.f32.mrb[0].mxu0
    %v5249 = vpop.f32.mrb[0].mxu0
    %v5250 = vadd.f32 0.0, %v5249
    %v5251 = vpop.f32.mrb[0].mxu0
    %5252 = vdwg.mxu0
    %v5253 = vpack.c.bf16 %v5002, %v4999
    %v5254 = vpack.c.bf16 %v5010, %v5007
    %v5255 = vpack.c.bf16 %v5018, %v5015
    %v5256 = vpack.c.bf16 %v5026, %v5023
    %v5257 = vpack.c.bf16 %v5034, %v5031
    %v5258 = vpack.c.bf16 %v5042, %v5039
    %v5259 = vpack.c.bf16 %v5050, %v5047
    %v5260 = vpack.c.bf16 %v5058, %v5055
    %v5261 = vpack.c.bf16 %v5066, %v5063
    %v5262 = vpack.c.bf16 %v5074, %v5071
    %v5263 = vpack.c.bf16 %v5082, %v5079
    %v5264 = vpack.c.bf16 %v5090, %v5087
    %v5265 = vpack.c.bf16 %v5098, %v5095
    %v5266 = vpack.c.bf16 %v5106, %v5103
    %v5267 = vpack.c.bf16 %v5114, %v5111
    %v5268 = vpack.c.bf16 %v5122, %v5119
    %v5269 = vpack.c.bf16 %v5130, %v5127
    %v5270 = vpack.c.bf16 %v5138, %v5135
    %v5271 = vpack.c.bf16 %v5146, %v5143
    %v5272 = vpack.c.bf16 %v5154, %v5151
    %v5273 = vpack.c.bf16 %v5162, %v5159
    %v5274 = vpack.c.bf16 %v5170, %v5167
    %v5275 = vpack.c.bf16 %v5178, %v5175
    %v5276 = vpack.c.bf16 %v5186, %v5183
    %v5277 = vpack.c.bf16 %v5194, %v5191
    %v5278 = vpack.c.bf16 %v5202, %v5199
    %v5279 = vpack.c.bf16 %v5210, %v5207
    %v5280 = vpack.c.bf16 %v5218, %v5215
    %v5281 = vpack.c.bf16 %v5226, %v5223
    %v5282 = vpack.c.bf16 %v5234, %v5231
    %v5283 = vpack.c.bf16 %v5242, %v5239
    %v5284 = vpack.c.bf16 %v5250, %v5247
    %v5317 = vunpack.c.l.b16 %v5253
    %v5318 = vunpack.c.h.b16 %v5253
    %v5319 = vunpack.c.l.b16 %v5254
    %v5320 = vunpack.c.h.b16 %v5254
    %v5321 = vunpack.c.l.b16 %v5255
    %v5322 = vunpack.c.h.b16 %v5255
    %v5323 = vunpack.c.l.b16 %v5256
    %v5324 = vunpack.c.h.b16 %v5256
    %v5325 = vunpack.c.l.b16 %v5257
    %v5326 = vunpack.c.h.b16 %v5257
    %v5327 = vunpack.c.l.b16 %v5258
    %v5328 = vunpack.c.h.b16 %v5258
    %v5329 = vunpack.c.l.b16 %v5259
    %v5330 = vunpack.c.h.b16 %v5259
    %v5331 = vunpack.c.l.b16 %v5260
    %v5332 = vunpack.c.h.b16 %v5260
    %v5333 = vunpack.c.l.b16 %v5261
    %v5334 = vunpack.c.h.b16 %v5261
    %v5335 = vunpack.c.l.b16 %v5262
    %v5336 = vunpack.c.h.b16 %v5262
    %v5337 = vunpack.c.l.b16 %v5263
    %v5338 = vunpack.c.h.b16 %v5263
    %v5339 = vunpack.c.l.b16 %v5264
    %v5340 = vunpack.c.h.b16 %v5264
    %v5341 = vunpack.c.l.b16 %v5265
    %v5342 = vunpack.c.h.b16 %v5265
    %v5343 = vunpack.c.l.b16 %v5266
    %v5344 = vunpack.c.h.b16 %v5266
    %v5345 = vunpack.c.l.b16 %v5267
    %v5346 = vunpack.c.h.b16 %v5267
    %v5347 = vunpack.c.l.b16 %v5268
    %v5348 = vunpack.c.h.b16 %v5268
    %v5349 = vunpack.c.l.b16 %v5269
    %v5350 = vunpack.c.h.b16 %v5269
    %v5351 = vunpack.c.l.b16 %v5270
    %v5352 = vunpack.c.h.b16 %v5270
    %v5353 = vunpack.c.l.b16 %v5271
    %v5354 = vunpack.c.h.b16 %v5271
    %v5355 = vunpack.c.l.b16 %v5272
    %v5356 = vunpack.c.h.b16 %v5272
    %v5357 = vunpack.c.l.b16 %v5273
    %v5358 = vunpack.c.h.b16 %v5273
    %v5359 = vunpack.c.l.b16 %v5274
    %v5360 = vunpack.c.h.b16 %v5274
    %v5361 = vunpack.c.l.b16 %v5275
    %v5362 = vunpack.c.h.b16 %v5275
    %v5363 = vunpack.c.l.b16 %v5276
    %v5364 = vunpack.c.h.b16 %v5276
    %v5365 = vunpack.c.l.b16 %v5277
    %v5366 = vunpack.c.h.b16 %v5277
    %v5367 = vunpack.c.l.b16 %v5278
    %v5368 = vunpack.c.h.b16 %v5278
    %v5369 = vunpack.c.l.b16 %v5279
    %v5370 = vunpack.c.h.b16 %v5279
    %v5371 = vunpack.c.l.b16 %v5280
    %v5372 = vunpack.c.h.b16 %v5280
    %v5373 = vunpack.c.l.b16 %v5281
    %v5374 = vunpack.c.h.b16 %v5281
    %v5375 = vunpack.c.l.b16 %v5282
    %v5376 = vunpack.c.h.b16 %v5282
    %v5377 = vunpack.c.l.b16 %v5283
    %v5378 = vunpack.c.h.b16 %v5283
    %v5379 = vunpack.c.l.b16 %v5284
    %v5380 = vunpack.c.h.b16 %v5284
    %v5381 = vpack.c.b16 %v5317, %v5317
    %v5382 = vpack.c.b16 %v5318, %v5318
    %v5383 = vpack.c.b16 %v5319, %v5319
    %v5384 = vpack.c.b16 %v5320, %v5320
    %v5385 = vpack.c.b16 %v5321, %v5321
    %v5386 = vpack.c.b16 %v5322, %v5322
    %v5387 = vpack.c.b16 %v5323, %v5323
    %v5388 = vpack.c.b16 %v5324, %v5324
    %v5389 = vpack.c.b16 %v5325, %v5325
    %v5390 = vpack.c.b16 %v5326, %v5326
    %v5391 = vpack.c.b16 %v5327, %v5327
    %v5392 = vpack.c.b16 %v5328, %v5328
    %v5393 = vpack.c.b16 %v5329, %v5329
    %v5394 = vpack.c.b16 %v5330, %v5330
    %v5395 = vpack.c.b16 %v5331, %v5331
    %v5396 = vpack.c.b16 %v5332, %v5332
    %v5397 = vpack.c.b16 %v5333, %v5333
    %v5398 = vpack.c.b16 %v5334, %v5334
    %v5399 = vpack.c.b16 %v5335, %v5335
    %v5400 = vpack.c.b16 %v5336, %v5336
    %v5401 = vpack.c.b16 %v5337, %v5337
    %v5402 = vpack.c.b16 %v5338, %v5338
    %v5403 = vpack.c.b16 %v5339, %v5339
    %v5404 = vpack.c.b16 %v5340, %v5340
    %v5405 = vpack.c.b16 %v5341, %v5341
    %v5406 = vpack.c.b16 %v5342, %v5342
    %v5407 = vpack.c.b16 %v5343, %v5343
    %v5408 = vpack.c.b16 %v5344, %v5344
    %v5409 = vpack.c.b16 %v5345, %v5345
    %v5410 = vpack.c.b16 %v5346, %v5346
    %v5411 = vpack.c.b16 %v5347, %v5347
    %v5412 = vpack.c.b16 %v5348, %v5348
    %v5413 = vpack.c.b16 %v5349, %v5349
    %v5414 = vpack.c.b16 %v5350, %v5350
    %v5415 = vpack.c.b16 %v5351, %v5351
    %v5416 = vpack.c.b16 %v5352, %v5352
    %v5417 = vpack.c.b16 %v5353, %v5353
    %v5418 = vpack.c.b16 %v5354, %v5354
    %v5419 = vpack.c.b16 %v5355, %v5355
    %v5420 = vpack.c.b16 %v5356, %v5356
    %v5421 = vpack.c.b16 %v5357, %v5357
    %v5422 = vpack.c.b16 %v5358, %v5358
    %v5423 = vpack.c.b16 %v5359, %v5359
    %v5424 = vpack.c.b16 %v5360, %v5360
    %v5425 = vpack.c.b16 %v5361, %v5361
    %v5426 = vpack.c.b16 %v5362, %v5362
    %v5427 = vpack.c.b16 %v5363, %v5363
    %v5428 = vpack.c.b16 %v5364, %v5364
    %v5429 = vpack.c.b16 %v5365, %v5365
    %v5430 = vpack.c.b16 %v5366, %v5366
    %v5431 = vpack.c.b16 %v5367, %v5367
    %v5432 = vpack.c.b16 %v5368, %v5368
    %v5433 = vpack.c.b16 %v5369, %v5369
    %v5434 = vpack.c.b16 %v5370, %v5370
    %v5435 = vpack.c.b16 %v5371, %v5371
    %v5436 = vpack.c.b16 %v5372, %v5372
    %v5437 = vpack.c.b16 %v5373, %v5373
    %v5438 = vpack.c.b16 %v5374, %v5374
    %v5439 = vpack.c.b16 %v5375, %v5375
    %v5440 = vpack.c.b16 %v5376, %v5376
    %v5441 = vpack.c.b16 %v5377, %v5377
    %v5442 = vpack.c.b16 %v5378, %v5378
    %v5443 = vpack.c.b16 %v5379, %v5379
    %v5444 = vpack.c.b16 %v5380, %v5380
    %vm5509 = vcmask 60416
    %5510 = vst.msk [vmem:[#allocation8] sm:$0xf] %vm5509, %v5381
    %5511 = vst.msk [vmem:[#allocation8 + $0x4] sm:$0xf] %vm5509, %v5382
    %5512 = vst.msk [vmem:[#allocation8 + $0x8] sm:$0xf] %vm5509, %v5383
    %5513 = vst.msk [vmem:[#allocation8 + $0xc] sm:$0xf] %vm5509, %v5384
    %5514 = vst.msk [vmem:[#allocation8 + $0x10] sm:$0xf] %vm5509, %v5385
    %5515 = vst.msk [vmem:[#allocation8 + $0x14] sm:$0xf] %vm5509, %v5386
    %5516 = vst.msk [vmem:[#allocation8 + $0x18] sm:$0xf] %vm5509, %v5387
    %5517 = vst.msk [vmem:[#allocation8 + $0x1c] sm:$0xf] %vm5509, %v5388
    %5518 = vst.msk [vmem:[#allocation8 + $0x20] sm:$0xf] %vm5509, %v5389
    %5519 = vst.msk [vmem:[#allocation8 + $0x24] sm:$0xf] %vm5509, %v5390
    %5520 = vst.msk [vmem:[#allocation8 + $0x28] sm:$0xf] %vm5509, %v5391
    %5521 = vst.msk [vmem:[#allocation8 + $0x2c] sm:$0xf] %vm5509, %v5392
    %5522 = vst.msk [vmem:[#allocation8 + $0x30] sm:$0xf] %vm5509, %v5393
    %5523 = vst.msk [vmem:[#allocation8 + $0x34] sm:$0xf] %vm5509, %v5394
    %5524 = vst.msk [vmem:[#allocation8 + $0x38] sm:$0xf] %vm5509, %v5395
    %5525 = vst.msk [vmem:[#allocation8 + $0x3c] sm:$0xf] %vm5509, %v5396
    %5526 = vst.msk [vmem:[#allocation8 + $0x40] sm:$0xf] %vm5509, %v5397
    %5527 = vst.msk [vmem:[#allocation8 + $0x44] sm:$0xf] %vm5509, %v5398
    %5528 = vst.msk [vmem:[#allocation8 + $0x48] sm:$0xf] %vm5509, %v5399
    %5529 = vst.msk [vmem:[#allocation8 + $0x4c] sm:$0xf] %vm5509, %v5400
    %5530 = vst.msk [vmem:[#allocation8 + $0x50] sm:$0xf] %vm5509, %v5401
    %5531 = vst.msk [vmem:[#allocation8 + $0x54] sm:$0xf] %vm5509, %v5402
    %5532 = vst.msk [vmem:[#allocation8 + $0x58] sm:$0xf] %vm5509, %v5403
    %5533 = vst.msk [vmem:[#allocation8 + $0x5c] sm:$0xf] %vm5509, %v5404
    %5534 = vst.msk [vmem:[#allocation8 + $0x60] sm:$0xf] %vm5509, %v5405
    %5535 = vst.msk [vmem:[#allocation8 + $0x64] sm:$0xf] %vm5509, %v5406
    %5536 = vst.msk [vmem:[#allocation8 + $0x68] sm:$0xf] %vm5509, %v5407
    %5537 = vst.msk [vmem:[#allocation8 + $0x6c] sm:$0xf] %vm5509, %v5408
    %5538 = vst.msk [vmem:[#allocation8 + $0x70] sm:$0xf] %vm5509, %v5409
    %5539 = vst.msk [vmem:[#allocation8 + $0x74] sm:$0xf] %vm5509, %v5410
    %5540 = vst.msk [vmem:[#allocation8 + $0x78] sm:$0xf] %vm5509, %v5411
    %5541 = vst.msk [vmem:[#allocation8 + $0x7c] sm:$0xf] %vm5509, %v5412
    %5542 = vst.msk [vmem:[#allocation8 + $0x80] sm:$0xf] %vm5509, %v5413
    %5543 = vst.msk [vmem:[#allocation8 + $0x84] sm:$0xf] %vm5509, %v5414
    %5544 = vst.msk [vmem:[#allocation8 + $0x88] sm:$0xf] %vm5509, %v5415
    %5545 = vst.msk [vmem:[#allocation8 + $0x8c] sm:$0xf] %vm5509, %v5416
    %5546 = vst.msk [vmem:[#allocation8 + $0x90] sm:$0xf] %vm5509, %v5417
    %5547 = vst.msk [vmem:[#allocation8 + $0x94] sm:$0xf] %vm5509, %v5418
    %5548 = vst.msk [vmem:[#allocation8 + $0x98] sm:$0xf] %vm5509, %v5419
    %5549 = vst.msk [vmem:[#allocation8 + $0x9c] sm:$0xf] %vm5509, %v5420
    %5550 = vst.msk [vmem:[#allocation8 + $0xa0] sm:$0xf] %vm5509, %v5421
    %5551 = vst.msk [vmem:[#allocation8 + $0xa4] sm:$0xf] %vm5509, %v5422
    %5552 = vst.msk [vmem:[#allocation8 + $0xa8] sm:$0xf] %vm5509, %v5423
    %5553 = vst.msk [vmem:[#allocation8 + $0xac] sm:$0xf] %vm5509, %v5424
    %5554 = vst.msk [vmem:[#allocation8 + $0xb0] sm:$0xf] %vm5509, %v5425
    %5555 = vst.msk [vmem:[#allocation8 + $0xb4] sm:$0xf] %vm5509, %v5426
    %5556 = vst.msk [vmem:[#allocation8 + $0xb8] sm:$0xf] %vm5509, %v5427
    %5557 = vst.msk [vmem:[#allocation8 + $0xbc] sm:$0xf] %vm5509, %v5428
    %5558 = vst.msk [vmem:[#allocation8 + $0xc0] sm:$0xf] %vm5509, %v5429
    %5559 = vst.msk [vmem:[#allocation8 + $0xc4] sm:$0xf] %vm5509, %v5430
    %5560 = vst.msk [vmem:[#allocation8 + $0xc8] sm:$0xf] %vm5509, %v5431
    %5561 = vst.msk [vmem:[#allocation8 + $0xcc] sm:$0xf] %vm5509, %v5432
    %5562 = vst.msk [vmem:[#allocation8 + $0xd0] sm:$0xf] %vm5509, %v5433
    %5563 = vst.msk [vmem:[#allocation8 + $0xd4] sm:$0xf] %vm5509, %v5434
    %5564 = vst.msk [vmem:[#allocation8 + $0xd8] sm:$0xf] %vm5509, %v5435
    %5565 = vst.msk [vmem:[#allocation8 + $0xdc] sm:$0xf] %vm5509, %v5436
    %5566 = vst.msk [vmem:[#allocation8 + $0xe0] sm:$0xf] %vm5509, %v5437
    %5567 = vst.msk [vmem:[#allocation8 + $0xe4] sm:$0xf] %vm5509, %v5438
    %5568 = vst.msk [vmem:[#allocation8 + $0xe8] sm:$0xf] %vm5509, %v5439
    %5569 = vst.msk [vmem:[#allocation8 + $0xec] sm:$0xf] %vm5509, %v5440
    %5570 = vst.msk [vmem:[#allocation8 + $0xf0] sm:$0xf] %vm5509, %v5441
    %5571 = vst.msk [vmem:[#allocation8 + $0xf4] sm:$0xf] %vm5509, %v5442
    %5572 = vst.msk [vmem:[#allocation8 + $0xf8] sm:$0xf] %vm5509, %v5443
    %5573 = vst.msk [vmem:[#allocation8 + $0xfc] sm:$0xf] %vm5509, %v5444
    %5574 = vrot.lane.b32.xlu0 %v5381, 120
    %v5575 = vpop.permute.xlu0 %5574
    %5576 = vrot.lane.b32.xlu0 %v5382, 120
    %v5577 = vpop.permute.xlu0 %5576
    %5578 = vrot.lane.b32.xlu0 %v5383, 120
    %v5579 = vpop.permute.xlu0 %5578
    %5580 = vrot.lane.b32.xlu0 %v5384, 120
    %v5581 = vpop.permute.xlu0 %5580
    %5582 = vrot.lane.b32.xlu0 %v5385, 120
    %v5583 = vpop.permute.xlu0 %5582
    %5584 = vrot.lane.b32.xlu0 %v5386, 120
    %v5585 = vpop.permute.xlu0 %5584
    %5586 = vrot.lane.b32.xlu0 %v5387, 120
    %v5587 = vpop.permute.xlu0 %5586
    %5588 = vrot.lane.b32.xlu0 %v5388, 120
    %v5589 = vpop.permute.xlu0 %5588
    %5590 = vrot.lane.b32.xlu0 %v5389, 120
    %v5591 = vpop.permute.xlu0 %5590
    %5592 = vrot.lane.b32.xlu0 %v5390, 120
    %v5593 = vpop.permute.xlu0 %5592
    %5594 = vrot.lane.b32.xlu0 %v5391, 120
    %v5595 = vpop.permute.xlu0 %5594
    %5596 = vrot.lane.b32.xlu0 %v5392, 120
    %v5597 = vpop.permute.xlu0 %5596
    %5598 = vrot.lane.b32.xlu0 %v5393, 120
    %v5599 = vpop.permute.xlu0 %5598
    %5600 = vrot.lane.b32.xlu0 %v5394, 120
    %v5601 = vpop.permute.xlu0 %5600
    %5602 = vrot.lane.b32.xlu0 %v5395, 120
    %v5603 = vpop.permute.xlu0 %5602
    %5604 = vrot.lane.b32.xlu0 %v5396, 120
    %v5605 = vpop.permute.xlu0 %5604
    %5606 = vrot.lane.b32.xlu0 %v5397, 120
    %v5607 = vpop.permute.xlu0 %5606
    %5608 = vrot.lane.b32.xlu0 %v5398, 120
    %v5609 = vpop.permute.xlu0 %5608
    %5610 = vrot.lane.b32.xlu0 %v5399, 120
    %v5611 = vpop.permute.xlu0 %5610
    %5612 = vrot.lane.b32.xlu0 %v5400, 120
    %v5613 = vpop.permute.xlu0 %5612
    %5614 = vrot.lane.b32.xlu0 %v5401, 120
    %v5615 = vpop.permute.xlu0 %5614
    %5616 = vrot.lane.b32.xlu0 %v5402, 120
    %v5617 = vpop.permute.xlu0 %5616
    %5618 = vrot.lane.b32.xlu0 %v5403, 120
    %v5619 = vpop.permute.xlu0 %5618
    %5620 = vrot.lane.b32.xlu0 %v5404, 120
    %v5621 = vpop.permute.xlu0 %5620
    %5622 = vrot.lane.b32.xlu0 %v5405, 120
    %v5623 = vpop.permute.xlu0 %5622
    %5624 = vrot.lane.b32.xlu0 %v5406, 120
    %v5625 = vpop.permute.xlu0 %5624
    %5626 = vrot.lane.b32.xlu0 %v5407, 120
    %v5627 = vpop.permute.xlu0 %5626
    %5628 = vrot.lane.b32.xlu0 %v5408, 120
    %v5629 = vpop.permute.xlu0 %5628
    %5630 = vrot.lane.b32.xlu0 %v5409, 120
    %v5631 = vpop.permute.xlu0 %5630
    %5632 = vrot.lane.b32.xlu0 %v5410, 120
    %v5633 = vpop.permute.xlu0 %5632
    %5634 = vrot.lane.b32.xlu0 %v5411, 120
    %v5635 = vpop.permute.xlu0 %5634
    %5636 = vrot.lane.b32.xlu0 %v5412, 120
    %v5637 = vpop.permute.xlu0 %5636
    %5638 = vrot.lane.b32.xlu0 %v5413, 120
    %v5639 = vpop.permute.xlu0 %5638
    %5640 = vrot.lane.b32.xlu0 %v5414, 120
    %v5641 = vpop.permute.xlu0 %5640
    %5642 = vrot.lane.b32.xlu0 %v5415, 120
    %v5643 = vpop.permute.xlu0 %5642
    %5644 = vrot.lane.b32.xlu0 %v5416, 120
    %v5645 = vpop.permute.xlu0 %5644
    %5646 = vrot.lane.b32.xlu0 %v5417, 120
    %v5647 = vpop.permute.xlu0 %5646
    %5648 = vrot.lane.b32.xlu0 %v5418, 120
    %v5649 = vpop.permute.xlu0 %5648
    %5650 = vrot.lane.b32.xlu0 %v5419, 120
    %v5651 = vpop.permute.xlu0 %5650
    %5652 = vrot.lane.b32.xlu0 %v5420, 120
    %v5653 = vpop.permute.xlu0 %5652
    %5654 = vrot.lane.b32.xlu0 %v5421, 120
    %v5655 = vpop.permute.xlu0 %5654
    %5656 = vrot.lane.b32.xlu0 %v5422, 120
    %v5657 = vpop.permute.xlu0 %5656
    %5658 = vrot.lane.b32.xlu0 %v5423, 120
    %v5659 = vpop.permute.xlu0 %5658
    %5660 = vrot.lane.b32.xlu0 %v5424, 120
    %v5661 = vpop.permute.xlu0 %5660
    %5662 = vrot.lane.b32.xlu0 %v5425, 120
    %v5663 = vpop.permute.xlu0 %5662
    %5664 = vrot.lane.b32.xlu0 %v5426, 120
    %v5665 = vpop.permute.xlu0 %5664
    %5666 = vrot.lane.b32.xlu0 %v5427, 120
    %v5667 = vpop.permute.xlu0 %5666
    %5668 = vrot.lane.b32.xlu0 %v5428, 120
    %v5669 = vpop.permute.xlu0 %5668
    %5670 = vrot.lane.b32.xlu0 %v5429, 120
    %v5671 = vpop.permute.xlu0 %5670
    %5672 = vrot.lane.b32.xlu0 %v5430, 120
    %v5673 = vpop.permute.xlu0 %5672
    %5674 = vrot.lane.b32.xlu0 %v5431, 120
    %v5675 = vpop.permute.xlu0 %5674
    %5676 = vrot.lane.b32.xlu0 %v5432, 120
    %v5677 = vpop.permute.xlu0 %5676
    %5678 = vrot.lane.b32.xlu0 %v5433, 120
    %v5679 = vpop.permute.xlu0 %5678
    %5680 = vrot.lane.b32.xlu0 %v5434, 120
    %v5681 = vpop.permute.xlu0 %5680
    %5682 = vrot.lane.b32.xlu0 %v5435, 120
    %v5683 = vpop.permute.xlu0 %5682
    %5684 = vrot.lane.b32.xlu0 %v5436, 120
    %v5685 = vpop.permute.xlu0 %5684
    %5686 = vrot.lane.b32.xlu0 %v5437, 120
    %v5687 = vpop.permute.xlu0 %5686
    %5688 = vrot.lane.b32.xlu0 %v5438, 120
    %v5689 = vpop.permute.xlu0 %5688
    %5690 = vrot.lane.b32.xlu0 %v5439, 120
    %v5691 = vpop.permute.xlu0 %5690
    %5692 = vrot.lane.b32.xlu0 %v5440, 120
    %v5693 = vpop.permute.xlu0 %5692
    %5694 = vrot.lane.b32.xlu0 %v5441, 120
    %v5695 = vpop.permute.xlu0 %5694
    %5696 = vrot.lane.b32.xlu0 %v5442, 120
    %v5697 = vpop.permute.xlu0 %5696
    %5698 = vrot.lane.b32.xlu0 %v5443, 120
    %v5699 = vpop.permute.xlu0 %5698
    %5700 = vrot.lane.b32.xlu0 %v5444, 120
    %v5701 = vpop.permute.xlu0 %5700
    %5766 = vst.msk [vmem:[#allocation9] sm:$0xf] %vm5509, %v5575
    %5767 = vst.msk [vmem:[#allocation9 + $0x4] sm:$0xf] %vm5509, %v5577
    %5768 = vst.msk [vmem:[#allocation9 + $0x8] sm:$0xf] %vm5509, %v5579
    %5769 = vst.msk [vmem:[#allocation9 + $0xc] sm:$0xf] %vm5509, %v5581
    %5770 = vst.msk [vmem:[#allocation9 + $0x10] sm:$0xf] %vm5509, %v5583
    %5771 = vst.msk [vmem:[#allocation9 + $0x14] sm:$0xf] %vm5509, %v5585
    %5772 = vst.msk [vmem:[#allocation9 + $0x18] sm:$0xf] %vm5509, %v5587
    %5773 = vst.msk [vmem:[#allocation9 + $0x1c] sm:$0xf] %vm5509, %v5589
    %5774 = vst.msk [vmem:[#allocation9 + $0x20] sm:$0xf] %vm5509, %v5591
    %5775 = vst.msk [vmem:[#allocation9 + $0x24] sm:$0xf] %vm5509, %v5593
    %5776 = vst.msk [vmem:[#allocation9 + $0x28] sm:$0xf] %vm5509, %v5595
    %5777 = vst.msk [vmem:[#allocation9 + $0x2c] sm:$0xf] %vm5509, %v5597
    %5778 = vst.msk [vmem:[#allocation9 + $0x30] sm:$0xf] %vm5509, %v5599
    %5779 = vst.msk [vmem:[#allocation9 + $0x34] sm:$0xf] %vm5509, %v5601
    %5780 = vst.msk [vmem:[#allocation9 + $0x38] sm:$0xf] %vm5509, %v5603
    %5781 = vst.msk [vmem:[#allocation9 + $0x3c] sm:$0xf] %vm5509, %v5605
    %5782 = vst.msk [vmem:[#allocation9 + $0x40] sm:$0xf] %vm5509, %v5607
    %5783 = vst.msk [vmem:[#allocation9 + $0x44] sm:$0xf] %vm5509, %v5609
    %5784 = vst.msk [vmem:[#allocation9 + $0x48] sm:$0xf] %vm5509, %v5611
    %5785 = vst.msk [vmem:[#allocation9 + $0x4c] sm:$0xf] %vm5509, %v5613
    %5786 = vst.msk [vmem:[#allocation9 + $0x50] sm:$0xf] %vm5509, %v5615
    %5787 = vst.msk [vmem:[#allocation9 + $0x54] sm:$0xf] %vm5509, %v5617
    %5788 = vst.msk [vmem:[#allocation9 + $0x58] sm:$0xf] %vm5509, %v5619
    %5789 = vst.msk [vmem:[#allocation9 + $0x5c] sm:$0xf] %vm5509, %v5621
    %5790 = vst.msk [vmem:[#allocation9 + $0x60] sm:$0xf] %vm5509, %v5623
    %5791 = vst.msk [vmem:[#allocation9 + $0x64] sm:$0xf] %vm5509, %v5625
    %5792 = vst.msk [vmem:[#allocation9 + $0x68] sm:$0xf] %vm5509, %v5627
    %5793 = vst.msk [vmem:[#allocation9 + $0x6c] sm:$0xf] %vm5509, %v5629
    %5794 = vst.msk [vmem:[#allocation9 + $0x70] sm:$0xf] %vm5509, %v5631
    %5795 = vst.msk [vmem:[#allocation9 + $0x74] sm:$0xf] %vm5509, %v5633
    %5796 = vst.msk [vmem:[#allocation9 + $0x78] sm:$0xf] %vm5509, %v5635
    %5797 = vst.msk [vmem:[#allocation9 + $0x7c] sm:$0xf] %vm5509, %v5637
    %5798 = vst.msk [vmem:[#allocation9 + $0x80] sm:$0xf] %vm5509, %v5639
    %5799 = vst.msk [vmem:[#allocation9 + $0x84] sm:$0xf] %vm5509, %v5641
    %5800 = vst.msk [vmem:[#allocation9 + $0x88] sm:$0xf] %vm5509, %v5643
    %5801 = vst.msk [vmem:[#allocation9 + $0x8c] sm:$0xf] %vm5509, %v5645
    %5802 = vst.msk [vmem:[#allocation9 + $0x90] sm:$0xf] %vm5509, %v5647
    %5803 = vst.msk [vmem:[#allocation9 + $0x94] sm:$0xf] %vm5509, %v5649
    %5804 = vst.msk [vmem:[#allocation9 + $0x98] sm:$0xf] %vm5509, %v5651
    %5805 = vst.msk [vmem:[#allocation9 + $0x9c] sm:$0xf] %vm5509, %v5653
    %5806 = vst.msk [vmem:[#allocation9 + $0xa0] sm:$0xf] %vm5509, %v5655
    %5807 = vst.msk [vmem:[#allocation9 + $0xa4] sm:$0xf] %vm5509, %v5657
    %5808 = vst.msk [vmem:[#allocation9 + $0xa8] sm:$0xf] %vm5509, %v5659
    %5809 = vst.msk [vmem:[#allocation9 + $0xac] sm:$0xf] %vm5509, %v5661
    %5810 = vst.msk [vmem:[#allocation9 + $0xb0] sm:$0xf] %vm5509, %v5663
    %5811 = vst.msk [vmem:[#allocation9 + $0xb4] sm:$0xf] %vm5509, %v5665
    %5812 = vst.msk [vmem:[#allocation9 + $0xb8] sm:$0xf] %vm5509, %v5667
    %5813 = vst.msk [vmem:[#allocation9 + $0xbc] sm:$0xf] %vm5509, %v5669
    %5814 = vst.msk [vmem:[#allocation9 + $0xc0] sm:$0xf] %vm5509, %v5671
    %5815 = vst.msk [vmem:[#allocation9 + $0xc4] sm:$0xf] %vm5509, %v5673
    %5816 = vst.msk [vmem:[#allocation9 + $0xc8] sm:$0xf] %vm5509, %v5675
    %5817 = vst.msk [vmem:[#allocation9 + $0xcc] sm:$0xf] %vm5509, %v5677
    %5818 = vst.msk [vmem:[#allocation9 + $0xd0] sm:$0xf] %vm5509, %v5679
    %5819 = vst.msk [vmem:[#allocation9 + $0xd4] sm:$0xf] %vm5509, %v5681
    %5820 = vst.msk [vmem:[#allocation9 + $0xd8] sm:$0xf] %vm5509, %v5683
    %5821 = vst.msk [vmem:[#allocation9 + $0xdc] sm:$0xf] %vm5509, %v5685
    %5822 = vst.msk [vmem:[#allocation9 + $0xe0] sm:$0xf] %vm5509, %v5687
    %5823 = vst.msk [vmem:[#allocation9 + $0xe4] sm:$0xf] %vm5509, %v5689
    %5824 = vst.msk [vmem:[#allocation9 + $0xe8] sm:$0xf] %vm5509, %v5691
    %5825 = vst.msk [vmem:[#allocation9 + $0xec] sm:$0xf] %vm5509, %v5693
    %5826 = vst.msk [vmem:[#allocation9 + $0xf0] sm:$0xf] %vm5509, %v5695
    %5827 = vst.msk [vmem:[#allocation9 + $0xf4] sm:$0xf] %vm5509, %v5697
    %5828 = vst.msk [vmem:[#allocation9 + $0xf8] sm:$0xf] %vm5509, %v5699
    %5829 = vst.msk [vmem:[#allocation9 + $0xfc] sm:$0xf] %vm5509, %v5701
    %5830 = vmatprep.subr.mxu0 0.0
    %5831 = vmatpush1.msra.mxu0 %v4999
    %5832 = vmatprep.subr.mxu0 0.0
    %5833 = vmatpush1.msra.mxu0 %v5002
    %5834 = vmatprep.subr.mxu0 0.0
    %5835 = vmatpush1.msra.mxu0 %v5007
    %5836 = vmatprep.subr.mxu0 0.0
    %5837 = vmatpush1.msra.mxu0 %v5010
    %5838 = vmatprep.subr.mxu0 0.0
    %5839 = vmatpush1.msra.mxu0 %v5015
    %5840 = vmatprep.subr.mxu0 0.0
    %5841 = vmatpush1.msra.mxu0 %v5018
    %5842 = vmatprep.subr.mxu0 0.0
    %5843 = vmatpush1.msra.mxu0 %v5023
    %5844 = vmatprep.subr.mxu0 0.0
    %5845 = vmatpush1.msra.mxu0 %v5026
    %5846 = vmatprep.subr.mxu0 0.0
    %5847 = vmatpush1.msra.mxu0 %v5031
    %5848 = vmatprep.subr.mxu0 0.0
    %5849 = vmatpush1.msra.mxu0 %v5034
    %5850 = vmatprep.subr.mxu0 0.0
    %5851 = vmatpush1.msra.mxu0 %v5039
    %5852 = vmatprep.subr.mxu0 0.0
    %5853 = vmatpush1.msra.mxu0 %v5042
    %5854 = vmatprep.subr.mxu0 0.0
    %5855 = vmatpush1.msra.mxu0 %v5047
    %5856 = vmatprep.subr.mxu0 0.0
    %5857 = vmatpush1.msra.mxu0 %v5050
    %5858 = vmatprep.subr.mxu0 0.0
    %5859 = vmatpush1.msra.mxu0 %v5055
    %5860 = vmatprep.subr.mxu0 0.0
    %5861 = vmatpush1.msra.mxu0 %v5058
    %5862 = vmatprep.subr.mxu0 0.0
    %5863 = vmatpush1.msra.mxu0 %v5063
    %5864 = vmatprep.subr.mxu0 0.0
    %5865 = vmatpush1.msra.mxu0 %v5066
    %5866 = vmatprep.subr.mxu0 0.0
    %5867 = vmatpush1.msra.mxu0 %v5071
    %5868 = vmatprep.subr.mxu0 0.0
    %5869 = vmatpush1.msra.mxu0 %v5074
    %5870 = vmatprep.subr.mxu0 0.0
    %5871 = vmatpush1.msra.mxu0 %v5079
    %5872 = vmatprep.subr.mxu0 0.0
    %5873 = vmatpush1.msra.mxu0 %v5082
    %5874 = vmatprep.subr.mxu0 0.0
    %5875 = vmatpush1.msra.mxu0 %v5087
    %5876 = vmatprep.subr.mxu0 0.0
    %5877 = vmatpush1.msra.mxu0 %v5090
    %5878 = vmatprep.subr.mxu0 0.0
    %5879 = vmatpush1.msra.mxu0 %v5095
    %5880 = vmatprep.subr.mxu0 0.0
    %5881 = vmatpush1.msra.mxu0 %v5098
    %5882 = vmatprep.subr.mxu0 0.0
    %5883 = vmatpush1.msra.mxu0 %v5103
    %5884 = vmatprep.subr.mxu0 0.0
    %5885 = vmatpush1.msra.mxu0 %v5106
    %5886 = vmatprep.subr.mxu0 0.0
    %5887 = vmatpush1.msra.mxu0 %v5111
    %5888 = vmatprep.subr.mxu0 0.0
    %5889 = vmatpush1.msra.mxu0 %v5114
    %5890 = vmatprep.subr.mxu0 0.0
    %5891 = vmatpush1.msra.mxu0 %v5119
    %5892 = vmatprep.subr.mxu0 0.0
    %5893 = vmatpush1.msra.mxu0 %v5122
    %5894 = vmatprep.mubr.f32.mxu0 1.0
    %5895 = vmatmul.mubr.f32.gmra.mrb[0].mxu0 1.0
    %v5896 = vpop.f32.mrb[0].mxu0
    %v5897 = vadd.f32 0.0, %v5896
    %v5898 = vpop.f32.mrb[0].mxu0
    %5899 = vdwg.mxu0
    %5900 = vmatprep.subr.mxu0 0.0
    %5901 = vmatpush1.msra.mxu0 %v5127
    %5902 = vmatprep.subr.mxu0 0.0
    %5903 = vmatpush1.msra.mxu0 %v5130
    %5904 = vmatprep.subr.mxu0 0.0
    %5905 = vmatpush1.msra.mxu0 %v5135
    %5906 = vmatprep.subr.mxu0 0.0
    %5907 = vmatpush1.msra.mxu0 %v5138
    %5908 = vmatprep.subr.mxu0 0.0
    %5909 = vmatpush1.msra.mxu0 %v5143
    %5910 = vmatprep.subr.mxu0 0.0
    %5911 = vmatpush1.msra.mxu0 %v5146
    %5912 = vmatprep.subr.mxu0 0.0
    %5913 = vmatpush1.msra.mxu0 %v5151
    %5914 = vmatprep.subr.mxu0 0.0
    %5915 = vmatpush1.msra.mxu0 %v5154
    %5916 = vmatprep.subr.mxu0 0.0
    %5917 = vmatpush1.msra.mxu0 %v5159
    %5918 = vmatprep.subr.mxu0 0.0
    %5919 = vmatpush1.msra.mxu0 %v5162
    %5920 = vmatprep.subr.mxu0 0.0
    %5921 = vmatpush1.msra.mxu0 %v5167
    %5922 = vmatprep.subr.mxu0 0.0
    %5923 = vmatpush1.msra.mxu0 %v5170
    %5924 = vmatprep.subr.mxu0 0.0
    %5925 = vmatpush1.msra.mxu0 %v5175
    %5926 = vmatprep.subr.mxu0 0.0
    %5927 = vmatpush1.msra.mxu0 %v5178
    %5928 = vmatprep.subr.mxu0 0.0
    %5929 = vmatpush1.msra.mxu0 %v5183
    %5930 = vmatprep.subr.mxu0 0.0
    %5931 = vmatpush1.msra.mxu0 %v5186
    %5932 = vmatprep.subr.mxu0 0.0
    %5933 = vmatpush1.msra.mxu0 %v5191
    %5934 = vmatprep.subr.mxu0 0.0
    %5935 = vmatpush1.msra.mxu0 %v5194
    %5936 = vmatprep.subr.mxu0 0.0
    %5937 = vmatpush1.msra.mxu0 %v5199
    %5938 = vmatprep.subr.mxu0 0.0
    %5939 = vmatpush1.msra.mxu0 %v5202
    %5940 = vmatprep.subr.mxu0 0.0
    %5941 = vmatpush1.msra.mxu0 %v5207
    %5942 = vmatprep.subr.mxu0 0.0
    %5943 = vmatpush1.msra.mxu0 %v5210
    %5944 = vmatprep.subr.mxu0 0.0
    %5945 = vmatpush1.msra.mxu0 %v5215
    %5946 = vmatprep.subr.mxu0 0.0
    %5947 = vmatpush1.msra.mxu0 %v5218
    %5948 = vmatprep.subr.mxu0 0.0
    %5949 = vmatpush1.msra.mxu0 %v5223
    %5950 = vmatprep.subr.mxu0 0.0
    %5951 = vmatpush1.msra.mxu0 %v5226
    %5952 = vmatprep.subr.mxu0 0.0
    %5953 = vmatpush1.msra.mxu0 %v5231
    %5954 = vmatprep.subr.mxu0 0.0
    %5955 = vmatpush1.msra.mxu0 %v5234
    %5956 = vmatprep.subr.mxu0 0.0
    %5957 = vmatpush1.msra.mxu0 %v5239
    %5958 = vmatprep.subr.mxu0 0.0
    %5959 = vmatpush1.msra.mxu0 %v5242
    %5960 = vmatprep.subr.mxu0 0.0
    %5961 = vmatpush1.msra.mxu0 %v5247
    %5962 = vmatprep.subr.mxu0 0.0
    %5963 = vmatpush1.msra.mxu0 %v5250
    %5964 = vmatprep.mubr.f32.mxu0 1.0
    %5965 = vmatmul.mubr.f32.gmra.mrb[0].mxu0 1.0
    %v5966 = vpop.f32.mrb[0].mxu0
    %v5967 = vadd.f32 %v5897, %v5966
    %v5968 = vpop.f32.mrb[0].mxu0
    %5969 = vdwg.mxu0
    %v5970 = vmul.f32 %v4999, %v4999
    %v5971 = vmul.f32 %v5002, %v5002
    %v5972 = vmul.f32 %v5007, %v5007
    %v5973 = vmul.f32 %v5010, %v5010
    %v5974 = vmul.f32 %v5015, %v5015
    %v5975 = vmul.f32 %v5018, %v5018
    %v5976 = vmul.f32 %v5023, %v5023
    %v5977 = vmul.f32 %v5026, %v5026
    %v5978 = vmul.f32 %v5031, %v5031
    %v5979 = vmul.f32 %v5034, %v5034
    %v5980 = vmul.f32 %v5039, %v5039
    %v5981 = vmul.f32 %v5042, %v5042
    %v5982 = vmul.f32 %v5047, %v5047
    %v5983 = vmul.f32 %v5050, %v5050
    %v5984 = vmul.f32 %v5055, %v5055
    %v5985 = vmul.f32 %v5058, %v5058
    %v5986 = vmul.f32 %v5063, %v5063
    %v5987 = vmul.f32 %v5066, %v5066
    %v5988 = vmul.f32 %v5071, %v5071
    %v5989 = vmul.f32 %v5074, %v5074
    %v5990 = vmul.f32 %v5079, %v5079
    %v5991 = vmul.f32 %v5082, %v5082
    %v5992 = vmul.f32 %v5087, %v5087
    %v5993 = vmul.f32 %v5090, %v5090
    %v5994 = vmul.f32 %v5095, %v5095
    %v5995 = vmul.f32 %v5098, %v5098
    %v5996 = vmul.f32 %v5103, %v5103
    %v5997 = vmul.f32 %v5106, %v5106
    %v5998 = vmul.f32 %v5111, %v5111
    %v5999 = vmul.f32 %v5114, %v5114
    %v6000 = vmul.f32 %v5119, %v5119
    %v6001 = vmul.f32 %v5122, %v5122
    %v6002 = vmul.f32 %v5127, %v5127
    %v6003 = vmul.f32 %v5130, %v5130
    %v6004 = vmul.f32 %v5135, %v5135
    %v6005 = vmul.f32 %v5138, %v5138
    %v6006 = vmul.f32 %v5143, %v5143
    %v6007 = vmul.f32 %v5146, %v5146
    %v6008 = vmul.f32 %v5151, %v5151
    %v6009 = vmul.f32 %v5154, %v5154
    %v6010 = vmul.f32 %v5159, %v5159
    %v6011 = vmul.f32 %v5162, %v5162
    %v6012 = vmul.f32 %v5167, %v5167
    %v6013 = vmul.f32 %v5170, %v5170
    %v6014 = vmul.f32 %v5175, %v5175
    %v6015 = vmul.f32 %v5178, %v5178
    %v6016 = vmul.f32 %v5183, %v5183
    %v6017 = vmul.f32 %v5186, %v5186
    %v6018 = vmul.f32 %v5191, %v5191
    %v6019 = vmul.f32 %v5194, %v5194
    %v6020 = vmul.f32 %v5199, %v5199
    %v6021 = vmul.f32 %v5202, %v5202
    %v6022 = vmul.f32 %v5207, %v5207
    %v6023 = vmul.f32 %v5210, %v5210
    %v6024 = vmul.f32 %v5215, %v5215
    %v6025 = vmul.f32 %v5218, %v5218
    %v6026 = vmul.f32 %v5223, %v5223
    %v6027 = vmul.f32 %v5226, %v5226
    %v6028 = vmul.f32 %v5231, %v5231
    %v6029 = vmul.f32 %v5234, %v5234
    %v6030 = vmul.f32 %v5239, %v5239
    %v6031 = vmul.f32 %v5242, %v5242
    %v6032 = vmul.f32 %v5247, %v5247
    %v6033 = vmul.f32 %v5250, %v5250
    %6034 = vmatprep.subr.mxu0 0.0
    %6035 = vmatpush1.msra.mxu0 %v5970
    %6036 = vmatprep.subr.mxu0 0.0
    %6037 = vmatpush1.msra.mxu0 %v5971
    %6038 = vmatprep.subr.mxu0 0.0
    %6039 = vmatpush1.msra.mxu0 %v5972
    %6040 = vmatprep.subr.mxu0 0.0
    %6041 = vmatpush1.msra.mxu0 %v5973
    %6042 = vmatprep.subr.mxu0 0.0
    %6043 = vmatpush1.msra.mxu0 %v5974
    %6044 = vmatprep.subr.mxu0 0.0
    %6045 = vmatpush1.msra.mxu0 %v5975
    %6046 = vmatprep.subr.mxu0 0.0
    %6047 = vmatpush1.msra.mxu0 %v5976
    %6048 = vmatprep.subr.mxu0 0.0
    %6049 = vmatpush1.msra.mxu0 %v5977
    %6050 = vmatprep.subr.mxu0 0.0
    %6051 = vmatpush1.msra.mxu0 %v5978
    %6052 = vmatprep.subr.mxu0 0.0
    %6053 = vmatpush1.msra.mxu0 %v5979
    %6054 = vmatprep.subr.mxu0 0.0
    %6055 = vmatpush1.msra.mxu0 %v5980
    %6056 = vmatprep.subr.mxu0 0.0
    %6057 = vmatpush1.msra.mxu0 %v5981
    %6058 = vmatprep.subr.mxu0 0.0
    %6059 = vmatpush1.msra.mxu0 %v5982
    %6060 = vmatprep.subr.mxu0 0.0
    %6061 = vmatpush1.msra.mxu0 %v5983
    %6062 = vmatprep.subr.mxu0 0.0
    %6063 = vmatpush1.msra.mxu0 %v5984
    %6064 = vmatprep.subr.mxu0 0.0
    %6065 = vmatpush1.msra.mxu0 %v5985
    %6066 = vmatprep.subr.mxu0 0.0
    %6067 = vmatpush1.msra.mxu0 %v5986
    %6068 = vmatprep.subr.mxu0 0.0
    %6069 = vmatpush1.msra.mxu0 %v5987
    %6070 = vmatprep.subr.mxu0 0.0
    %6071 = vmatpush1.msra.mxu0 %v5988
    %6072 = vmatprep.subr.mxu0 0.0
    %6073 = vmatpush1.msra.mxu0 %v5989
    %6074 = vmatprep.subr.mxu0 0.0
    %6075 = vmatpush1.msra.mxu0 %v5990
    %6076 = vmatprep.subr.mxu0 0.0
    %6077 = vmatpush1.msra.mxu0 %v5991
    %6078 = vmatprep.subr.mxu0 0.0
    %6079 = vmatpush1.msra.mxu0 %v5992
    %6080 = vmatprep.subr.mxu0 0.0
    %6081 = vmatpush1.msra.mxu0 %v5993
    %6082 = vmatprep.subr.mxu0 0.0
    %6083 = vmatpush1.msra.mxu0 %v5994
    %6084 = vmatprep.subr.mxu0 0.0
    %6085 = vmatpush1.msra.mxu0 %v5995
    %6086 = vmatprep.subr.mxu0 0.0
    %6087 = vmatpush1.msra.mxu0 %v5996
    %6088 = vmatprep.subr.mxu0 0.0
    %6089 = vmatpush1.msra.mxu0 %v5997
    %6090 = vmatprep.subr.mxu0 0.0
    %6091 = vmatpush1.msra.mxu0 %v5998
    %6092 = vmatprep.subr.mxu0 0.0
    %6093 = vmatpush1.msra.mxu0 %v5999
    %6094 = vmatprep.subr.mxu0 0.0
    %6095 = vmatpush1.msra.mxu0 %v6000
    %6096 = vmatprep.subr.mxu0 0.0
    %6097 = vmatpush1.msra.mxu0 %v6001
    %6098 = vmatprep.mubr.f32.mxu0 1.0
    %6099 = vmatmul.mubr.f32.gmra.mrb[0].mxu0 1.0
    %v6100 = vpop.f32.mrb[0].mxu0
    %v6101 = vadd.f32 0.0, %v6100
    %v6102 = vpop.f32.mrb[0].mxu0
    %6103 = vdwg.mxu0
    %6104 = vmatprep.subr.mxu0 0.0
    %6105 = vmatpush1.msra.mxu0 %v6002
    %6106 = vmatprep.subr.mxu0 0.0
    %6107 = vmatpush1.msra.mxu0 %v6003
    %6108 = vmatprep.subr.mxu0 0.0
    %6109 = vmatpush1.msra.mxu0 %v6004
    %6110 = vmatprep.subr.mxu0 0.0
    %6111 = vmatpush1.msra.mxu0 %v6005
    %6112 = vmatprep.subr.mxu0 0.0
    %6113 = vmatpush1.msra.mxu0 %v6006
    %6114 = vmatprep.subr.mxu0 0.0
    %6115 = vmatpush1.msra.mxu0 %v6007
    %6116 = vmatprep.subr.mxu0 0.0
    %6117 = vmatpush1.msra.mxu0 %v6008
    %6118 = vmatprep.subr.mxu0 0.0
    %6119 = vmatpush1.msra.mxu0 %v6009
    %6120 = vmatprep.subr.mxu0 0.0
    %6121 = vmatpush1.msra.mxu0 %v6010
    %6122 = vmatprep.subr.mxu0 0.0
    %6123 = vmatpush1.msra.mxu0 %v6011
    %6124 = vmatprep.subr.mxu0 0.0
    %6125 = vmatpush1.msra.mxu0 %v6012
    %6126 = vmatprep.subr.mxu0 0.0
    %6127 = vmatpush1.msra.mxu0 %v6013
    %6128 = vmatprep.subr.mxu0 0.0
    %6129 = vmatpush1.msra.mxu0 %v6014
    %6130 = vmatprep.subr.mxu0 0.0
    %6131 = vmatpush1.msra.mxu0 %v6015
    %6132 = vmatprep.subr.mxu0 0.0
    %6133 = vmatpush1.msra.mxu0 %v6016
    %6134 = vmatprep.subr.mxu0 0.0
    %6135 = vmatpush1.msra.mxu0 %v6017
    %6136 = vmatprep.subr.mxu0 0.0
    %6137 = vmatpush1.msra.mxu0 %v6018
    %6138 = vmatprep.subr.mxu0 0.0
    %6139 = vmatpush1.msra.mxu0 %v6019
    %6140 = vmatprep.subr.mxu0 0.0
    %6141 = vmatpush1.msra.mxu0 %v6020
    %6142 = vmatprep.subr.mxu0 0.0
    %6143 = vmatpush1.msra.mxu0 %v6021
    %6144 = vmatprep.subr.mxu0 0.0
    %6145 = vmatpush1.msra.mxu0 %v6022
    %6146 = vmatprep.subr.mxu0 0.0
    %6147 = vmatpush1.msra.mxu0 %v6023
    %6148 = vmatprep.subr.mxu0 0.0
    %6149 = vmatpush1.msra.mxu0 %v6024
    %6150 = vmatprep.subr.mxu0 0.0
    %6151 = vmatpush1.msra.mxu0 %v6025
    %6152 = vmatprep.subr.mxu0 0.0
    %6153 = vmatpush1.msra.mxu0 %v6026
    %6154 = vmatprep.subr.mxu0 0.0
    %6155 = vmatpush1.msra.mxu0 %v6027
    %6156 = vmatprep.subr.mxu0 0.0
    %6157 = vmatpush1.msra.mxu0 %v6028
    %6158 = vmatprep.subr.mxu0 0.0
    %6159 = vmatpush1.msra.mxu0 %v6029
    %6160 = vmatprep.subr.mxu0 0.0
    %6161 = vmatpush1.msra.mxu0 %v6030
    %6162 = vmatprep.subr.mxu0 0.0
    %6163 = vmatpush1.msra.mxu0 %v6031
    %6164 = vmatprep.subr.mxu0 0.0
    %6165 = vmatpush1.msra.mxu0 %v6032
    %6166 = vmatprep.subr.mxu0 0.0
    %6167 = vmatpush1.msra.mxu0 %v6033
    %6168 = vmatprep.mubr.f32.mxu0 1.0
    %6169 = vmatmul.mubr.f32.gmra.mrb[0].mxu0 1.0
    %v6170 = vpop.f32.mrb[0].mxu0
    %v6171 = vadd.f32 %v6101, %v6170
    %v6172 = vpop.f32.mrb[0].mxu0
    %6173 = vdwg.mxu0
    %v6175 = vrot.slane %v6171, 7
    %vm6177 = vcmask 1040384
    %v6178 = vsel %vm6177, %v5967, %v6175
    %vm6179 = vcmask 123904
    %6180 = vst.msk [vmem:[#allocation11] sm:$0x3] %vm6179, %v6178
    // Predicated region
    $region18: #{residual_block.3} parent=1 // pred_check
      _
    $region19: #{residual_block.3} parent=1 // pred_check_branch
      %6182 = sbr.rel (0) target = $region21
    $region20: #{residual_block.3} parent=1 // pred_region
      %s6184 = ssub.s32 4096, 4096
      %6185 = vsyncadd [#allocation5], %s6184
      %s6186 = sshll.u32 [#allocation8], 4
      %s6187 = int_to_ptr.vmem [resolvable:$true] %s6186
      %6192 = dma.vmem_to_hbm [thread:$0]  %s6187, 4096, %s2, [#allocation5], 64, 64, 4
    $region21: #{residual_block.3} parent=1 // pred_fallthru
      _
    // Predicated region
    $region22: #{residual_block.3} parent=1 // pred_check
      _
    $region23: #{residual_block.3} parent=1 // pred_check_branch
      %6194 = sbr.rel (0) target = $region25
    $region24: #{residual_block.3} parent=1 // pred_region
      %s6196 = ssub.s32 4096, 4096
      %6197 = vsyncadd [#allocation10], %s6196
      %s6198 = sshll.u32 [#allocation9], 4
      %s6199 = int_to_ptr.vmem [resolvable:$true] %s6198
      %6204 = dma.vmem_to_hbm [thread:$0]  %s6199, 4096, %s3, [#allocation10], 64, 64, 4
    $region25: #{residual_block.3} parent=1 // pred_fallthru
      _
    // Predicated region
    $region26: #{residual_block.3} parent=1 // pred_check
      _
    $region27: #{residual_block.3} parent=1 // pred_check_branch
      %6206 = sbr.rel (0) target = $region29
    $region28: #{residual_block.3} parent=1 // pred_region
      %s6208 = ssub.s32 32, 32
      %6209 = vsyncadd [#allocation10], %s6208
      %s6211 = sshll.u32 [#allocation11], 4
      %s6212 = int_to_ptr.vmem [resolvable:$true] %s6211
      %6214 = dma.vmem_to_hbm [thread:$0]  %s6212, 32, %s4, [#allocation10]
    $region29: #{residual_block.3} parent=1 // pred_fallthru
      _
    // Predicated region
    $region30: #{residual_block.3} parent=1 // pred_check
      _
    $region31: #{residual_block.3} parent=1 // pred_check_branch
      %6216 = sbr.rel (0) target = $region33
    $region32: #{residual_block.3} parent=1 // pred_region
      %6217 = dma.done [#allocation5], 4096
    $region33: #{residual_block.3} parent=1 // pred_fallthru
      _
    // Predicated region
    $region34: #{residual_block.3} parent=1 // pred_check
      _
    $region35: #{residual_block.3} parent=1 // pred_check_branch
      %6219 = sbr.rel (0) target = $region37
    $region36: #{residual_block.3} parent=1 // pred_region
      %6220 = dma.done [#allocation10], 4096
    $region37: #{residual_block.3} parent=1 // pred_fallthru
      _
    // Predicated region
    $region38: #{residual_block.3} parent=1 // pred_check
      _
    $region39: #{residual_block.3} parent=1 // pred_check_branch
      %6222 = sbr.rel (0) target = $region41
    $region40: #{residual_block.3} parent=1 // pred_region
      %6223 = dma.done [#allocation10], 32
    $region41: #{residual_block.3} parent=1 // pred_fallthru
      _
    %6224 = vsyncpa [#allocation4], 1
    %6225 = vsyncpa [#allocation7], 1
    %6226 = vsyncpa [#allocation5], 1
    %6227 = vsyncpa [#allocation10], 1

</llo_original>
